<compile_context>
chip_gen: v7x
topology: tpu7x:2x2x1
jax: 0.10.0
libtpu: 0.0.40
codegen_flags: <defaults>
</compile_context>

<pallas_src>
import functools

import jax
import jax.numpy as jnp
from jax import lax
from jax.experimental import pallas as pl
from jax.experimental.pallas import tpu as pltpu


def _lstm_kernel(x_ref, wih1_ref, b1_ref, whh1_ref, w2_ref, b2_ref,
                 wlin_ref, blin_ref, out_ref,
                 xproj_ref, h2all_ref, h1_ref, c1_ref, h2_ref, c2_ref,
                 *, seq_chunk, b_pad, unroll):
    # x_ref:    (seq_chunk*B_pad, I_pad)   bf16, time-major flattened rows
    # wih1_ref: (I_pad, 4*H_pad) bf16      b1_ref: (1, 4*H_pad) f32 (b_ih+b_hh)
    # whh1_ref: (H_pad, 4*H_pad) bf16
    # w2_ref:   (2*H_pad, 4*H_pad) bf16    (stack of [W_ih2; W_hh2], K = 256)
    # b2_ref:   (1, 4*H_pad) f32
    # wlin_ref: (H_pad, O_pad) bf16        blin_ref: (1, O_pad) f32
    # out_ref:  (seq_chunk*B_pad, O_pad) f32
    H = whh1_ref.shape[0]  # padded hidden size (128)

    # ---- non-recurrent work, once per chunk: layer-1 input projection -------
    xproj_ref[...] = (
        jnp.dot(x_ref[...], wih1_ref[...], preferred_element_type=jnp.float32)
        + b1_ref[...])

    # ---- init carries on the first sequence chunk ---------------------------
    @pl.when(pl.program_id(0) == 0)
    def _():
        zeros = jnp.zeros((b_pad, H), jnp.float32)
        h1_ref[...] = zeros
        c1_ref[...] = zeros
        h2_ref[...] = zeros
        c2_ref[...] = zeros

    # hoisted bias broadcast (JAX does not CSE broadcast_in_dim inside the loop)
    b2b = jnp.broadcast_to(b2_ref[...], (b_pad, 4 * H))

    def gates(pre):
        i = jax.nn.sigmoid(pre[:, 0 * H:1 * H])
        f = jax.nn.sigmoid(pre[:, 1 * H:2 * H])
        g = jnp.tanh(pre[:, 2 * H:3 * H])
        o = jax.nn.sigmoid(pre[:, 3 * H:4 * H])
        return i, f, g, o

    def step(t, carry):
        h1, c1, h2, c2 = carry
        row = pl.multiple_of(t * b_pad, b_pad)

        # layer 1: only the recurrent matmul is on the serial path
        pre1 = xproj_ref[pl.ds(row, b_pad), :] + jnp.dot(
            h1.astype(jnp.bfloat16), whh1_ref[...],
            preferred_element_type=jnp.float32)
        i1, f1, g1, o1 = gates(pre1)
        c1 = f1 * c1 + i1 * g1
        h1 = o1 * jnp.tanh(c1)

        # layer 2: fused [input; hidden] matmul, K = 256
        in2 = jnp.concatenate([h1, h2], axis=1).astype(jnp.bfloat16)
        pre2 = jnp.dot(in2, w2_ref[...],
                       preferred_element_type=jnp.float32) + b2b
        i2, f2, g2, o2 = gates(pre2)
        c2 = f2 * c2 + i2 * g2
        h2 = o2 * jnp.tanh(c2)

        h2all_ref[pl.ds(row, b_pad), :] = h2
        return h1, c1, h2, c2

    carry0 = (h1_ref[...], c1_ref[...], h2_ref[...], c2_ref[...])
    h1, c1, h2, c2 = lax.fori_loop(0, seq_chunk, step, carry0, unroll=unroll)
    h1_ref[...] = h1
    c1_ref[...] = c1
    h2_ref[...] = h2
    c2_ref[...] = c2

    # ---- hoisted output Linear: one big matmul over the whole chunk ---------
    out_ref[...] = (
        jnp.dot(h2all_ref[...].astype(jnp.bfloat16), wlin_ref[...],
                preferred_element_type=jnp.float32)
        + blin_ref[...])


def _pack_lstm_layer(w_ih, w_hh, b_ih, b_hh, H, H_pad, in_pad):
    """Transpose + zero-pad PyTorch-layout LSTM weights, keeping i,f,g,o blocks."""
    I = w_ih.shape[1]
    w_ih4 = jnp.pad(w_ih.reshape(4, H, I),
                    ((0, 0), (0, H_pad - H), (0, in_pad - I)))
    wih_t = jnp.transpose(w_ih4, (2, 0, 1)).reshape(in_pad, 4 * H_pad)

    w_hh4 = jnp.pad(w_hh.reshape(4, H, H),
                    ((0, 0), (0, H_pad - H), (0, H_pad - H)))
    whh_t = jnp.transpose(w_hh4, (2, 0, 1)).reshape(H_pad, 4 * H_pad)

    b = jnp.pad((b_ih + b_hh).reshape(4, H),
                ((0, 0), (0, H_pad - H))).reshape(1, 4 * H_pad)
    return wih_t, whh_t, b


def lstm_forward(x, params, *, feat_pad=128, seq_chunk=128):
    """x: (S, B, input_size) float32 -> (S, B, output_size)."""
    S, B, I = x.shape
    H = params["w_hh_l0"].shape[1]
    O = params["w_lin"].shape[0]
    I_pad = H_pad = O_pad = feat_pad
    B_pad = pl.cdiv(B, 8) * 8                      # multiple of 8 sublanes
    S_chunk = min(seq_chunk, S)
    n_chunks = pl.cdiv(S, S_chunk)
    S_pad = n_chunks * S_chunk
    rows_per_chunk = S_chunk * B_pad

    # ---- pack / pad weights (bf16 matmul operands, f32 biases) --------------
    wih1, whh1, b1 = _pack_lstm_layer(params["w_ih_l0"], params["w_hh_l0"],
                                      params["b_ih_l0"], params["b_hh_l0"],
                                      H, H_pad, I_pad)
    wih2, whh2, b2 = _pack_lstm_layer(params["w_ih_l1"], params["w_hh_l1"],
                                      params["b_ih_l1"], params["b_hh_l1"],
                                      H, H_pad, H_pad)
    w2 = jnp.concatenate([wih2, whh2], axis=0)     # (2*H_pad, 4*H_pad)
    wlin = jnp.pad(params["w_lin"].T, ((0, H_pad - H), (0, O_pad - O)))
    blin = jnp.pad(params["b_lin"], (0, O_pad - O)).reshape(1, O_pad)

    wih1 = wih1.astype(jnp.bfloat16)
    whh1 = whh1.astype(jnp.bfloat16)
    w2 = w2.astype(jnp.bfloat16)
    wlin = wlin.astype(jnp.bfloat16)

    # time-major flatten: row index = t * B_pad + b
    x_p = jnp.pad(x.astype(jnp.float32),
                  ((0, S_pad - S), (0, B_pad - B), (0, I_pad - I)))
    x_flat = x_p.reshape(S_pad * B_pad, I_pad).astype(jnp.bfloat16)

    unroll = True if S_chunk <= 16 else 4
    kernel = functools.partial(_lstm_kernel, seq_chunk=S_chunk,
                               b_pad=B_pad, unroll=unroll)

    def pinned(arr):  # weights: constant block index -> fetched once
        return pl.BlockSpec(arr.shape, lambda s: (0, 0))

    grid_spec = pltpu.PrefetchScalarGridSpec(
        num_scalar_prefetch=0,
        grid=(n_chunks,),
        in_specs=[
            pl.BlockSpec((rows_per_chunk, I_pad), lambda s: (s, 0)),  # x chunk
            pinned(wih1), pinned(b1), pinned(whh1),
            pinned(w2), pinned(b2),
            pinned(wlin), pinned(blin),
        ],
        out_specs=pl.BlockSpec((rows_per_chunk, O_pad), lambda s: (s, 0)),
        scratch_shapes=[
            pltpu.VMEM((rows_per_chunk, 4 * H_pad), jnp.float32),  # x projection
            pltpu.VMEM((rows_per_chunk, H_pad), jnp.float32),      # h2 per step
            pltpu.VMEM((B_pad, H_pad), jnp.float32),               # h1 carry
            pltpu.VMEM((B_pad, H_pad), jnp.float32),               # c1 carry
            pltpu.VMEM((B_pad, H_pad), jnp.float32),               # h2 carry
            pltpu.VMEM((B_pad, H_pad), jnp.float32),               # c2 carry
        ],
    )

    # size the scoped-VMEM limit to the actual buffers (+ pipelining headroom)
    def nbytes(a):
        return a.size * a.dtype.itemsize
    block_bytes = rows_per_chunk * I_pad * 2 + rows_per_chunk * O_pad * 4
    weight_bytes = sum(nbytes(a) for a in (wih1, b1, whh1, w2, b2, wlin, blin))
    scratch_bytes = (rows_per_chunk * 4 * H_pad * 4
                     + rows_per_chunk * H_pad * 4
                     + 4 * B_pad * H_pad * 4)
    vmem_limit = int(2 * (block_bytes + weight_bytes) + scratch_bytes + (4 << 20))

    out_flat = pl.pallas_call(
        kernel,
        out_shape=jax.ShapeDtypeStruct((S_pad * B_pad, O_pad), jnp.float32),
        grid_spec=grid_spec,
        compiler_params=pltpu.CompilerParams(
            dimension_semantics=("arbitrary",),   # serial recurrence over chunks
            vmem_limit_bytes=vmem_limit),
    )(x_flat, wih1, b1, whh1, w2, b2, wlin, blin)

    out = out_flat.reshape(S_pad, B_pad, O_pad)
    return out[:S, :B, :O]


def lstm_reference(x, params):
    """Pure-JAX f32 reference of the PyTorch module (for verification)."""
    S, B, _ = x.shape
    H = params["w_hh_l0"].shape[1]

    def cell(x_t, h, c, w_ih, w_hh, b_ih, b_hh):
        pre = x_t @ w_ih.T + b_ih + h @ w_hh.T + b_hh
        i = jax.nn.sigmoid(pre[:, 0:H])
        f = jax.nn.sigmoid(pre[:, H:2 * H])
        g = jnp.tanh(pre[:, 2 * H:3 * H])
        o = jax.nn.sigmoid(pre[:, 3 * H:4 * H])
        c = f * c + i * g
        h = o * jnp.tanh(c)
        return h, c

    h1 = c1 = h2 = c2 = jnp.zeros((B, H), jnp.float32)
    ys = []
    for t in range(S):
        h1, c1 = cell(x[t], h1, c1, params["w_ih_l0"], params["w_hh_l0"],
                      params["b_ih_l0"], params["b_hh_l0"])
        h2, c2 = cell(h1, h2, c2, params["w_ih_l1"], params["w_hh_l1"],
                      params["b_ih_l1"], params["b_hh_l1"])
        ys.append(h2 @ params["w_lin"].T + params["b_lin"])
    return jnp.stack(ys, axis=0)


def init_params(key, input_size=2, hidden_size=4, output_size=1):
    """Deterministic init with PyTorch-like uniform(-1/sqrt(H), 1/sqrt(H))."""
    k = 1.0 / jnp.sqrt(jnp.float32(hidden_size))
    keys = jax.random.split(key, 10)

    def u(kk, shape):
        return jax.random.uniform(kk, shape, jnp.float32, -k, k)

    return {
        "w_ih_l0": u(keys[0], (4 * hidden_size, input_size)),
        "w_hh_l0": u(keys[1], (4 * hidden_size, hidden_size)),
        "b_ih_l0": u(keys[2], (4 * hidden_size,)),
        "b_hh_l0": u(keys[3], (4 * hidden_size,)),
        "w_ih_l1": u(keys[4], (4 * hidden_size, hidden_size)),
        "w_hh_l1": u(keys[5], (4 * hidden_size, hidden_size)),
        "b_ih_l1": u(keys[6], (4 * hidden_size,)),
        "b_hh_l1": u(keys[7], (4 * hidden_size,)),
        "w_lin":   u(keys[8], (output_size, hidden_size)),
        "b_lin":   u(keys[9], (output_size,)),
    }


if __name__ == "__main__":
    key = jax.random.PRNGKey(0)
    key_p, key_x = jax.random.split(key)

    seq, batch, input_size, hidden_size, output_size = 8, 2, 2, 4, 1
    params = init_params(key_p, input_size, hidden_size, output_size)
    x = jax.random.normal(key_x, (seq, batch, input_size), jnp.float32)

    out = lstm_forward(x, params)
    out = jax.block_until_ready(out)

    ref = lstm_reference(x, params)
    assert out.shape == (seq, batch, output_size), out.shape
    max_err = float(jnp.max(jnp.abs(out - ref)))
    # bf16 matmul operands (f32 accumulation / gate math) -> looser tolerance
    assert jnp.allclose(out, ref, atol=3e-2, rtol=3e-2), f"max abs err {max_err}"
    print("KERNEL_OK")
</pallas_src>

<mosaic_0001>
module attributes {stable_mosaic.version = 11 : i64} {
  func.func @_lstm_kernel(%arg0: i32, %arg1: memref<64x128xbf16, #tpu.memory_space<vmem>>, %arg2: memref<128x512xbf16, #tpu.memory_space<vmem>>, %arg3: memref<1x512xf32, #tpu.memory_space<vmem>>, %arg4: memref<128x512xbf16, #tpu.memory_space<vmem>>, %arg5: memref<256x512xbf16, #tpu.memory_space<vmem>>, %arg6: memref<1x512xf32, #tpu.memory_space<vmem>>, %arg7: memref<128x128xbf16, #tpu.memory_space<vmem>>, %arg8: memref<1x128xf32, #tpu.memory_space<vmem>>, %arg9: memref<64x128xf32, #tpu.memory_space<vmem>>, %arg10: memref<64x512xf32, #tpu.memory_space<vmem>>, %arg11: memref<64x128xf32, #tpu.memory_space<vmem>>, %arg12: memref<8x128xf32, #tpu.memory_space<vmem>>, %arg13: memref<8x128xf32, #tpu.memory_space<vmem>>, %arg14: memref<8x128xf32, #tpu.memory_space<vmem>>, %arg15: memref<8x128xf32, #tpu.memory_space<vmem>>) attributes {dimension_semantics = [#tpu.dimension_semantics<arbitrary>], iteration_bounds = array<i64: 1>, scalar_prefetch = 0 : i64, scratch_operands = 6 : i64, tpu.core_type = #tpu.core_type<tc>, window_params = [{transform_indices = @transform_0, window_bounds = array<i64: 64, 128>}, {pipeline_mode = #tpu.pipeline_mode<synchronous>, transform_indices = @transform_1, window_bounds = array<i64: 128, 512>}, {pipeline_mode = #tpu.pipeline_mode<synchronous>, transform_indices = @transform_2, window_bounds = array<i64: 1, 512>}, {pipeline_mode = #tpu.pipeline_mode<synchronous>, transform_indices = @transform_3, window_bounds = array<i64: 128, 512>}, {pipeline_mode = #tpu.pipeline_mode<synchronous>, transform_indices = @transform_4, window_bounds = array<i64: 256, 512>}, {pipeline_mode = #tpu.pipeline_mode<synchronous>, transform_indices = @transform_5, window_bounds = array<i64: 1, 512>}, {pipeline_mode = #tpu.pipeline_mode<synchronous>, transform_indices = @transform_6, window_bounds = array<i64: 128, 128>}, {pipeline_mode = #tpu.pipeline_mode<synchronous>, transform_indices = @transform_7, window_bounds = array<i64: 1, 128>}, {transform_indices = @transform_8, window_bounds = array<i64: 64, 128>}]} {
    %c0 = arith.constant 0 : index
    %c0_0 = arith.constant 0 : index
    %0 = vector.load %arg1[%c0, %c0_0] : memref<64x128xbf16, #tpu.memory_space<vmem>>, vector<64x128xbf16>
    %c0_1 = arith.constant 0 : index
    %c0_2 = arith.constant 0 : index
    %1 = vector.load %arg2[%c0_1, %c0_2] : memref<128x512xbf16, #tpu.memory_space<vmem>>, vector<128x512xbf16>
    %cst = arith.constant dense<0.000000e+00> : vector<64x512xf32>
    %2 = tpu.matmul %0, %1, %cst {dimension_numbers = #tpu.dot_dimension_numbers<[1], [0], [0], [1], [0, 0, 1, 1], [], []>} : vector<64x128xbf16>, vector<128x512xbf16>, vector<64x512xf32> -> vector<64x512xf32>
    %c0_3 = arith.constant 0 : index
    %c0_4 = arith.constant 0 : index
    %3 = vector.load %arg3[%c0_3, %c0_4] : memref<1x512xf32, #tpu.memory_space<vmem>>, vector<1x512xf32>
    %4 = vector.broadcast %3 : vector<1x512xf32> to vector<64x512xf32>
    %5 = arith.addf %2, %4 : vector<64x512xf32>
    %c0_5 = arith.constant 0 : index
    %c0_6 = arith.constant 0 : index
    %6 = vector.load %arg10[%c0_5, %c0_6] : memref<64x512xf32, #tpu.memory_space<vmem>>, vector<64x512xf32>
    tpu.vector_store %arg10[%c0_5, %c0_6], %5 {strides = array<i32>} : memref<64x512xf32, #tpu.memory_space<vmem>>, vector<64x512xf32>,
    %c0_i32 = arith.constant 0 : i32
    %7 = arith.cmpi eq, %arg0, %c0_i32 : i32
    %8 = arith.extui %7 : i1 to i32
    %c0_i32_7 = arith.constant 0 : i32
    %9 = arith.cmpi ne, %8, %c0_i32_7 : i32
    scf.if %9 {
      %cst_156 = arith.constant 0.000000e+00 : f32
      %549 = vector.broadcast %cst_156 : f32 to vector<8x128xf32>
      %c0_157 = arith.constant 0 : index
      %c0_158 = arith.constant 0 : index
      %550 = vector.load %arg12[%c0_157, %c0_158] : memref<8x128xf32, #tpu.memory_space<vmem>>, vector<8x128xf32>
      tpu.vector_store %arg12[%c0_157, %c0_158], %549 {strides = array<i32>} : memref<8x128xf32, #tpu.memory_space<vmem>>, vector<8x128xf32>,
      %c0_159 = arith.constant 0 : index
      %c0_160 = arith.constant 0 : index
      %551 = vector.load %arg13[%c0_159, %c0_160] : memref<8x128xf32, #tpu.memory_space<vmem>>, vector<8x128xf32>
      tpu.vector_store %arg13[%c0_159, %c0_160], %549 {strides = array<i32>} : memref<8x128xf32, #tpu.memory_space<vmem>>, vector<8x128xf32>,
      %c0_161 = arith.constant 0 : index
      %c0_162 = arith.constant 0 : index
      %552 = vector.load %arg14[%c0_161, %c0_162] : memref<8x128xf32, #tpu.memory_space<vmem>>, vector<8x128xf32>
      tpu.vector_store %arg14[%c0_161, %c0_162], %549 {strides = array<i32>} : memref<8x128xf32, #tpu.memory_space<vmem>>, vector<8x128xf32>,
      %c0_163 = arith.constant 0 : index
      %c0_164 = arith.constant 0 : index
      %553 = vector.load %arg15[%c0_163, %c0_164] : memref<8x128xf32, #tpu.memory_space<vmem>>, vector<8x128xf32>
      tpu.vector_store %arg15[%c0_163, %c0_164], %549 {strides = array<i32>} : memref<8x128xf32, #tpu.memory_space<vmem>>, vector<8x128xf32>,
    } else {
    }
    %c0_8 = arith.constant 0 : index
    %c0_9 = arith.constant 0 : index
    %10 = vector.load %arg6[%c0_8, %c0_9] : memref<1x512xf32, #tpu.memory_space<vmem>>, vector<1x512xf32>
    %11 = vector.shape_cast %10 : vector<1x512xf32> to vector<1x512xf32>
    %12 = vector.broadcast %11 : vector<1x512xf32> to vector<8x512xf32>
    %c0_10 = arith.constant 0 : index
    %c0_11 = arith.constant 0 : index
    %13 = vector.load %arg12[%c0_10, %c0_11] : memref<8x128xf32, #tpu.memory_space<vmem>>, vector<8x128xf32>
    %c0_12 = arith.constant 0 : index
    %c0_13 = arith.constant 0 : index
    %14 = vector.load %arg13[%c0_12, %c0_13] : memref<8x128xf32, #tpu.memory_space<vmem>>, vector<8x128xf32>
    %c0_14 = arith.constant 0 : index
    %c0_15 = arith.constant 0 : index
    %15 = vector.load %arg14[%c0_14, %c0_15] : memref<8x128xf32, #tpu.memory_space<vmem>>, vector<8x128xf32>
    %c0_16 = arith.constant 0 : index
    %c0_17 = arith.constant 0 : index
    %16 = vector.load %arg15[%c0_16, %c0_17] : memref<8x128xf32, #tpu.memory_space<vmem>>, vector<8x128xf32>
    %c0_i32_18 = arith.constant 0 : i32
    %c8_i32 = arith.constant 8 : i32
    %17 = arith.muli %c0_i32_18, %c8_i32 : i32
    %18 = tpu.assume_multiple %17, 8 : i32
    %19 = arith.index_cast %18 : i32 to index
    %c0_19 = arith.constant 0 : index
    %20 = vector.load %arg10[%19, %c0_19] : memref<64x512xf32, #tpu.memory_space<vmem>>, vector<8x512xf32>
    %21 = arith.truncf %13 : vector<8x128xf32> to vector<8x128xbf16>
    %c0_20 = arith.constant 0 : index
    %c0_21 = arith.constant 0 : index
    %22 = vector.load %arg4[%c0_20, %c0_21] : memref<128x512xbf16, #tpu.memory_space<vmem>>, vector<128x512xbf16>
    %cst_22 = arith.constant dense<0.000000e+00> : vector<8x512xf32>
    %23 = tpu.matmul %21, %22, %cst_22 {dimension_numbers = #tpu.dot_dimension_numbers<[1], [0], [0], [1], [0, 0, 1, 1], [], []>} : vector<8x128xbf16>, vector<128x512xbf16>, vector<8x512xf32> -> vector<8x512xf32>
    %24 = arith.addf %20, %23 : vector<8x512xf32>
    %25 = vector.extract_strided_slice %24 {offsets = [0, 0], sizes = [8, 128], strides = [1, 1]} : vector<8x512xf32> to vector<8x128xf32>
    %26 = arith.negf %25 : vector<8x128xf32>
    %27 = math.exp %26 : vector<8x128xf32>
    %cst_23 = arith.constant 1.000000e+00 : f32
    %28 = vector.broadcast %cst_23 : f32 to vector<8x128xf32>
    %29 = arith.addf %28, %27 : vector<8x128xf32>
    %30 = arith.divf %28, %29 : vector<8x128xf32>
    %31 = vector.extract_strided_slice %24 {offsets = [0, 128], sizes = [8, 128], strides = [1, 1]} : vector<8x512xf32> to vector<8x128xf32>
    %32 = arith.negf %31 : vector<8x128xf32>
    %33 = math.exp %32 : vector<8x128xf32>
    %cst_24 = arith.constant 1.000000e+00 : f32
    %34 = vector.broadcast %cst_24 : f32 to vector<8x128xf32>
    %35 = arith.addf %34, %33 : vector<8x128xf32>
    %36 = arith.divf %34, %35 : vector<8x128xf32>
    %37 = vector.extract_strided_slice %24 {offsets = [0, 256], sizes = [8, 128], strides = [1, 1]} : vector<8x512xf32> to vector<8x128xf32>
    %38 = math.tanh %37 : vector<8x128xf32>
    %39 = vector.extract_strided_slice %24 {offsets = [0, 384], sizes = [8, 128], strides = [1, 1]} : vector<8x512xf32> to vector<8x128xf32>
    %40 = arith.negf %39 : vector<8x128xf32>
    %41 = math.exp %40 : vector<8x128xf32>
    %cst_25 = arith.constant 1.000000e+00 : f32
    %42 = vector.broadcast %cst_25 : f32 to vector<8x128xf32>
    %43 = arith.addf %42, %41 : vector<8x128xf32>
    %44 = arith.divf %42, %43 : vector<8x128xf32>
    %45 = arith.mulf %36, %14 : vector<8x128xf32>
    %46 = arith.mulf %30, %38 : vector<8x128xf32>
    %47 = arith.addf %45, %46 : vector<8x128xf32>
    %48 = math.tanh %47 : vector<8x128xf32>
    %49 = arith.mulf %44, %48 : vector<8x128xf32>
    %50 = tpu.concatenate %49, %15 in 1 : vector<8x128xf32>, vector<8x128xf32> -> vector<8x256xf32>
    %51 = arith.truncf %50 : vector<8x256xf32> to vector<8x256xbf16>
    %c0_26 = arith.constant 0 : index
    %c0_27 = arith.constant 0 : index
    %52 = vector.load %arg5[%c0_26, %c0_27] : memref<256x512xbf16, #tpu.memory_space<vmem>>, vector<256x512xbf16>
    %cst_28 = arith.constant dense<0.000000e+00> : vector<8x512xf32>
    %53 = tpu.matmul %51, %52, %cst_28 {dimension_numbers = #tpu.dot_dimension_numbers<[1], [0], [0], [1], [0, 0, 1, 1], [], []>} : vector<8x256xbf16>, vector<256x512xbf16>, vector<8x512xf32> -> vector<8x512xf32>
    %54 = arith.addf %53, %12 : vector<8x512xf32>
    %55 = vector.extract_strided_slice %54 {offsets = [0, 0], sizes = [8, 128], strides = [1, 1]} : vector<8x512xf32> to vector<8x128xf32>
    %56 = arith.negf %55 : vector<8x128xf32>
    %57 = math.exp %56 : vector<8x128xf32>
    %cst_29 = arith.constant 1.000000e+00 : f32
    %58 = vector.broadcast %cst_29 : f32 to vector<8x128xf32>
    %59 = arith.addf %58, %57 : vector<8x128xf32>
    %60 = arith.divf %58, %59 : vector<8x128xf32>
    %61 = vector.extract_strided_slice %54 {offsets = [0, 128], sizes = [8, 128], strides = [1, 1]} : vector<8x512xf32> to vector<8x128xf32>
    %62 = arith.negf %61 : vector<8x128xf32>
    %63 = math.exp %62 : vector<8x128xf32>
    %cst_30 = arith.constant 1.000000e+00 : f32
    %64 = vector.broadcast %cst_30 : f32 to vector<8x128xf32>
    %65 = arith.addf %64, %63 : vector<8x128xf32>
    %66 = arith.divf %64, %65 : vector<8x128xf32>
    %67 = vector.extract_strided_slice %54 {offsets = [0, 256], sizes = [8, 128], strides = [1, 1]} : vector<8x512xf32> to vector<8x128xf32>
    %68 = math.tanh %67 : vector<8x128xf32>
    %69 = vector.extract_strided_slice %54 {offsets = [0, 384], sizes = [8, 128], strides = [1, 1]} : vector<8x512xf32> to vector<8x128xf32>
    %70 = arith.negf %69 : vector<8x128xf32>
    %71 = math.exp %70 : vector<8x128xf32>
    %cst_31 = arith.constant 1.000000e+00 : f32
    %72 = vector.broadcast %cst_31 : f32 to vector<8x128xf32>
    %73 = arith.addf %72, %71 : vector<8x128xf32>
    %74 = arith.divf %72, %73 : vector<8x128xf32>
    %75 = arith.mulf %66, %16 : vector<8x128xf32>
    %76 = arith.mulf %60, %68 : vector<8x128xf32>
    %77 = arith.addf %75, %76 : vector<8x128xf32>
    %78 = math.tanh %77 : vector<8x128xf32>
    %79 = arith.mulf %74, %78 : vector<8x128xf32>
    %80 = arith.index_cast %18 : i32 to index
    %c0_32 = arith.constant 0 : index
    %81 = vector.load %arg11[%80, %c0_32] : memref<64x128xf32, #tpu.memory_space<vmem>>, vector<8x128xf32>
    tpu.vector_store %arg11[%80, %c0_32], %79 {strides = array<i32>} : memref<64x128xf32, #tpu.memory_space<vmem>>, vector<8x128xf32>,
    %c1_i32 = arith.constant 1 : i32
    %c8_i32_33 = arith.constant 8 : i32
    %82 = arith.muli %c1_i32, %c8_i32_33 : i32
    %83 = tpu.assume_multiple %82, 8 : i32
    %84 = arith.index_cast %83 : i32 to index
    %c0_34 = arith.constant 0 : index
    %85 = vector.load %arg10[%84, %c0_34] : memref<64x512xf32, #tpu.memory_space<vmem>>, vector<8x512xf32>
    %86 = arith.truncf %49 : vector<8x128xf32> to vector<8x128xbf16>
    %c0_35 = arith.constant 0 : index
    %c0_36 = arith.constant 0 : index
    %87 = vector.load %arg4[%c0_35, %c0_36] : memref<128x512xbf16, #tpu.memory_space<vmem>>, vector<128x512xbf16>
    %cst_37 = arith.constant dense<0.000000e+00> : vector<8x512xf32>
    %88 = tpu.matmul %86, %87, %cst_37 {dimension_numbers = #tpu.dot_dimension_numbers<[1], [0], [0], [1], [0, 0, 1, 1], [], []>} : vector<8x128xbf16>, vector<128x512xbf16>, vector<8x512xf32> -> vector<8x512xf32>
    %89 = arith.addf %85, %88 : vector<8x512xf32>
    %90 = vector.extract_strided_slice %89 {offsets = [0, 0], sizes = [8, 128], strides = [1, 1]} : vector<8x512xf32> to vector<8x128xf32>
    %91 = arith.negf %90 : vector<8x128xf32>
    %92 = math.exp %91 : vector<8x128xf32>
    %cst_38 = arith.constant 1.000000e+00 : f32
    %93 = vector.broadcast %cst_38 : f32 to vector<8x128xf32>
    %94 = arith.addf %93, %92 : vector<8x128xf32>
    %95 = arith.divf %93, %94 : vector<8x128xf32>
    %96 = vector.extract_strided_slice %89 {offsets = [0, 128], sizes = [8, 128], strides = [1, 1]} : vector<8x512xf32> to vector<8x128xf32>
    %97 = arith.negf %96 : vector<8x128xf32>
    %98 = math.exp %97 : vector<8x128xf32>
    %cst_39 = arith.constant 1.000000e+00 : f32
    %99 = vector.broadcast %cst_39 : f32 to vector<8x128xf32>
    %100 = arith.addf %99, %98 : vector<8x128xf32>
    %101 = arith.divf %99, %100 : vector<8x128xf32>
    %102 = vector.extract_strided_slice %89 {offsets = [0, 256], sizes = [8, 128], strides = [1, 1]} : vector<8x512xf32> to vector<8x128xf32>
    %103 = math.tanh %102 : vector<8x128xf32>
    %104 = vector.extract_strided_slice %89 {offsets = [0, 384], sizes = [8, 128], strides = [1, 1]} : vector<8x512xf32> to vector<8x128xf32>
    %105 = arith.negf %104 : vector<8x128xf32>
    %106 = math.exp %105 : vector<8x128xf32>
    %cst_40 = arith.constant 1.000000e+00 : f32
    %107 = vector.broadcast %cst_40 : f32 to vector<8x128xf32>
    %108 = arith.addf %107, %106 : vector<8x128xf32>
    %109 = arith.divf %107, %108 : vector<8x128xf32>
    %110 = arith.mulf %101, %47 : vector<8x128xf32>
    %111 = arith.mulf %95, %103 : vector<8x128xf32>
    %112 = arith.addf %110, %111 : vector<8x128xf32>
    %113 = math.tanh %112 : vector<8x128xf32>
    %114 = arith.mulf %109, %113 : vector<8x128xf32>
    %115 = tpu.concatenate %114, %79 in 1 : vector<8x128xf32>, vector<8x128xf32> -> vector<8x256xf32>
    %116 = arith.truncf %115 : vector<8x256xf32> to vector<8x256xbf16>
    %c0_41 = arith.constant 0 : index
    %c0_42 = arith.constant 0 : index
    %117 = vector.load %arg5[%c0_41, %c0_42] : memref<256x512xbf16, #tpu.memory_space<vmem>>, vector<256x512xbf16>
    %cst_43 = arith.constant dense<0.000000e+00> : vector<8x512xf32>
    %118 = tpu.matmul %116, %117, %cst_43 {dimension_numbers = #tpu.dot_dimension_numbers<[1], [0], [0], [1], [0, 0, 1, 1], [], []>} : vector<8x256xbf16>, vector<256x512xbf16>, vector<8x512xf32> -> vector<8x512xf32>
    %119 = arith.addf %118, %12 : vector<8x512xf32>
    %120 = vector.extract_strided_slice %119 {offsets = [0, 0], sizes = [8, 128], strides = [1, 1]} : vector<8x512xf32> to vector<8x128xf32>
    %121 = arith.negf %120 : vector<8x128xf32>
    %122 = math.exp %121 : vector<8x128xf32>
    %cst_44 = arith.constant 1.000000e+00 : f32
    %123 = vector.broadcast %cst_44 : f32 to vector<8x128xf32>
    %124 = arith.addf %123, %122 : vector<8x128xf32>
    %125 = arith.divf %123, %124 : vector<8x128xf32>
    %126 = vector.extract_strided_slice %119 {offsets = [0, 128], sizes = [8, 128], strides = [1, 1]} : vector<8x512xf32> to vector<8x128xf32>
    %127 = arith.negf %126 : vector<8x128xf32>
    %128 = math.exp %127 : vector<8x128xf32>
    %cst_45 = arith.constant 1.000000e+00 : f32
    %129 = vector.broadcast %cst_45 : f32 to vector<8x128xf32>
    %130 = arith.addf %129, %128 : vector<8x128xf32>
    %131 = arith.divf %129, %130 : vector<8x128xf32>
    %132 = vector.extract_strided_slice %119 {offsets = [0, 256], sizes = [8, 128], strides = [1, 1]} : vector<8x512xf32> to vector<8x128xf32>
    %133 = math.tanh %132 : vector<8x128xf32>
    %134 = vector.extract_strided_slice %119 {offsets = [0, 384], sizes = [8, 128], strides = [1, 1]} : vector<8x512xf32> to vector<8x128xf32>
    %135 = arith.negf %134 : vector<8x128xf32>
    %136 = math.exp %135 : vector<8x128xf32>
    %cst_46 = arith.constant 1.000000e+00 : f32
    %137 = vector.broadcast %cst_46 : f32 to vector<8x128xf32>
    %138 = arith.addf %137, %136 : vector<8x128xf32>
    %139 = arith.divf %137, %138 : vector<8x128xf32>
    %140 = arith.mulf %131, %77 : vector<8x128xf32>
    %141 = arith.mulf %125, %133 : vector<8x128xf32>
    %142 = arith.addf %140, %141 : vector<8x128xf32>
    %143 = math.tanh %142 : vector<8x128xf32>
    %144 = arith.mulf %139, %143 : vector<8x128xf32>
    %145 = arith.index_cast %83 : i32 to index
    %c0_47 = arith.constant 0 : index
    %146 = vector.load %arg11[%145, %c0_47] : memref<64x128xf32, #tpu.memory_space<vmem>>, vector<8x128xf32>
    tpu.vector_store %arg11[%145, %c0_47], %144 {strides = array<i32>} : memref<64x128xf32, #tpu.memory_space<vmem>>, vector<8x128xf32>,
    %c2_i32 = arith.constant 2 : i32
    %c8_i32_48 = arith.constant 8 : i32
    %147 = arith.muli %c2_i32, %c8_i32_48 : i32
    %148 = tpu.assume_multiple %147, 8 : i32
    %149 = arith.index_cast %148 : i32 to index
    %c0_49 = arith.constant 0 : index
    %150 = vector.load %arg10[%149, %c0_49] : memref<64x512xf32, #tpu.memory_space<vmem>>, vector<8x512xf32>
    %151 = arith.truncf %114 : vector<8x128xf32> to vector<8x128xbf16>
    %c0_50 = arith.constant 0 : index
    %c0_51 = arith.constant 0 : index
    %152 = vector.load %arg4[%c0_50, %c0_51] : memref<128x512xbf16, #tpu.memory_space<vmem>>, vector<128x512xbf16>
    %cst_52 = arith.constant dense<0.000000e+00> : vector<8x512xf32>
    %153 = tpu.matmul %151, %152, %cst_52 {dimension_numbers = #tpu.dot_dimension_numbers<[1], [0], [0], [1], [0, 0, 1, 1], [], []>} : vector<8x128xbf16>, vector<128x512xbf16>, vector<8x512xf32> -> vector<8x512xf32>
    %154 = arith.addf %150, %153 : vector<8x512xf32>
    %155 = vector.extract_strided_slice %154 {offsets = [0, 0], sizes = [8, 128], strides = [1, 1]} : vector<8x512xf32> to vector<8x128xf32>
    %156 = arith.negf %155 : vector<8x128xf32>
    %157 = math.exp %156 : vector<8x128xf32>
    %cst_53 = arith.constant 1.000000e+00 : f32
    %158 = vector.broadcast %cst_53 : f32 to vector<8x128xf32>
    %159 = arith.addf %158, %157 : vector<8x128xf32>
    %160 = arith.divf %158, %159 : vector<8x128xf32>
    %161 = vector.extract_strided_slice %154 {offsets = [0, 128], sizes = [8, 128], strides = [1, 1]} : vector<8x512xf32> to vector<8x128xf32>
    %162 = arith.negf %161 : vector<8x128xf32>
    %163 = math.exp %162 : vector<8x128xf32>
    %cst_54 = arith.constant 1.000000e+00 : f32
    %164 = vector.broadcast %cst_54 : f32 to vector<8x128xf32>
    %165 = arith.addf %164, %163 : vector<8x128xf32>
    %166 = arith.divf %164, %165 : vector<8x128xf32>
    %167 = vector.extract_strided_slice %154 {offsets = [0, 256], sizes = [8, 128], strides = [1, 1]} : vector<8x512xf32> to vector<8x128xf32>
    %168 = math.tanh %167 : vector<8x128xf32>
    %169 = vector.extract_strided_slice %154 {offsets = [0, 384], sizes = [8, 128], strides = [1, 1]} : vector<8x512xf32> to vector<8x128xf32>
    %170 = arith.negf %169 : vector<8x128xf32>
    %171 = math.exp %170 : vector<8x128xf32>
    %cst_55 = arith.constant 1.000000e+00 : f32
    %172 = vector.broadcast %cst_55 : f32 to vector<8x128xf32>
    %173 = arith.addf %172, %171 : vector<8x128xf32>
    %174 = arith.divf %172, %173 : vector<8x128xf32>
    %175 = arith.mulf %166, %112 : vector<8x128xf32>
    %176 = arith.mulf %160, %168 : vector<8x128xf32>
    %177 = arith.addf %175, %176 : vector<8x128xf32>
    %178 = math.tanh %177 : vector<8x128xf32>
    %179 = arith.mulf %174, %178 : vector<8x128xf32>
    %180 = tpu.concatenate %179, %144 in 1 : vector<8x128xf32>, vector<8x128xf32> -> vector<8x256xf32>
    %181 = arith.truncf %180 : vector<8x256xf32> to vector<8x256xbf16>
    %c0_56 = arith.constant 0 : index
    %c0_57 = arith.constant 0 : index
    %182 = vector.load %arg5[%c0_56, %c0_57] : memref<256x512xbf16, #tpu.memory_space<vmem>>, vector<256x512xbf16>
    %cst_58 = arith.constant dense<0.000000e+00> : vector<8x512xf32>
    %183 = tpu.matmul %181, %182, %cst_58 {dimension_numbers = #tpu.dot_dimension_numbers<[1], [0], [0], [1], [0, 0, 1, 1], [], []>} : vector<8x256xbf16>, vector<256x512xbf16>, vector<8x512xf32> -> vector<8x512xf32>
    %184 = arith.addf %183, %12 : vector<8x512xf32>
    %185 = vector.extract_strided_slice %184 {offsets = [0, 0], sizes = [8, 128], strides = [1, 1]} : vector<8x512xf32> to vector<8x128xf32>
    %186 = arith.negf %185 : vector<8x128xf32>
    %187 = math.exp %186 : vector<8x128xf32>
    %cst_59 = arith.constant 1.000000e+00 : f32
    %188 = vector.broadcast %cst_59 : f32 to vector<8x128xf32>
    %189 = arith.addf %188, %187 : vector<8x128xf32>
    %190 = arith.divf %188, %189 : vector<8x128xf32>
    %191 = vector.extract_strided_slice %184 {offsets = [0, 128], sizes = [8, 128], strides = [1, 1]} : vector<8x512xf32> to vector<8x128xf32>
    %192 = arith.negf %191 : vector<8x128xf32>
    %193 = math.exp %192 : vector<8x128xf32>
    %cst_60 = arith.constant 1.000000e+00 : f32
    %194 = vector.broadcast %cst_60 : f32 to vector<8x128xf32>
    %195 = arith.addf %194, %193 : vector<8x128xf32>
    %196 = arith.divf %194, %195 : vector<8x128xf32>
    %197 = vector.extract_strided_slice %184 {offsets = [0, 256], sizes = [8, 128], strides = [1, 1]} : vector<8x512xf32> to vector<8x128xf32>
    %198 = math.tanh %197 : vector<8x128xf32>
    %199 = vector.extract_strided_slice %184 {offsets = [0, 384], sizes = [8, 128], strides = [1, 1]} : vector<8x512xf32> to vector<8x128xf32>
    %200 = arith.negf %199 : vector<8x128xf32>
    %201 = math.exp %200 : vector<8x128xf32>
    %cst_61 = arith.constant 1.000000e+00 : f32
    %202 = vector.broadcast %cst_61 : f32 to vector<8x128xf32>
    %203 = arith.addf %202, %201 : vector<8x128xf32>
    %204 = arith.divf %202, %203 : vector<8x128xf32>
    %205 = arith.mulf %196, %142 : vector<8x128xf32>
    %206 = arith.mulf %190, %198 : vector<8x128xf32>
    %207 = arith.addf %205, %206 : vector<8x128xf32>
    %208 = math.tanh %207 : vector<8x128xf32>
    %209 = arith.mulf %204, %208 : vector<8x128xf32>
    %210 = arith.index_cast %148 : i32 to index
    %c0_62 = arith.constant 0 : index
    %211 = vector.load %arg11[%210, %c0_62] : memref<64x128xf32, #tpu.memory_space<vmem>>, vector<8x128xf32>
    tpu.vector_store %arg11[%210, %c0_62], %209 {strides = array<i32>} : memref<64x128xf32, #tpu.memory_space<vmem>>, vector<8x128xf32>,
    %c3_i32 = arith.constant 3 : i32
    %c8_i32_63 = arith.constant 8 : i32
    %212 = arith.muli %c3_i32, %c8_i32_63 : i32
    %213 = tpu.assume_multiple %212, 8 : i32
    %214 = arith.index_cast %213 : i32 to index
    %c0_64 = arith.constant 0 : index
    %215 = vector.load %arg10[%214, %c0_64] : memref<64x512xf32, #tpu.memory_space<vmem>>, vector<8x512xf32>
    %216 = arith.truncf %179 : vector<8x128xf32> to vector<8x128xbf16>
    %c0_65 = arith.constant 0 : index
    %c0_66 = arith.constant 0 : index
    %217 = vector.load %arg4[%c0_65, %c0_66] : memref<128x512xbf16, #tpu.memory_space<vmem>>, vector<128x512xbf16>
    %cst_67 = arith.constant dense<0.000000e+00> : vector<8x512xf32>
    %218 = tpu.matmul %216, %217, %cst_67 {dimension_numbers = #tpu.dot_dimension_numbers<[1], [0], [0], [1], [0, 0, 1, 1], [], []>} : vector<8x128xbf16>, vector<128x512xbf16>, vector<8x512xf32> -> vector<8x512xf32>
    %219 = arith.addf %215, %218 : vector<8x512xf32>
    %220 = vector.extract_strided_slice %219 {offsets = [0, 0], sizes = [8, 128], strides = [1, 1]} : vector<8x512xf32> to vector<8x128xf32>
    %221 = arith.negf %220 : vector<8x128xf32>
    %222 = math.exp %221 : vector<8x128xf32>
    %cst_68 = arith.constant 1.000000e+00 : f32
    %223 = vector.broadcast %cst_68 : f32 to vector<8x128xf32>
    %224 = arith.addf %223, %222 : vector<8x128xf32>
    %225 = arith.divf %223, %224 : vector<8x128xf32>
    %226 = vector.extract_strided_slice %219 {offsets = [0, 128], sizes = [8, 128], strides = [1, 1]} : vector<8x512xf32> to vector<8x128xf32>
    %227 = arith.negf %226 : vector<8x128xf32>
    %228 = math.exp %227 : vector<8x128xf32>
    %cst_69 = arith.constant 1.000000e+00 : f32
    %229 = vector.broadcast %cst_69 : f32 to vector<8x128xf32>
    %230 = arith.addf %229, %228 : vector<8x128xf32>
    %231 = arith.divf %229, %230 : vector<8x128xf32>
    %232 = vector.extract_strided_slice %219 {offsets = [0, 256], sizes = [8, 128], strides = [1, 1]} : vector<8x512xf32> to vector<8x128xf32>
    %233 = math.tanh %232 : vector<8x128xf32>
    %234 = vector.extract_strided_slice %219 {offsets = [0, 384], sizes = [8, 128], strides = [1, 1]} : vector<8x512xf32> to vector<8x128xf32>
    %235 = arith.negf %234 : vector<8x128xf32>
    %236 = math.exp %235 : vector<8x128xf32>
    %cst_70 = arith.constant 1.000000e+00 : f32
    %237 = vector.broadcast %cst_70 : f32 to vector<8x128xf32>
    %238 = arith.addf %237, %236 : vector<8x128xf32>
    %239 = arith.divf %237, %238 : vector<8x128xf32>
    %240 = arith.mulf %231, %177 : vector<8x128xf32>
    %241 = arith.mulf %225, %233 : vector<8x128xf32>
    %242 = arith.addf %240, %241 : vector<8x128xf32>
    %243 = math.tanh %242 : vector<8x128xf32>
    %244 = arith.mulf %239, %243 : vector<8x128xf32>
    %245 = tpu.concatenate %244, %209 in 1 : vector<8x128xf32>, vector<8x128xf32> -> vector<8x256xf32>
    %246 = arith.truncf %245 : vector<8x256xf32> to vector<8x256xbf16>
    %c0_71 = arith.constant 0 : index
    %c0_72 = arith.constant 0 : index
    %247 = vector.load %arg5[%c0_71, %c0_72] : memref<256x512xbf16, #tpu.memory_space<vmem>>, vector<256x512xbf16>
    %cst_73 = arith.constant dense<0.000000e+00> : vector<8x512xf32>
    %248 = tpu.matmul %246, %247, %cst_73 {dimension_numbers = #tpu.dot_dimension_numbers<[1], [0], [0], [1], [0, 0, 1, 1], [], []>} : vector<8x256xbf16>, vector<256x512xbf16>, vector<8x512xf32> -> vector<8x512xf32>
    %249 = arith.addf %248, %12 : vector<8x512xf32>
    %250 = vector.extract_strided_slice %249 {offsets = [0, 0], sizes = [8, 128], strides = [1, 1]} : vector<8x512xf32> to vector<8x128xf32>
    %251 = arith.negf %250 : vector<8x128xf32>
    %252 = math.exp %251 : vector<8x128xf32>
    %cst_74 = arith.constant 1.000000e+00 : f32
    %253 = vector.broadcast %cst_74 : f32 to vector<8x128xf32>
    %254 = arith.addf %253, %252 : vector<8x128xf32>
    %255 = arith.divf %253, %254 : vector<8x128xf32>
    %256 = vector.extract_strided_slice %249 {offsets = [0, 128], sizes = [8, 128], strides = [1, 1]} : vector<8x512xf32> to vector<8x128xf32>
    %257 = arith.negf %256 : vector<8x128xf32>
    %258 = math.exp %257 : vector<8x128xf32>
    %cst_75 = arith.constant 1.000000e+00 : f32
    %259 = vector.broadcast %cst_75 : f32 to vector<8x128xf32>
    %260 = arith.addf %259, %258 : vector<8x128xf32>
    %261 = arith.divf %259, %260 : vector<8x128xf32>
    %262 = vector.extract_strided_slice %249 {offsets = [0, 256], sizes = [8, 128], strides = [1, 1]} : vector<8x512xf32> to vector<8x128xf32>
    %263 = math.tanh %262 : vector<8x128xf32>
    %264 = vector.extract_strided_slice %249 {offsets = [0, 384], sizes = [8, 128], strides = [1, 1]} : vector<8x512xf32> to vector<8x128xf32>
    %265 = arith.negf %264 : vector<8x128xf32>
    %266 = math.exp %265 : vector<8x128xf32>
    %cst_76 = arith.constant 1.000000e+00 : f32
    %267 = vector.broadcast %cst_76 : f32 to vector<8x128xf32>
    %268 = arith.addf %267, %266 : vector<8x128xf32>
    %269 = arith.divf %267, %268 : vector<8x128xf32>
    %270 = arith.mulf %261, %207 : vector<8x128xf32>
    %271 = arith.mulf %255, %263 : vector<8x128xf32>
    %272 = arith.addf %270, %271 : vector<8x128xf32>
    %273 = math.tanh %272 : vector<8x128xf32>
    %274 = arith.mulf %269, %273 : vector<8x128xf32>
    %275 = arith.index_cast %213 : i32 to index
    %c0_77 = arith.constant 0 : index
    %276 = vector.load %arg11[%275, %c0_77] : memref<64x128xf32, #tpu.memory_space<vmem>>, vector<8x128xf32>
    tpu.vector_store %arg11[%275, %c0_77], %274 {strides = array<i32>} : memref<64x128xf32, #tpu.memory_space<vmem>>, vector<8x128xf32>,
    %c4_i32 = arith.constant 4 : i32
    %c8_i32_78 = arith.constant 8 : i32
    %277 = arith.muli %c4_i32, %c8_i32_78 : i32
    %278 = tpu.assume_multiple %277, 8 : i32
    %279 = arith.index_cast %278 : i32 to index
    %c0_79 = arith.constant 0 : index
    %280 = vector.load %arg10[%279, %c0_79] : memref<64x512xf32, #tpu.memory_space<vmem>>, vector<8x512xf32>
    %281 = arith.truncf %244 : vector<8x128xf32> to vector<8x128xbf16>
    %c0_80 = arith.constant 0 : index
    %c0_81 = arith.constant 0 : index
    %282 = vector.load %arg4[%c0_80, %c0_81] : memref<128x512xbf16, #tpu.memory_space<vmem>>, vector<128x512xbf16>
    %cst_82 = arith.constant dense<0.000000e+00> : vector<8x512xf32>
    %283 = tpu.matmul %281, %282, %cst_82 {dimension_numbers = #tpu.dot_dimension_numbers<[1], [0], [0], [1], [0, 0, 1, 1], [], []>} : vector<8x128xbf16>, vector<128x512xbf16>, vector<8x512xf32> -> vector<8x512xf32>
    %284 = arith.addf %280, %283 : vector<8x512xf32>
    %285 = vector.extract_strided_slice %284 {offsets = [0, 0], sizes = [8, 128], strides = [1, 1]} : vector<8x512xf32> to vector<8x128xf32>
    %286 = arith.negf %285 : vector<8x128xf32>
    %287 = math.exp %286 : vector<8x128xf32>
    %cst_83 = arith.constant 1.000000e+00 : f32
    %288 = vector.broadcast %cst_83 : f32 to vector<8x128xf32>
    %289 = arith.addf %288, %287 : vector<8x128xf32>
    %290 = arith.divf %288, %289 : vector<8x128xf32>
    %291 = vector.extract_strided_slice %284 {offsets = [0, 128], sizes = [8, 128], strides = [1, 1]} : vector<8x512xf32> to vector<8x128xf32>
    %292 = arith.negf %291 : vector<8x128xf32>
    %293 = math.exp %292 : vector<8x128xf32>
    %cst_84 = arith.constant 1.000000e+00 : f32
    %294 = vector.broadcast %cst_84 : f32 to vector<8x128xf32>
    %295 = arith.addf %294, %293 : vector<8x128xf32>
    %296 = arith.divf %294, %295 : vector<8x128xf32>
    %297 = vector.extract_strided_slice %284 {offsets = [0, 256], sizes = [8, 128], strides = [1, 1]} : vector<8x512xf32> to vector<8x128xf32>
    %298 = math.tanh %297 : vector<8x128xf32>
    %299 = vector.extract_strided_slice %284 {offsets = [0, 384], sizes = [8, 128], strides = [1, 1]} : vector<8x512xf32> to vector<8x128xf32>
    %300 = arith.negf %299 : vector<8x128xf32>
    %301 = math.exp %300 : vector<8x128xf32>
    %cst_85 = arith.constant 1.000000e+00 : f32
    %302 = vector.broadcast %cst_85 : f32 to vector<8x128xf32>
    %303 = arith.addf %302, %301 : vector<8x128xf32>
    %304 = arith.divf %302, %303 : vector<8x128xf32>
    %305 = arith.mulf %296, %242 : vector<8x128xf32>
    %306 = arith.mulf %290, %298 : vector<8x128xf32>
    %307 = arith.addf %305, %306 : vector<8x128xf32>
    %308 = math.tanh %307 : vector<8x128xf32>
    %309 = arith.mulf %304, %308 : vector<8x128xf32>
    %310 = tpu.concatenate %309, %274 in 1 : vector<8x128xf32>, vector<8x128xf32> -> vector<8x256xf32>
    %311 = arith.truncf %310 : vector<8x256xf32> to vector<8x256xbf16>
    %c0_86 = arith.constant 0 : index
    %c0_87 = arith.constant 0 : index
    %312 = vector.load %arg5[%c0_86, %c0_87] : memref<256x512xbf16, #tpu.memory_space<vmem>>, vector<256x512xbf16>
    %cst_88 = arith.constant dense<0.000000e+00> : vector<8x512xf32>
    %313 = tpu.matmul %311, %312, %cst_88 {dimension_numbers = #tpu.dot_dimension_numbers<[1], [0], [0], [1], [0, 0, 1, 1], [], []>} : vector<8x256xbf16>, vector<256x512xbf16>, vector<8x512xf32> -> vector<8x512xf32>
    %314 = arith.addf %313, %12 : vector<8x512xf32>
    %315 = vector.extract_strided_slice %314 {offsets = [0, 0], sizes = [8, 128], strides = [1, 1]} : vector<8x512xf32> to vector<8x128xf32>
    %316 = arith.negf %315 : vector<8x128xf32>
    %317 = math.exp %316 : vector<8x128xf32>
    %cst_89 = arith.constant 1.000000e+00 : f32
    %318 = vector.broadcast %cst_89 : f32 to vector<8x128xf32>
    %319 = arith.addf %318, %317 : vector<8x128xf32>
    %320 = arith.divf %318, %319 : vector<8x128xf32>
    %321 = vector.extract_strided_slice %314 {offsets = [0, 128], sizes = [8, 128], strides = [1, 1]} : vector<8x512xf32> to vector<8x128xf32>
    %322 = arith.negf %321 : vector<8x128xf32>
    %323 = math.exp %322 : vector<8x128xf32>
    %cst_90 = arith.constant 1.000000e+00 : f32
    %324 = vector.broadcast %cst_90 : f32 to vector<8x128xf32>
    %325 = arith.addf %324, %323 : vector<8x128xf32>
    %326 = arith.divf %324, %325 : vector<8x128xf32>
    %327 = vector.extract_strided_slice %314 {offsets = [0, 256], sizes = [8, 128], strides = [1, 1]} : vector<8x512xf32> to vector<8x128xf32>
    %328 = math.tanh %327 : vector<8x128xf32>
    %329 = vector.extract_strided_slice %314 {offsets = [0, 384], sizes = [8, 128], strides = [1, 1]} : vector<8x512xf32> to vector<8x128xf32>
    %330 = arith.negf %329 : vector<8x128xf32>
    %331 = math.exp %330 : vector<8x128xf32>
    %cst_91 = arith.constant 1.000000e+00 : f32
    %332 = vector.broadcast %cst_91 : f32 to vector<8x128xf32>
    %333 = arith.addf %332, %331 : vector<8x128xf32>
    %334 = arith.divf %332, %333 : vector<8x128xf32>
    %335 = arith.mulf %326, %272 : vector<8x128xf32>
    %336 = arith.mulf %320, %328 : vector<8x128xf32>
    %337 = arith.addf %335, %336 : vector<8x128xf32>
    %338 = math.tanh %337 : vector<8x128xf32>
    %339 = arith.mulf %334, %338 : vector<8x128xf32>
    %340 = arith.index_cast %278 : i32 to index
    %c0_92 = arith.constant 0 : index
    %341 = vector.load %arg11[%340, %c0_92] : memref<64x128xf32, #tpu.memory_space<vmem>>, vector<8x128xf32>
    tpu.vector_store %arg11[%340, %c0_92], %339 {strides = array<i32>} : memref<64x128xf32, #tpu.memory_space<vmem>>, vector<8x128xf32>,
    %c5_i32 = arith.constant 5 : i32
    %c8_i32_93 = arith.constant 8 : i32
    %342 = arith.muli %c5_i32, %c8_i32_93 : i32
    %343 = tpu.assume_multiple %342, 8 : i32
    %344 = arith.index_cast %343 : i32 to index
    %c0_94 = arith.constant 0 : index
    %345 = vector.load %arg10[%344, %c0_94] : memref<64x512xf32, #tpu.memory_space<vmem>>, vector<8x512xf32>
    %346 = arith.truncf %309 : vector<8x128xf32> to vector<8x128xbf16>
    %c0_95 = arith.constant 0 : index
    %c0_96 = arith.constant 0 : index
    %347 = vector.load %arg4[%c0_95, %c0_96] : memref<128x512xbf16, #tpu.memory_space<vmem>>, vector<128x512xbf16>
    %cst_97 = arith.constant dense<0.000000e+00> : vector<8x512xf32>
    %348 = tpu.matmul %346, %347, %cst_97 {dimension_numbers = #tpu.dot_dimension_numbers<[1], [0], [0], [1], [0, 0, 1, 1], [], []>} : vector<8x128xbf16>, vector<128x512xbf16>, vector<8x512xf32> -> vector<8x512xf32>
    %349 = arith.addf %345, %348 : vector<8x512xf32>
    %350 = vector.extract_strided_slice %349 {offsets = [0, 0], sizes = [8, 128], strides = [1, 1]} : vector<8x512xf32> to vector<8x128xf32>
    %351 = arith.negf %350 : vector<8x128xf32>
    %352 = math.exp %351 : vector<8x128xf32>
    %cst_98 = arith.constant 1.000000e+00 : f32
    %353 = vector.broadcast %cst_98 : f32 to vector<8x128xf32>
    %354 = arith.addf %353, %352 : vector<8x128xf32>
    %355 = arith.divf %353, %354 : vector<8x128xf32>
    %356 = vector.extract_strided_slice %349 {offsets = [0, 128], sizes = [8, 128], strides = [1, 1]} : vector<8x512xf32> to vector<8x128xf32>
    %357 = arith.negf %356 : vector<8x128xf32>
    %358 = math.exp %357 : vector<8x128xf32>
    %cst_99 = arith.constant 1.000000e+00 : f32
    %359 = vector.broadcast %cst_99 : f32 to vector<8x128xf32>
    %360 = arith.addf %359, %358 : vector<8x128xf32>
    %361 = arith.divf %359, %360 : vector<8x128xf32>
    %362 = vector.extract_strided_slice %349 {offsets = [0, 256], sizes = [8, 128], strides = [1, 1]} : vector<8x512xf32> to vector<8x128xf32>
    %363 = math.tanh %362 : vector<8x128xf32>
    %364 = vector.extract_strided_slice %349 {offsets = [0, 384], sizes = [8, 128], strides = [1, 1]} : vector<8x512xf32> to vector<8x128xf32>
    %365 = arith.negf %364 : vector<8x128xf32>
    %366 = math.exp %365 : vector<8x128xf32>
    %cst_100 = arith.constant 1.000000e+00 : f32
    %367 = vector.broadcast %cst_100 : f32 to vector<8x128xf32>
    %368 = arith.addf %367, %366 : vector<8x128xf32>
    %369 = arith.divf %367, %368 : vector<8x128xf32>
    %370 = arith.mulf %361, %307 : vector<8x128xf32>
    %371 = arith.mulf %355, %363 : vector<8x128xf32>
    %372 = arith.addf %370, %371 : vector<8x128xf32>
    %373 = math.tanh %372 : vector<8x128xf32>
    %374 = arith.mulf %369, %373 : vector<8x128xf32>
    %375 = tpu.concatenate %374, %339 in 1 : vector<8x128xf32>, vector<8x128xf32> -> vector<8x256xf32>
    %376 = arith.truncf %375 : vector<8x256xf32> to vector<8x256xbf16>
    %c0_101 = arith.constant 0 : index
    %c0_102 = arith.constant 0 : index
    %377 = vector.load %arg5[%c0_101, %c0_102] : memref<256x512xbf16, #tpu.memory_space<vmem>>, vector<256x512xbf16>
    %cst_103 = arith.constant dense<0.000000e+00> : vector<8x512xf32>
    %378 = tpu.matmul %376, %377, %cst_103 {dimension_numbers = #tpu.dot_dimension_numbers<[1], [0], [0], [1], [0, 0, 1, 1], [], []>} : vector<8x256xbf16>, vector<256x512xbf16>, vector<8x512xf32> -> vector<8x512xf32>
    %379 = arith.addf %378, %12 : vector<8x512xf32>
    %380 = vector.extract_strided_slice %379 {offsets = [0, 0], sizes = [8, 128], strides = [1, 1]} : vector<8x512xf32> to vector<8x128xf32>
    %381 = arith.negf %380 : vector<8x128xf32>
    %382 = math.exp %381 : vector<8x128xf32>
    %cst_104 = arith.constant 1.000000e+00 : f32
    %383 = vector.broadcast %cst_104 : f32 to vector<8x128xf32>
    %384 = arith.addf %383, %382 : vector<8x128xf32>
    %385 = arith.divf %383, %384 : vector<8x128xf32>
    %386 = vector.extract_strided_slice %379 {offsets = [0, 128], sizes = [8, 128], strides = [1, 1]} : vector<8x512xf32> to vector<8x128xf32>
    %387 = arith.negf %386 : vector<8x128xf32>
    %388 = math.exp %387 : vector<8x128xf32>
    %cst_105 = arith.constant 1.000000e+00 : f32
    %389 = vector.broadcast %cst_105 : f32 to vector<8x128xf32>
    %390 = arith.addf %389, %388 : vector<8x128xf32>
    %391 = arith.divf %389, %390 : vector<8x128xf32>
    %392 = vector.extract_strided_slice %379 {offsets = [0, 256], sizes = [8, 128], strides = [1, 1]} : vector<8x512xf32> to vector<8x128xf32>
    %393 = math.tanh %392 : vector<8x128xf32>
    %394 = vector.extract_strided_slice %379 {offsets = [0, 384], sizes = [8, 128], strides = [1, 1]} : vector<8x512xf32> to vector<8x128xf32>
    %395 = arith.negf %394 : vector<8x128xf32>
    %396 = math.exp %395 : vector<8x128xf32>
    %cst_106 = arith.constant 1.000000e+00 : f32
    %397 = vector.broadcast %cst_106 : f32 to vector<8x128xf32>
    %398 = arith.addf %397, %396 : vector<8x128xf32>
    %399 = arith.divf %397, %398 : vector<8x128xf32>
    %400 = arith.mulf %391, %337 : vector<8x128xf32>
    %401 = arith.mulf %385, %393 : vector<8x128xf32>
    %402 = arith.addf %400, %401 : vector<8x128xf32>
    %403 = math.tanh %402 : vector<8x128xf32>
    %404 = arith.mulf %399, %403 : vector<8x128xf32>
    %405 = arith.index_cast %343 : i32 to index
    %c0_107 = arith.constant 0 : index
    %406 = vector.load %arg11[%405, %c0_107] : memref<64x128xf32, #tpu.memory_space<vmem>>, vector<8x128xf32>
    tpu.vector_store %arg11[%405, %c0_107], %404 {strides = array<i32>} : memref<64x128xf32, #tpu.memory_space<vmem>>, vector<8x128xf32>,
    %c6_i32 = arith.constant 6 : i32
    %c8_i32_108 = arith.constant 8 : i32
    %407 = arith.muli %c6_i32, %c8_i32_108 : i32
    %408 = tpu.assume_multiple %407, 8 : i32
    %409 = arith.index_cast %408 : i32 to index
    %c0_109 = arith.constant 0 : index
    %410 = vector.load %arg10[%409, %c0_109] : memref<64x512xf32, #tpu.memory_space<vmem>>, vector<8x512xf32>
    %411 = arith.truncf %374 : vector<8x128xf32> to vector<8x128xbf16>
    %c0_110 = arith.constant 0 : index
    %c0_111 = arith.constant 0 : index
    %412 = vector.load %arg4[%c0_110, %c0_111] : memref<128x512xbf16, #tpu.memory_space<vmem>>, vector<128x512xbf16>
    %cst_112 = arith.constant dense<0.000000e+00> : vector<8x512xf32>
    %413 = tpu.matmul %411, %412, %cst_112 {dimension_numbers = #tpu.dot_dimension_numbers<[1], [0], [0], [1], [0, 0, 1, 1], [], []>} : vector<8x128xbf16>, vector<128x512xbf16>, vector<8x512xf32> -> vector<8x512xf32>
    %414 = arith.addf %410, %413 : vector<8x512xf32>
    %415 = vector.extract_strided_slice %414 {offsets = [0, 0], sizes = [8, 128], strides = [1, 1]} : vector<8x512xf32> to vector<8x128xf32>
    %416 = arith.negf %415 : vector<8x128xf32>
    %417 = math.exp %416 : vector<8x128xf32>
    %cst_113 = arith.constant 1.000000e+00 : f32
    %418 = vector.broadcast %cst_113 : f32 to vector<8x128xf32>
    %419 = arith.addf %418, %417 : vector<8x128xf32>
    %420 = arith.divf %418, %419 : vector<8x128xf32>
    %421 = vector.extract_strided_slice %414 {offsets = [0, 128], sizes = [8, 128], strides = [1, 1]} : vector<8x512xf32> to vector<8x128xf32>
    %422 = arith.negf %421 : vector<8x128xf32>
    %423 = math.exp %422 : vector<8x128xf32>
    %cst_114 = arith.constant 1.000000e+00 : f32
    %424 = vector.broadcast %cst_114 : f32 to vector<8x128xf32>
    %425 = arith.addf %424, %423 : vector<8x128xf32>
    %426 = arith.divf %424, %425 : vector<8x128xf32>
    %427 = vector.extract_strided_slice %414 {offsets = [0, 256], sizes = [8, 128], strides = [1, 1]} : vector<8x512xf32> to vector<8x128xf32>
    %428 = math.tanh %427 : vector<8x128xf32>
    %429 = vector.extract_strided_slice %414 {offsets = [0, 384], sizes = [8, 128], strides = [1, 1]} : vector<8x512xf32> to vector<8x128xf32>
    %430 = arith.negf %429 : vector<8x128xf32>
    %431 = math.exp %430 : vector<8x128xf32>
    %cst_115 = arith.constant 1.000000e+00 : f32
    %432 = vector.broadcast %cst_115 : f32 to vector<8x128xf32>
    %433 = arith.addf %432, %431 : vector<8x128xf32>
    %434 = arith.divf %432, %433 : vector<8x128xf32>
    %435 = arith.mulf %426, %372 : vector<8x128xf32>
    %436 = arith.mulf %420, %428 : vector<8x128xf32>
    %437 = arith.addf %435, %436 : vector<8x128xf32>
    %438 = math.tanh %437 : vector<8x128xf32>
    %439 = arith.mulf %434, %438 : vector<8x128xf32>
    %440 = tpu.concatenate %439, %404 in 1 : vector<8x128xf32>, vector<8x128xf32> -> vector<8x256xf32>
    %441 = arith.truncf %440 : vector<8x256xf32> to vector<8x256xbf16>
    %c0_116 = arith.constant 0 : index
    %c0_117 = arith.constant 0 : index
    %442 = vector.load %arg5[%c0_116, %c0_117] : memref<256x512xbf16, #tpu.memory_space<vmem>>, vector<256x512xbf16>
    %cst_118 = arith.constant dense<0.000000e+00> : vector<8x512xf32>
    %443 = tpu.matmul %441, %442, %cst_118 {dimension_numbers = #tpu.dot_dimension_numbers<[1], [0], [0], [1], [0, 0, 1, 1], [], []>} : vector<8x256xbf16>, vector<256x512xbf16>, vector<8x512xf32> -> vector<8x512xf32>
    %444 = arith.addf %443, %12 : vector<8x512xf32>
    %445 = vector.extract_strided_slice %444 {offsets = [0, 0], sizes = [8, 128], strides = [1, 1]} : vector<8x512xf32> to vector<8x128xf32>
    %446 = arith.negf %445 : vector<8x128xf32>
    %447 = math.exp %446 : vector<8x128xf32>
    %cst_119 = arith.constant 1.000000e+00 : f32
    %448 = vector.broadcast %cst_119 : f32 to vector<8x128xf32>
    %449 = arith.addf %448, %447 : vector<8x128xf32>
    %450 = arith.divf %448, %449 : vector<8x128xf32>
    %451 = vector.extract_strided_slice %444 {offsets = [0, 128], sizes = [8, 128], strides = [1, 1]} : vector<8x512xf32> to vector<8x128xf32>
    %452 = arith.negf %451 : vector<8x128xf32>
    %453 = math.exp %452 : vector<8x128xf32>
    %cst_120 = arith.constant 1.000000e+00 : f32
    %454 = vector.broadcast %cst_120 : f32 to vector<8x128xf32>
    %455 = arith.addf %454, %453 : vector<8x128xf32>
    %456 = arith.divf %454, %455 : vector<8x128xf32>
    %457 = vector.extract_strided_slice %444 {offsets = [0, 256], sizes = [8, 128], strides = [1, 1]} : vector<8x512xf32> to vector<8x128xf32>
    %458 = math.tanh %457 : vector<8x128xf32>
    %459 = vector.extract_strided_slice %444 {offsets = [0, 384], sizes = [8, 128], strides = [1, 1]} : vector<8x512xf32> to vector<8x128xf32>
    %460 = arith.negf %459 : vector<8x128xf32>
    %461 = math.exp %460 : vector<8x128xf32>
    %cst_121 = arith.constant 1.000000e+00 : f32
    %462 = vector.broadcast %cst_121 : f32 to vector<8x128xf32>
    %463 = arith.addf %462, %461 : vector<8x128xf32>
    %464 = arith.divf %462, %463 : vector<8x128xf32>
    %465 = arith.mulf %456, %402 : vector<8x128xf32>
    %466 = arith.mulf %450, %458 : vector<8x128xf32>
    %467 = arith.addf %465, %466 : vector<8x128xf32>
    %468 = math.tanh %467 : vector<8x128xf32>
    %469 = arith.mulf %464, %468 : vector<8x128xf32>
    %470 = arith.index_cast %408 : i32 to index
    %c0_122 = arith.constant 0 : index
    %471 = vector.load %arg11[%470, %c0_122] : memref<64x128xf32, #tpu.memory_space<vmem>>, vector<8x128xf32>
    tpu.vector_store %arg11[%470, %c0_122], %469 {strides = array<i32>} : memref<64x128xf32, #tpu.memory_space<vmem>>, vector<8x128xf32>,
    %c7_i32 = arith.constant 7 : i32
    %c8_i32_123 = arith.constant 8 : i32
    %472 = arith.muli %c7_i32, %c8_i32_123 : i32
    %473 = tpu.assume_multiple %472, 8 : i32
    %474 = arith.index_cast %473 : i32 to index
    %c0_124 = arith.constant 0 : index
    %475 = vector.load %arg10[%474, %c0_124] : memref<64x512xf32, #tpu.memory_space<vmem>>, vector<8x512xf32>
    %476 = arith.truncf %439 : vector<8x128xf32> to vector<8x128xbf16>
    %c0_125 = arith.constant 0 : index
    %c0_126 = arith.constant 0 : index
    %477 = vector.load %arg4[%c0_125, %c0_126] : memref<128x512xbf16, #tpu.memory_space<vmem>>, vector<128x512xbf16>
    %cst_127 = arith.constant dense<0.000000e+00> : vector<8x512xf32>
    %478 = tpu.matmul %476, %477, %cst_127 {dimension_numbers = #tpu.dot_dimension_numbers<[1], [0], [0], [1], [0, 0, 1, 1], [], []>} : vector<8x128xbf16>, vector<128x512xbf16>, vector<8x512xf32> -> vector<8x512xf32>
    %479 = arith.addf %475, %478 : vector<8x512xf32>
    %480 = vector.extract_strided_slice %479 {offsets = [0, 0], sizes = [8, 128], strides = [1, 1]} : vector<8x512xf32> to vector<8x128xf32>
    %481 = arith.negf %480 : vector<8x128xf32>
    %482 = math.exp %481 : vector<8x128xf32>
    %cst_128 = arith.constant 1.000000e+00 : f32
    %483 = vector.broadcast %cst_128 : f32 to vector<8x128xf32>
    %484 = arith.addf %483, %482 : vector<8x128xf32>
    %485 = arith.divf %483, %484 : vector<8x128xf32>
    %486 = vector.extract_strided_slice %479 {offsets = [0, 128], sizes = [8, 128], strides = [1, 1]} : vector<8x512xf32> to vector<8x128xf32>
    %487 = arith.negf %486 : vector<8x128xf32>
    %488 = math.exp %487 : vector<8x128xf32>
    %cst_129 = arith.constant 1.000000e+00 : f32
    %489 = vector.broadcast %cst_129 : f32 to vector<8x128xf32>
    %490 = arith.addf %489, %488 : vector<8x128xf32>
    %491 = arith.divf %489, %490 : vector<8x128xf32>
    %492 = vector.extract_strided_slice %479 {offsets = [0, 256], sizes = [8, 128], strides = [1, 1]} : vector<8x512xf32> to vector<8x128xf32>
    %493 = math.tanh %492 : vector<8x128xf32>
    %494 = vector.extract_strided_slice %479 {offsets = [0, 384], sizes = [8, 128], strides = [1, 1]} : vector<8x512xf32> to vector<8x128xf32>
    %495 = arith.negf %494 : vector<8x128xf32>
    %496 = math.exp %495 : vector<8x128xf32>
    %cst_130 = arith.constant 1.000000e+00 : f32
    %497 = vector.broadcast %cst_130 : f32 to vector<8x128xf32>
    %498 = arith.addf %497, %496 : vector<8x128xf32>
    %499 = arith.divf %497, %498 : vector<8x128xf32>
    %500 = arith.mulf %491, %437 : vector<8x128xf32>
    %501 = arith.mulf %485, %493 : vector<8x128xf32>
    %502 = arith.addf %500, %501 : vector<8x128xf32>
    %503 = math.tanh %502 : vector<8x128xf32>
    %504 = arith.mulf %499, %503 : vector<8x128xf32>
    %505 = tpu.concatenate %504, %469 in 1 : vector<8x128xf32>, vector<8x128xf32> -> vector<8x256xf32>
    %506 = arith.truncf %505 : vector<8x256xf32> to vector<8x256xbf16>
    %c0_131 = arith.constant 0 : index
    %c0_132 = arith.constant 0 : index
    %507 = vector.load %arg5[%c0_131, %c0_132] : memref<256x512xbf16, #tpu.memory_space<vmem>>, vector<256x512xbf16>
    %cst_133 = arith.constant dense<0.000000e+00> : vector<8x512xf32>
    %508 = tpu.matmul %506, %507, %cst_133 {dimension_numbers = #tpu.dot_dimension_numbers<[1], [0], [0], [1], [0, 0, 1, 1], [], []>} : vector<8x256xbf16>, vector<256x512xbf16>, vector<8x512xf32> -> vector<8x512xf32>
    %509 = arith.addf %508, %12 : vector<8x512xf32>
    %510 = vector.extract_strided_slice %509 {offsets = [0, 0], sizes = [8, 128], strides = [1, 1]} : vector<8x512xf32> to vector<8x128xf32>
    %511 = arith.negf %510 : vector<8x128xf32>
    %512 = math.exp %511 : vector<8x128xf32>
    %cst_134 = arith.constant 1.000000e+00 : f32
    %513 = vector.broadcast %cst_134 : f32 to vector<8x128xf32>
    %514 = arith.addf %513, %512 : vector<8x128xf32>
    %515 = arith.divf %513, %514 : vector<8x128xf32>
    %516 = vector.extract_strided_slice %509 {offsets = [0, 128], sizes = [8, 128], strides = [1, 1]} : vector<8x512xf32> to vector<8x128xf32>
    %517 = arith.negf %516 : vector<8x128xf32>
    %518 = math.exp %517 : vector<8x128xf32>
    %cst_135 = arith.constant 1.000000e+00 : f32
    %519 = vector.broadcast %cst_135 : f32 to vector<8x128xf32>
    %520 = arith.addf %519, %518 : vector<8x128xf32>
    %521 = arith.divf %519, %520 : vector<8x128xf32>
    %522 = vector.extract_strided_slice %509 {offsets = [0, 256], sizes = [8, 128], strides = [1, 1]} : vector<8x512xf32> to vector<8x128xf32>
    %523 = math.tanh %522 : vector<8x128xf32>
    %524 = vector.extract_strided_slice %509 {offsets = [0, 384], sizes = [8, 128], strides = [1, 1]} : vector<8x512xf32> to vector<8x128xf32>
    %525 = arith.negf %524 : vector<8x128xf32>
    %526 = math.exp %525 : vector<8x128xf32>
    %cst_136 = arith.constant 1.000000e+00 : f32
    %527 = vector.broadcast %cst_136 : f32 to vector<8x128xf32>
    %528 = arith.addf %527, %526 : vector<8x128xf32>
    %529 = arith.divf %527, %528 : vector<8x128xf32>
    %530 = arith.mulf %521, %467 : vector<8x128xf32>
    %531 = arith.mulf %515, %523 : vector<8x128xf32>
    %532 = arith.addf %530, %531 : vector<8x128xf32>
    %533 = math.tanh %532 : vector<8x128xf32>
    %534 = arith.mulf %529, %533 : vector<8x128xf32>
    %535 = arith.index_cast %473 : i32 to index
    %c0_137 = arith.constant 0 : index
    %536 = vector.load %arg11[%535, %c0_137] : memref<64x128xf32, #tpu.memory_space<vmem>>, vector<8x128xf32>
    tpu.vector_store %arg11[%535, %c0_137], %534 {strides = array<i32>} : memref<64x128xf32, #tpu.memory_space<vmem>>, vector<8x128xf32>,
    %c8_i32_138 = arith.constant 8 : i32
    %c0_139 = arith.constant 0 : index
    %c0_140 = arith.constant 0 : index
    %537 = vector.load %arg12[%c0_139, %c0_140] : memref<8x128xf32, #tpu.memory_space<vmem>>, vector<8x128xf32>
    tpu.vector_store %arg12[%c0_139, %c0_140], %504 {strides = array<i32>} : memref<8x128xf32, #tpu.memory_space<vmem>>, vector<8x128xf32>,
    %c0_141 = arith.constant 0 : index
    %c0_142 = arith.constant 0 : index
    %538 = vector.load %arg13[%c0_141, %c0_142] : memref<8x128xf32, #tpu.memory_space<vmem>>, vector<8x128xf32>
    tpu.vector_store %arg13[%c0_141, %c0_142], %502 {strides = array<i32>} : memref<8x128xf32, #tpu.memory_space<vmem>>, vector<8x128xf32>,
    %c0_143 = arith.constant 0 : index
    %c0_144 = arith.constant 0 : index
    %539 = vector.load %arg14[%c0_143, %c0_144] : memref<8x128xf32, #tpu.memory_space<vmem>>, vector<8x128xf32>
    tpu.vector_store %arg14[%c0_143, %c0_144], %534 {strides = array<i32>} : memref<8x128xf32, #tpu.memory_space<vmem>>, vector<8x128xf32>,
    %c0_145 = arith.constant 0 : index
    %c0_146 = arith.constant 0 : index
    %540 = vector.load %arg15[%c0_145, %c0_146] : memref<8x128xf32, #tpu.memory_space<vmem>>, vector<8x128xf32>
    tpu.vector_store %arg15[%c0_145, %c0_146], %532 {strides = array<i32>} : memref<8x128xf32, #tpu.memory_space<vmem>>, vector<8x128xf32>,
    %c0_147 = arith.constant 0 : index
    %c0_148 = arith.constant 0 : index
    %541 = vector.load %arg11[%c0_147, %c0_148] : memref<64x128xf32, #tpu.memory_space<vmem>>, vector<64x128xf32>
    %542 = arith.truncf %541 : vector<64x128xf32> to vector<64x128xbf16>
    %c0_149 = arith.constant 0 : index
    %c0_150 = arith.constant 0 : index
    %543 = vector.load %arg7[%c0_149, %c0_150] : memref<128x128xbf16, #tpu.memory_space<vmem>>, vector<128x128xbf16>
    %cst_151 = arith.constant dense<0.000000e+00> : vector<64x128xf32>
    %544 = tpu.matmul %542, %543, %cst_151 {dimension_numbers = #tpu.dot_dimension_numbers<[1], [0], [0], [1], [0, 0, 1, 1], [], []>} : vector<64x128xbf16>, vector<128x128xbf16>, vector<64x128xf32> -> vector<64x128xf32>
    %c0_152 = arith.constant 0 : index
    %c0_153 = arith.constant 0 : index
    %545 = vector.load %arg8[%c0_152, %c0_153] : memref<1x128xf32, #tpu.memory_space<vmem>>, vector<1x128xf32>
    %546 = vector.broadcast %545 : vector<1x128xf32> to vector<64x128xf32>
    %547 = arith.addf %544, %546 : vector<64x128xf32>
    %c0_154 = arith.constant 0 : index
    %c0_155 = arith.constant 0 : index
    %548 = vector.load %arg9[%c0_154, %c0_155] : memref<64x128xf32, #tpu.memory_space<vmem>>, vector<64x128xf32>
    tpu.vector_store %arg9[%c0_154, %c0_155], %547 {strides = array<i32>} : memref<64x128xf32, #tpu.memory_space<vmem>>, vector<64x128xf32>,
    return
  }
  func.func @transform_0(%arg0: i32) -> (i32, i32) {
    %c0_i32 = arith.constant 0 : i32
    %c0_i32_0 = arith.constant 0 : i32
    return %arg0, %c0_i32 : i32, i32
  }
  func.func @transform_1(%arg0: i32) -> (i32, i32) {
    %c0_i32 = arith.constant 0 : i32
    %c0_i32_0 = arith.constant 0 : i32
    %c0_i32_1 = arith.constant 0 : i32
    return %c0_i32, %c0_i32_0 : i32, i32
  }
  func.func @transform_2(%arg0: i32) -> (i32, i32) {
    %c0_i32 = arith.constant 0 : i32
    %c0_i32_0 = arith.constant 0 : i32
    %c0_i32_1 = arith.constant 0 : i32
    return %c0_i32, %c0_i32_0 : i32, i32
  }
  func.func @transform_3(%arg0: i32) -> (i32, i32) {
    %c0_i32 = arith.constant 0 : i32
    %c0_i32_0 = arith.constant 0 : i32
    %c0_i32_1 = arith.constant 0 : i32
    return %c0_i32, %c0_i32_0 : i32, i32
  }
  func.func @transform_4(%arg0: i32) -> (i32, i32) {
    %c0_i32 = arith.constant 0 : i32
    %c0_i32_0 = arith.constant 0 : i32
    %c0_i32_1 = arith.constant 0 : i32
    return %c0_i32, %c0_i32_0 : i32, i32
  }
  func.func @transform_5(%arg0: i32) -> (i32, i32) {
    %c0_i32 = arith.constant 0 : i32
    %c0_i32_0 = arith.constant 0 : i32
    %c0_i32_1 = arith.constant 0 : i32
    return %c0_i32, %c0_i32_0 : i32, i32
  }
  func.func @transform_6(%arg0: i32) -> (i32, i32) {
    %c0_i32 = arith.constant 0 : i32
    %c0_i32_0 = arith.constant 0 : i32
    %c0_i32_1 = arith.constant 0 : i32
    return %c0_i32, %c0_i32_0 : i32, i32
  }
  func.func @transform_7(%arg0: i32) -> (i32, i32) {
    %c0_i32 = arith.constant 0 : i32
    %c0_i32_0 = arith.constant 0 : i32
    %c0_i32_1 = arith.constant 0 : i32
    return %c0_i32, %c0_i32_0 : i32, i32
  }
  func.func @transform_8(%arg0: i32) -> (i32, i32) {
    %c0_i32 = arith.constant 0 : i32
    %c0_i32_0 = arith.constant 0 : i32
    return %arg0, %c0_i32 : i32, i32
  }
}

</mosaic_0001>

<llo_original>
// kernel: tpu_custom_call.1
$region0: #{tpu_custom_call.1}
  #allocation0 [shape = 'u32[]', space=smem, size = 0x4, offset = 0x4, fixed_abs, tag = 'smem constant byte address 0x4 - core index']
  #allocation1 [shape = 'u32[144,128]{1,0:T(1,128)}', space=vmem, size = 0x12000, scoped, tag = 'internal scratch']
  #allocation2 [shape = 'f32[64,512]{1,0:T(8,128)}', space=vmem, size = 0x20000, scoped, tag = 'scratch operand']
  #allocation3 [shape = 'f32[64,128]{1,0:T(8,128)}', space=vmem, size = 0x8000, scoped, tag = 'scratch operand']
  #allocation4 [shape = 'f32[8,128]{1,0:T(8,128)}', space=vmem, size = 0x1000, scoped, tag = 'scratch operand']
  #allocation5 [shape = 'f32[8,128]{1,0:T(8,128)}', space=vmem, size = 0x1000, scoped, tag = 'scratch operand']
  #allocation6 [shape = 'f32[8,128]{1,0:T(8,128)}', space=vmem, size = 0x1000, scoped, tag = 'scratch operand']
  #allocation7 [shape = 'f32[8,128]{1,0:T(8,128)}', space=vmem, size = 0x1000, scoped, tag = 'scratch operand']
  %s0 = inlined_call_operand.hbm [shape: bf16[64,128], index: 0, kind: input, shape index: {}]
  %s1 = inlined_call_operand.hbm [shape: bf16[128,512], index: 1, kind: input, shape index: {}]
  %s2 = inlined_call_operand.vmem [shape: f32[1,512], index: 2, kind: input, shape index: {}]
  %s3 = inlined_call_operand.hbm [shape: bf16[128,512], index: 3, kind: input, shape index: {}]
  %s4 = inlined_call_operand.hbm [shape: bf16[256,512], index: 4, kind: input, shape index: {}]
  %s5 = inlined_call_operand.vmem [shape: f32[1,512], index: 5, kind: input, shape index: {}]
  %s6 = inlined_call_operand.hbm [shape: bf16[128,128], index: 6, kind: input, shape index: {}]
  %s7 = inlined_call_operand.vmem [shape: f32[1,128], index: 7, kind: input, shape index: {}]
  %s8 = inlined_call_operand.hbm [shape: f32[64,128], index: 8, kind: output, shape index: {}]
  %s9 = sld [smem:[#allocation0]]
  $region66: #{tpu_custom_call.1} parent=0
    _
  %s11 = ssub.s32 1, %s9
  %s12 = scalar_select 0, %s11, %s9
  $region1: #{tpu_custom_call.1} parent=0
    #allocation8 [shape = 'u8[16384]{0}', space=vmem, size = 0x4000, scoped, tag = 'input window, operand 0, single buffered']
    #allocation9 [shape = 's32[1]{0}', space=sflag, size = 0x4, scoped, tag = 'scoped memory for tpu_custom_call.1']
    #allocation10 [shape = 's32[1]{0}', space=sflag, size = 0x4, scoped, tag = 'scoped memory for tpu_custom_call.1']
    #allocation11 [shape = 'u8[131072]{0}', space=vmem, size = 0x20000, scoped, tag = 'input window, operand 1, single buffered']
    #allocation12 [shape = 's32[1]{0}', space=sflag, size = 0x4, scoped, tag = 'scoped memory for tpu_custom_call.1']
    #allocation13 [shape = 'u8[131072]{0}', space=vmem, size = 0x20000, scoped, tag = 'input window, operand 3, single buffered']
    #allocation14 [shape = 'u8[262144]{0}', space=vmem, size = 0x40000, scoped, tag = 'input window, operand 4, single buffered']
    #allocation15 [shape = 's32[1]{0}', space=sflag, size = 0x4, scoped, tag = 'scoped memory for tpu_custom_call.1']
    #allocation16 [shape = 'u8[32768]{0}', space=vmem, size = 0x8000, scoped, tag = 'input window, operand 6, single buffered']
    #allocation17 [shape = 'u8[32768]{0}', space=vmem, size = 0x8000, scoped, tag = 'output window, operand 0, single buffered']
    %13 = vsyncpa [#allocation9], 0
    %14 = vsyncpa [#allocation12], 0
    %15 = vsyncpa [#allocation15], 0
    %16 = vsyncpa [#allocation10], 0
    // Predicated region
    $region2: #{tpu_custom_call.1} parent=1 // pred_check
      _
    $region3: #{tpu_custom_call.1} parent=1 // pred_check_branch
      %18 = sbr.rel (0) target = $region5
    $region4: #{tpu_custom_call.1} parent=1 // pred_region
      %s20 = ssub.s32 512, 512
      %21 = vsyncadd [#allocation9], %s20
      %s22 = sshll.u32 [#allocation8], 4
      %s23 = int_to_ptr.vmem [resolvable:$true] %s22
      %28 = dma.hbm_to_vmem [thread:$0]  %s0, 512, %s23, [#allocation9], 64, 64, 4
    $region5: #{tpu_custom_call.1} parent=1 // pred_fallthru
      _
    // Predicated region
    $region6: #{tpu_custom_call.1} parent=1 // pred_check
      _
    $region7: #{tpu_custom_call.1} parent=1 // pred_check_branch
      %30 = sbr.rel (0) target = $region9
    $region8: #{tpu_custom_call.1} parent=1 // pred_region
      %s32 = ssub.s32 4096, 4096
      %33 = vsyncadd [#allocation12], %s32
      %s34 = sshll.u32 [#allocation11], 4
      %s35 = int_to_ptr.vmem [resolvable:$true] %s34
      %40 = dma.hbm_to_vmem [thread:$0]  %s1, 4096, %s35, [#allocation12], 256, 256, 16
    $region9: #{tpu_custom_call.1} parent=1 // pred_fallthru
      _
    // Predicated region
    $region10: #{tpu_custom_call.1} parent=1 // pred_check
      _
    $region11: #{tpu_custom_call.1} parent=1 // pred_check_branch
      %42 = sbr.rel (0) target = $region13
    $region12: #{tpu_custom_call.1} parent=1 // pred_region
      _
    $region13: #{tpu_custom_call.1} parent=1 // pred_fallthru
      _
    // Predicated region
    $region14: #{tpu_custom_call.1} parent=1 // pred_check
      _
    $region15: #{tpu_custom_call.1} parent=1 // pred_check_branch
      %44 = sbr.rel (0) target = $region17
    $region16: #{tpu_custom_call.1} parent=1 // pred_region
      %s46 = ssub.s32 4096, 4096
      %47 = vsyncadd [#allocation12], %s46
      %s48 = sshll.u32 [#allocation13], 4
      %s49 = int_to_ptr.vmem [resolvable:$true] %s48
      %54 = dma.hbm_to_vmem [thread:$0]  %s3, 4096, %s49, [#allocation12], 256, 256, 16
    $region17: #{tpu_custom_call.1} parent=1 // pred_fallthru
      _
    // Predicated region
    $region18: #{tpu_custom_call.1} parent=1 // pred_check
      _
    $region19: #{tpu_custom_call.1} parent=1 // pred_check_branch
      %56 = sbr.rel (0) target = $region21
    $region20: #{tpu_custom_call.1} parent=1 // pred_region
      %s58 = ssub.s32 8192, 8192
      %59 = vsyncadd [#allocation15], %s58
      %s60 = sshll.u32 [#allocation14], 4
      %s61 = int_to_ptr.vmem [resolvable:$true] %s60
      %66 = dma.hbm_to_vmem [thread:$0]  %s4, 8192, %s61, [#allocation15], 256, 256, 16
    $region21: #{tpu_custom_call.1} parent=1 // pred_fallthru
      _
    // Predicated region
    $region22: #{tpu_custom_call.1} parent=1 // pred_check
      _
    $region23: #{tpu_custom_call.1} parent=1 // pred_check_branch
      %68 = sbr.rel (0) target = $region25
    $region24: #{tpu_custom_call.1} parent=1 // pred_region
      _
    $region25: #{tpu_custom_call.1} parent=1 // pred_fallthru
      _
    // Predicated region
    $region26: #{tpu_custom_call.1} parent=1 // pred_check
      _
    $region27: #{tpu_custom_call.1} parent=1 // pred_check_branch
      %70 = sbr.rel (0) target = $region29
    $region28: #{tpu_custom_call.1} parent=1 // pred_region
      %s72 = ssub.s32 1024, 1024
      %73 = vsyncadd [#allocation15], %s72
      %s74 = sshll.u32 [#allocation16], 4
      %s75 = int_to_ptr.vmem [resolvable:$true] %s74
      %80 = dma.hbm_to_vmem [thread:$0]  %s6, 1024, %s75, [#allocation15], 64, 64, 4
    $region29: #{tpu_custom_call.1} parent=1 // pred_fallthru
      _
    // Predicated region
    $region30: #{tpu_custom_call.1} parent=1 // pred_check
      _
    $region31: #{tpu_custom_call.1} parent=1 // pred_check_branch
      %82 = sbr.rel (0) target = $region33
    $region32: #{tpu_custom_call.1} parent=1 // pred_region
      _
    $region33: #{tpu_custom_call.1} parent=1 // pred_fallthru
      _
    // Predicated region
    $region34: #{tpu_custom_call.1} parent=1 // pred_check
      _
    $region35: #{tpu_custom_call.1} parent=1 // pred_check_branch
      %84 = sbr.rel (0) target = $region37
    $region36: #{tpu_custom_call.1} parent=1 // pred_region
      %85 = dma.done [#allocation9], 512
    $region37: #{tpu_custom_call.1} parent=1 // pred_fallthru
      _
    // Predicated region
    $region38: #{tpu_custom_call.1} parent=1 // pred_check
      _
    $region39: #{tpu_custom_call.1} parent=1 // pred_check_branch
      %87 = sbr.rel (0) target = $region41
    $region40: #{tpu_custom_call.1} parent=1 // pred_region
      %88 = dma.done [#allocation12], 4096
    $region41: #{tpu_custom_call.1} parent=1 // pred_fallthru
      _
    // Predicated region
    $region42: #{tpu_custom_call.1} parent=1 // pred_check
      _
    $region43: #{tpu_custom_call.1} parent=1 // pred_check_branch
      %90 = sbr.rel (0) target = $region45
    $region44: #{tpu_custom_call.1} parent=1 // pred_region
      %91 = dma.done [#allocation12], 4096
    $region45: #{tpu_custom_call.1} parent=1 // pred_fallthru
      _
    // Predicated region
    $region46: #{tpu_custom_call.1} parent=1 // pred_check
      _
    $region47: #{tpu_custom_call.1} parent=1 // pred_check_branch
      %93 = sbr.rel (0) target = $region49
    $region48: #{tpu_custom_call.1} parent=1 // pred_region
      %94 = dma.done [#allocation15], 8192
    $region49: #{tpu_custom_call.1} parent=1 // pred_fallthru
      _
    // Predicated region
    $region50: #{tpu_custom_call.1} parent=1 // pred_check
      _
    $region51: #{tpu_custom_call.1} parent=1 // pred_check_branch
      %96 = sbr.rel (0) target = $region53
    $region52: #{tpu_custom_call.1} parent=1 // pred_region
      %97 = dma.done [#allocation15], 1024
    $region53: #{tpu_custom_call.1} parent=1 // pred_fallthru
      _
    %v99 = vld [vmem:[#allocation8] sm:$0xf]
    %v100 = vld [vmem:[#allocation8 + $0x4] sm:$0xf]
    %v101 = vld [vmem:[#allocation8 + $0x8] sm:$0xf]
    %v102 = vld [vmem:[#allocation8 + $0xc] sm:$0xf]
    %v103 = vld [vmem:[#allocation8 + $0x10] sm:$0xf]
    %v104 = vld [vmem:[#allocation8 + $0x14] sm:$0xf]
    %v105 = vld [vmem:[#allocation8 + $0x18] sm:$0xf]
    %v106 = vld [vmem:[#allocation8 + $0x1c] sm:$0xf]
    %v107 = vld [vmem:[#allocation11] sm:$0xff]
    %v108 = vld [vmem:[#allocation11 + $0x8] sm:$0xff]
    %v109 = vld [vmem:[#allocation11 + $0x10] sm:$0xff]
    %v110 = vld [vmem:[#allocation11 + $0x18] sm:$0xff]
    %v111 = vld [vmem:[#allocation11 + $0x20] sm:$0xff]
    %v112 = vld [vmem:[#allocation11 + $0x28] sm:$0xff]
    %v113 = vld [vmem:[#allocation11 + $0x30] sm:$0xff]
    %v114 = vld [vmem:[#allocation11 + $0x38] sm:$0xff]
    %v115 = vld [vmem:[#allocation11 + $0x40] sm:$0xff]
    %v116 = vld [vmem:[#allocation11 + $0x48] sm:$0xff]
    %v117 = vld [vmem:[#allocation11 + $0x50] sm:$0xff]
    %v118 = vld [vmem:[#allocation11 + $0x58] sm:$0xff]
    %v119 = vld [vmem:[#allocation11 + $0x60] sm:$0xff]
    %v120 = vld [vmem:[#allocation11 + $0x68] sm:$0xff]
    %v121 = vld [vmem:[#allocation11 + $0x70] sm:$0xff]
    %v122 = vld [vmem:[#allocation11 + $0x78] sm:$0xff]
    %v123 = vld [vmem:[#allocation11 + $0x80] sm:$0xff]
    %v124 = vld [vmem:[#allocation11 + $0x88] sm:$0xff]
    %v125 = vld [vmem:[#allocation11 + $0x90] sm:$0xff]
    %v126 = vld [vmem:[#allocation11 + $0x98] sm:$0xff]
    %v127 = vld [vmem:[#allocation11 + $0xa0] sm:$0xff]
    %v128 = vld [vmem:[#allocation11 + $0xa8] sm:$0xff]
    %v129 = vld [vmem:[#allocation11 + $0xb0] sm:$0xff]
    %v130 = vld [vmem:[#allocation11 + $0xb8] sm:$0xff]
    %v131 = vld [vmem:[#allocation11 + $0xc0] sm:$0xff]
    %v132 = vld [vmem:[#allocation11 + $0xc8] sm:$0xff]
    %v133 = vld [vmem:[#allocation11 + $0xd0] sm:$0xff]
    %v134 = vld [vmem:[#allocation11 + $0xd8] sm:$0xff]
    %v135 = vld [vmem:[#allocation11 + $0xe0] sm:$0xff]
    %v136 = vld [vmem:[#allocation11 + $0xe8] sm:$0xff]
    %v137 = vld [vmem:[#allocation11 + $0xf0] sm:$0xff]
    %v138 = vld [vmem:[#allocation11 + $0xf8] sm:$0xff]
    %v139 = vld [vmem:[%s2] sm:$0xf]
    %v141 = vlaneseq
    %v142 = vshrl.u32 %v141, 7
    %v143 = vsub.s32 0, %v142
    %v144 = vrot.slane %v139, %v143
    %v145 = vlaneseq
    %v146 = vshrl.u32 %v145, 7
    %v147 = vsub.s32 1, %v146
    %v148 = vrot.slane %v139, %v147
    %v149 = vlaneseq
    %v150 = vshrl.u32 %v149, 7
    %v151 = vsub.s32 2, %v150
    %v152 = vrot.slane %v139, %v151
    %v153 = vlaneseq
    %v154 = vshrl.u32 %v153, 7
    %v155 = vsub.s32 3, %v154
    %v156 = vrot.slane %v139, %v155
    %v169 = vunpack.c.l.b16 %v99
    %v170 = vunpack.c.l.b16 %v100
    %v171 = vunpack.c.l.b16 %v101
    %v172 = vunpack.c.l.b16 %v102
    %v173 = vunpack.c.l.b16 %v103
    %v174 = vunpack.c.l.b16 %v104
    %v175 = vunpack.c.l.b16 %v105
    %v176 = vunpack.c.l.b16 %v106
    %v177 = vpack.c.b16 %v170, %v169
    %v178 = vpack.c.b16 %v172, %v171
    %v179 = vpack.c.b16 %v174, %v173
    %v180 = vpack.c.b16 %v176, %v175
    %v217 = vunpack.c.l.b16 %v107
    %v218 = vunpack.c.h.b16 %v107
    %v219 = vunpack.c.l.b16 %v108
    %v220 = vunpack.c.h.b16 %v108
    %v221 = vunpack.c.l.b16 %v109
    %v222 = vunpack.c.h.b16 %v109
    %v223 = vunpack.c.l.b16 %v110
    %v224 = vunpack.c.h.b16 %v110
    %v225 = vunpack.c.l.b16 %v111
    %v226 = vunpack.c.h.b16 %v111
    %v227 = vunpack.c.l.b16 %v112
    %v228 = vunpack.c.h.b16 %v112
    %v229 = vunpack.c.l.b16 %v113
    %v230 = vunpack.c.h.b16 %v113
    %v231 = vunpack.c.l.b16 %v114
    %v232 = vunpack.c.h.b16 %v114
    %v233 = vunpack.c.l.b16 %v115
    %v234 = vunpack.c.h.b16 %v115
    %v235 = vunpack.c.l.b16 %v116
    %v236 = vunpack.c.h.b16 %v116
    %v237 = vunpack.c.l.b16 %v117
    %v238 = vunpack.c.h.b16 %v117
    %v239 = vunpack.c.l.b16 %v118
    %v240 = vunpack.c.h.b16 %v118
    %v241 = vunpack.c.l.b16 %v119
    %v242 = vunpack.c.h.b16 %v119
    %v243 = vunpack.c.l.b16 %v120
    %v244 = vunpack.c.h.b16 %v120
    %v245 = vunpack.c.l.b16 %v121
    %v246 = vunpack.c.h.b16 %v121
    %v247 = vunpack.c.l.b16 %v122
    %v248 = vunpack.c.h.b16 %v122
    %v249 = vunpack.c.l.b16 %v123
    %v250 = vunpack.c.h.b16 %v123
    %v251 = vunpack.c.l.b16 %v124
    %v252 = vunpack.c.h.b16 %v124
    %v253 = vunpack.c.l.b16 %v125
    %v254 = vunpack.c.h.b16 %v125
    %v255 = vunpack.c.l.b16 %v126
    %v256 = vunpack.c.h.b16 %v126
    %v257 = vunpack.c.l.b16 %v127
    %v258 = vunpack.c.h.b16 %v127
    %v259 = vunpack.c.l.b16 %v128
    %v260 = vunpack.c.h.b16 %v128
    %v261 = vunpack.c.l.b16 %v129
    %v262 = vunpack.c.h.b16 %v129
    %v263 = vunpack.c.l.b16 %v130
    %v264 = vunpack.c.h.b16 %v130
    %v265 = vunpack.c.l.b16 %v131
    %v266 = vunpack.c.h.b16 %v131
    %v267 = vunpack.c.l.b16 %v132
    %v268 = vunpack.c.h.b16 %v132
    %v269 = vunpack.c.l.b16 %v133
    %v270 = vunpack.c.h.b16 %v133
    %v271 = vunpack.c.l.b16 %v134
    %v272 = vunpack.c.h.b16 %v134
    %v273 = vunpack.c.l.b16 %v135
    %v274 = vunpack.c.h.b16 %v135
    %v275 = vunpack.c.l.b16 %v136
    %v276 = vunpack.c.h.b16 %v136
    %v277 = vunpack.c.l.b16 %v137
    %v278 = vunpack.c.h.b16 %v137
    %v279 = vunpack.c.l.b16 %v138
    %v280 = vunpack.c.h.b16 %v138
    %v281 = vpack.c.b16 %v221, %v217
    %v282 = vpack.c.b16 %v222, %v218
    %v283 = vpack.c.b16 %v223, %v219
    %v284 = vpack.c.b16 %v224, %v220
    %v285 = vpack.c.b16 %v229, %v225
    %v286 = vpack.c.b16 %v230, %v226
    %v287 = vpack.c.b16 %v231, %v227
    %v288 = vpack.c.b16 %v232, %v228
    %v289 = vpack.c.b16 %v237, %v233
    %v290 = vpack.c.b16 %v238, %v234
    %v291 = vpack.c.b16 %v239, %v235
    %v292 = vpack.c.b16 %v240, %v236
    %v293 = vpack.c.b16 %v245, %v241
    %v294 = vpack.c.b16 %v246, %v242
    %v295 = vpack.c.b16 %v247, %v243
    %v296 = vpack.c.b16 %v248, %v244
    %v297 = vpack.c.b16 %v253, %v249
    %v298 = vpack.c.b16 %v254, %v250
    %v299 = vpack.c.b16 %v255, %v251
    %v300 = vpack.c.b16 %v256, %v252
    %v301 = vpack.c.b16 %v261, %v257
    %v302 = vpack.c.b16 %v262, %v258
    %v303 = vpack.c.b16 %v263, %v259
    %v304 = vpack.c.b16 %v264, %v260
    %v305 = vpack.c.b16 %v269, %v265
    %v306 = vpack.c.b16 %v270, %v266
    %v307 = vpack.c.b16 %v271, %v267
    %v308 = vpack.c.b16 %v272, %v268
    %v309 = vpack.c.b16 %v277, %v273
    %v310 = vpack.c.b16 %v278, %v274
    %v311 = vpack.c.b16 %v279, %v275
    %v312 = vpack.c.b16 %v280, %v276
    %345 = vmatprep.subr.bf16.mxu0 %v282
    %346 = vmatpush1.bf16.msra.mxu0 %v281
    %347 = vmatprep.subr.bf16.mxu0 %v286
    %348 = vmatpush1.bf16.msra.mxu0 %v285
    %349 = vmatprep.subr.bf16.mxu0 %v290
    %350 = vmatpush1.bf16.msra.mxu0 %v289
    %351 = vmatprep.subr.bf16.mxu0 %v294
    %352 = vmatpush1.bf16.msra.mxu0 %v293
    %353 = vmatprep.subr.bf16.mxu0 %v298
    %354 = vmatpush1.bf16.msra.mxu0 %v297
    %355 = vmatprep.subr.bf16.mxu0 %v302
    %356 = vmatpush1.bf16.msra.mxu0 %v301
    %357 = vmatprep.subr.bf16.mxu0 %v306
    %358 = vmatpush1.bf16.msra.mxu0 %v305
    %359 = vmatprep.subr.bf16.mxu0 %v310
    %360 = vmatpush1.bf16.msra.mxu0 %v309
    %361 = vmatprep.subr.bf16.mxu0 0
    %362 = vmatpush1.bf16.msra.mxu0 0
    %363 = vmatprep.subr.bf16.mxu0 0
    %364 = vmatpush1.bf16.msra.mxu0 0
    %365 = vmatprep.subr.bf16.mxu0 0
    %366 = vmatpush1.bf16.msra.mxu0 0
    %367 = vmatprep.subr.bf16.mxu0 0
    %368 = vmatpush1.bf16.msra.mxu0 0
    %369 = vmatprep.subr.bf16.mxu0 0
    %370 = vmatpush1.bf16.msra.mxu0 0
    %371 = vmatprep.subr.bf16.mxu0 0
    %372 = vmatpush1.bf16.msra.mxu0 0
    %373 = vmatprep.subr.bf16.mxu0 0
    %374 = vmatpush1.bf16.msra.mxu0 0
    %375 = vmatprep.subr.bf16.mxu0 0
    %376 = vmatpush1.bf16.msra.mxu0 0
    %377 = vmatprep.mubr.bf16.mxu0 0
    %378 = vmatmul.mubr.bf16.gmra.mrb[0].mxu0 %v177
    %v379 = vpop.f32.mrb[0].mxu0
    %v380 = vadd.f32 %v144, %v379
    %v381 = vpop.f32.mrb[0].mxu0
    %v382 = vadd.f32 %v148, %v381
    %v383 = vpop.f32.mrb[0].mxu0
    %v384 = vadd.f32 %v144, %v383
    %v385 = vpop.f32.mrb[0].mxu0
    %v386 = vadd.f32 %v148, %v385
    %387 = vmatprep.mubr.bf16.mxu0 0
    %388 = vmatmul.mubr.bf16.gmra.mrb[0].mxu0 %v178
    %v389 = vpop.f32.mrb[0].mxu0
    %v390 = vadd.f32 %v144, %v389
    %v391 = vpop.f32.mrb[0].mxu0
    %v392 = vadd.f32 %v148, %v391
    %v393 = vpop.f32.mrb[0].mxu0
    %v394 = vadd.f32 %v144, %v393
    %v395 = vpop.f32.mrb[0].mxu0
    %v396 = vadd.f32 %v148, %v395
    %397 = vmatprep.mubr.bf16.mxu0 0
    %398 = vmatmul.mubr.bf16.gmra.mrb[0].mxu0 %v179
    %v399 = vpop.f32.mrb[0].mxu0
    %v400 = vadd.f32 %v144, %v399
    %v401 = vpop.f32.mrb[0].mxu0
    %v402 = vadd.f32 %v148, %v401
    %v403 = vpop.f32.mrb[0].mxu0
    %v404 = vadd.f32 %v144, %v403
    %v405 = vpop.f32.mrb[0].mxu0
    %v406 = vadd.f32 %v148, %v405
    %407 = vmatprep.mubr.bf16.mxu0 0
    %408 = vmatmul.mubr.bf16.gmra.mrb[0].mxu0 %v180
    %v409 = vpop.f32.mrb[0].mxu0
    %v410 = vadd.f32 %v144, %v409
    %v411 = vpop.f32.mrb[0].mxu0
    %v412 = vadd.f32 %v148, %v411
    %v413 = vpop.f32.mrb[0].mxu0
    %v414 = vadd.f32 %v144, %v413
    %v415 = vpop.f32.mrb[0].mxu0
    %v416 = vadd.f32 %v148, %v415
    %417 = vdwg.mxu0
    %418 = vmatprep.subr.bf16.mxu0 %v284
    %419 = vmatpush1.bf16.msra.mxu0 %v283
    %420 = vmatprep.subr.bf16.mxu0 %v288
    %421 = vmatpush1.bf16.msra.mxu0 %v287
    %422 = vmatprep.subr.bf16.mxu0 %v292
    %423 = vmatpush1.bf16.msra.mxu0 %v291
    %424 = vmatprep.subr.bf16.mxu0 %v296
    %425 = vmatpush1.bf16.msra.mxu0 %v295
    %426 = vmatprep.subr.bf16.mxu0 %v300
    %427 = vmatpush1.bf16.msra.mxu0 %v299
    %428 = vmatprep.subr.bf16.mxu0 %v304
    %429 = vmatpush1.bf16.msra.mxu0 %v303
    %430 = vmatprep.subr.bf16.mxu0 %v308
    %431 = vmatpush1.bf16.msra.mxu0 %v307
    %432 = vmatprep.subr.bf16.mxu0 %v312
    %433 = vmatpush1.bf16.msra.mxu0 %v311
    %434 = vmatprep.subr.bf16.mxu0 0
    %435 = vmatpush1.bf16.msra.mxu0 0
    %436 = vmatprep.subr.bf16.mxu0 0
    %437 = vmatpush1.bf16.msra.mxu0 0
    %438 = vmatprep.subr.bf16.mxu0 0
    %439 = vmatpush1.bf16.msra.mxu0 0
    %440 = vmatprep.subr.bf16.mxu0 0
    %441 = vmatpush1.bf16.msra.mxu0 0
    %442 = vmatprep.subr.bf16.mxu0 0
    %443 = vmatpush1.bf16.msra.mxu0 0
    %444 = vmatprep.subr.bf16.mxu0 0
    %445 = vmatpush1.bf16.msra.mxu0 0
    %446 = vmatprep.subr.bf16.mxu0 0
    %447 = vmatpush1.bf16.msra.mxu0 0
    %448 = vmatprep.subr.bf16.mxu0 0
    %449 = vmatpush1.bf16.msra.mxu0 0
    %450 = vmatprep.mubr.bf16.mxu0 0
    %451 = vmatmul.mubr.bf16.gmra.mrb[0].mxu0 %v177
    %v452 = vpop.f32.mrb[0].mxu0
    %v453 = vadd.f32 %v152, %v452
    %v454 = vpop.f32.mrb[0].mxu0
    %v455 = vadd.f32 %v156, %v454
    %v456 = vpop.f32.mrb[0].mxu0
    %v457 = vadd.f32 %v152, %v456
    %v458 = vpop.f32.mrb[0].mxu0
    %v459 = vadd.f32 %v156, %v458
    %460 = vmatprep.mubr.bf16.mxu0 0
    %461 = vmatmul.mubr.bf16.gmra.mrb[0].mxu0 %v178
    %v462 = vpop.f32.mrb[0].mxu0
    %v463 = vadd.f32 %v152, %v462
    %v464 = vpop.f32.mrb[0].mxu0
    %v465 = vadd.f32 %v156, %v464
    %v466 = vpop.f32.mrb[0].mxu0
    %v467 = vadd.f32 %v152, %v466
    %v468 = vpop.f32.mrb[0].mxu0
    %v469 = vadd.f32 %v156, %v468
    %470 = vmatprep.mubr.bf16.mxu0 0
    %471 = vmatmul.mubr.bf16.gmra.mrb[0].mxu0 %v179
    %v472 = vpop.f32.mrb[0].mxu0
    %v473 = vadd.f32 %v152, %v472
    %v474 = vpop.f32.mrb[0].mxu0
    %v475 = vadd.f32 %v156, %v474
    %v476 = vpop.f32.mrb[0].mxu0
    %v477 = vadd.f32 %v152, %v476
    %v478 = vpop.f32.mrb[0].mxu0
    %v479 = vadd.f32 %v156, %v478
    %480 = vmatprep.mubr.bf16.mxu0 0
    %481 = vmatmul.mubr.bf16.gmra.mrb[0].mxu0 %v180
    %v482 = vpop.f32.mrb[0].mxu0
    %v483 = vadd.f32 %v152, %v482
    %v484 = vpop.f32.mrb[0].mxu0
    %v485 = vadd.f32 %v156, %v484
    %v486 = vpop.f32.mrb[0].mxu0
    %v487 = vadd.f32 %v152, %v486
    %v488 = vpop.f32.mrb[0].mxu0
    %v489 = vadd.f32 %v156, %v488
    %490 = vdwg.mxu0
    %491 = vst [vmem:[#allocation2] sm:$0xff] %v380
    %492 = vst [vmem:[#allocation2 + $0x8] sm:$0xff] %v382
    %493 = vst [vmem:[#allocation2 + $0x10] sm:$0xff] %v453
    %494 = vst [vmem:[#allocation2 + $0x18] sm:$0xff] %v455
    %495 = vst [vmem:[#allocation2 + $0x20] sm:$0xff] %v384
    %496 = vst [vmem:[#allocation2 + $0x28] sm:$0xff] %v386
    %497 = vst [vmem:[#allocation2 + $0x30] sm:$0xff] %v457
    %498 = vst [vmem:[#allocation2 + $0x38] sm:$0xff] %v459
    %499 = vst [vmem:[#allocation2 + $0x40] sm:$0xff] %v390
    %500 = vst [vmem:[#allocation2 + $0x48] sm:$0xff] %v392
    %501 = vst [vmem:[#allocation2 + $0x50] sm:$0xff] %v463
    %502 = vst [vmem:[#allocation2 + $0x58] sm:$0xff] %v465
    %503 = vst [vmem:[#allocation2 + $0x60] sm:$0xff] %v394
    %504 = vst [vmem:[#allocation2 + $0x68] sm:$0xff] %v396
    %505 = vst [vmem:[#allocation2 + $0x70] sm:$0xff] %v467
    %506 = vst [vmem:[#allocation2 + $0x78] sm:$0xff] %v469
    %507 = vst [vmem:[#allocation2 + $0x80] sm:$0xff] %v400
    %508 = vst [vmem:[#allocation2 + $0x88] sm:$0xff] %v402
    %509 = vst [vmem:[#allocation2 + $0x90] sm:$0xff] %v473
    %510 = vst [vmem:[#allocation2 + $0x98] sm:$0xff] %v475
    %511 = vst [vmem:[#allocation2 + $0xa0] sm:$0xff] %v404
    %512 = vst [vmem:[#allocation2 + $0xa8] sm:$0xff] %v406
    %513 = vst [vmem:[#allocation2 + $0xb0] sm:$0xff] %v477
    %514 = vst [vmem:[#allocation2 + $0xb8] sm:$0xff] %v479
    %515 = vst [vmem:[#allocation2 + $0xc0] sm:$0xff] %v410
    %516 = vst [vmem:[#allocation2 + $0xc8] sm:$0xff] %v412
    %517 = vst [vmem:[#allocation2 + $0xd0] sm:$0xff] %v483
    %518 = vst [vmem:[#allocation2 + $0xd8] sm:$0xff] %v485
    %519 = vst [vmem:[#allocation2 + $0xe0] sm:$0xff] %v414
    %520 = vst [vmem:[#allocation2 + $0xe8] sm:$0xff] %v416
    %521 = vst [vmem:[#allocation2 + $0xf0] sm:$0xff] %v487
    %522 = vst [vmem:[#allocation2 + $0xf8] sm:$0xff] %v489
    %p523 = scmp.eq.s32.totalorder 0, 0
    // Predicated region
    $region54: #{tpu_custom_call.1} parent=1 // pred_check
      %p524 = pneg %p523
    $region55: #{tpu_custom_call.1} parent=1 // pred_check_branch
      %526 = sbr.rel (%p524) target = $region57
    $region56: #{tpu_custom_call.1} parent=1 // pred_region
      %527 = vst [vmem:[#allocation4] sm:$0xff] 0.0
      %528 = vst [vmem:[#allocation5] sm:$0xff] 0.0
      %529 = vst [vmem:[#allocation6] sm:$0xff] 0.0
      %530 = vst [vmem:[#allocation7] sm:$0xff] 0.0
    $region57: #{tpu_custom_call.1} parent=1 // pred_fallthru
      _
    %v531 = vld [vmem:[%s5] sm:$0xf]
    %v533 = vlaneseq
    %v534 = vshrl.u32 %v533, 7
    %v535 = vsub.s32 0, %v534
    %v536 = vrot.slane %v531, %v535
    %v537 = vlaneseq
    %v538 = vshrl.u32 %v537, 7
    %v539 = vsub.s32 1, %v538
    %v540 = vrot.slane %v531, %v539
    %v541 = vlaneseq
    %v542 = vshrl.u32 %v541, 7
    %v543 = vsub.s32 2, %v542
    %v544 = vrot.slane %v531, %v543
    %v545 = vlaneseq
    %v546 = vshrl.u32 %v545, 7
    %v547 = vsub.s32 3, %v546
    %v548 = vrot.slane %v531, %v547
    %v553 = vld [vmem:[#allocation4] sm:$0xff]
    %v554 = vld [vmem:[#allocation5] sm:$0xff]
    %v555 = vld [vmem:[#allocation6] sm:$0xff]
    %v556 = vld [vmem:[#allocation7] sm:$0xff]
    %s557 = smul.u32 0, 4
    %s558 = smul.addr %s557, 8
    %s559 = scalar_lea.vmem [#allocation2], %s558
    %v560 = vld [vmem:[%s559] sm:$0xff]
    %v561 = vld [vmem:[%s559 + $0x8] sm:$0xff]
    %v562 = vld [vmem:[%s559 + $0x10] sm:$0xff]
    %v563 = vld [vmem:[%s559 + $0x18] sm:$0xff]
    %v564 = vpack.c.bf16 %v553, %v553
    %v565 = vld [vmem:[#allocation13] sm:$0xff]
    %v566 = vld [vmem:[#allocation13 + $0x8] sm:$0xff]
    %v567 = vld [vmem:[#allocation13 + $0x10] sm:$0xff]
    %v568 = vld [vmem:[#allocation13 + $0x18] sm:$0xff]
    %v569 = vld [vmem:[#allocation13 + $0x20] sm:$0xff]
    %v570 = vld [vmem:[#allocation13 + $0x28] sm:$0xff]
    %v571 = vld [vmem:[#allocation13 + $0x30] sm:$0xff]
    %v572 = vld [vmem:[#allocation13 + $0x38] sm:$0xff]
    %v573 = vld [vmem:[#allocation13 + $0x40] sm:$0xff]
    %v574 = vld [vmem:[#allocation13 + $0x48] sm:$0xff]
    %v575 = vld [vmem:[#allocation13 + $0x50] sm:$0xff]
    %v576 = vld [vmem:[#allocation13 + $0x58] sm:$0xff]
    %v577 = vld [vmem:[#allocation13 + $0x60] sm:$0xff]
    %v578 = vld [vmem:[#allocation13 + $0x68] sm:$0xff]
    %v579 = vld [vmem:[#allocation13 + $0x70] sm:$0xff]
    %v580 = vld [vmem:[#allocation13 + $0x78] sm:$0xff]
    %v581 = vld [vmem:[#allocation13 + $0x80] sm:$0xff]
    %v582 = vld [vmem:[#allocation13 + $0x88] sm:$0xff]
    %v583 = vld [vmem:[#allocation13 + $0x90] sm:$0xff]
    %v584 = vld [vmem:[#allocation13 + $0x98] sm:$0xff]
    %v585 = vld [vmem:[#allocation13 + $0xa0] sm:$0xff]
    %v586 = vld [vmem:[#allocation13 + $0xa8] sm:$0xff]
    %v587 = vld [vmem:[#allocation13 + $0xb0] sm:$0xff]
    %v588 = vld [vmem:[#allocation13 + $0xb8] sm:$0xff]
    %v589 = vld [vmem:[#allocation13 + $0xc0] sm:$0xff]
    %v590 = vld [vmem:[#allocation13 + $0xc8] sm:$0xff]
    %v591 = vld [vmem:[#allocation13 + $0xd0] sm:$0xff]
    %v592 = vld [vmem:[#allocation13 + $0xd8] sm:$0xff]
    %v593 = vld [vmem:[#allocation13 + $0xe0] sm:$0xff]
    %v594 = vld [vmem:[#allocation13 + $0xe8] sm:$0xff]
    %v595 = vld [vmem:[#allocation13 + $0xf0] sm:$0xff]
    %v596 = vld [vmem:[#allocation13 + $0xf8] sm:$0xff]
    %v629 = vunpack.c.l.b16 %v565
    %v630 = vunpack.c.h.b16 %v565
    %v631 = vunpack.c.l.b16 %v566
    %v632 = vunpack.c.h.b16 %v566
    %v633 = vunpack.c.l.b16 %v567
    %v634 = vunpack.c.h.b16 %v567
    %v635 = vunpack.c.l.b16 %v568
    %v636 = vunpack.c.h.b16 %v568
    %v637 = vunpack.c.l.b16 %v569
    %v638 = vunpack.c.h.b16 %v569
    %v639 = vunpack.c.l.b16 %v570
    %v640 = vunpack.c.h.b16 %v570
    %v641 = vunpack.c.l.b16 %v571
    %v642 = vunpack.c.h.b16 %v571
    %v643 = vunpack.c.l.b16 %v572
    %v644 = vunpack.c.h.b16 %v572
    %v645 = vunpack.c.l.b16 %v573
    %v646 = vunpack.c.h.b16 %v573
    %v647 = vunpack.c.l.b16 %v574
    %v648 = vunpack.c.h.b16 %v574
    %v649 = vunpack.c.l.b16 %v575
    %v650 = vunpack.c.h.b16 %v575
    %v651 = vunpack.c.l.b16 %v576
    %v652 = vunpack.c.h.b16 %v576
    %v653 = vunpack.c.l.b16 %v577
    %v654 = vunpack.c.h.b16 %v577
    %v655 = vunpack.c.l.b16 %v578
    %v656 = vunpack.c.h.b16 %v578
    %v657 = vunpack.c.l.b16 %v579
    %v658 = vunpack.c.h.b16 %v579
    %v659 = vunpack.c.l.b16 %v580
    %v660 = vunpack.c.h.b16 %v580
    %v661 = vunpack.c.l.b16 %v581
    %v662 = vunpack.c.h.b16 %v581
    %v663 = vunpack.c.l.b16 %v582
    %v664 = vunpack.c.h.b16 %v582
    %v665 = vunpack.c.l.b16 %v583
    %v666 = vunpack.c.h.b16 %v583
    %v667 = vunpack.c.l.b16 %v584
    %v668 = vunpack.c.h.b16 %v584
    %v669 = vunpack.c.l.b16 %v585
    %v670 = vunpack.c.h.b16 %v585
    %v671 = vunpack.c.l.b16 %v586
    %v672 = vunpack.c.h.b16 %v586
    %v673 = vunpack.c.l.b16 %v587
    %v674 = vunpack.c.h.b16 %v587
    %v675 = vunpack.c.l.b16 %v588
    %v676 = vunpack.c.h.b16 %v588
    %v677 = vunpack.c.l.b16 %v589
    %v678 = vunpack.c.h.b16 %v589
    %v679 = vunpack.c.l.b16 %v590
    %v680 = vunpack.c.h.b16 %v590
    %v681 = vunpack.c.l.b16 %v591
    %v682 = vunpack.c.h.b16 %v591
    %v683 = vunpack.c.l.b16 %v592
    %v684 = vunpack.c.h.b16 %v592
    %v685 = vunpack.c.l.b16 %v593
    %v686 = vunpack.c.h.b16 %v593
    %v687 = vunpack.c.l.b16 %v594
    %v688 = vunpack.c.h.b16 %v594
    %v689 = vunpack.c.l.b16 %v595
    %v690 = vunpack.c.h.b16 %v595
    %v691 = vunpack.c.l.b16 %v596
    %v692 = vunpack.c.h.b16 %v596
    %v693 = vpack.c.b16 %v633, %v629
    %v694 = vpack.c.b16 %v634, %v630
    %v695 = vpack.c.b16 %v635, %v631
    %v696 = vpack.c.b16 %v636, %v632
    %v697 = vpack.c.b16 %v641, %v637
    %v698 = vpack.c.b16 %v642, %v638
    %v699 = vpack.c.b16 %v643, %v639
    %v700 = vpack.c.b16 %v644, %v640
    %v701 = vpack.c.b16 %v649, %v645
    %v702 = vpack.c.b16 %v650, %v646
    %v703 = vpack.c.b16 %v651, %v647
    %v704 = vpack.c.b16 %v652, %v648
    %v705 = vpack.c.b16 %v657, %v653
    %v706 = vpack.c.b16 %v658, %v654
    %v707 = vpack.c.b16 %v659, %v655
    %v708 = vpack.c.b16 %v660, %v656
    %v709 = vpack.c.b16 %v665, %v661
    %v710 = vpack.c.b16 %v666, %v662
    %v711 = vpack.c.b16 %v667, %v663
    %v712 = vpack.c.b16 %v668, %v664
    %v713 = vpack.c.b16 %v673, %v669
    %v714 = vpack.c.b16 %v674, %v670
    %v715 = vpack.c.b16 %v675, %v671
    %v716 = vpack.c.b16 %v676, %v672
    %v717 = vpack.c.b16 %v681, %v677
    %v718 = vpack.c.b16 %v682, %v678
    %v719 = vpack.c.b16 %v683, %v679
    %v720 = vpack.c.b16 %v684, %v680
    %v721 = vpack.c.b16 %v689, %v685
    %v722 = vpack.c.b16 %v690, %v686
    %v723 = vpack.c.b16 %v691, %v687
    %v724 = vpack.c.b16 %v692, %v688
    %757 = vmatprep.subr.bf16.mxu0 %v694
    %758 = vmatpush1.bf16.msra.mxu0 %v693
    %759 = vmatprep.subr.bf16.mxu0 %v698
    %760 = vmatpush1.bf16.msra.mxu0 %v697
    %761 = vmatprep.subr.bf16.mxu0 %v702
    %762 = vmatpush1.bf16.msra.mxu0 %v701
    %763 = vmatprep.subr.bf16.mxu0 %v706
    %764 = vmatpush1.bf16.msra.mxu0 %v705
    %765 = vmatprep.subr.bf16.mxu0 %v710
    %766 = vmatpush1.bf16.msra.mxu0 %v709
    %767 = vmatprep.subr.bf16.mxu0 %v714
    %768 = vmatpush1.bf16.msra.mxu0 %v713
    %769 = vmatprep.subr.bf16.mxu0 %v718
    %770 = vmatpush1.bf16.msra.mxu0 %v717
    %771 = vmatprep.subr.bf16.mxu0 %v722
    %772 = vmatpush1.bf16.msra.mxu0 %v721
    %773 = vmatprep.subr.bf16.mxu0 0
    %774 = vmatpush1.bf16.msra.mxu0 0
    %775 = vmatprep.subr.bf16.mxu0 0
    %776 = vmatpush1.bf16.msra.mxu0 0
    %777 = vmatprep.subr.bf16.mxu0 0
    %778 = vmatpush1.bf16.msra.mxu0 0
    %779 = vmatprep.subr.bf16.mxu0 0
    %780 = vmatpush1.bf16.msra.mxu0 0
    %781 = vmatprep.subr.bf16.mxu0 0
    %782 = vmatpush1.bf16.msra.mxu0 0
    %783 = vmatprep.subr.bf16.mxu0 0
    %784 = vmatpush1.bf16.msra.mxu0 0
    %785 = vmatprep.subr.bf16.mxu0 0
    %786 = vmatpush1.bf16.msra.mxu0 0
    %787 = vmatprep.subr.bf16.mxu0 0
    %788 = vmatpush1.bf16.msra.mxu0 0
    %789 = vmatprep.mubr.bf16.mxu0 0
    %790 = vmatmul.mubr.bf16.gmra.mrb[0].mxu0 %v564
    %v791 = vpop.f32.mrb[0].mxu0
    %v792 = vadd.f32 0.0, %v791
    %v793 = vpop.f32.mrb[0].mxu0
    %v794 = vadd.f32 0.0, %v793
    %v795 = vpop.f32.mrb[0].mxu0
    %v796 = vpop.f32.mrb[0].mxu0
    %797 = vdwg.mxu0
    %798 = vmatprep.subr.bf16.mxu0 %v696
    %799 = vmatpush1.bf16.msra.mxu0 %v695
    %800 = vmatprep.subr.bf16.mxu0 %v700
    %801 = vmatpush1.bf16.msra.mxu0 %v699
    %802 = vmatprep.subr.bf16.mxu0 %v704
    %803 = vmatpush1.bf16.msra.mxu0 %v703
    %804 = vmatprep.subr.bf16.mxu0 %v708
    %805 = vmatpush1.bf16.msra.mxu0 %v707
    %806 = vmatprep.subr.bf16.mxu0 %v712
    %807 = vmatpush1.bf16.msra.mxu0 %v711
    %808 = vmatprep.subr.bf16.mxu0 %v716
    %809 = vmatpush1.bf16.msra.mxu0 %v715
    %810 = vmatprep.subr.bf16.mxu0 %v720
    %811 = vmatpush1.bf16.msra.mxu0 %v719
    %812 = vmatprep.subr.bf16.mxu0 %v724
    %813 = vmatpush1.bf16.msra.mxu0 %v723
    %814 = vmatprep.subr.bf16.mxu0 0
    %815 = vmatpush1.bf16.msra.mxu0 0
    %816 = vmatprep.subr.bf16.mxu0 0
    %817 = vmatpush1.bf16.msra.mxu0 0
    %818 = vmatprep.subr.bf16.mxu0 0
    %819 = vmatpush1.bf16.msra.mxu0 0
    %820 = vmatprep.subr.bf16.mxu0 0
    %821 = vmatpush1.bf16.msra.mxu0 0
    %822 = vmatprep.subr.bf16.mxu0 0
    %823 = vmatpush1.bf16.msra.mxu0 0
    %824 = vmatprep.subr.bf16.mxu0 0
    %825 = vmatpush1.bf16.msra.mxu0 0
    %826 = vmatprep.subr.bf16.mxu0 0
    %827 = vmatpush1.bf16.msra.mxu0 0
    %828 = vmatprep.subr.bf16.mxu0 0
    %829 = vmatpush1.bf16.msra.mxu0 0
    %830 = vmatprep.mubr.bf16.mxu0 0
    %831 = vmatmul.mubr.bf16.gmra.mrb[0].mxu0 %v564
    %v832 = vpop.f32.mrb[0].mxu0
    %v833 = vadd.f32 0.0, %v832
    %v834 = vpop.f32.mrb[0].mxu0
    %v835 = vadd.f32 0.0, %v834
    %v836 = vpop.f32.mrb[0].mxu0
    %v837 = vpop.f32.mrb[0].mxu0
    %838 = vdwg.mxu0
    %v839 = vadd.f32 %v560, %v792
    %v840 = vadd.f32 %v561, %v794
    %v841 = vadd.f32 %v562, %v833
    %v842 = vadd.f32 %v563, %v835
    %v843 = vxor.u32 %v839, 2147483648
    %v844 = vmul.f32 %v843, 1.442695
    %v845 = vpow.pop %v844
    %v846 = vadd.f32 %v845, 1.0
    %v847 = vrcp.pop %v846
    %v848 = vmul.f32 1.0, %v847
    %v849 = vxor.u32 %v840, 2147483648
    %v850 = vmul.f32 %v849, 1.442695
    %v851 = vpow.pop %v850
    %v852 = vadd.f32 %v851, 1.0
    %v853 = vrcp.pop %v852
    %v854 = vmul.f32 1.0, %v853
    %v855 = vtanh.pop %v841
    %v856 = vxor.u32 %v842, 2147483648
    %v857 = vmul.f32 %v856, 1.442695
    %v858 = vpow.pop %v857
    %v859 = vadd.f32 %v858, 1.0
    %v860 = vrcp.pop %v859
    %v861 = vmul.f32 1.0, %v860
    %v862 = vmul.f32 %v854, %v554
    %v863 = vmul.f32 %v848, %v855
    %v864 = vadd.f32 %v862, %v863
    %v865 = vtanh.pop %v864
    %v866 = vmul.f32 %v861, %v865
    %v867 = vpack.c.bf16 %v866, %v866
    %v868 = vpack.c.bf16 %v555, %v555
    %v869 = vld [vmem:[#allocation14] sm:$0xff]
    %v870 = vld [vmem:[#allocation14 + $0x8] sm:$0xff]
    %v871 = vld [vmem:[#allocation14 + $0x10] sm:$0xff]
    %v872 = vld [vmem:[#allocation14 + $0x18] sm:$0xff]
    %v873 = vld [vmem:[#allocation14 + $0x20] sm:$0xff]
    %v874 = vld [vmem:[#allocation14 + $0x28] sm:$0xff]
    %v875 = vld [vmem:[#allocation14 + $0x30] sm:$0xff]
    %v876 = vld [vmem:[#allocation14 + $0x38] sm:$0xff]
    %v877 = vld [vmem:[#allocation14 + $0x40] sm:$0xff]
    %v878 = vld [vmem:[#allocation14 + $0x48] sm:$0xff]
    %v879 = vld [vmem:[#allocation14 + $0x50] sm:$0xff]
    %v880 = vld [vmem:[#allocation14 + $0x58] sm:$0xff]
    %v881 = vld [vmem:[#allocation14 + $0x60] sm:$0xff]
    %v882 = vld [vmem:[#allocation14 + $0x68] sm:$0xff]
    %v883 = vld [vmem:[#allocation14 + $0x70] sm:$0xff]
    %v884 = vld [vmem:[#allocation14 + $0x78] sm:$0xff]
    %v885 = vld [vmem:[#allocation14 + $0x80] sm:$0xff]
    %v886 = vld [vmem:[#allocation14 + $0x88] sm:$0xff]
    %v887 = vld [vmem:[#allocation14 + $0x90] sm:$0xff]
    %v888 = vld [vmem:[#allocation14 + $0x98] sm:$0xff]
    %v889 = vld [vmem:[#allocation14 + $0xa0] sm:$0xff]
    %v890 = vld [vmem:[#allocation14 + $0xa8] sm:$0xff]
    %v891 = vld [vmem:[#allocation14 + $0xb0] sm:$0xff]
    %v892 = vld [vmem:[#allocation14 + $0xb8] sm:$0xff]
    %v893 = vld [vmem:[#allocation14 + $0xc0] sm:$0xff]
    %v894 = vld [vmem:[#allocation14 + $0xc8] sm:$0xff]
    %v895 = vld [vmem:[#allocation14 + $0xd0] sm:$0xff]
    %v896 = vld [vmem:[#allocation14 + $0xd8] sm:$0xff]
    %v897 = vld [vmem:[#allocation14 + $0xe0] sm:$0xff]
    %v898 = vld [vmem:[#allocation14 + $0xe8] sm:$0xff]
    %v899 = vld [vmem:[#allocation14 + $0xf0] sm:$0xff]
    %v900 = vld [vmem:[#allocation14 + $0xf8] sm:$0xff]
    %v901 = vld [vmem:[#allocation14 + $0x100] sm:$0xff]
    %v902 = vld [vmem:[#allocation14 + $0x108] sm:$0xff]
    %v903 = vld [vmem:[#allocation14 + $0x110] sm:$0xff]
    %v904 = vld [vmem:[#allocation14 + $0x118] sm:$0xff]
    %v905 = vld [vmem:[#allocation14 + $0x120] sm:$0xff]
    %v906 = vld [vmem:[#allocation14 + $0x128] sm:$0xff]
    %v907 = vld [vmem:[#allocation14 + $0x130] sm:$0xff]
    %v908 = vld [vmem:[#allocation14 + $0x138] sm:$0xff]
    %v909 = vld [vmem:[#allocation14 + $0x140] sm:$0xff]
    %v910 = vld [vmem:[#allocation14 + $0x148] sm:$0xff]
    %v911 = vld [vmem:[#allocation14 + $0x150] sm:$0xff]
    %v912 = vld [vmem:[#allocation14 + $0x158] sm:$0xff]
    %v913 = vld [vmem:[#allocation14 + $0x160] sm:$0xff]
    %v914 = vld [vmem:[#allocation14 + $0x168] sm:$0xff]
    %v915 = vld [vmem:[#allocation14 + $0x170] sm:$0xff]
    %v916 = vld [vmem:[#allocation14 + $0x178] sm:$0xff]
    %v917 = vld [vmem:[#allocation14 + $0x180] sm:$0xff]
    %v918 = vld [vmem:[#allocation14 + $0x188] sm:$0xff]
    %v919 = vld [vmem:[#allocation14 + $0x190] sm:$0xff]
    %v920 = vld [vmem:[#allocation14 + $0x198] sm:$0xff]
    %v921 = vld [vmem:[#allocation14 + $0x1a0] sm:$0xff]
    %v922 = vld [vmem:[#allocation14 + $0x1a8] sm:$0xff]
    %v923 = vld [vmem:[#allocation14 + $0x1b0] sm:$0xff]
    %v924 = vld [vmem:[#allocation14 + $0x1b8] sm:$0xff]
    %v925 = vld [vmem:[#allocation14 + $0x1c0] sm:$0xff]
    %v926 = vld [vmem:[#allocation14 + $0x1c8] sm:$0xff]
    %v927 = vld [vmem:[#allocation14 + $0x1d0] sm:$0xff]
    %v928 = vld [vmem:[#allocation14 + $0x1d8] sm:$0xff]
    %v929 = vld [vmem:[#allocation14 + $0x1e0] sm:$0xff]
    %v930 = vld [vmem:[#allocation14 + $0x1e8] sm:$0xff]
    %v931 = vld [vmem:[#allocation14 + $0x1f0] sm:$0xff]
    %v932 = vld [vmem:[#allocation14 + $0x1f8] sm:$0xff]
    %v997 = vunpack.c.l.b16 %v869
    %v998 = vunpack.c.h.b16 %v869
    %v999 = vunpack.c.l.b16 %v870
    %v1000 = vunpack.c.h.b16 %v870
    %v1001 = vunpack.c.l.b16 %v871
    %v1002 = vunpack.c.h.b16 %v871
    %v1003 = vunpack.c.l.b16 %v872
    %v1004 = vunpack.c.h.b16 %v872
    %v1005 = vunpack.c.l.b16 %v873
    %v1006 = vunpack.c.h.b16 %v873
    %v1007 = vunpack.c.l.b16 %v874
    %v1008 = vunpack.c.h.b16 %v874
    %v1009 = vunpack.c.l.b16 %v875
    %v1010 = vunpack.c.h.b16 %v875
    %v1011 = vunpack.c.l.b16 %v876
    %v1012 = vunpack.c.h.b16 %v876
    %v1013 = vunpack.c.l.b16 %v877
    %v1014 = vunpack.c.h.b16 %v877
    %v1015 = vunpack.c.l.b16 %v878
    %v1016 = vunpack.c.h.b16 %v878
    %v1017 = vunpack.c.l.b16 %v879
    %v1018 = vunpack.c.h.b16 %v879
    %v1019 = vunpack.c.l.b16 %v880
    %v1020 = vunpack.c.h.b16 %v880
    %v1021 = vunpack.c.l.b16 %v881
    %v1022 = vunpack.c.h.b16 %v881
    %v1023 = vunpack.c.l.b16 %v882
    %v1024 = vunpack.c.h.b16 %v882
    %v1025 = vunpack.c.l.b16 %v883
    %v1026 = vunpack.c.h.b16 %v883
    %v1027 = vunpack.c.l.b16 %v884
    %v1028 = vunpack.c.h.b16 %v884
    %v1029 = vunpack.c.l.b16 %v885
    %v1030 = vunpack.c.h.b16 %v885
    %v1031 = vunpack.c.l.b16 %v886
    %v1032 = vunpack.c.h.b16 %v886
    %v1033 = vunpack.c.l.b16 %v887
    %v1034 = vunpack.c.h.b16 %v887
    %v1035 = vunpack.c.l.b16 %v888
    %v1036 = vunpack.c.h.b16 %v888
    %v1037 = vunpack.c.l.b16 %v889
    %v1038 = vunpack.c.h.b16 %v889
    %v1039 = vunpack.c.l.b16 %v890
    %v1040 = vunpack.c.h.b16 %v890
    %v1041 = vunpack.c.l.b16 %v891
    %v1042 = vunpack.c.h.b16 %v891
    %v1043 = vunpack.c.l.b16 %v892
    %v1044 = vunpack.c.h.b16 %v892
    %v1045 = vunpack.c.l.b16 %v893
    %v1046 = vunpack.c.h.b16 %v893
    %v1047 = vunpack.c.l.b16 %v894
    %v1048 = vunpack.c.h.b16 %v894
    %v1049 = vunpack.c.l.b16 %v895
    %v1050 = vunpack.c.h.b16 %v895
    %v1051 = vunpack.c.l.b16 %v896
    %v1052 = vunpack.c.h.b16 %v896
    %v1053 = vunpack.c.l.b16 %v897
    %v1054 = vunpack.c.h.b16 %v897
    %v1055 = vunpack.c.l.b16 %v898
    %v1056 = vunpack.c.h.b16 %v898
    %v1057 = vunpack.c.l.b16 %v899
    %v1058 = vunpack.c.h.b16 %v899
    %v1059 = vunpack.c.l.b16 %v900
    %v1060 = vunpack.c.h.b16 %v900
    %v1061 = vunpack.c.l.b16 %v901
    %v1062 = vunpack.c.h.b16 %v901
    %v1063 = vunpack.c.l.b16 %v902
    %v1064 = vunpack.c.h.b16 %v902
    %v1065 = vunpack.c.l.b16 %v903
    %v1066 = vunpack.c.h.b16 %v903
    %v1067 = vunpack.c.l.b16 %v904
    %v1068 = vunpack.c.h.b16 %v904
    %v1069 = vunpack.c.l.b16 %v905
    %v1070 = vunpack.c.h.b16 %v905
    %v1071 = vunpack.c.l.b16 %v906
    %v1072 = vunpack.c.h.b16 %v906
    %v1073 = vunpack.c.l.b16 %v907
    %v1074 = vunpack.c.h.b16 %v907
    %v1075 = vunpack.c.l.b16 %v908
    %v1076 = vunpack.c.h.b16 %v908
    %v1077 = vunpack.c.l.b16 %v909
    %v1078 = vunpack.c.h.b16 %v909
    %v1079 = vunpack.c.l.b16 %v910
    %v1080 = vunpack.c.h.b16 %v910
    %v1081 = vunpack.c.l.b16 %v911
    %v1082 = vunpack.c.h.b16 %v911
    %v1083 = vunpack.c.l.b16 %v912
    %v1084 = vunpack.c.h.b16 %v912
    %v1085 = vunpack.c.l.b16 %v913
    %v1086 = vunpack.c.h.b16 %v913
    %v1087 = vunpack.c.l.b16 %v914
    %v1088 = vunpack.c.h.b16 %v914
    %v1089 = vunpack.c.l.b16 %v915
    %v1090 = vunpack.c.h.b16 %v915
    %v1091 = vunpack.c.l.b16 %v916
    %v1092 = vunpack.c.h.b16 %v916
    %v1093 = vunpack.c.l.b16 %v917
    %v1094 = vunpack.c.h.b16 %v917
    %v1095 = vunpack.c.l.b16 %v918
    %v1096 = vunpack.c.h.b16 %v918
    %v1097 = vunpack.c.l.b16 %v919
    %v1098 = vunpack.c.h.b16 %v919
    %v1099 = vunpack.c.l.b16 %v920
    %v1100 = vunpack.c.h.b16 %v920
    %v1101 = vunpack.c.l.b16 %v921
    %v1102 = vunpack.c.h.b16 %v921
    %v1103 = vunpack.c.l.b16 %v922
    %v1104 = vunpack.c.h.b16 %v922
    %v1105 = vunpack.c.l.b16 %v923
    %v1106 = vunpack.c.h.b16 %v923
    %v1107 = vunpack.c.l.b16 %v924
    %v1108 = vunpack.c.h.b16 %v924
    %v1109 = vunpack.c.l.b16 %v925
    %v1110 = vunpack.c.h.b16 %v925
    %v1111 = vunpack.c.l.b16 %v926
    %v1112 = vunpack.c.h.b16 %v926
    %v1113 = vunpack.c.l.b16 %v927
    %v1114 = vunpack.c.h.b16 %v927
    %v1115 = vunpack.c.l.b16 %v928
    %v1116 = vunpack.c.h.b16 %v928
    %v1117 = vunpack.c.l.b16 %v929
    %v1118 = vunpack.c.h.b16 %v929
    %v1119 = vunpack.c.l.b16 %v930
    %v1120 = vunpack.c.h.b16 %v930
    %v1121 = vunpack.c.l.b16 %v931
    %v1122 = vunpack.c.h.b16 %v931
    %v1123 = vunpack.c.l.b16 %v932
    %v1124 = vunpack.c.h.b16 %v932
    %v1125 = vpack.c.b16 %v1001, %v997
    %v1126 = vpack.c.b16 %v1002, %v998
    %v1127 = vpack.c.b16 %v1003, %v999
    %v1128 = vpack.c.b16 %v1004, %v1000
    %v1129 = vpack.c.b16 %v1009, %v1005
    %v1130 = vpack.c.b16 %v1010, %v1006
    %v1131 = vpack.c.b16 %v1011, %v1007
    %v1132 = vpack.c.b16 %v1012, %v1008
    %v1133 = vpack.c.b16 %v1017, %v1013
    %v1134 = vpack.c.b16 %v1018, %v1014
    %v1135 = vpack.c.b16 %v1019, %v1015
    %v1136 = vpack.c.b16 %v1020, %v1016
    %v1137 = vpack.c.b16 %v1025, %v1021
    %v1138 = vpack.c.b16 %v1026, %v1022
    %v1139 = vpack.c.b16 %v1027, %v1023
    %v1140 = vpack.c.b16 %v1028, %v1024
    %v1141 = vpack.c.b16 %v1033, %v1029
    %v1142 = vpack.c.b16 %v1034, %v1030
    %v1143 = vpack.c.b16 %v1035, %v1031
    %v1144 = vpack.c.b16 %v1036, %v1032
    %v1145 = vpack.c.b16 %v1041, %v1037
    %v1146 = vpack.c.b16 %v1042, %v1038
    %v1147 = vpack.c.b16 %v1043, %v1039
    %v1148 = vpack.c.b16 %v1044, %v1040
    %v1149 = vpack.c.b16 %v1049, %v1045
    %v1150 = vpack.c.b16 %v1050, %v1046
    %v1151 = vpack.c.b16 %v1051, %v1047
    %v1152 = vpack.c.b16 %v1052, %v1048
    %v1153 = vpack.c.b16 %v1057, %v1053
    %v1154 = vpack.c.b16 %v1058, %v1054
    %v1155 = vpack.c.b16 %v1059, %v1055
    %v1156 = vpack.c.b16 %v1060, %v1056
    %v1157 = vpack.c.b16 %v1065, %v1061
    %v1158 = vpack.c.b16 %v1066, %v1062
    %v1159 = vpack.c.b16 %v1067, %v1063
    %v1160 = vpack.c.b16 %v1068, %v1064
    %v1161 = vpack.c.b16 %v1073, %v1069
    %v1162 = vpack.c.b16 %v1074, %v1070
    %v1163 = vpack.c.b16 %v1075, %v1071
    %v1164 = vpack.c.b16 %v1076, %v1072
    %v1165 = vpack.c.b16 %v1081, %v1077
    %v1166 = vpack.c.b16 %v1082, %v1078
    %v1167 = vpack.c.b16 %v1083, %v1079
    %v1168 = vpack.c.b16 %v1084, %v1080
    %v1169 = vpack.c.b16 %v1089, %v1085
    %v1170 = vpack.c.b16 %v1090, %v1086
    %v1171 = vpack.c.b16 %v1091, %v1087
    %v1172 = vpack.c.b16 %v1092, %v1088
    %v1173 = vpack.c.b16 %v1097, %v1093
    %v1174 = vpack.c.b16 %v1098, %v1094
    %v1175 = vpack.c.b16 %v1099, %v1095
    %v1176 = vpack.c.b16 %v1100, %v1096
    %v1177 = vpack.c.b16 %v1105, %v1101
    %v1178 = vpack.c.b16 %v1106, %v1102
    %v1179 = vpack.c.b16 %v1107, %v1103
    %v1180 = vpack.c.b16 %v1108, %v1104
    %v1181 = vpack.c.b16 %v1113, %v1109
    %v1182 = vpack.c.b16 %v1114, %v1110
    %v1183 = vpack.c.b16 %v1115, %v1111
    %v1184 = vpack.c.b16 %v1116, %v1112
    %v1185 = vpack.c.b16 %v1121, %v1117
    %v1186 = vpack.c.b16 %v1122, %v1118
    %v1187 = vpack.c.b16 %v1123, %v1119
    %v1188 = vpack.c.b16 %v1124, %v1120
    %1253 = vmatprep.subr.bf16.mxu0 %v1126
    %1254 = vmatpush1.bf16.msra.mxu0 %v1125
    %1255 = vmatprep.subr.bf16.mxu0 %v1130
    %1256 = vmatpush1.bf16.msra.mxu0 %v1129
    %1257 = vmatprep.subr.bf16.mxu0 %v1134
    %1258 = vmatpush1.bf16.msra.mxu0 %v1133
    %1259 = vmatprep.subr.bf16.mxu0 %v1138
    %1260 = vmatpush1.bf16.msra.mxu0 %v1137
    %1261 = vmatprep.subr.bf16.mxu0 %v1142
    %1262 = vmatpush1.bf16.msra.mxu0 %v1141
    %1263 = vmatprep.subr.bf16.mxu0 %v1146
    %1264 = vmatpush1.bf16.msra.mxu0 %v1145
    %1265 = vmatprep.subr.bf16.mxu0 %v1150
    %1266 = vmatpush1.bf16.msra.mxu0 %v1149
    %1267 = vmatprep.subr.bf16.mxu0 %v1154
    %1268 = vmatpush1.bf16.msra.mxu0 %v1153
    %1269 = vmatprep.subr.bf16.mxu0 %v1158
    %1270 = vmatpush1.bf16.msra.mxu0 %v1157
    %1271 = vmatprep.subr.bf16.mxu0 %v1162
    %1272 = vmatpush1.bf16.msra.mxu0 %v1161
    %1273 = vmatprep.subr.bf16.mxu0 %v1166
    %1274 = vmatpush1.bf16.msra.mxu0 %v1165
    %1275 = vmatprep.subr.bf16.mxu0 %v1170
    %1276 = vmatpush1.bf16.msra.mxu0 %v1169
    %1277 = vmatprep.subr.bf16.mxu0 %v1174
    %1278 = vmatpush1.bf16.msra.mxu0 %v1173
    %1279 = vmatprep.subr.bf16.mxu0 %v1178
    %1280 = vmatpush1.bf16.msra.mxu0 %v1177
    %1281 = vmatprep.subr.bf16.mxu0 %v1182
    %1282 = vmatpush1.bf16.msra.mxu0 %v1181
    %1283 = vmatprep.subr.bf16.mxu0 %v1186
    %1284 = vmatpush1.bf16.msra.mxu0 %v1185
    %1285 = vmatprep.mubr.bf16.mxu0 %v868
    %1286 = vmatmul.mubr.bf16.gmra.mrb[0].mxu0 %v867
    %v1287 = vpop.f32.mrb[0].mxu0
    %v1288 = vadd.f32 %v536, %v1287
    %v1289 = vpop.f32.mrb[0].mxu0
    %v1290 = vadd.f32 %v540, %v1289
    %v1291 = vpop.f32.mrb[0].mxu0
    %v1292 = vpop.f32.mrb[0].mxu0
    %1293 = vdwg.mxu0
    %1294 = vmatprep.subr.bf16.mxu0 %v1128
    %1295 = vmatpush1.bf16.msra.mxu0 %v1127
    %1296 = vmatprep.subr.bf16.mxu0 %v1132
    %1297 = vmatpush1.bf16.msra.mxu0 %v1131
    %1298 = vmatprep.subr.bf16.mxu0 %v1136
    %1299 = vmatpush1.bf16.msra.mxu0 %v1135
    %1300 = vmatprep.subr.bf16.mxu0 %v1140
    %1301 = vmatpush1.bf16.msra.mxu0 %v1139
    %1302 = vmatprep.subr.bf16.mxu0 %v1144
    %1303 = vmatpush1.bf16.msra.mxu0 %v1143
    %1304 = vmatprep.subr.bf16.mxu0 %v1148
    %1305 = vmatpush1.bf16.msra.mxu0 %v1147
    %1306 = vmatprep.subr.bf16.mxu0 %v1152
    %1307 = vmatpush1.bf16.msra.mxu0 %v1151
    %1308 = vmatprep.subr.bf16.mxu0 %v1156
    %1309 = vmatpush1.bf16.msra.mxu0 %v1155
    %1310 = vmatprep.subr.bf16.mxu0 %v1160
    %1311 = vmatpush1.bf16.msra.mxu0 %v1159
    %1312 = vmatprep.subr.bf16.mxu0 %v1164
    %1313 = vmatpush1.bf16.msra.mxu0 %v1163
    %1314 = vmatprep.subr.bf16.mxu0 %v1168
    %1315 = vmatpush1.bf16.msra.mxu0 %v1167
    %1316 = vmatprep.subr.bf16.mxu0 %v1172
    %1317 = vmatpush1.bf16.msra.mxu0 %v1171
    %1318 = vmatprep.subr.bf16.mxu0 %v1176
    %1319 = vmatpush1.bf16.msra.mxu0 %v1175
    %1320 = vmatprep.subr.bf16.mxu0 %v1180
    %1321 = vmatpush1.bf16.msra.mxu0 %v1179
    %1322 = vmatprep.subr.bf16.mxu0 %v1184
    %1323 = vmatpush1.bf16.msra.mxu0 %v1183
    %1324 = vmatprep.subr.bf16.mxu0 %v1188
    %1325 = vmatpush1.bf16.msra.mxu0 %v1187
    %1326 = vmatprep.mubr.bf16.mxu0 %v868
    %1327 = vmatmul.mubr.bf16.gmra.mrb[0].mxu0 %v867
    %v1328 = vpop.f32.mrb[0].mxu0
    %v1329 = vadd.f32 %v544, %v1328
    %v1330 = vpop.f32.mrb[0].mxu0
    %v1331 = vadd.f32 %v548, %v1330
    %v1332 = vpop.f32.mrb[0].mxu0
    %v1333 = vpop.f32.mrb[0].mxu0
    %1334 = vdwg.mxu0
    %v1335 = vxor.u32 %v1288, 2147483648
    %v1336 = vmul.f32 %v1335, 1.442695
    %v1337 = vpow.pop %v1336
    %v1338 = vadd.f32 %v1337, 1.0
    %v1339 = vrcp.pop %v1338
    %v1340 = vmul.f32 1.0, %v1339
    %v1341 = vxor.u32 %v1290, 2147483648
    %v1342 = vmul.f32 %v1341, 1.442695
    %v1343 = vpow.pop %v1342
    %v1344 = vadd.f32 %v1343, 1.0
    %v1345 = vrcp.pop %v1344
    %v1346 = vmul.f32 1.0, %v1345
    %v1347 = vtanh.pop %v1329
    %v1348 = vxor.u32 %v1331, 2147483648
    %v1349 = vmul.f32 %v1348, 1.442695
    %v1350 = vpow.pop %v1349
    %v1351 = vadd.f32 %v1350, 1.0
    %v1352 = vrcp.pop %v1351
    %v1353 = vmul.f32 1.0, %v1352
    %v1354 = vmul.f32 %v1346, %v556
    %v1355 = vmul.f32 %v1340, %v1347
    %v1356 = vadd.f32 %v1354, %v1355
    %v1357 = vtanh.pop %v1356
    %v1358 = vmul.f32 %v1353, %v1357
    %1359 = vst [vmem:[#allocation3] sm:$0xff] %v1358
    %s1360 = smul.u32 1, 4
    %s1361 = smul.addr %s1360, 8
    %s1362 = scalar_lea.vmem [#allocation2], %s1361
    %v1363 = vld [vmem:[%s1362] sm:$0xff]
    %v1364 = vld [vmem:[%s1362 + $0x8] sm:$0xff]
    %v1365 = vld [vmem:[%s1362 + $0x10] sm:$0xff]
    %v1366 = vld [vmem:[%s1362 + $0x18] sm:$0xff]
    %v1367 = vld [vmem:[#allocation13] sm:$0xff]
    %v1368 = vld [vmem:[#allocation13 + $0x8] sm:$0xff]
    %v1369 = vld [vmem:[#allocation13 + $0x10] sm:$0xff]
    %v1370 = vld [vmem:[#allocation13 + $0x18] sm:$0xff]
    %v1371 = vld [vmem:[#allocation13 + $0x20] sm:$0xff]
    %v1372 = vld [vmem:[#allocation13 + $0x28] sm:$0xff]
    %v1373 = vld [vmem:[#allocation13 + $0x30] sm:$0xff]
    %v1374 = vld [vmem:[#allocation13 + $0x38] sm:$0xff]
    %v1375 = vld [vmem:[#allocation13 + $0x40] sm:$0xff]
    %v1376 = vld [vmem:[#allocation13 + $0x48] sm:$0xff]
    %v1377 = vld [vmem:[#allocation13 + $0x50] sm:$0xff]
    %v1378 = vld [vmem:[#allocation13 + $0x58] sm:$0xff]
    %v1379 = vld [vmem:[#allocation13 + $0x60] sm:$0xff]
    %v1380 = vld [vmem:[#allocation13 + $0x68] sm:$0xff]
    %v1381 = vld [vmem:[#allocation13 + $0x70] sm:$0xff]
    %v1382 = vld [vmem:[#allocation13 + $0x78] sm:$0xff]
    %v1383 = vld [vmem:[#allocation13 + $0x80] sm:$0xff]
    %v1384 = vld [vmem:[#allocation13 + $0x88] sm:$0xff]
    %v1385 = vld [vmem:[#allocation13 + $0x90] sm:$0xff]
    %v1386 = vld [vmem:[#allocation13 + $0x98] sm:$0xff]
    %v1387 = vld [vmem:[#allocation13 + $0xa0] sm:$0xff]
    %v1388 = vld [vmem:[#allocation13 + $0xa8] sm:$0xff]
    %v1389 = vld [vmem:[#allocation13 + $0xb0] sm:$0xff]
    %v1390 = vld [vmem:[#allocation13 + $0xb8] sm:$0xff]
    %v1391 = vld [vmem:[#allocation13 + $0xc0] sm:$0xff]
    %v1392 = vld [vmem:[#allocation13 + $0xc8] sm:$0xff]
    %v1393 = vld [vmem:[#allocation13 + $0xd0] sm:$0xff]
    %v1394 = vld [vmem:[#allocation13 + $0xd8] sm:$0xff]
    %v1395 = vld [vmem:[#allocation13 + $0xe0] sm:$0xff]
    %v1396 = vld [vmem:[#allocation13 + $0xe8] sm:$0xff]
    %v1397 = vld [vmem:[#allocation13 + $0xf0] sm:$0xff]
    %v1398 = vld [vmem:[#allocation13 + $0xf8] sm:$0xff]
    %v1431 = vunpack.c.l.b16 %v1367
    %v1432 = vunpack.c.h.b16 %v1367
    %v1433 = vunpack.c.l.b16 %v1368
    %v1434 = vunpack.c.h.b16 %v1368
    %v1435 = vunpack.c.l.b16 %v1369
    %v1436 = vunpack.c.h.b16 %v1369
    %v1437 = vunpack.c.l.b16 %v1370
    %v1438 = vunpack.c.h.b16 %v1370
    %v1439 = vunpack.c.l.b16 %v1371
    %v1440 = vunpack.c.h.b16 %v1371
    %v1441 = vunpack.c.l.b16 %v1372
    %v1442 = vunpack.c.h.b16 %v1372
    %v1443 = vunpack.c.l.b16 %v1373
    %v1444 = vunpack.c.h.b16 %v1373
    %v1445 = vunpack.c.l.b16 %v1374
    %v1446 = vunpack.c.h.b16 %v1374
    %v1447 = vunpack.c.l.b16 %v1375
    %v1448 = vunpack.c.h.b16 %v1375
    %v1449 = vunpack.c.l.b16 %v1376
    %v1450 = vunpack.c.h.b16 %v1376
    %v1451 = vunpack.c.l.b16 %v1377
    %v1452 = vunpack.c.h.b16 %v1377
    %v1453 = vunpack.c.l.b16 %v1378
    %v1454 = vunpack.c.h.b16 %v1378
    %v1455 = vunpack.c.l.b16 %v1379
    %v1456 = vunpack.c.h.b16 %v1379
    %v1457 = vunpack.c.l.b16 %v1380
    %v1458 = vunpack.c.h.b16 %v1380
    %v1459 = vunpack.c.l.b16 %v1381
    %v1460 = vunpack.c.h.b16 %v1381
    %v1461 = vunpack.c.l.b16 %v1382
    %v1462 = vunpack.c.h.b16 %v1382
    %v1463 = vunpack.c.l.b16 %v1383
    %v1464 = vunpack.c.h.b16 %v1383
    %v1465 = vunpack.c.l.b16 %v1384
    %v1466 = vunpack.c.h.b16 %v1384
    %v1467 = vunpack.c.l.b16 %v1385
    %v1468 = vunpack.c.h.b16 %v1385
    %v1469 = vunpack.c.l.b16 %v1386
    %v1470 = vunpack.c.h.b16 %v1386
    %v1471 = vunpack.c.l.b16 %v1387
    %v1472 = vunpack.c.h.b16 %v1387
    %v1473 = vunpack.c.l.b16 %v1388
    %v1474 = vunpack.c.h.b16 %v1388
    %v1475 = vunpack.c.l.b16 %v1389
    %v1476 = vunpack.c.h.b16 %v1389
    %v1477 = vunpack.c.l.b16 %v1390
    %v1478 = vunpack.c.h.b16 %v1390
    %v1479 = vunpack.c.l.b16 %v1391
    %v1480 = vunpack.c.h.b16 %v1391
    %v1481 = vunpack.c.l.b16 %v1392
    %v1482 = vunpack.c.h.b16 %v1392
    %v1483 = vunpack.c.l.b16 %v1393
    %v1484 = vunpack.c.h.b16 %v1393
    %v1485 = vunpack.c.l.b16 %v1394
    %v1486 = vunpack.c.h.b16 %v1394
    %v1487 = vunpack.c.l.b16 %v1395
    %v1488 = vunpack.c.h.b16 %v1395
    %v1489 = vunpack.c.l.b16 %v1396
    %v1490 = vunpack.c.h.b16 %v1396
    %v1491 = vunpack.c.l.b16 %v1397
    %v1492 = vunpack.c.h.b16 %v1397
    %v1493 = vunpack.c.l.b16 %v1398
    %v1494 = vunpack.c.h.b16 %v1398
    %v1495 = vpack.c.b16 %v1435, %v1431
    %v1496 = vpack.c.b16 %v1436, %v1432
    %v1497 = vpack.c.b16 %v1437, %v1433
    %v1498 = vpack.c.b16 %v1438, %v1434
    %v1499 = vpack.c.b16 %v1443, %v1439
    %v1500 = vpack.c.b16 %v1444, %v1440
    %v1501 = vpack.c.b16 %v1445, %v1441
    %v1502 = vpack.c.b16 %v1446, %v1442
    %v1503 = vpack.c.b16 %v1451, %v1447
    %v1504 = vpack.c.b16 %v1452, %v1448
    %v1505 = vpack.c.b16 %v1453, %v1449
    %v1506 = vpack.c.b16 %v1454, %v1450
    %v1507 = vpack.c.b16 %v1459, %v1455
    %v1508 = vpack.c.b16 %v1460, %v1456
    %v1509 = vpack.c.b16 %v1461, %v1457
    %v1510 = vpack.c.b16 %v1462, %v1458
    %v1511 = vpack.c.b16 %v1467, %v1463
    %v1512 = vpack.c.b16 %v1468, %v1464
    %v1513 = vpack.c.b16 %v1469, %v1465
    %v1514 = vpack.c.b16 %v1470, %v1466
    %v1515 = vpack.c.b16 %v1475, %v1471
    %v1516 = vpack.c.b16 %v1476, %v1472
    %v1517 = vpack.c.b16 %v1477, %v1473
    %v1518 = vpack.c.b16 %v1478, %v1474
    %v1519 = vpack.c.b16 %v1483, %v1479
    %v1520 = vpack.c.b16 %v1484, %v1480
    %v1521 = vpack.c.b16 %v1485, %v1481
    %v1522 = vpack.c.b16 %v1486, %v1482
    %v1523 = vpack.c.b16 %v1491, %v1487
    %v1524 = vpack.c.b16 %v1492, %v1488
    %v1525 = vpack.c.b16 %v1493, %v1489
    %v1526 = vpack.c.b16 %v1494, %v1490
    %1559 = vmatprep.subr.bf16.mxu0 %v1496
    %1560 = vmatpush1.bf16.msra.mxu0 %v1495
    %1561 = vmatprep.subr.bf16.mxu0 %v1500
    %1562 = vmatpush1.bf16.msra.mxu0 %v1499
    %1563 = vmatprep.subr.bf16.mxu0 %v1504
    %1564 = vmatpush1.bf16.msra.mxu0 %v1503
    %1565 = vmatprep.subr.bf16.mxu0 %v1508
    %1566 = vmatpush1.bf16.msra.mxu0 %v1507
    %1567 = vmatprep.subr.bf16.mxu0 %v1512
    %1568 = vmatpush1.bf16.msra.mxu0 %v1511
    %1569 = vmatprep.subr.bf16.mxu0 %v1516
    %1570 = vmatpush1.bf16.msra.mxu0 %v1515
    %1571 = vmatprep.subr.bf16.mxu0 %v1520
    %1572 = vmatpush1.bf16.msra.mxu0 %v1519
    %1573 = vmatprep.subr.bf16.mxu0 %v1524
    %1574 = vmatpush1.bf16.msra.mxu0 %v1523
    %1575 = vmatprep.subr.bf16.mxu0 0
    %1576 = vmatpush1.bf16.msra.mxu0 0
    %1577 = vmatprep.subr.bf16.mxu0 0
    %1578 = vmatpush1.bf16.msra.mxu0 0
    %1579 = vmatprep.subr.bf16.mxu0 0
    %1580 = vmatpush1.bf16.msra.mxu0 0
    %1581 = vmatprep.subr.bf16.mxu0 0
    %1582 = vmatpush1.bf16.msra.mxu0 0
    %1583 = vmatprep.subr.bf16.mxu0 0
    %1584 = vmatpush1.bf16.msra.mxu0 0
    %1585 = vmatprep.subr.bf16.mxu0 0
    %1586 = vmatpush1.bf16.msra.mxu0 0
    %1587 = vmatprep.subr.bf16.mxu0 0
    %1588 = vmatpush1.bf16.msra.mxu0 0
    %1589 = vmatprep.subr.bf16.mxu0 0
    %1590 = vmatpush1.bf16.msra.mxu0 0
    %1591 = vmatprep.mubr.bf16.mxu0 0
    %1592 = vmatmul.mubr.bf16.gmra.mrb[0].mxu0 %v867
    %v1593 = vpop.f32.mrb[0].mxu0
    %v1594 = vadd.f32 0.0, %v1593
    %v1595 = vpop.f32.mrb[0].mxu0
    %v1596 = vadd.f32 0.0, %v1595
    %v1597 = vpop.f32.mrb[0].mxu0
    %v1598 = vpop.f32.mrb[0].mxu0
    %1599 = vdwg.mxu0
    %1600 = vmatprep.subr.bf16.mxu0 %v1498
    %1601 = vmatpush1.bf16.msra.mxu0 %v1497
    %1602 = vmatprep.subr.bf16.mxu0 %v1502
    %1603 = vmatpush1.bf16.msra.mxu0 %v1501
    %1604 = vmatprep.subr.bf16.mxu0 %v1506
    %1605 = vmatpush1.bf16.msra.mxu0 %v1505
    %1606 = vmatprep.subr.bf16.mxu0 %v1510
    %1607 = vmatpush1.bf16.msra.mxu0 %v1509
    %1608 = vmatprep.subr.bf16.mxu0 %v1514
    %1609 = vmatpush1.bf16.msra.mxu0 %v1513
    %1610 = vmatprep.subr.bf16.mxu0 %v1518
    %1611 = vmatpush1.bf16.msra.mxu0 %v1517
    %1612 = vmatprep.subr.bf16.mxu0 %v1522
    %1613 = vmatpush1.bf16.msra.mxu0 %v1521
    %1614 = vmatprep.subr.bf16.mxu0 %v1526
    %1615 = vmatpush1.bf16.msra.mxu0 %v1525
    %1616 = vmatprep.subr.bf16.mxu0 0
    %1617 = vmatpush1.bf16.msra.mxu0 0
    %1618 = vmatprep.subr.bf16.mxu0 0
    %1619 = vmatpush1.bf16.msra.mxu0 0
    %1620 = vmatprep.subr.bf16.mxu0 0
    %1621 = vmatpush1.bf16.msra.mxu0 0
    %1622 = vmatprep.subr.bf16.mxu0 0
    %1623 = vmatpush1.bf16.msra.mxu0 0
    %1624 = vmatprep.subr.bf16.mxu0 0
    %1625 = vmatpush1.bf16.msra.mxu0 0
    %1626 = vmatprep.subr.bf16.mxu0 0
    %1627 = vmatpush1.bf16.msra.mxu0 0
    %1628 = vmatprep.subr.bf16.mxu0 0
    %1629 = vmatpush1.bf16.msra.mxu0 0
    %1630 = vmatprep.subr.bf16.mxu0 0
    %1631 = vmatpush1.bf16.msra.mxu0 0
    %1632 = vmatprep.mubr.bf16.mxu0 0
    %1633 = vmatmul.mubr.bf16.gmra.mrb[0].mxu0 %v867
    %v1634 = vpop.f32.mrb[0].mxu0
    %v1635 = vadd.f32 0.0, %v1634
    %v1636 = vpop.f32.mrb[0].mxu0
    %v1637 = vadd.f32 0.0, %v1636
    %v1638 = vpop.f32.mrb[0].mxu0
    %v1639 = vpop.f32.mrb[0].mxu0
    %1640 = vdwg.mxu0
    %v1641 = vadd.f32 %v1363, %v1594
    %v1642 = vadd.f32 %v1364, %v1596
    %v1643 = vadd.f32 %v1365, %v1635
    %v1644 = vadd.f32 %v1366, %v1637
    %v1645 = vxor.u32 %v1641, 2147483648
    %v1646 = vmul.f32 %v1645, 1.442695
    %v1647 = vpow.pop %v1646
    %v1648 = vadd.f32 %v1647, 1.0
    %v1649 = vrcp.pop %v1648
    %v1650 = vmul.f32 1.0, %v1649
    %v1651 = vxor.u32 %v1642, 2147483648
    %v1652 = vmul.f32 %v1651, 1.442695
    %v1653 = vpow.pop %v1652
    %v1654 = vadd.f32 %v1653, 1.0
    %v1655 = vrcp.pop %v1654
    %v1656 = vmul.f32 1.0, %v1655
    %v1657 = vtanh.pop %v1643
    %v1658 = vxor.u32 %v1644, 2147483648
    %v1659 = vmul.f32 %v1658, 1.442695
    %v1660 = vpow.pop %v1659
    %v1661 = vadd.f32 %v1660, 1.0
    %v1662 = vrcp.pop %v1661
    %v1663 = vmul.f32 1.0, %v1662
    %v1664 = vmul.f32 %v1656, %v864
    %v1665 = vmul.f32 %v1650, %v1657
    %v1666 = vadd.f32 %v1664, %v1665
    %v1667 = vtanh.pop %v1666
    %v1668 = vmul.f32 %v1663, %v1667
    %v1669 = vpack.c.bf16 %v1668, %v1668
    %v1670 = vpack.c.bf16 %v1358, %v1358
    %v1671 = vld [vmem:[#allocation14] sm:$0xff]
    %v1672 = vld [vmem:[#allocation14 + $0x8] sm:$0xff]
    %v1673 = vld [vmem:[#allocation14 + $0x10] sm:$0xff]
    %v1674 = vld [vmem:[#allocation14 + $0x18] sm:$0xff]
    %v1675 = vld [vmem:[#allocation14 + $0x20] sm:$0xff]
    %v1676 = vld [vmem:[#allocation14 + $0x28] sm:$0xff]
    %v1677 = vld [vmem:[#allocation14 + $0x30] sm:$0xff]
    %v1678 = vld [vmem:[#allocation14 + $0x38] sm:$0xff]
    %v1679 = vld [vmem:[#allocation14 + $0x40] sm:$0xff]
    %v1680 = vld [vmem:[#allocation14 + $0x48] sm:$0xff]
    %v1681 = vld [vmem:[#allocation14 + $0x50] sm:$0xff]
    %v1682 = vld [vmem:[#allocation14 + $0x58] sm:$0xff]
    %v1683 = vld [vmem:[#allocation14 + $0x60] sm:$0xff]
    %v1684 = vld [vmem:[#allocation14 + $0x68] sm:$0xff]
    %v1685 = vld [vmem:[#allocation14 + $0x70] sm:$0xff]
    %v1686 = vld [vmem:[#allocation14 + $0x78] sm:$0xff]
    %v1687 = vld [vmem:[#allocation14 + $0x80] sm:$0xff]
    %v1688 = vld [vmem:[#allocation14 + $0x88] sm:$0xff]
    %v1689 = vld [vmem:[#allocation14 + $0x90] sm:$0xff]
    %v1690 = vld [vmem:[#allocation14 + $0x98] sm:$0xff]
    %v1691 = vld [vmem:[#allocation14 + $0xa0] sm:$0xff]
    %v1692 = vld [vmem:[#allocation14 + $0xa8] sm:$0xff]
    %v1693 = vld [vmem:[#allocation14 + $0xb0] sm:$0xff]
    %v1694 = vld [vmem:[#allocation14 + $0xb8] sm:$0xff]
    %v1695 = vld [vmem:[#allocation14 + $0xc0] sm:$0xff]
    %v1696 = vld [vmem:[#allocation14 + $0xc8] sm:$0xff]
    %v1697 = vld [vmem:[#allocation14 + $0xd0] sm:$0xff]
    %v1698 = vld [vmem:[#allocation14 + $0xd8] sm:$0xff]
    %v1699 = vld [vmem:[#allocation14 + $0xe0] sm:$0xff]
    %v1700 = vld [vmem:[#allocation14 + $0xe8] sm:$0xff]
    %v1701 = vld [vmem:[#allocation14 + $0xf0] sm:$0xff]
    %v1702 = vld [vmem:[#allocation14 + $0xf8] sm:$0xff]
    %v1703 = vld [vmem:[#allocation14 + $0x100] sm:$0xff]
    %v1704 = vld [vmem:[#allocation14 + $0x108] sm:$0xff]
    %v1705 = vld [vmem:[#allocation14 + $0x110] sm:$0xff]
    %v1706 = vld [vmem:[#allocation14 + $0x118] sm:$0xff]
    %v1707 = vld [vmem:[#allocation14 + $0x120] sm:$0xff]
    %v1708 = vld [vmem:[#allocation14 + $0x128] sm:$0xff]
    %v1709 = vld [vmem:[#allocation14 + $0x130] sm:$0xff]
    %v1710 = vld [vmem:[#allocation14 + $0x138] sm:$0xff]
    %v1711 = vld [vmem:[#allocation14 + $0x140] sm:$0xff]
    %v1712 = vld [vmem:[#allocation14 + $0x148] sm:$0xff]
    %v1713 = vld [vmem:[#allocation14 + $0x150] sm:$0xff]
    %v1714 = vld [vmem:[#allocation14 + $0x158] sm:$0xff]
    %v1715 = vld [vmem:[#allocation14 + $0x160] sm:$0xff]
    %v1716 = vld [vmem:[#allocation14 + $0x168] sm:$0xff]
    %v1717 = vld [vmem:[#allocation14 + $0x170] sm:$0xff]
    %v1718 = vld [vmem:[#allocation14 + $0x178] sm:$0xff]
    %v1719 = vld [vmem:[#allocation14 + $0x180] sm:$0xff]
    %v1720 = vld [vmem:[#allocation14 + $0x188] sm:$0xff]
    %v1721 = vld [vmem:[#allocation14 + $0x190] sm:$0xff]
    %v1722 = vld [vmem:[#allocation14 + $0x198] sm:$0xff]
    %v1723 = vld [vmem:[#allocation14 + $0x1a0] sm:$0xff]
    %v1724 = vld [vmem:[#allocation14 + $0x1a8] sm:$0xff]
    %v1725 = vld [vmem:[#allocation14 + $0x1b0] sm:$0xff]
    %v1726 = vld [vmem:[#allocation14 + $0x1b8] sm:$0xff]
    %v1727 = vld [vmem:[#allocation14 + $0x1c0] sm:$0xff]
    %v1728 = vld [vmem:[#allocation14 + $0x1c8] sm:$0xff]
    %v1729 = vld [vmem:[#allocation14 + $0x1d0] sm:$0xff]
    %v1730 = vld [vmem:[#allocation14 + $0x1d8] sm:$0xff]
    %v1731 = vld [vmem:[#allocation14 + $0x1e0] sm:$0xff]
    %v1732 = vld [vmem:[#allocation14 + $0x1e8] sm:$0xff]
    %v1733 = vld [vmem:[#allocation14 + $0x1f0] sm:$0xff]
    %v1734 = vld [vmem:[#allocation14 + $0x1f8] sm:$0xff]
    %v1799 = vunpack.c.l.b16 %v1671
    %v1800 = vunpack.c.h.b16 %v1671
    %v1801 = vunpack.c.l.b16 %v1672
    %v1802 = vunpack.c.h.b16 %v1672
    %v1803 = vunpack.c.l.b16 %v1673
    %v1804 = vunpack.c.h.b16 %v1673
    %v1805 = vunpack.c.l.b16 %v1674
    %v1806 = vunpack.c.h.b16 %v1674
    %v1807 = vunpack.c.l.b16 %v1675
    %v1808 = vunpack.c.h.b16 %v1675
    %v1809 = vunpack.c.l.b16 %v1676
    %v1810 = vunpack.c.h.b16 %v1676
    %v1811 = vunpack.c.l.b16 %v1677
    %v1812 = vunpack.c.h.b16 %v1677
    %v1813 = vunpack.c.l.b16 %v1678
    %v1814 = vunpack.c.h.b16 %v1678
    %v1815 = vunpack.c.l.b16 %v1679
    %v1816 = vunpack.c.h.b16 %v1679
    %v1817 = vunpack.c.l.b16 %v1680
    %v1818 = vunpack.c.h.b16 %v1680
    %v1819 = vunpack.c.l.b16 %v1681
    %v1820 = vunpack.c.h.b16 %v1681
    %v1821 = vunpack.c.l.b16 %v1682
    %v1822 = vunpack.c.h.b16 %v1682
    %v1823 = vunpack.c.l.b16 %v1683
    %v1824 = vunpack.c.h.b16 %v1683
    %v1825 = vunpack.c.l.b16 %v1684
    %v1826 = vunpack.c.h.b16 %v1684
    %v1827 = vunpack.c.l.b16 %v1685
    %v1828 = vunpack.c.h.b16 %v1685
    %v1829 = vunpack.c.l.b16 %v1686
    %v1830 = vunpack.c.h.b16 %v1686
    %v1831 = vunpack.c.l.b16 %v1687
    %v1832 = vunpack.c.h.b16 %v1687
    %v1833 = vunpack.c.l.b16 %v1688
    %v1834 = vunpack.c.h.b16 %v1688
    %v1835 = vunpack.c.l.b16 %v1689
    %v1836 = vunpack.c.h.b16 %v1689
    %v1837 = vunpack.c.l.b16 %v1690
    %v1838 = vunpack.c.h.b16 %v1690
    %v1839 = vunpack.c.l.b16 %v1691
    %v1840 = vunpack.c.h.b16 %v1691
    %v1841 = vunpack.c.l.b16 %v1692
    %v1842 = vunpack.c.h.b16 %v1692
    %v1843 = vunpack.c.l.b16 %v1693
    %v1844 = vunpack.c.h.b16 %v1693
    %v1845 = vunpack.c.l.b16 %v1694
    %v1846 = vunpack.c.h.b16 %v1694
    %v1847 = vunpack.c.l.b16 %v1695
    %v1848 = vunpack.c.h.b16 %v1695
    %v1849 = vunpack.c.l.b16 %v1696
    %v1850 = vunpack.c.h.b16 %v1696
    %v1851 = vunpack.c.l.b16 %v1697
    %v1852 = vunpack.c.h.b16 %v1697
    %v1853 = vunpack.c.l.b16 %v1698
    %v1854 = vunpack.c.h.b16 %v1698
    %v1855 = vunpack.c.l.b16 %v1699
    %v1856 = vunpack.c.h.b16 %v1699
    %v1857 = vunpack.c.l.b16 %v1700
    %v1858 = vunpack.c.h.b16 %v1700
    %v1859 = vunpack.c.l.b16 %v1701
    %v1860 = vunpack.c.h.b16 %v1701
    %v1861 = vunpack.c.l.b16 %v1702
    %v1862 = vunpack.c.h.b16 %v1702
    %v1863 = vunpack.c.l.b16 %v1703
    %v1864 = vunpack.c.h.b16 %v1703
    %v1865 = vunpack.c.l.b16 %v1704
    %v1866 = vunpack.c.h.b16 %v1704
    %v1867 = vunpack.c.l.b16 %v1705
    %v1868 = vunpack.c.h.b16 %v1705
    %v1869 = vunpack.c.l.b16 %v1706
    %v1870 = vunpack.c.h.b16 %v1706
    %v1871 = vunpack.c.l.b16 %v1707
    %v1872 = vunpack.c.h.b16 %v1707
    %v1873 = vunpack.c.l.b16 %v1708
    %v1874 = vunpack.c.h.b16 %v1708
    %v1875 = vunpack.c.l.b16 %v1709
    %v1876 = vunpack.c.h.b16 %v1709
    %v1877 = vunpack.c.l.b16 %v1710
    %v1878 = vunpack.c.h.b16 %v1710
    %v1879 = vunpack.c.l.b16 %v1711
    %v1880 = vunpack.c.h.b16 %v1711
    %v1881 = vunpack.c.l.b16 %v1712
    %v1882 = vunpack.c.h.b16 %v1712
    %v1883 = vunpack.c.l.b16 %v1713
    %v1884 = vunpack.c.h.b16 %v1713
    %v1885 = vunpack.c.l.b16 %v1714
    %v1886 = vunpack.c.h.b16 %v1714
    %v1887 = vunpack.c.l.b16 %v1715
    %v1888 = vunpack.c.h.b16 %v1715
    %v1889 = vunpack.c.l.b16 %v1716
    %v1890 = vunpack.c.h.b16 %v1716
    %v1891 = vunpack.c.l.b16 %v1717
    %v1892 = vunpack.c.h.b16 %v1717
    %v1893 = vunpack.c.l.b16 %v1718
    %v1894 = vunpack.c.h.b16 %v1718
    %v1895 = vunpack.c.l.b16 %v1719
    %v1896 = vunpack.c.h.b16 %v1719
    %v1897 = vunpack.c.l.b16 %v1720
    %v1898 = vunpack.c.h.b16 %v1720
    %v1899 = vunpack.c.l.b16 %v1721
    %v1900 = vunpack.c.h.b16 %v1721
    %v1901 = vunpack.c.l.b16 %v1722
    %v1902 = vunpack.c.h.b16 %v1722
    %v1903 = vunpack.c.l.b16 %v1723
    %v1904 = vunpack.c.h.b16 %v1723
    %v1905 = vunpack.c.l.b16 %v1724
    %v1906 = vunpack.c.h.b16 %v1724
    %v1907 = vunpack.c.l.b16 %v1725
    %v1908 = vunpack.c.h.b16 %v1725
    %v1909 = vunpack.c.l.b16 %v1726
    %v1910 = vunpack.c.h.b16 %v1726
    %v1911 = vunpack.c.l.b16 %v1727
    %v1912 = vunpack.c.h.b16 %v1727
    %v1913 = vunpack.c.l.b16 %v1728
    %v1914 = vunpack.c.h.b16 %v1728
    %v1915 = vunpack.c.l.b16 %v1729
    %v1916 = vunpack.c.h.b16 %v1729
    %v1917 = vunpack.c.l.b16 %v1730
    %v1918 = vunpack.c.h.b16 %v1730
    %v1919 = vunpack.c.l.b16 %v1731
    %v1920 = vunpack.c.h.b16 %v1731
    %v1921 = vunpack.c.l.b16 %v1732
    %v1922 = vunpack.c.h.b16 %v1732
    %v1923 = vunpack.c.l.b16 %v1733
    %v1924 = vunpack.c.h.b16 %v1733
    %v1925 = vunpack.c.l.b16 %v1734
    %v1926 = vunpack.c.h.b16 %v1734
    %v1927 = vpack.c.b16 %v1803, %v1799
    %v1928 = vpack.c.b16 %v1804, %v1800
    %v1929 = vpack.c.b16 %v1805, %v1801
    %v1930 = vpack.c.b16 %v1806, %v1802
    %v1931 = vpack.c.b16 %v1811, %v1807
    %v1932 = vpack.c.b16 %v1812, %v1808
    %v1933 = vpack.c.b16 %v1813, %v1809
    %v1934 = vpack.c.b16 %v1814, %v1810
    %v1935 = vpack.c.b16 %v1819, %v1815
    %v1936 = vpack.c.b16 %v1820, %v1816
    %v1937 = vpack.c.b16 %v1821, %v1817
    %v1938 = vpack.c.b16 %v1822, %v1818
    %v1939 = vpack.c.b16 %v1827, %v1823
    %v1940 = vpack.c.b16 %v1828, %v1824
    %v1941 = vpack.c.b16 %v1829, %v1825
    %v1942 = vpack.c.b16 %v1830, %v1826
    %v1943 = vpack.c.b16 %v1835, %v1831
    %v1944 = vpack.c.b16 %v1836, %v1832
    %v1945 = vpack.c.b16 %v1837, %v1833
    %v1946 = vpack.c.b16 %v1838, %v1834
    %v1947 = vpack.c.b16 %v1843, %v1839
    %v1948 = vpack.c.b16 %v1844, %v1840
    %v1949 = vpack.c.b16 %v1845, %v1841
    %v1950 = vpack.c.b16 %v1846, %v1842
    %v1951 = vpack.c.b16 %v1851, %v1847
    %v1952 = vpack.c.b16 %v1852, %v1848
    %v1953 = vpack.c.b16 %v1853, %v1849
    %v1954 = vpack.c.b16 %v1854, %v1850
    %v1955 = vpack.c.b16 %v1859, %v1855
    %v1956 = vpack.c.b16 %v1860, %v1856
    %v1957 = vpack.c.b16 %v1861, %v1857
    %v1958 = vpack.c.b16 %v1862, %v1858
    %v1959 = vpack.c.b16 %v1867, %v1863
    %v1960 = vpack.c.b16 %v1868, %v1864
    %v1961 = vpack.c.b16 %v1869, %v1865
    %v1962 = vpack.c.b16 %v1870, %v1866
    %v1963 = vpack.c.b16 %v1875, %v1871
    %v1964 = vpack.c.b16 %v1876, %v1872
    %v1965 = vpack.c.b16 %v1877, %v1873
    %v1966 = vpack.c.b16 %v1878, %v1874
    %v1967 = vpack.c.b16 %v1883, %v1879
    %v1968 = vpack.c.b16 %v1884, %v1880
    %v1969 = vpack.c.b16 %v1885, %v1881
    %v1970 = vpack.c.b16 %v1886, %v1882
    %v1971 = vpack.c.b16 %v1891, %v1887
    %v1972 = vpack.c.b16 %v1892, %v1888
    %v1973 = vpack.c.b16 %v1893, %v1889
    %v1974 = vpack.c.b16 %v1894, %v1890
    %v1975 = vpack.c.b16 %v1899, %v1895
    %v1976 = vpack.c.b16 %v1900, %v1896
    %v1977 = vpack.c.b16 %v1901, %v1897
    %v1978 = vpack.c.b16 %v1902, %v1898
    %v1979 = vpack.c.b16 %v1907, %v1903
    %v1980 = vpack.c.b16 %v1908, %v1904
    %v1981 = vpack.c.b16 %v1909, %v1905
    %v1982 = vpack.c.b16 %v1910, %v1906
    %v1983 = vpack.c.b16 %v1915, %v1911
    %v1984 = vpack.c.b16 %v1916, %v1912
    %v1985 = vpack.c.b16 %v1917, %v1913
    %v1986 = vpack.c.b16 %v1918, %v1914
    %v1987 = vpack.c.b16 %v1923, %v1919
    %v1988 = vpack.c.b16 %v1924, %v1920
    %v1989 = vpack.c.b16 %v1925, %v1921
    %v1990 = vpack.c.b16 %v1926, %v1922
    %2055 = vmatprep.subr.bf16.mxu0 %v1928
    %2056 = vmatpush1.bf16.msra.mxu0 %v1927
    %2057 = vmatprep.subr.bf16.mxu0 %v1932
    %2058 = vmatpush1.bf16.msra.mxu0 %v1931
    %2059 = vmatprep.subr.bf16.mxu0 %v1936
    %2060 = vmatpush1.bf16.msra.mxu0 %v1935
    %2061 = vmatprep.subr.bf16.mxu0 %v1940
    %2062 = vmatpush1.bf16.msra.mxu0 %v1939
    %2063 = vmatprep.subr.bf16.mxu0 %v1944
    %2064 = vmatpush1.bf16.msra.mxu0 %v1943
    %2065 = vmatprep.subr.bf16.mxu0 %v1948
    %2066 = vmatpush1.bf16.msra.mxu0 %v1947
    %2067 = vmatprep.subr.bf16.mxu0 %v1952
    %2068 = vmatpush1.bf16.msra.mxu0 %v1951
    %2069 = vmatprep.subr.bf16.mxu0 %v1956
    %2070 = vmatpush1.bf16.msra.mxu0 %v1955
    %2071 = vmatprep.subr.bf16.mxu0 %v1960
    %2072 = vmatpush1.bf16.msra.mxu0 %v1959
    %2073 = vmatprep.subr.bf16.mxu0 %v1964
    %2074 = vmatpush1.bf16.msra.mxu0 %v1963
    %2075 = vmatprep.subr.bf16.mxu0 %v1968
    %2076 = vmatpush1.bf16.msra.mxu0 %v1967
    %2077 = vmatprep.subr.bf16.mxu0 %v1972
    %2078 = vmatpush1.bf16.msra.mxu0 %v1971
    %2079 = vmatprep.subr.bf16.mxu0 %v1976
    %2080 = vmatpush1.bf16.msra.mxu0 %v1975
    %2081 = vmatprep.subr.bf16.mxu0 %v1980
    %2082 = vmatpush1.bf16.msra.mxu0 %v1979
    %2083 = vmatprep.subr.bf16.mxu0 %v1984
    %2084 = vmatpush1.bf16.msra.mxu0 %v1983
    %2085 = vmatprep.subr.bf16.mxu0 %v1988
    %2086 = vmatpush1.bf16.msra.mxu0 %v1987
    %2087 = vmatprep.mubr.bf16.mxu0 %v1670
    %2088 = vmatmul.mubr.bf16.gmra.mrb[0].mxu0 %v1669
    %v2089 = vpop.f32.mrb[0].mxu0
    %v2090 = vadd.f32 %v536, %v2089
    %v2091 = vpop.f32.mrb[0].mxu0
    %v2092 = vadd.f32 %v540, %v2091
    %v2093 = vpop.f32.mrb[0].mxu0
    %v2094 = vpop.f32.mrb[0].mxu0
    %2095 = vdwg.mxu0
    %2096 = vmatprep.subr.bf16.mxu0 %v1930
    %2097 = vmatpush1.bf16.msra.mxu0 %v1929
    %2098 = vmatprep.subr.bf16.mxu0 %v1934
    %2099 = vmatpush1.bf16.msra.mxu0 %v1933
    %2100 = vmatprep.subr.bf16.mxu0 %v1938
    %2101 = vmatpush1.bf16.msra.mxu0 %v1937
    %2102 = vmatprep.subr.bf16.mxu0 %v1942
    %2103 = vmatpush1.bf16.msra.mxu0 %v1941
    %2104 = vmatprep.subr.bf16.mxu0 %v1946
    %2105 = vmatpush1.bf16.msra.mxu0 %v1945
    %2106 = vmatprep.subr.bf16.mxu0 %v1950
    %2107 = vmatpush1.bf16.msra.mxu0 %v1949
    %2108 = vmatprep.subr.bf16.mxu0 %v1954
    %2109 = vmatpush1.bf16.msra.mxu0 %v1953
    %2110 = vmatprep.subr.bf16.mxu0 %v1958
    %2111 = vmatpush1.bf16.msra.mxu0 %v1957
    %2112 = vmatprep.subr.bf16.mxu0 %v1962
    %2113 = vmatpush1.bf16.msra.mxu0 %v1961
    %2114 = vmatprep.subr.bf16.mxu0 %v1966
    %2115 = vmatpush1.bf16.msra.mxu0 %v1965
    %2116 = vmatprep.subr.bf16.mxu0 %v1970
    %2117 = vmatpush1.bf16.msra.mxu0 %v1969
    %2118 = vmatprep.subr.bf16.mxu0 %v1974
    %2119 = vmatpush1.bf16.msra.mxu0 %v1973
    %2120 = vmatprep.subr.bf16.mxu0 %v1978
    %2121 = vmatpush1.bf16.msra.mxu0 %v1977
    %2122 = vmatprep.subr.bf16.mxu0 %v1982
    %2123 = vmatpush1.bf16.msra.mxu0 %v1981
    %2124 = vmatprep.subr.bf16.mxu0 %v1986
    %2125 = vmatpush1.bf16.msra.mxu0 %v1985
    %2126 = vmatprep.subr.bf16.mxu0 %v1990
    %2127 = vmatpush1.bf16.msra.mxu0 %v1989
    %2128 = vmatprep.mubr.bf16.mxu0 %v1670
    %2129 = vmatmul.mubr.bf16.gmra.mrb[0].mxu0 %v1669
    %v2130 = vpop.f32.mrb[0].mxu0
    %v2131 = vadd.f32 %v544, %v2130
    %v2132 = vpop.f32.mrb[0].mxu0
    %v2133 = vadd.f32 %v548, %v2132
    %v2134 = vpop.f32.mrb[0].mxu0
    %v2135 = vpop.f32.mrb[0].mxu0
    %2136 = vdwg.mxu0
    %v2137 = vxor.u32 %v2090, 2147483648
    %v2138 = vmul.f32 %v2137, 1.442695
    %v2139 = vpow.pop %v2138
    %v2140 = vadd.f32 %v2139, 1.0
    %v2141 = vrcp.pop %v2140
    %v2142 = vmul.f32 1.0, %v2141
    %v2143 = vxor.u32 %v2092, 2147483648
    %v2144 = vmul.f32 %v2143, 1.442695
    %v2145 = vpow.pop %v2144
    %v2146 = vadd.f32 %v2145, 1.0
    %v2147 = vrcp.pop %v2146
    %v2148 = vmul.f32 1.0, %v2147
    %v2149 = vtanh.pop %v2131
    %v2150 = vxor.u32 %v2133, 2147483648
    %v2151 = vmul.f32 %v2150, 1.442695
    %v2152 = vpow.pop %v2151
    %v2153 = vadd.f32 %v2152, 1.0
    %v2154 = vrcp.pop %v2153
    %v2155 = vmul.f32 1.0, %v2154
    %v2156 = vmul.f32 %v2148, %v1356
    %v2157 = vmul.f32 %v2142, %v2149
    %v2158 = vadd.f32 %v2156, %v2157
    %v2159 = vtanh.pop %v2158
    %v2160 = vmul.f32 %v2155, %v2159
    %s2161 = scalar_lea.vmem [#allocation3], 8
    %2162 = vst [vmem:[%s2161] sm:$0xff] %v2160
    %s2163 = smul.u32 2, 4
    %s2164 = smul.addr %s2163, 8
    %s2165 = scalar_lea.vmem [#allocation2], %s2164
    %v2166 = vld [vmem:[%s2165] sm:$0xff]
    %v2167 = vld [vmem:[%s2165 + $0x8] sm:$0xff]
    %v2168 = vld [vmem:[%s2165 + $0x10] sm:$0xff]
    %v2169 = vld [vmem:[%s2165 + $0x18] sm:$0xff]
    %v2170 = vld [vmem:[#allocation13] sm:$0xff]
    %v2171 = vld [vmem:[#allocation13 + $0x8] sm:$0xff]
    %v2172 = vld [vmem:[#allocation13 + $0x10] sm:$0xff]
    %v2173 = vld [vmem:[#allocation13 + $0x18] sm:$0xff]
    %v2174 = vld [vmem:[#allocation13 + $0x20] sm:$0xff]
    %v2175 = vld [vmem:[#allocation13 + $0x28] sm:$0xff]
    %v2176 = vld [vmem:[#allocation13 + $0x30] sm:$0xff]
    %v2177 = vld [vmem:[#allocation13 + $0x38] sm:$0xff]
    %v2178 = vld [vmem:[#allocation13 + $0x40] sm:$0xff]
    %v2179 = vld [vmem:[#allocation13 + $0x48] sm:$0xff]
    %v2180 = vld [vmem:[#allocation13 + $0x50] sm:$0xff]
    %v2181 = vld [vmem:[#allocation13 + $0x58] sm:$0xff]
    %v2182 = vld [vmem:[#allocation13 + $0x60] sm:$0xff]
    %v2183 = vld [vmem:[#allocation13 + $0x68] sm:$0xff]
    %v2184 = vld [vmem:[#allocation13 + $0x70] sm:$0xff]
    %v2185 = vld [vmem:[#allocation13 + $0x78] sm:$0xff]
    %v2186 = vld [vmem:[#allocation13 + $0x80] sm:$0xff]
    %v2187 = vld [vmem:[#allocation13 + $0x88] sm:$0xff]
    %v2188 = vld [vmem:[#allocation13 + $0x90] sm:$0xff]
    %v2189 = vld [vmem:[#allocation13 + $0x98] sm:$0xff]
    %v2190 = vld [vmem:[#allocation13 + $0xa0] sm:$0xff]
    %v2191 = vld [vmem:[#allocation13 + $0xa8] sm:$0xff]
    %v2192 = vld [vmem:[#allocation13 + $0xb0] sm:$0xff]
    %v2193 = vld [vmem:[#allocation13 + $0xb8] sm:$0xff]
    %v2194 = vld [vmem:[#allocation13 + $0xc0] sm:$0xff]
    %v2195 = vld [vmem:[#allocation13 + $0xc8] sm:$0xff]
    %v2196 = vld [vmem:[#allocation13 + $0xd0] sm:$0xff]
    %v2197 = vld [vmem:[#allocation13 + $0xd8] sm:$0xff]
    %v2198 = vld [vmem:[#allocation13 + $0xe0] sm:$0xff]
    %v2199 = vld [vmem:[#allocation13 + $0xe8] sm:$0xff]
    %v2200 = vld [vmem:[#allocation13 + $0xf0] sm:$0xff]
    %v2201 = vld [vmem:[#allocation13 + $0xf8] sm:$0xff]
    %v2234 = vunpack.c.l.b16 %v2170
    %v2235 = vunpack.c.h.b16 %v2170
    %v2236 = vunpack.c.l.b16 %v2171
    %v2237 = vunpack.c.h.b16 %v2171
    %v2238 = vunpack.c.l.b16 %v2172
    %v2239 = vunpack.c.h.b16 %v2172
    %v2240 = vunpack.c.l.b16 %v2173
    %v2241 = vunpack.c.h.b16 %v2173
    %v2242 = vunpack.c.l.b16 %v2174
    %v2243 = vunpack.c.h.b16 %v2174
    %v2244 = vunpack.c.l.b16 %v2175
    %v2245 = vunpack.c.h.b16 %v2175
    %v2246 = vunpack.c.l.b16 %v2176
    %v2247 = vunpack.c.h.b16 %v2176
    %v2248 = vunpack.c.l.b16 %v2177
    %v2249 = vunpack.c.h.b16 %v2177
    %v2250 = vunpack.c.l.b16 %v2178
    %v2251 = vunpack.c.h.b16 %v2178
    %v2252 = vunpack.c.l.b16 %v2179
    %v2253 = vunpack.c.h.b16 %v2179
    %v2254 = vunpack.c.l.b16 %v2180
    %v2255 = vunpack.c.h.b16 %v2180
    %v2256 = vunpack.c.l.b16 %v2181
    %v2257 = vunpack.c.h.b16 %v2181
    %v2258 = vunpack.c.l.b16 %v2182
    %v2259 = vunpack.c.h.b16 %v2182
    %v2260 = vunpack.c.l.b16 %v2183
    %v2261 = vunpack.c.h.b16 %v2183
    %v2262 = vunpack.c.l.b16 %v2184
    %v2263 = vunpack.c.h.b16 %v2184
    %v2264 = vunpack.c.l.b16 %v2185
    %v2265 = vunpack.c.h.b16 %v2185
    %v2266 = vunpack.c.l.b16 %v2186
    %v2267 = vunpack.c.h.b16 %v2186
    %v2268 = vunpack.c.l.b16 %v2187
    %v2269 = vunpack.c.h.b16 %v2187
    %v2270 = vunpack.c.l.b16 %v2188
    %v2271 = vunpack.c.h.b16 %v2188
    %v2272 = vunpack.c.l.b16 %v2189
    %v2273 = vunpack.c.h.b16 %v2189
    %v2274 = vunpack.c.l.b16 %v2190
    %v2275 = vunpack.c.h.b16 %v2190
    %v2276 = vunpack.c.l.b16 %v2191
    %v2277 = vunpack.c.h.b16 %v2191
    %v2278 = vunpack.c.l.b16 %v2192
    %v2279 = vunpack.c.h.b16 %v2192
    %v2280 = vunpack.c.l.b16 %v2193
    %v2281 = vunpack.c.h.b16 %v2193
    %v2282 = vunpack.c.l.b16 %v2194
    %v2283 = vunpack.c.h.b16 %v2194
    %v2284 = vunpack.c.l.b16 %v2195
    %v2285 = vunpack.c.h.b16 %v2195
    %v2286 = vunpack.c.l.b16 %v2196
    %v2287 = vunpack.c.h.b16 %v2196
    %v2288 = vunpack.c.l.b16 %v2197
    %v2289 = vunpack.c.h.b16 %v2197
    %v2290 = vunpack.c.l.b16 %v2198
    %v2291 = vunpack.c.h.b16 %v2198
    %v2292 = vunpack.c.l.b16 %v2199
    %v2293 = vunpack.c.h.b16 %v2199
    %v2294 = vunpack.c.l.b16 %v2200
    %v2295 = vunpack.c.h.b16 %v2200
    %v2296 = vunpack.c.l.b16 %v2201
    %v2297 = vunpack.c.h.b16 %v2201
    %v2298 = vpack.c.b16 %v2238, %v2234
    %v2299 = vpack.c.b16 %v2239, %v2235
    %v2300 = vpack.c.b16 %v2240, %v2236
    %v2301 = vpack.c.b16 %v2241, %v2237
    %v2302 = vpack.c.b16 %v2246, %v2242
    %v2303 = vpack.c.b16 %v2247, %v2243
    %v2304 = vpack.c.b16 %v2248, %v2244
    %v2305 = vpack.c.b16 %v2249, %v2245
    %v2306 = vpack.c.b16 %v2254, %v2250
    %v2307 = vpack.c.b16 %v2255, %v2251
    %v2308 = vpack.c.b16 %v2256, %v2252
    %v2309 = vpack.c.b16 %v2257, %v2253
    %v2310 = vpack.c.b16 %v2262, %v2258
    %v2311 = vpack.c.b16 %v2263, %v2259
    %v2312 = vpack.c.b16 %v2264, %v2260
    %v2313 = vpack.c.b16 %v2265, %v2261
    %v2314 = vpack.c.b16 %v2270, %v2266
    %v2315 = vpack.c.b16 %v2271, %v2267
    %v2316 = vpack.c.b16 %v2272, %v2268
    %v2317 = vpack.c.b16 %v2273, %v2269
    %v2318 = vpack.c.b16 %v2278, %v2274
    %v2319 = vpack.c.b16 %v2279, %v2275
    %v2320 = vpack.c.b16 %v2280, %v2276
    %v2321 = vpack.c.b16 %v2281, %v2277
    %v2322 = vpack.c.b16 %v2286, %v2282
    %v2323 = vpack.c.b16 %v2287, %v2283
    %v2324 = vpack.c.b16 %v2288, %v2284
    %v2325 = vpack.c.b16 %v2289, %v2285
    %v2326 = vpack.c.b16 %v2294, %v2290
    %v2327 = vpack.c.b16 %v2295, %v2291
    %v2328 = vpack.c.b16 %v2296, %v2292
    %v2329 = vpack.c.b16 %v2297, %v2293
    %2362 = vmatprep.subr.bf16.mxu0 %v2299
    %2363 = vmatpush1.bf16.msra.mxu0 %v2298
    %2364 = vmatprep.subr.bf16.mxu0 %v2303
    %2365 = vmatpush1.bf16.msra.mxu0 %v2302
    %2366 = vmatprep.subr.bf16.mxu0 %v2307
    %2367 = vmatpush1.bf16.msra.mxu0 %v2306
    %2368 = vmatprep.subr.bf16.mxu0 %v2311
    %2369 = vmatpush1.bf16.msra.mxu0 %v2310
    %2370 = vmatprep.subr.bf16.mxu0 %v2315
    %2371 = vmatpush1.bf16.msra.mxu0 %v2314
    %2372 = vmatprep.subr.bf16.mxu0 %v2319
    %2373 = vmatpush1.bf16.msra.mxu0 %v2318
    %2374 = vmatprep.subr.bf16.mxu0 %v2323
    %2375 = vmatpush1.bf16.msra.mxu0 %v2322
    %2376 = vmatprep.subr.bf16.mxu0 %v2327
    %2377 = vmatpush1.bf16.msra.mxu0 %v2326
    %2378 = vmatprep.subr.bf16.mxu0 0
    %2379 = vmatpush1.bf16.msra.mxu0 0
    %2380 = vmatprep.subr.bf16.mxu0 0
    %2381 = vmatpush1.bf16.msra.mxu0 0
    %2382 = vmatprep.subr.bf16.mxu0 0
    %2383 = vmatpush1.bf16.msra.mxu0 0
    %2384 = vmatprep.subr.bf16.mxu0 0
    %2385 = vmatpush1.bf16.msra.mxu0 0
    %2386 = vmatprep.subr.bf16.mxu0 0
    %2387 = vmatpush1.bf16.msra.mxu0 0
    %2388 = vmatprep.subr.bf16.mxu0 0
    %2389 = vmatpush1.bf16.msra.mxu0 0
    %2390 = vmatprep.subr.bf16.mxu0 0
    %2391 = vmatpush1.bf16.msra.mxu0 0
    %2392 = vmatprep.subr.bf16.mxu0 0
    %2393 = vmatpush1.bf16.msra.mxu0 0
    %2394 = vmatprep.mubr.bf16.mxu0 0
    %2395 = vmatmul.mubr.bf16.gmra.mrb[0].mxu0 %v1669
    %v2396 = vpop.f32.mrb[0].mxu0
    %v2397 = vadd.f32 0.0, %v2396
    %v2398 = vpop.f32.mrb[0].mxu0
    %v2399 = vadd.f32 0.0, %v2398
    %v2400 = vpop.f32.mrb[0].mxu0
    %v2401 = vpop.f32.mrb[0].mxu0
    %2402 = vdwg.mxu0
    %2403 = vmatprep.subr.bf16.mxu0 %v2301
    %2404 = vmatpush1.bf16.msra.mxu0 %v2300
    %2405 = vmatprep.subr.bf16.mxu0 %v2305
    %2406 = vmatpush1.bf16.msra.mxu0 %v2304
    %2407 = vmatprep.subr.bf16.mxu0 %v2309
    %2408 = vmatpush1.bf16.msra.mxu0 %v2308
    %2409 = vmatprep.subr.bf16.mxu0 %v2313
    %2410 = vmatpush1.bf16.msra.mxu0 %v2312
    %2411 = vmatprep.subr.bf16.mxu0 %v2317
    %2412 = vmatpush1.bf16.msra.mxu0 %v2316
    %2413 = vmatprep.subr.bf16.mxu0 %v2321
    %2414 = vmatpush1.bf16.msra.mxu0 %v2320
    %2415 = vmatprep.subr.bf16.mxu0 %v2325
    %2416 = vmatpush1.bf16.msra.mxu0 %v2324
    %2417 = vmatprep.subr.bf16.mxu0 %v2329
    %2418 = vmatpush1.bf16.msra.mxu0 %v2328
    %2419 = vmatprep.subr.bf16.mxu0 0
    %2420 = vmatpush1.bf16.msra.mxu0 0
    %2421 = vmatprep.subr.bf16.mxu0 0
    %2422 = vmatpush1.bf16.msra.mxu0 0
    %2423 = vmatprep.subr.bf16.mxu0 0
    %2424 = vmatpush1.bf16.msra.mxu0 0
    %2425 = vmatprep.subr.bf16.mxu0 0
    %2426 = vmatpush1.bf16.msra.mxu0 0
    %2427 = vmatprep.subr.bf16.mxu0 0
    %2428 = vmatpush1.bf16.msra.mxu0 0
    %2429 = vmatprep.subr.bf16.mxu0 0
    %2430 = vmatpush1.bf16.msra.mxu0 0
    %2431 = vmatprep.subr.bf16.mxu0 0
    %2432 = vmatpush1.bf16.msra.mxu0 0
    %2433 = vmatprep.subr.bf16.mxu0 0
    %2434 = vmatpush1.bf16.msra.mxu0 0
    %2435 = vmatprep.mubr.bf16.mxu0 0
    %2436 = vmatmul.mubr.bf16.gmra.mrb[0].mxu0 %v1669
    %v2437 = vpop.f32.mrb[0].mxu0
    %v2438 = vadd.f32 0.0, %v2437
    %v2439 = vpop.f32.mrb[0].mxu0
    %v2440 = vadd.f32 0.0, %v2439
    %v2441 = vpop.f32.mrb[0].mxu0
    %v2442 = vpop.f32.mrb[0].mxu0
    %2443 = vdwg.mxu0
    %v2444 = vadd.f32 %v2166, %v2397
    %v2445 = vadd.f32 %v2167, %v2399
    %v2446 = vadd.f32 %v2168, %v2438
    %v2447 = vadd.f32 %v2169, %v2440
    %v2448 = vxor.u32 %v2444, 2147483648
    %v2449 = vmul.f32 %v2448, 1.442695
    %v2450 = vpow.pop %v2449
    %v2451 = vadd.f32 %v2450, 1.0
    %v2452 = vrcp.pop %v2451
    %v2453 = vmul.f32 1.0, %v2452
    %v2454 = vxor.u32 %v2445, 2147483648
    %v2455 = vmul.f32 %v2454, 1.442695
    %v2456 = vpow.pop %v2455
    %v2457 = vadd.f32 %v2456, 1.0
    %v2458 = vrcp.pop %v2457
    %v2459 = vmul.f32 1.0, %v2458
    %v2460 = vtanh.pop %v2446
    %v2461 = vxor.u32 %v2447, 2147483648
    %v2462 = vmul.f32 %v2461, 1.442695
    %v2463 = vpow.pop %v2462
    %v2464 = vadd.f32 %v2463, 1.0
    %v2465 = vrcp.pop %v2464
    %v2466 = vmul.f32 1.0, %v2465
    %v2467 = vmul.f32 %v2459, %v1666
    %v2468 = vmul.f32 %v2453, %v2460
    %v2469 = vadd.f32 %v2467, %v2468
    %v2470 = vtanh.pop %v2469
    %v2471 = vmul.f32 %v2466, %v2470
    %v2472 = vpack.c.bf16 %v2471, %v2471
    %v2473 = vpack.c.bf16 %v2160, %v2160
    %v2474 = vld [vmem:[#allocation14] sm:$0xff]
    %v2475 = vld [vmem:[#allocation14 + $0x8] sm:$0xff]
    %v2476 = vld [vmem:[#allocation14 + $0x10] sm:$0xff]
    %v2477 = vld [vmem:[#allocation14 + $0x18] sm:$0xff]
    %v2478 = vld [vmem:[#allocation14 + $0x20] sm:$0xff]
    %v2479 = vld [vmem:[#allocation14 + $0x28] sm:$0xff]
    %v2480 = vld [vmem:[#allocation14 + $0x30] sm:$0xff]
    %v2481 = vld [vmem:[#allocation14 + $0x38] sm:$0xff]
    %v2482 = vld [vmem:[#allocation14 + $0x40] sm:$0xff]
    %v2483 = vld [vmem:[#allocation14 + $0x48] sm:$0xff]
    %v2484 = vld [vmem:[#allocation14 + $0x50] sm:$0xff]
    %v2485 = vld [vmem:[#allocation14 + $0x58] sm:$0xff]
    %v2486 = vld [vmem:[#allocation14 + $0x60] sm:$0xff]
    %v2487 = vld [vmem:[#allocation14 + $0x68] sm:$0xff]
    %v2488 = vld [vmem:[#allocation14 + $0x70] sm:$0xff]
    %v2489 = vld [vmem:[#allocation14 + $0x78] sm:$0xff]
    %v2490 = vld [vmem:[#allocation14 + $0x80] sm:$0xff]
    %v2491 = vld [vmem:[#allocation14 + $0x88] sm:$0xff]
    %v2492 = vld [vmem:[#allocation14 + $0x90] sm:$0xff]
    %v2493 = vld [vmem:[#allocation14 + $0x98] sm:$0xff]
    %v2494 = vld [vmem:[#allocation14 + $0xa0] sm:$0xff]
    %v2495 = vld [vmem:[#allocation14 + $0xa8] sm:$0xff]
    %v2496 = vld [vmem:[#allocation14 + $0xb0] sm:$0xff]
    %v2497 = vld [vmem:[#allocation14 + $0xb8] sm:$0xff]
    %v2498 = vld [vmem:[#allocation14 + $0xc0] sm:$0xff]
    %v2499 = vld [vmem:[#allocation14 + $0xc8] sm:$0xff]
    %v2500 = vld [vmem:[#allocation14 + $0xd0] sm:$0xff]
    %v2501 = vld [vmem:[#allocation14 + $0xd8] sm:$0xff]
    %v2502 = vld [vmem:[#allocation14 + $0xe0] sm:$0xff]
    %v2503 = vld [vmem:[#allocation14 + $0xe8] sm:$0xff]
    %v2504 = vld [vmem:[#allocation14 + $0xf0] sm:$0xff]
    %v2505 = vld [vmem:[#allocation14 + $0xf8] sm:$0xff]
    %v2506 = vld [vmem:[#allocation14 + $0x100] sm:$0xff]
    %v2507 = vld [vmem:[#allocation14 + $0x108] sm:$0xff]
    %v2508 = vld [vmem:[#allocation14 + $0x110] sm:$0xff]
    %v2509 = vld [vmem:[#allocation14 + $0x118] sm:$0xff]
    %v2510 = vld [vmem:[#allocation14 + $0x120] sm:$0xff]
    %v2511 = vld [vmem:[#allocation14 + $0x128] sm:$0xff]
    %v2512 = vld [vmem:[#allocation14 + $0x130] sm:$0xff]
    %v2513 = vld [vmem:[#allocation14 + $0x138] sm:$0xff]
    %v2514 = vld [vmem:[#allocation14 + $0x140] sm:$0xff]
    %v2515 = vld [vmem:[#allocation14 + $0x148] sm:$0xff]
    %v2516 = vld [vmem:[#allocation14 + $0x150] sm:$0xff]
    %v2517 = vld [vmem:[#allocation14 + $0x158] sm:$0xff]
    %v2518 = vld [vmem:[#allocation14 + $0x160] sm:$0xff]
    %v2519 = vld [vmem:[#allocation14 + $0x168] sm:$0xff]
    %v2520 = vld [vmem:[#allocation14 + $0x170] sm:$0xff]
    %v2521 = vld [vmem:[#allocation14 + $0x178] sm:$0xff]
    %v2522 = vld [vmem:[#allocation14 + $0x180] sm:$0xff]
    %v2523 = vld [vmem:[#allocation14 + $0x188] sm:$0xff]
    %v2524 = vld [vmem:[#allocation14 + $0x190] sm:$0xff]
    %v2525 = vld [vmem:[#allocation14 + $0x198] sm:$0xff]
    %v2526 = vld [vmem:[#allocation14 + $0x1a0] sm:$0xff]
    %v2527 = vld [vmem:[#allocation14 + $0x1a8] sm:$0xff]
    %v2528 = vld [vmem:[#allocation14 + $0x1b0] sm:$0xff]
    %v2529 = vld [vmem:[#allocation14 + $0x1b8] sm:$0xff]
    %v2530 = vld [vmem:[#allocation14 + $0x1c0] sm:$0xff]
    %v2531 = vld [vmem:[#allocation14 + $0x1c8] sm:$0xff]
    %v2532 = vld [vmem:[#allocation14 + $0x1d0] sm:$0xff]
    %v2533 = vld [vmem:[#allocation14 + $0x1d8] sm:$0xff]
    %v2534 = vld [vmem:[#allocation14 + $0x1e0] sm:$0xff]
    %v2535 = vld [vmem:[#allocation14 + $0x1e8] sm:$0xff]
    %v2536 = vld [vmem:[#allocation14 + $0x1f0] sm:$0xff]
    %v2537 = vld [vmem:[#allocation14 + $0x1f8] sm:$0xff]
    %v2602 = vunpack.c.l.b16 %v2474
    %v2603 = vunpack.c.h.b16 %v2474
    %v2604 = vunpack.c.l.b16 %v2475
    %v2605 = vunpack.c.h.b16 %v2475
    %v2606 = vunpack.c.l.b16 %v2476
    %v2607 = vunpack.c.h.b16 %v2476
    %v2608 = vunpack.c.l.b16 %v2477
    %v2609 = vunpack.c.h.b16 %v2477
    %v2610 = vunpack.c.l.b16 %v2478
    %v2611 = vunpack.c.h.b16 %v2478
    %v2612 = vunpack.c.l.b16 %v2479
    %v2613 = vunpack.c.h.b16 %v2479
    %v2614 = vunpack.c.l.b16 %v2480
    %v2615 = vunpack.c.h.b16 %v2480
    %v2616 = vunpack.c.l.b16 %v2481
    %v2617 = vunpack.c.h.b16 %v2481
    %v2618 = vunpack.c.l.b16 %v2482
    %v2619 = vunpack.c.h.b16 %v2482
    %v2620 = vunpack.c.l.b16 %v2483
    %v2621 = vunpack.c.h.b16 %v2483
    %v2622 = vunpack.c.l.b16 %v2484
    %v2623 = vunpack.c.h.b16 %v2484
    %v2624 = vunpack.c.l.b16 %v2485
    %v2625 = vunpack.c.h.b16 %v2485
    %v2626 = vunpack.c.l.b16 %v2486
    %v2627 = vunpack.c.h.b16 %v2486
    %v2628 = vunpack.c.l.b16 %v2487
    %v2629 = vunpack.c.h.b16 %v2487
    %v2630 = vunpack.c.l.b16 %v2488
    %v2631 = vunpack.c.h.b16 %v2488
    %v2632 = vunpack.c.l.b16 %v2489
    %v2633 = vunpack.c.h.b16 %v2489
    %v2634 = vunpack.c.l.b16 %v2490
    %v2635 = vunpack.c.h.b16 %v2490
    %v2636 = vunpack.c.l.b16 %v2491
    %v2637 = vunpack.c.h.b16 %v2491
    %v2638 = vunpack.c.l.b16 %v2492
    %v2639 = vunpack.c.h.b16 %v2492
    %v2640 = vunpack.c.l.b16 %v2493
    %v2641 = vunpack.c.h.b16 %v2493
    %v2642 = vunpack.c.l.b16 %v2494
    %v2643 = vunpack.c.h.b16 %v2494
    %v2644 = vunpack.c.l.b16 %v2495
    %v2645 = vunpack.c.h.b16 %v2495
    %v2646 = vunpack.c.l.b16 %v2496
    %v2647 = vunpack.c.h.b16 %v2496
    %v2648 = vunpack.c.l.b16 %v2497
    %v2649 = vunpack.c.h.b16 %v2497
    %v2650 = vunpack.c.l.b16 %v2498
    %v2651 = vunpack.c.h.b16 %v2498
    %v2652 = vunpack.c.l.b16 %v2499
    %v2653 = vunpack.c.h.b16 %v2499
    %v2654 = vunpack.c.l.b16 %v2500
    %v2655 = vunpack.c.h.b16 %v2500
    %v2656 = vunpack.c.l.b16 %v2501
    %v2657 = vunpack.c.h.b16 %v2501
    %v2658 = vunpack.c.l.b16 %v2502
    %v2659 = vunpack.c.h.b16 %v2502
    %v2660 = vunpack.c.l.b16 %v2503
    %v2661 = vunpack.c.h.b16 %v2503
    %v2662 = vunpack.c.l.b16 %v2504
    %v2663 = vunpack.c.h.b16 %v2504
    %v2664 = vunpack.c.l.b16 %v2505
    %v2665 = vunpack.c.h.b16 %v2505
    %v2666 = vunpack.c.l.b16 %v2506
    %v2667 = vunpack.c.h.b16 %v2506
    %v2668 = vunpack.c.l.b16 %v2507
    %v2669 = vunpack.c.h.b16 %v2507
    %v2670 = vunpack.c.l.b16 %v2508
    %v2671 = vunpack.c.h.b16 %v2508
    %v2672 = vunpack.c.l.b16 %v2509
    %v2673 = vunpack.c.h.b16 %v2509
    %v2674 = vunpack.c.l.b16 %v2510
    %v2675 = vunpack.c.h.b16 %v2510
    %v2676 = vunpack.c.l.b16 %v2511
    %v2677 = vunpack.c.h.b16 %v2511
    %v2678 = vunpack.c.l.b16 %v2512
    %v2679 = vunpack.c.h.b16 %v2512
    %v2680 = vunpack.c.l.b16 %v2513
    %v2681 = vunpack.c.h.b16 %v2513
    %v2682 = vunpack.c.l.b16 %v2514
    %v2683 = vunpack.c.h.b16 %v2514
    %v2684 = vunpack.c.l.b16 %v2515
    %v2685 = vunpack.c.h.b16 %v2515
    %v2686 = vunpack.c.l.b16 %v2516
    %v2687 = vunpack.c.h.b16 %v2516
    %v2688 = vunpack.c.l.b16 %v2517
    %v2689 = vunpack.c.h.b16 %v2517
    %v2690 = vunpack.c.l.b16 %v2518
    %v2691 = vunpack.c.h.b16 %v2518
    %v2692 = vunpack.c.l.b16 %v2519
    %v2693 = vunpack.c.h.b16 %v2519
    %v2694 = vunpack.c.l.b16 %v2520
    %v2695 = vunpack.c.h.b16 %v2520
    %v2696 = vunpack.c.l.b16 %v2521
    %v2697 = vunpack.c.h.b16 %v2521
    %v2698 = vunpack.c.l.b16 %v2522
    %v2699 = vunpack.c.h.b16 %v2522
    %v2700 = vunpack.c.l.b16 %v2523
    %v2701 = vunpack.c.h.b16 %v2523
    %v2702 = vunpack.c.l.b16 %v2524
    %v2703 = vunpack.c.h.b16 %v2524
    %v2704 = vunpack.c.l.b16 %v2525
    %v2705 = vunpack.c.h.b16 %v2525
    %v2706 = vunpack.c.l.b16 %v2526
    %v2707 = vunpack.c.h.b16 %v2526
    %v2708 = vunpack.c.l.b16 %v2527
    %v2709 = vunpack.c.h.b16 %v2527
    %v2710 = vunpack.c.l.b16 %v2528
    %v2711 = vunpack.c.h.b16 %v2528
    %v2712 = vunpack.c.l.b16 %v2529
    %v2713 = vunpack.c.h.b16 %v2529
    %v2714 = vunpack.c.l.b16 %v2530
    %v2715 = vunpack.c.h.b16 %v2530
    %v2716 = vunpack.c.l.b16 %v2531
    %v2717 = vunpack.c.h.b16 %v2531
    %v2718 = vunpack.c.l.b16 %v2532
    %v2719 = vunpack.c.h.b16 %v2532
    %v2720 = vunpack.c.l.b16 %v2533
    %v2721 = vunpack.c.h.b16 %v2533
    %v2722 = vunpack.c.l.b16 %v2534
    %v2723 = vunpack.c.h.b16 %v2534
    %v2724 = vunpack.c.l.b16 %v2535
    %v2725 = vunpack.c.h.b16 %v2535
    %v2726 = vunpack.c.l.b16 %v2536
    %v2727 = vunpack.c.h.b16 %v2536
    %v2728 = vunpack.c.l.b16 %v2537
    %v2729 = vunpack.c.h.b16 %v2537
    %v2730 = vpack.c.b16 %v2606, %v2602
    %v2731 = vpack.c.b16 %v2607, %v2603
    %v2732 = vpack.c.b16 %v2608, %v2604
    %v2733 = vpack.c.b16 %v2609, %v2605
    %v2734 = vpack.c.b16 %v2614, %v2610
    %v2735 = vpack.c.b16 %v2615, %v2611
    %v2736 = vpack.c.b16 %v2616, %v2612
    %v2737 = vpack.c.b16 %v2617, %v2613
    %v2738 = vpack.c.b16 %v2622, %v2618
    %v2739 = vpack.c.b16 %v2623, %v2619
    %v2740 = vpack.c.b16 %v2624, %v2620
    %v2741 = vpack.c.b16 %v2625, %v2621
    %v2742 = vpack.c.b16 %v2630, %v2626
    %v2743 = vpack.c.b16 %v2631, %v2627
    %v2744 = vpack.c.b16 %v2632, %v2628
    %v2745 = vpack.c.b16 %v2633, %v2629
    %v2746 = vpack.c.b16 %v2638, %v2634
    %v2747 = vpack.c.b16 %v2639, %v2635
    %v2748 = vpack.c.b16 %v2640, %v2636
    %v2749 = vpack.c.b16 %v2641, %v2637
    %v2750 = vpack.c.b16 %v2646, %v2642
    %v2751 = vpack.c.b16 %v2647, %v2643
    %v2752 = vpack.c.b16 %v2648, %v2644
    %v2753 = vpack.c.b16 %v2649, %v2645
    %v2754 = vpack.c.b16 %v2654, %v2650
    %v2755 = vpack.c.b16 %v2655, %v2651
    %v2756 = vpack.c.b16 %v2656, %v2652
    %v2757 = vpack.c.b16 %v2657, %v2653
    %v2758 = vpack.c.b16 %v2662, %v2658
    %v2759 = vpack.c.b16 %v2663, %v2659
    %v2760 = vpack.c.b16 %v2664, %v2660
    %v2761 = vpack.c.b16 %v2665, %v2661
    %v2762 = vpack.c.b16 %v2670, %v2666
    %v2763 = vpack.c.b16 %v2671, %v2667
    %v2764 = vpack.c.b16 %v2672, %v2668
    %v2765 = vpack.c.b16 %v2673, %v2669
    %v2766 = vpack.c.b16 %v2678, %v2674
    %v2767 = vpack.c.b16 %v2679, %v2675
    %v2768 = vpack.c.b16 %v2680, %v2676
    %v2769 = vpack.c.b16 %v2681, %v2677
    %v2770 = vpack.c.b16 %v2686, %v2682
    %v2771 = vpack.c.b16 %v2687, %v2683
    %v2772 = vpack.c.b16 %v2688, %v2684
    %v2773 = vpack.c.b16 %v2689, %v2685
    %v2774 = vpack.c.b16 %v2694, %v2690
    %v2775 = vpack.c.b16 %v2695, %v2691
    %v2776 = vpack.c.b16 %v2696, %v2692
    %v2777 = vpack.c.b16 %v2697, %v2693
    %v2778 = vpack.c.b16 %v2702, %v2698
    %v2779 = vpack.c.b16 %v2703, %v2699
    %v2780 = vpack.c.b16 %v2704, %v2700
    %v2781 = vpack.c.b16 %v2705, %v2701
    %v2782 = vpack.c.b16 %v2710, %v2706
    %v2783 = vpack.c.b16 %v2711, %v2707
    %v2784 = vpack.c.b16 %v2712, %v2708
    %v2785 = vpack.c.b16 %v2713, %v2709
    %v2786 = vpack.c.b16 %v2718, %v2714
    %v2787 = vpack.c.b16 %v2719, %v2715
    %v2788 = vpack.c.b16 %v2720, %v2716
    %v2789 = vpack.c.b16 %v2721, %v2717
    %v2790 = vpack.c.b16 %v2726, %v2722
    %v2791 = vpack.c.b16 %v2727, %v2723
    %v2792 = vpack.c.b16 %v2728, %v2724
    %v2793 = vpack.c.b16 %v2729, %v2725
    %2858 = vmatprep.subr.bf16.mxu0 %v2731
    %2859 = vmatpush1.bf16.msra.mxu0 %v2730
    %2860 = vmatprep.subr.bf16.mxu0 %v2735
    %2861 = vmatpush1.bf16.msra.mxu0 %v2734
    %2862 = vmatprep.subr.bf16.mxu0 %v2739
    %2863 = vmatpush1.bf16.msra.mxu0 %v2738
    %2864 = vmatprep.subr.bf16.mxu0 %v2743
    %2865 = vmatpush1.bf16.msra.mxu0 %v2742
    %2866 = vmatprep.subr.bf16.mxu0 %v2747
    %2867 = vmatpush1.bf16.msra.mxu0 %v2746
    %2868 = vmatprep.subr.bf16.mxu0 %v2751
    %2869 = vmatpush1.bf16.msra.mxu0 %v2750
    %2870 = vmatprep.subr.bf16.mxu0 %v2755
    %2871 = vmatpush1.bf16.msra.mxu0 %v2754
    %2872 = vmatprep.subr.bf16.mxu0 %v2759
    %2873 = vmatpush1.bf16.msra.mxu0 %v2758
    %2874 = vmatprep.subr.bf16.mxu0 %v2763
    %2875 = vmatpush1.bf16.msra.mxu0 %v2762
    %2876 = vmatprep.subr.bf16.mxu0 %v2767
    %2877 = vmatpush1.bf16.msra.mxu0 %v2766
    %2878 = vmatprep.subr.bf16.mxu0 %v2771
    %2879 = vmatpush1.bf16.msra.mxu0 %v2770
    %2880 = vmatprep.subr.bf16.mxu0 %v2775
    %2881 = vmatpush1.bf16.msra.mxu0 %v2774
    %2882 = vmatprep.subr.bf16.mxu0 %v2779
    %2883 = vmatpush1.bf16.msra.mxu0 %v2778
    %2884 = vmatprep.subr.bf16.mxu0 %v2783
    %2885 = vmatpush1.bf16.msra.mxu0 %v2782
    %2886 = vmatprep.subr.bf16.mxu0 %v2787
    %2887 = vmatpush1.bf16.msra.mxu0 %v2786
    %2888 = vmatprep.subr.bf16.mxu0 %v2791
    %2889 = vmatpush1.bf16.msra.mxu0 %v2790
    %2890 = vmatprep.mubr.bf16.mxu0 %v2473
    %2891 = vmatmul.mubr.bf16.gmra.mrb[0].mxu0 %v2472
    %v2892 = vpop.f32.mrb[0].mxu0
    %v2893 = vadd.f32 %v536, %v2892
    %v2894 = vpop.f32.mrb[0].mxu0
    %v2895 = vadd.f32 %v540, %v2894
    %v2896 = vpop.f32.mrb[0].mxu0
    %v2897 = vpop.f32.mrb[0].mxu0
    %2898 = vdwg.mxu0
    %2899 = vmatprep.subr.bf16.mxu0 %v2733
    %2900 = vmatpush1.bf16.msra.mxu0 %v2732
    %2901 = vmatprep.subr.bf16.mxu0 %v2737
    %2902 = vmatpush1.bf16.msra.mxu0 %v2736
    %2903 = vmatprep.subr.bf16.mxu0 %v2741
    %2904 = vmatpush1.bf16.msra.mxu0 %v2740
    %2905 = vmatprep.subr.bf16.mxu0 %v2745
    %2906 = vmatpush1.bf16.msra.mxu0 %v2744
    %2907 = vmatprep.subr.bf16.mxu0 %v2749
    %2908 = vmatpush1.bf16.msra.mxu0 %v2748
    %2909 = vmatprep.subr.bf16.mxu0 %v2753
    %2910 = vmatpush1.bf16.msra.mxu0 %v2752
    %2911 = vmatprep.subr.bf16.mxu0 %v2757
    %2912 = vmatpush1.bf16.msra.mxu0 %v2756
    %2913 = vmatprep.subr.bf16.mxu0 %v2761
    %2914 = vmatpush1.bf16.msra.mxu0 %v2760
    %2915 = vmatprep.subr.bf16.mxu0 %v2765
    %2916 = vmatpush1.bf16.msra.mxu0 %v2764
    %2917 = vmatprep.subr.bf16.mxu0 %v2769
    %2918 = vmatpush1.bf16.msra.mxu0 %v2768
    %2919 = vmatprep.subr.bf16.mxu0 %v2773
    %2920 = vmatpush1.bf16.msra.mxu0 %v2772
    %2921 = vmatprep.subr.bf16.mxu0 %v2777
    %2922 = vmatpush1.bf16.msra.mxu0 %v2776
    %2923 = vmatprep.subr.bf16.mxu0 %v2781
    %2924 = vmatpush1.bf16.msra.mxu0 %v2780
    %2925 = vmatprep.subr.bf16.mxu0 %v2785
    %2926 = vmatpush1.bf16.msra.mxu0 %v2784
    %2927 = vmatprep.subr.bf16.mxu0 %v2789
    %2928 = vmatpush1.bf16.msra.mxu0 %v2788
    %2929 = vmatprep.subr.bf16.mxu0 %v2793
    %2930 = vmatpush1.bf16.msra.mxu0 %v2792
    %2931 = vmatprep.mubr.bf16.mxu0 %v2473
    %2932 = vmatmul.mubr.bf16.gmra.mrb[0].mxu0 %v2472
    %v2933 = vpop.f32.mrb[0].mxu0
    %v2934 = vadd.f32 %v544, %v2933
    %v2935 = vpop.f32.mrb[0].mxu0
    %v2936 = vadd.f32 %v548, %v2935
    %v2937 = vpop.f32.mrb[0].mxu0
    %v2938 = vpop.f32.mrb[0].mxu0
    %2939 = vdwg.mxu0
    %v2940 = vxor.u32 %v2893, 2147483648
    %v2941 = vmul.f32 %v2940, 1.442695
    %v2942 = vpow.pop %v2941
    %v2943 = vadd.f32 %v2942, 1.0
    %v2944 = vrcp.pop %v2943
    %v2945 = vmul.f32 1.0, %v2944
    %v2946 = vxor.u32 %v2895, 2147483648
    %v2947 = vmul.f32 %v2946, 1.442695
    %v2948 = vpow.pop %v2947
    %v2949 = vadd.f32 %v2948, 1.0
    %v2950 = vrcp.pop %v2949
    %v2951 = vmul.f32 1.0, %v2950
    %v2952 = vtanh.pop %v2934
    %v2953 = vxor.u32 %v2936, 2147483648
    %v2954 = vmul.f32 %v2953, 1.442695
    %v2955 = vpow.pop %v2954
    %v2956 = vadd.f32 %v2955, 1.0
    %v2957 = vrcp.pop %v2956
    %v2958 = vmul.f32 1.0, %v2957
    %v2959 = vmul.f32 %v2951, %v2158
    %v2960 = vmul.f32 %v2945, %v2952
    %v2961 = vadd.f32 %v2959, %v2960
    %v2962 = vtanh.pop %v2961
    %v2963 = vmul.f32 %v2958, %v2962
    %s2964 = scalar_lea.vmem [#allocation3], 16
    %2965 = vst [vmem:[%s2964] sm:$0xff] %v2963
    %s2966 = smul.u32 3, 4
    %s2967 = smul.addr %s2966, 8
    %s2968 = scalar_lea.vmem [#allocation2], %s2967
    %v2969 = vld [vmem:[%s2968] sm:$0xff]
    %v2970 = vld [vmem:[%s2968 + $0x8] sm:$0xff]
    %v2971 = vld [vmem:[%s2968 + $0x10] sm:$0xff]
    %v2972 = vld [vmem:[%s2968 + $0x18] sm:$0xff]
    %v2973 = vld [vmem:[#allocation13] sm:$0xff]
    %v2974 = vld [vmem:[#allocation13 + $0x8] sm:$0xff]
    %v2975 = vld [vmem:[#allocation13 + $0x10] sm:$0xff]
    %v2976 = vld [vmem:[#allocation13 + $0x18] sm:$0xff]
    %v2977 = vld [vmem:[#allocation13 + $0x20] sm:$0xff]
    %v2978 = vld [vmem:[#allocation13 + $0x28] sm:$0xff]
    %v2979 = vld [vmem:[#allocation13 + $0x30] sm:$0xff]
    %v2980 = vld [vmem:[#allocation13 + $0x38] sm:$0xff]
    %v2981 = vld [vmem:[#allocation13 + $0x40] sm:$0xff]
    %v2982 = vld [vmem:[#allocation13 + $0x48] sm:$0xff]
    %v2983 = vld [vmem:[#allocation13 + $0x50] sm:$0xff]
    %v2984 = vld [vmem:[#allocation13 + $0x58] sm:$0xff]
    %v2985 = vld [vmem:[#allocation13 + $0x60] sm:$0xff]
    %v2986 = vld [vmem:[#allocation13 + $0x68] sm:$0xff]
    %v2987 = vld [vmem:[#allocation13 + $0x70] sm:$0xff]
    %v2988 = vld [vmem:[#allocation13 + $0x78] sm:$0xff]
    %v2989 = vld [vmem:[#allocation13 + $0x80] sm:$0xff]
    %v2990 = vld [vmem:[#allocation13 + $0x88] sm:$0xff]
    %v2991 = vld [vmem:[#allocation13 + $0x90] sm:$0xff]
    %v2992 = vld [vmem:[#allocation13 + $0x98] sm:$0xff]
    %v2993 = vld [vmem:[#allocation13 + $0xa0] sm:$0xff]
    %v2994 = vld [vmem:[#allocation13 + $0xa8] sm:$0xff]
    %v2995 = vld [vmem:[#allocation13 + $0xb0] sm:$0xff]
    %v2996 = vld [vmem:[#allocation13 + $0xb8] sm:$0xff]
    %v2997 = vld [vmem:[#allocation13 + $0xc0] sm:$0xff]
    %v2998 = vld [vmem:[#allocation13 + $0xc8] sm:$0xff]
    %v2999 = vld [vmem:[#allocation13 + $0xd0] sm:$0xff]
    %v3000 = vld [vmem:[#allocation13 + $0xd8] sm:$0xff]
    %v3001 = vld [vmem:[#allocation13 + $0xe0] sm:$0xff]
    %v3002 = vld [vmem:[#allocation13 + $0xe8] sm:$0xff]
    %v3003 = vld [vmem:[#allocation13 + $0xf0] sm:$0xff]
    %v3004 = vld [vmem:[#allocation13 + $0xf8] sm:$0xff]
    %v3037 = vunpack.c.l.b16 %v2973
    %v3038 = vunpack.c.h.b16 %v2973
    %v3039 = vunpack.c.l.b16 %v2974
    %v3040 = vunpack.c.h.b16 %v2974
    %v3041 = vunpack.c.l.b16 %v2975
    %v3042 = vunpack.c.h.b16 %v2975
    %v3043 = vunpack.c.l.b16 %v2976
    %v3044 = vunpack.c.h.b16 %v2976
    %v3045 = vunpack.c.l.b16 %v2977
    %v3046 = vunpack.c.h.b16 %v2977
    %v3047 = vunpack.c.l.b16 %v2978
    %v3048 = vunpack.c.h.b16 %v2978
    %v3049 = vunpack.c.l.b16 %v2979
    %v3050 = vunpack.c.h.b16 %v2979
    %v3051 = vunpack.c.l.b16 %v2980
    %v3052 = vunpack.c.h.b16 %v2980
    %v3053 = vunpack.c.l.b16 %v2981
    %v3054 = vunpack.c.h.b16 %v2981
    %v3055 = vunpack.c.l.b16 %v2982
    %v3056 = vunpack.c.h.b16 %v2982
    %v3057 = vunpack.c.l.b16 %v2983
    %v3058 = vunpack.c.h.b16 %v2983
    %v3059 = vunpack.c.l.b16 %v2984
    %v3060 = vunpack.c.h.b16 %v2984
    %v3061 = vunpack.c.l.b16 %v2985
    %v3062 = vunpack.c.h.b16 %v2985
    %v3063 = vunpack.c.l.b16 %v2986
    %v3064 = vunpack.c.h.b16 %v2986
    %v3065 = vunpack.c.l.b16 %v2987
    %v3066 = vunpack.c.h.b16 %v2987
    %v3067 = vunpack.c.l.b16 %v2988
    %v3068 = vunpack.c.h.b16 %v2988
    %v3069 = vunpack.c.l.b16 %v2989
    %v3070 = vunpack.c.h.b16 %v2989
    %v3071 = vunpack.c.l.b16 %v2990
    %v3072 = vunpack.c.h.b16 %v2990
    %v3073 = vunpack.c.l.b16 %v2991
    %v3074 = vunpack.c.h.b16 %v2991
    %v3075 = vunpack.c.l.b16 %v2992
    %v3076 = vunpack.c.h.b16 %v2992
    %v3077 = vunpack.c.l.b16 %v2993
    %v3078 = vunpack.c.h.b16 %v2993
    %v3079 = vunpack.c.l.b16 %v2994
    %v3080 = vunpack.c.h.b16 %v2994
    %v3081 = vunpack.c.l.b16 %v2995
    %v3082 = vunpack.c.h.b16 %v2995
    %v3083 = vunpack.c.l.b16 %v2996
    %v3084 = vunpack.c.h.b16 %v2996
    %v3085 = vunpack.c.l.b16 %v2997
    %v3086 = vunpack.c.h.b16 %v2997
    %v3087 = vunpack.c.l.b16 %v2998
    %v3088 = vunpack.c.h.b16 %v2998
    %v3089 = vunpack.c.l.b16 %v2999
    %v3090 = vunpack.c.h.b16 %v2999
    %v3091 = vunpack.c.l.b16 %v3000
    %v3092 = vunpack.c.h.b16 %v3000
    %v3093 = vunpack.c.l.b16 %v3001
    %v3094 = vunpack.c.h.b16 %v3001
    %v3095 = vunpack.c.l.b16 %v3002
    %v3096 = vunpack.c.h.b16 %v3002
    %v3097 = vunpack.c.l.b16 %v3003
    %v3098 = vunpack.c.h.b16 %v3003
    %v3099 = vunpack.c.l.b16 %v3004
    %v3100 = vunpack.c.h.b16 %v3004
    %v3101 = vpack.c.b16 %v3041, %v3037
    %v3102 = vpack.c.b16 %v3042, %v3038
    %v3103 = vpack.c.b16 %v3043, %v3039
    %v3104 = vpack.c.b16 %v3044, %v3040
    %v3105 = vpack.c.b16 %v3049, %v3045
    %v3106 = vpack.c.b16 %v3050, %v3046
    %v3107 = vpack.c.b16 %v3051, %v3047
    %v3108 = vpack.c.b16 %v3052, %v3048
    %v3109 = vpack.c.b16 %v3057, %v3053
    %v3110 = vpack.c.b16 %v3058, %v3054
    %v3111 = vpack.c.b16 %v3059, %v3055
    %v3112 = vpack.c.b16 %v3060, %v3056
    %v3113 = vpack.c.b16 %v3065, %v3061
    %v3114 = vpack.c.b16 %v3066, %v3062
    %v3115 = vpack.c.b16 %v3067, %v3063
    %v3116 = vpack.c.b16 %v3068, %v3064
    %v3117 = vpack.c.b16 %v3073, %v3069
    %v3118 = vpack.c.b16 %v3074, %v3070
    %v3119 = vpack.c.b16 %v3075, %v3071
    %v3120 = vpack.c.b16 %v3076, %v3072
    %v3121 = vpack.c.b16 %v3081, %v3077
    %v3122 = vpack.c.b16 %v3082, %v3078
    %v3123 = vpack.c.b16 %v3083, %v3079
    %v3124 = vpack.c.b16 %v3084, %v3080
    %v3125 = vpack.c.b16 %v3089, %v3085
    %v3126 = vpack.c.b16 %v3090, %v3086
    %v3127 = vpack.c.b16 %v3091, %v3087
    %v3128 = vpack.c.b16 %v3092, %v3088
    %v3129 = vpack.c.b16 %v3097, %v3093
    %v3130 = vpack.c.b16 %v3098, %v3094
    %v3131 = vpack.c.b16 %v3099, %v3095
    %v3132 = vpack.c.b16 %v3100, %v3096
    %3165 = vmatprep.subr.bf16.mxu0 %v3102
    %3166 = vmatpush1.bf16.msra.mxu0 %v3101
    %3167 = vmatprep.subr.bf16.mxu0 %v3106
    %3168 = vmatpush1.bf16.msra.mxu0 %v3105
    %3169 = vmatprep.subr.bf16.mxu0 %v3110
    %3170 = vmatpush1.bf16.msra.mxu0 %v3109
    %3171 = vmatprep.subr.bf16.mxu0 %v3114
    %3172 = vmatpush1.bf16.msra.mxu0 %v3113
    %3173 = vmatprep.subr.bf16.mxu0 %v3118
    %3174 = vmatpush1.bf16.msra.mxu0 %v3117
    %3175 = vmatprep.subr.bf16.mxu0 %v3122
    %3176 = vmatpush1.bf16.msra.mxu0 %v3121
    %3177 = vmatprep.subr.bf16.mxu0 %v3126
    %3178 = vmatpush1.bf16.msra.mxu0 %v3125
    %3179 = vmatprep.subr.bf16.mxu0 %v3130
    %3180 = vmatpush1.bf16.msra.mxu0 %v3129
    %3181 = vmatprep.subr.bf16.mxu0 0
    %3182 = vmatpush1.bf16.msra.mxu0 0
    %3183 = vmatprep.subr.bf16.mxu0 0
    %3184 = vmatpush1.bf16.msra.mxu0 0
    %3185 = vmatprep.subr.bf16.mxu0 0
    %3186 = vmatpush1.bf16.msra.mxu0 0
    %3187 = vmatprep.subr.bf16.mxu0 0
    %3188 = vmatpush1.bf16.msra.mxu0 0
    %3189 = vmatprep.subr.bf16.mxu0 0
    %3190 = vmatpush1.bf16.msra.mxu0 0
    %3191 = vmatprep.subr.bf16.mxu0 0
    %3192 = vmatpush1.bf16.msra.mxu0 0
    %3193 = vmatprep.subr.bf16.mxu0 0
    %3194 = vmatpush1.bf16.msra.mxu0 0
    %3195 = vmatprep.subr.bf16.mxu0 0
    %3196 = vmatpush1.bf16.msra.mxu0 0
    %3197 = vmatprep.mubr.bf16.mxu0 0
    %3198 = vmatmul.mubr.bf16.gmra.mrb[0].mxu0 %v2472
    %v3199 = vpop.f32.mrb[0].mxu0
    %v3200 = vadd.f32 0.0, %v3199
    %v3201 = vpop.f32.mrb[0].mxu0
    %v3202 = vadd.f32 0.0, %v3201
    %v3203 = vpop.f32.mrb[0].mxu0
    %v3204 = vpop.f32.mrb[0].mxu0
    %3205 = vdwg.mxu0
    %3206 = vmatprep.subr.bf16.mxu0 %v3104
    %3207 = vmatpush1.bf16.msra.mxu0 %v3103
    %3208 = vmatprep.subr.bf16.mxu0 %v3108
    %3209 = vmatpush1.bf16.msra.mxu0 %v3107
    %3210 = vmatprep.subr.bf16.mxu0 %v3112
    %3211 = vmatpush1.bf16.msra.mxu0 %v3111
    %3212 = vmatprep.subr.bf16.mxu0 %v3116
    %3213 = vmatpush1.bf16.msra.mxu0 %v3115
    %3214 = vmatprep.subr.bf16.mxu0 %v3120
    %3215 = vmatpush1.bf16.msra.mxu0 %v3119
    %3216 = vmatprep.subr.bf16.mxu0 %v3124
    %3217 = vmatpush1.bf16.msra.mxu0 %v3123
    %3218 = vmatprep.subr.bf16.mxu0 %v3128
    %3219 = vmatpush1.bf16.msra.mxu0 %v3127
    %3220 = vmatprep.subr.bf16.mxu0 %v3132
    %3221 = vmatpush1.bf16.msra.mxu0 %v3131
    %3222 = vmatprep.subr.bf16.mxu0 0
    %3223 = vmatpush1.bf16.msra.mxu0 0
    %3224 = vmatprep.subr.bf16.mxu0 0
    %3225 = vmatpush1.bf16.msra.mxu0 0
    %3226 = vmatprep.subr.bf16.mxu0 0
    %3227 = vmatpush1.bf16.msra.mxu0 0
    %3228 = vmatprep.subr.bf16.mxu0 0
    %3229 = vmatpush1.bf16.msra.mxu0 0
    %3230 = vmatprep.subr.bf16.mxu0 0
    %3231 = vmatpush1.bf16.msra.mxu0 0
    %3232 = vmatprep.subr.bf16.mxu0 0
    %3233 = vmatpush1.bf16.msra.mxu0 0
    %3234 = vmatprep.subr.bf16.mxu0 0
    %3235 = vmatpush1.bf16.msra.mxu0 0
    %3236 = vmatprep.subr.bf16.mxu0 0
    %3237 = vmatpush1.bf16.msra.mxu0 0
    %3238 = vmatprep.mubr.bf16.mxu0 0
    %3239 = vmatmul.mubr.bf16.gmra.mrb[0].mxu0 %v2472
    %v3240 = vpop.f32.mrb[0].mxu0
    %v3241 = vadd.f32 0.0, %v3240
    %v3242 = vpop.f32.mrb[0].mxu0
    %v3243 = vadd.f32 0.0, %v3242
    %v3244 = vpop.f32.mrb[0].mxu0
    %v3245 = vpop.f32.mrb[0].mxu0
    %3246 = vdwg.mxu0
    %v3247 = vadd.f32 %v2969, %v3200
    %v3248 = vadd.f32 %v2970, %v3202
    %v3249 = vadd.f32 %v2971, %v3241
    %v3250 = vadd.f32 %v2972, %v3243
    %v3251 = vxor.u32 %v3247, 2147483648
    %v3252 = vmul.f32 %v3251, 1.442695
    %v3253 = vpow.pop %v3252
    %v3254 = vadd.f32 %v3253, 1.0
    %v3255 = vrcp.pop %v3254
    %v3256 = vmul.f32 1.0, %v3255
    %v3257 = vxor.u32 %v3248, 2147483648
    %v3258 = vmul.f32 %v3257, 1.442695
    %v3259 = vpow.pop %v3258
    %v3260 = vadd.f32 %v3259, 1.0
    %v3261 = vrcp.pop %v3260
    %v3262 = vmul.f32 1.0, %v3261
    %v3263 = vtanh.pop %v3249
    %v3264 = vxor.u32 %v3250, 2147483648
    %v3265 = vmul.f32 %v3264, 1.442695
    %v3266 = vpow.pop %v3265
    %v3267 = vadd.f32 %v3266, 1.0
    %v3268 = vrcp.pop %v3267
    %v3269 = vmul.f32 1.0, %v3268
    %v3270 = vmul.f32 %v3262, %v2469
    %v3271 = vmul.f32 %v3256, %v3263
    %v3272 = vadd.f32 %v3270, %v3271
    %v3273 = vtanh.pop %v3272
    %v3274 = vmul.f32 %v3269, %v3273
    %v3275 = vpack.c.bf16 %v3274, %v3274
    %v3276 = vpack.c.bf16 %v2963, %v2963
    %v3277 = vld [vmem:[#allocation14] sm:$0xff]
    %v3278 = vld [vmem:[#allocation14 + $0x8] sm:$0xff]
    %v3279 = vld [vmem:[#allocation14 + $0x10] sm:$0xff]
    %v3280 = vld [vmem:[#allocation14 + $0x18] sm:$0xff]
    %v3281 = vld [vmem:[#allocation14 + $0x20] sm:$0xff]
    %v3282 = vld [vmem:[#allocation14 + $0x28] sm:$0xff]
    %v3283 = vld [vmem:[#allocation14 + $0x30] sm:$0xff]
    %v3284 = vld [vmem:[#allocation14 + $0x38] sm:$0xff]
    %v3285 = vld [vmem:[#allocation14 + $0x40] sm:$0xff]
    %v3286 = vld [vmem:[#allocation14 + $0x48] sm:$0xff]
    %v3287 = vld [vmem:[#allocation14 + $0x50] sm:$0xff]
    %v3288 = vld [vmem:[#allocation14 + $0x58] sm:$0xff]
    %v3289 = vld [vmem:[#allocation14 + $0x60] sm:$0xff]
    %v3290 = vld [vmem:[#allocation14 + $0x68] sm:$0xff]
    %v3291 = vld [vmem:[#allocation14 + $0x70] sm:$0xff]
    %v3292 = vld [vmem:[#allocation14 + $0x78] sm:$0xff]
    %v3293 = vld [vmem:[#allocation14 + $0x80] sm:$0xff]
    %v3294 = vld [vmem:[#allocation14 + $0x88] sm:$0xff]
    %v3295 = vld [vmem:[#allocation14 + $0x90] sm:$0xff]
    %v3296 = vld [vmem:[#allocation14 + $0x98] sm:$0xff]
    %v3297 = vld [vmem:[#allocation14 + $0xa0] sm:$0xff]
    %v3298 = vld [vmem:[#allocation14 + $0xa8] sm:$0xff]
    %v3299 = vld [vmem:[#allocation14 + $0xb0] sm:$0xff]
    %v3300 = vld [vmem:[#allocation14 + $0xb8] sm:$0xff]
    %v3301 = vld [vmem:[#allocation14 + $0xc0] sm:$0xff]
    %v3302 = vld [vmem:[#allocation14 + $0xc8] sm:$0xff]
    %v3303 = vld [vmem:[#allocation14 + $0xd0] sm:$0xff]
    %v3304 = vld [vmem:[#allocation14 + $0xd8] sm:$0xff]
    %v3305 = vld [vmem:[#allocation14 + $0xe0] sm:$0xff]
    %v3306 = vld [vmem:[#allocation14 + $0xe8] sm:$0xff]
    %v3307 = vld [vmem:[#allocation14 + $0xf0] sm:$0xff]
    %v3308 = vld [vmem:[#allocation14 + $0xf8] sm:$0xff]
    %v3309 = vld [vmem:[#allocation14 + $0x100] sm:$0xff]
    %v3310 = vld [vmem:[#allocation14 + $0x108] sm:$0xff]
    %v3311 = vld [vmem:[#allocation14 + $0x110] sm:$0xff]
    %v3312 = vld [vmem:[#allocation14 + $0x118] sm:$0xff]
    %v3313 = vld [vmem:[#allocation14 + $0x120] sm:$0xff]
    %v3314 = vld [vmem:[#allocation14 + $0x128] sm:$0xff]
    %v3315 = vld [vmem:[#allocation14 + $0x130] sm:$0xff]
    %v3316 = vld [vmem:[#allocation14 + $0x138] sm:$0xff]
    %v3317 = vld [vmem:[#allocation14 + $0x140] sm:$0xff]
    %v3318 = vld [vmem:[#allocation14 + $0x148] sm:$0xff]
    %v3319 = vld [vmem:[#allocation14 + $0x150] sm:$0xff]
    %v3320 = vld [vmem:[#allocation14 + $0x158] sm:$0xff]
    %v3321 = vld [vmem:[#allocation14 + $0x160] sm:$0xff]
    %v3322 = vld [vmem:[#allocation14 + $0x168] sm:$0xff]
    %v3323 = vld [vmem:[#allocation14 + $0x170] sm:$0xff]
    %v3324 = vld [vmem:[#allocation14 + $0x178] sm:$0xff]
    %v3325 = vld [vmem:[#allocation14 + $0x180] sm:$0xff]
    %v3326 = vld [vmem:[#allocation14 + $0x188] sm:$0xff]
    %v3327 = vld [vmem:[#allocation14 + $0x190] sm:$0xff]
    %v3328 = vld [vmem:[#allocation14 + $0x198] sm:$0xff]
    %v3329 = vld [vmem:[#allocation14 + $0x1a0] sm:$0xff]
    %v3330 = vld [vmem:[#allocation14 + $0x1a8] sm:$0xff]
    %v3331 = vld [vmem:[#allocation14 + $0x1b0] sm:$0xff]
    %v3332 = vld [vmem:[#allocation14 + $0x1b8] sm:$0xff]
    %v3333 = vld [vmem:[#allocation14 + $0x1c0] sm:$0xff]
    %v3334 = vld [vmem:[#allocation14 + $0x1c8] sm:$0xff]
    %v3335 = vld [vmem:[#allocation14 + $0x1d0] sm:$0xff]
    %v3336 = vld [vmem:[#allocation14 + $0x1d8] sm:$0xff]
    %v3337 = vld [vmem:[#allocation14 + $0x1e0] sm:$0xff]
    %v3338 = vld [vmem:[#allocation14 + $0x1e8] sm:$0xff]
    %v3339 = vld [vmem:[#allocation14 + $0x1f0] sm:$0xff]
    %v3340 = vld [vmem:[#allocation14 + $0x1f8] sm:$0xff]
    %v3405 = vunpack.c.l.b16 %v3277
    %v3406 = vunpack.c.h.b16 %v3277
    %v3407 = vunpack.c.l.b16 %v3278
    %v3408 = vunpack.c.h.b16 %v3278
    %v3409 = vunpack.c.l.b16 %v3279
    %v3410 = vunpack.c.h.b16 %v3279
    %v3411 = vunpack.c.l.b16 %v3280
    %v3412 = vunpack.c.h.b16 %v3280
    %v3413 = vunpack.c.l.b16 %v3281
    %v3414 = vunpack.c.h.b16 %v3281
    %v3415 = vunpack.c.l.b16 %v3282
    %v3416 = vunpack.c.h.b16 %v3282
    %v3417 = vunpack.c.l.b16 %v3283
    %v3418 = vunpack.c.h.b16 %v3283
    %v3419 = vunpack.c.l.b16 %v3284
    %v3420 = vunpack.c.h.b16 %v3284
    %v3421 = vunpack.c.l.b16 %v3285
    %v3422 = vunpack.c.h.b16 %v3285
    %v3423 = vunpack.c.l.b16 %v3286
    %v3424 = vunpack.c.h.b16 %v3286
    %v3425 = vunpack.c.l.b16 %v3287
    %v3426 = vunpack.c.h.b16 %v3287
    %v3427 = vunpack.c.l.b16 %v3288
    %v3428 = vunpack.c.h.b16 %v3288
    %v3429 = vunpack.c.l.b16 %v3289
    %v3430 = vunpack.c.h.b16 %v3289
    %v3431 = vunpack.c.l.b16 %v3290
    %v3432 = vunpack.c.h.b16 %v3290
    %v3433 = vunpack.c.l.b16 %v3291
    %v3434 = vunpack.c.h.b16 %v3291
    %v3435 = vunpack.c.l.b16 %v3292
    %v3436 = vunpack.c.h.b16 %v3292
    %v3437 = vunpack.c.l.b16 %v3293
    %v3438 = vunpack.c.h.b16 %v3293
    %v3439 = vunpack.c.l.b16 %v3294
    %v3440 = vunpack.c.h.b16 %v3294
    %v3441 = vunpack.c.l.b16 %v3295
    %v3442 = vunpack.c.h.b16 %v3295
    %v3443 = vunpack.c.l.b16 %v3296
    %v3444 = vunpack.c.h.b16 %v3296
    %v3445 = vunpack.c.l.b16 %v3297
    %v3446 = vunpack.c.h.b16 %v3297
    %v3447 = vunpack.c.l.b16 %v3298
    %v3448 = vunpack.c.h.b16 %v3298
    %v3449 = vunpack.c.l.b16 %v3299
    %v3450 = vunpack.c.h.b16 %v3299
    %v3451 = vunpack.c.l.b16 %v3300
    %v3452 = vunpack.c.h.b16 %v3300
    %v3453 = vunpack.c.l.b16 %v3301
    %v3454 = vunpack.c.h.b16 %v3301
    %v3455 = vunpack.c.l.b16 %v3302
    %v3456 = vunpack.c.h.b16 %v3302
    %v3457 = vunpack.c.l.b16 %v3303
    %v3458 = vunpack.c.h.b16 %v3303
    %v3459 = vunpack.c.l.b16 %v3304
    %v3460 = vunpack.c.h.b16 %v3304
    %v3461 = vunpack.c.l.b16 %v3305
    %v3462 = vunpack.c.h.b16 %v3305
    %v3463 = vunpack.c.l.b16 %v3306
    %v3464 = vunpack.c.h.b16 %v3306
    %v3465 = vunpack.c.l.b16 %v3307
    %v3466 = vunpack.c.h.b16 %v3307
    %v3467 = vunpack.c.l.b16 %v3308
    %v3468 = vunpack.c.h.b16 %v3308
    %v3469 = vunpack.c.l.b16 %v3309
    %v3470 = vunpack.c.h.b16 %v3309
    %v3471 = vunpack.c.l.b16 %v3310
    %v3472 = vunpack.c.h.b16 %v3310
    %v3473 = vunpack.c.l.b16 %v3311
    %v3474 = vunpack.c.h.b16 %v3311
    %v3475 = vunpack.c.l.b16 %v3312
    %v3476 = vunpack.c.h.b16 %v3312
    %v3477 = vunpack.c.l.b16 %v3313
    %v3478 = vunpack.c.h.b16 %v3313
    %v3479 = vunpack.c.l.b16 %v3314
    %v3480 = vunpack.c.h.b16 %v3314
    %v3481 = vunpack.c.l.b16 %v3315
    %v3482 = vunpack.c.h.b16 %v3315
    %v3483 = vunpack.c.l.b16 %v3316
    %v3484 = vunpack.c.h.b16 %v3316
    %v3485 = vunpack.c.l.b16 %v3317
    %v3486 = vunpack.c.h.b16 %v3317
    %v3487 = vunpack.c.l.b16 %v3318
    %v3488 = vunpack.c.h.b16 %v3318
    %v3489 = vunpack.c.l.b16 %v3319
    %v3490 = vunpack.c.h.b16 %v3319
    %v3491 = vunpack.c.l.b16 %v3320
    %v3492 = vunpack.c.h.b16 %v3320
    %v3493 = vunpack.c.l.b16 %v3321
    %v3494 = vunpack.c.h.b16 %v3321
    %v3495 = vunpack.c.l.b16 %v3322
    %v3496 = vunpack.c.h.b16 %v3322
    %v3497 = vunpack.c.l.b16 %v3323
    %v3498 = vunpack.c.h.b16 %v3323
    %v3499 = vunpack.c.l.b16 %v3324
    %v3500 = vunpack.c.h.b16 %v3324
    %v3501 = vunpack.c.l.b16 %v3325
    %v3502 = vunpack.c.h.b16 %v3325
    %v3503 = vunpack.c.l.b16 %v3326
    %v3504 = vunpack.c.h.b16 %v3326
    %v3505 = vunpack.c.l.b16 %v3327
    %v3506 = vunpack.c.h.b16 %v3327
    %v3507 = vunpack.c.l.b16 %v3328
    %v3508 = vunpack.c.h.b16 %v3328
    %v3509 = vunpack.c.l.b16 %v3329
    %v3510 = vunpack.c.h.b16 %v3329
    %v3511 = vunpack.c.l.b16 %v3330
    %v3512 = vunpack.c.h.b16 %v3330
    %v3513 = vunpack.c.l.b16 %v3331
    %v3514 = vunpack.c.h.b16 %v3331
    %v3515 = vunpack.c.l.b16 %v3332
    %v3516 = vunpack.c.h.b16 %v3332
    %v3517 = vunpack.c.l.b16 %v3333
    %v3518 = vunpack.c.h.b16 %v3333
    %v3519 = vunpack.c.l.b16 %v3334
    %v3520 = vunpack.c.h.b16 %v3334
    %v3521 = vunpack.c.l.b16 %v3335
    %v3522 = vunpack.c.h.b16 %v3335
    %v3523 = vunpack.c.l.b16 %v3336
    %v3524 = vunpack.c.h.b16 %v3336
    %v3525 = vunpack.c.l.b16 %v3337
    %v3526 = vunpack.c.h.b16 %v3337
    %v3527 = vunpack.c.l.b16 %v3338
    %v3528 = vunpack.c.h.b16 %v3338
    %v3529 = vunpack.c.l.b16 %v3339
    %v3530 = vunpack.c.h.b16 %v3339
    %v3531 = vunpack.c.l.b16 %v3340
    %v3532 = vunpack.c.h.b16 %v3340
    %v3533 = vpack.c.b16 %v3409, %v3405
    %v3534 = vpack.c.b16 %v3410, %v3406
    %v3535 = vpack.c.b16 %v3411, %v3407
    %v3536 = vpack.c.b16 %v3412, %v3408
    %v3537 = vpack.c.b16 %v3417, %v3413
    %v3538 = vpack.c.b16 %v3418, %v3414
    %v3539 = vpack.c.b16 %v3419, %v3415
    %v3540 = vpack.c.b16 %v3420, %v3416
    %v3541 = vpack.c.b16 %v3425, %v3421
    %v3542 = vpack.c.b16 %v3426, %v3422
    %v3543 = vpack.c.b16 %v3427, %v3423
    %v3544 = vpack.c.b16 %v3428, %v3424
    %v3545 = vpack.c.b16 %v3433, %v3429
    %v3546 = vpack.c.b16 %v3434, %v3430
    %v3547 = vpack.c.b16 %v3435, %v3431
    %v3548 = vpack.c.b16 %v3436, %v3432
    %v3549 = vpack.c.b16 %v3441, %v3437
    %v3550 = vpack.c.b16 %v3442, %v3438
    %v3551 = vpack.c.b16 %v3443, %v3439
    %v3552 = vpack.c.b16 %v3444, %v3440
    %v3553 = vpack.c.b16 %v3449, %v3445
    %v3554 = vpack.c.b16 %v3450, %v3446
    %v3555 = vpack.c.b16 %v3451, %v3447
    %v3556 = vpack.c.b16 %v3452, %v3448
    %v3557 = vpack.c.b16 %v3457, %v3453
    %v3558 = vpack.c.b16 %v3458, %v3454
    %v3559 = vpack.c.b16 %v3459, %v3455
    %v3560 = vpack.c.b16 %v3460, %v3456
    %v3561 = vpack.c.b16 %v3465, %v3461
    %v3562 = vpack.c.b16 %v3466, %v3462
    %v3563 = vpack.c.b16 %v3467, %v3463
    %v3564 = vpack.c.b16 %v3468, %v3464
    %v3565 = vpack.c.b16 %v3473, %v3469
    %v3566 = vpack.c.b16 %v3474, %v3470
    %v3567 = vpack.c.b16 %v3475, %v3471
    %v3568 = vpack.c.b16 %v3476, %v3472
    %v3569 = vpack.c.b16 %v3481, %v3477
    %v3570 = vpack.c.b16 %v3482, %v3478
    %v3571 = vpack.c.b16 %v3483, %v3479
    %v3572 = vpack.c.b16 %v3484, %v3480
    %v3573 = vpack.c.b16 %v3489, %v3485
    %v3574 = vpack.c.b16 %v3490, %v3486
    %v3575 = vpack.c.b16 %v3491, %v3487
    %v3576 = vpack.c.b16 %v3492, %v3488
    %v3577 = vpack.c.b16 %v3497, %v3493
    %v3578 = vpack.c.b16 %v3498, %v3494
    %v3579 = vpack.c.b16 %v3499, %v3495
    %v3580 = vpack.c.b16 %v3500, %v3496
    %v3581 = vpack.c.b16 %v3505, %v3501
    %v3582 = vpack.c.b16 %v3506, %v3502
    %v3583 = vpack.c.b16 %v3507, %v3503
    %v3584 = vpack.c.b16 %v3508, %v3504
    %v3585 = vpack.c.b16 %v3513, %v3509
    %v3586 = vpack.c.b16 %v3514, %v3510
    %v3587 = vpack.c.b16 %v3515, %v3511
    %v3588 = vpack.c.b16 %v3516, %v3512
    %v3589 = vpack.c.b16 %v3521, %v3517
    %v3590 = vpack.c.b16 %v3522, %v3518
    %v3591 = vpack.c.b16 %v3523, %v3519
    %v3592 = vpack.c.b16 %v3524, %v3520
    %v3593 = vpack.c.b16 %v3529, %v3525
    %v3594 = vpack.c.b16 %v3530, %v3526
    %v3595 = vpack.c.b16 %v3531, %v3527
    %v3596 = vpack.c.b16 %v3532, %v3528
    %3661 = vmatprep.subr.bf16.mxu0 %v3534
    %3662 = vmatpush1.bf16.msra.mxu0 %v3533
    %3663 = vmatprep.subr.bf16.mxu0 %v3538
    %3664 = vmatpush1.bf16.msra.mxu0 %v3537
    %3665 = vmatprep.subr.bf16.mxu0 %v3542
    %3666 = vmatpush1.bf16.msra.mxu0 %v3541
    %3667 = vmatprep.subr.bf16.mxu0 %v3546
    %3668 = vmatpush1.bf16.msra.mxu0 %v3545
    %3669 = vmatprep.subr.bf16.mxu0 %v3550
    %3670 = vmatpush1.bf16.msra.mxu0 %v3549
    %3671 = vmatprep.subr.bf16.mxu0 %v3554
    %3672 = vmatpush1.bf16.msra.mxu0 %v3553
    %3673 = vmatprep.subr.bf16.mxu0 %v3558
    %3674 = vmatpush1.bf16.msra.mxu0 %v3557
    %3675 = vmatprep.subr.bf16.mxu0 %v3562
    %3676 = vmatpush1.bf16.msra.mxu0 %v3561
    %3677 = vmatprep.subr.bf16.mxu0 %v3566
    %3678 = vmatpush1.bf16.msra.mxu0 %v3565
    %3679 = vmatprep.subr.bf16.mxu0 %v3570
    %3680 = vmatpush1.bf16.msra.mxu0 %v3569
    %3681 = vmatprep.subr.bf16.mxu0 %v3574
    %3682 = vmatpush1.bf16.msra.mxu0 %v3573
    %3683 = vmatprep.subr.bf16.mxu0 %v3578
    %3684 = vmatpush1.bf16.msra.mxu0 %v3577
    %3685 = vmatprep.subr.bf16.mxu0 %v3582
    %3686 = vmatpush1.bf16.msra.mxu0 %v3581
    %3687 = vmatprep.subr.bf16.mxu0 %v3586
    %3688 = vmatpush1.bf16.msra.mxu0 %v3585
    %3689 = vmatprep.subr.bf16.mxu0 %v3590
    %3690 = vmatpush1.bf16.msra.mxu0 %v3589
    %3691 = vmatprep.subr.bf16.mxu0 %v3594
    %3692 = vmatpush1.bf16.msra.mxu0 %v3593
    %3693 = vmatprep.mubr.bf16.mxu0 %v3276
    %3694 = vmatmul.mubr.bf16.gmra.mrb[0].mxu0 %v3275
    %v3695 = vpop.f32.mrb[0].mxu0
    %v3696 = vadd.f32 %v536, %v3695
    %v3697 = vpop.f32.mrb[0].mxu0
    %v3698 = vadd.f32 %v540, %v3697
    %v3699 = vpop.f32.mrb[0].mxu0
    %v3700 = vpop.f32.mrb[0].mxu0
    %3701 = vdwg.mxu0
    %3702 = vmatprep.subr.bf16.mxu0 %v3536
    %3703 = vmatpush1.bf16.msra.mxu0 %v3535
    %3704 = vmatprep.subr.bf16.mxu0 %v3540
    %3705 = vmatpush1.bf16.msra.mxu0 %v3539
    %3706 = vmatprep.subr.bf16.mxu0 %v3544
    %3707 = vmatpush1.bf16.msra.mxu0 %v3543
    %3708 = vmatprep.subr.bf16.mxu0 %v3548
    %3709 = vmatpush1.bf16.msra.mxu0 %v3547
    %3710 = vmatprep.subr.bf16.mxu0 %v3552
    %3711 = vmatpush1.bf16.msra.mxu0 %v3551
    %3712 = vmatprep.subr.bf16.mxu0 %v3556
    %3713 = vmatpush1.bf16.msra.mxu0 %v3555
    %3714 = vmatprep.subr.bf16.mxu0 %v3560
    %3715 = vmatpush1.bf16.msra.mxu0 %v3559
    %3716 = vmatprep.subr.bf16.mxu0 %v3564
    %3717 = vmatpush1.bf16.msra.mxu0 %v3563
    %3718 = vmatprep.subr.bf16.mxu0 %v3568
    %3719 = vmatpush1.bf16.msra.mxu0 %v3567
    %3720 = vmatprep.subr.bf16.mxu0 %v3572
    %3721 = vmatpush1.bf16.msra.mxu0 %v3571
    %3722 = vmatprep.subr.bf16.mxu0 %v3576
    %3723 = vmatpush1.bf16.msra.mxu0 %v3575
    %3724 = vmatprep.subr.bf16.mxu0 %v3580
    %3725 = vmatpush1.bf16.msra.mxu0 %v3579
    %3726 = vmatprep.subr.bf16.mxu0 %v3584
    %3727 = vmatpush1.bf16.msra.mxu0 %v3583
    %3728 = vmatprep.subr.bf16.mxu0 %v3588
    %3729 = vmatpush1.bf16.msra.mxu0 %v3587
    %3730 = vmatprep.subr.bf16.mxu0 %v3592
    %3731 = vmatpush1.bf16.msra.mxu0 %v3591
    %3732 = vmatprep.subr.bf16.mxu0 %v3596
    %3733 = vmatpush1.bf16.msra.mxu0 %v3595
    %3734 = vmatprep.mubr.bf16.mxu0 %v3276
    %3735 = vmatmul.mubr.bf16.gmra.mrb[0].mxu0 %v3275
    %v3736 = vpop.f32.mrb[0].mxu0
    %v3737 = vadd.f32 %v544, %v3736
    %v3738 = vpop.f32.mrb[0].mxu0
    %v3739 = vadd.f32 %v548, %v3738
    %v3740 = vpop.f32.mrb[0].mxu0
    %v3741 = vpop.f32.mrb[0].mxu0
    %3742 = vdwg.mxu0
    %v3743 = vxor.u32 %v3696, 2147483648
    %v3744 = vmul.f32 %v3743, 1.442695
    %v3745 = vpow.pop %v3744
    %v3746 = vadd.f32 %v3745, 1.0
    %v3747 = vrcp.pop %v3746
    %v3748 = vmul.f32 1.0, %v3747
    %v3749 = vxor.u32 %v3698, 2147483648
    %v3750 = vmul.f32 %v3749, 1.442695
    %v3751 = vpow.pop %v3750
    %v3752 = vadd.f32 %v3751, 1.0
    %v3753 = vrcp.pop %v3752
    %v3754 = vmul.f32 1.0, %v3753
    %v3755 = vtanh.pop %v3737
    %v3756 = vxor.u32 %v3739, 2147483648
    %v3757 = vmul.f32 %v3756, 1.442695
    %v3758 = vpow.pop %v3757
    %v3759 = vadd.f32 %v3758, 1.0
    %v3760 = vrcp.pop %v3759
    %v3761 = vmul.f32 1.0, %v3760
    %v3762 = vmul.f32 %v3754, %v2961
    %v3763 = vmul.f32 %v3748, %v3755
    %v3764 = vadd.f32 %v3762, %v3763
    %v3765 = vtanh.pop %v3764
    %v3766 = vmul.f32 %v3761, %v3765
    %s3767 = scalar_lea.vmem [#allocation3], 24
    %3768 = vst [vmem:[%s3767] sm:$0xff] %v3766
    %s3769 = smul.u32 4, 4
    %s3770 = smul.addr %s3769, 8
    %s3771 = scalar_lea.vmem [#allocation2], %s3770
    %v3772 = vld [vmem:[%s3771] sm:$0xff]
    %v3773 = vld [vmem:[%s3771 + $0x8] sm:$0xff]
    %v3774 = vld [vmem:[%s3771 + $0x10] sm:$0xff]
    %v3775 = vld [vmem:[%s3771 + $0x18] sm:$0xff]
    %v3776 = vld [vmem:[#allocation13] sm:$0xff]
    %v3777 = vld [vmem:[#allocation13 + $0x8] sm:$0xff]
    %v3778 = vld [vmem:[#allocation13 + $0x10] sm:$0xff]
    %v3779 = vld [vmem:[#allocation13 + $0x18] sm:$0xff]
    %v3780 = vld [vmem:[#allocation13 + $0x20] sm:$0xff]
    %v3781 = vld [vmem:[#allocation13 + $0x28] sm:$0xff]
    %v3782 = vld [vmem:[#allocation13 + $0x30] sm:$0xff]
    %v3783 = vld [vmem:[#allocation13 + $0x38] sm:$0xff]
    %v3784 = vld [vmem:[#allocation13 + $0x40] sm:$0xff]
    %v3785 = vld [vmem:[#allocation13 + $0x48] sm:$0xff]
    %v3786 = vld [vmem:[#allocation13 + $0x50] sm:$0xff]
    %v3787 = vld [vmem:[#allocation13 + $0x58] sm:$0xff]
    %v3788 = vld [vmem:[#allocation13 + $0x60] sm:$0xff]
    %v3789 = vld [vmem:[#allocation13 + $0x68] sm:$0xff]
    %v3790 = vld [vmem:[#allocation13 + $0x70] sm:$0xff]
    %v3791 = vld [vmem:[#allocation13 + $0x78] sm:$0xff]
    %v3792 = vld [vmem:[#allocation13 + $0x80] sm:$0xff]
    %v3793 = vld [vmem:[#allocation13 + $0x88] sm:$0xff]
    %v3794 = vld [vmem:[#allocation13 + $0x90] sm:$0xff]
    %v3795 = vld [vmem:[#allocation13 + $0x98] sm:$0xff]
    %v3796 = vld [vmem:[#allocation13 + $0xa0] sm:$0xff]
    %v3797 = vld [vmem:[#allocation13 + $0xa8] sm:$0xff]
    %v3798 = vld [vmem:[#allocation13 + $0xb0] sm:$0xff]
    %v3799 = vld [vmem:[#allocation13 + $0xb8] sm:$0xff]
    %v3800 = vld [vmem:[#allocation13 + $0xc0] sm:$0xff]
    %v3801 = vld [vmem:[#allocation13 + $0xc8] sm:$0xff]
    %v3802 = vld [vmem:[#allocation13 + $0xd0] sm:$0xff]
    %v3803 = vld [vmem:[#allocation13 + $0xd8] sm:$0xff]
    %v3804 = vld [vmem:[#allocation13 + $0xe0] sm:$0xff]
    %v3805 = vld [vmem:[#allocation13 + $0xe8] sm:$0xff]
    %v3806 = vld [vmem:[#allocation13 + $0xf0] sm:$0xff]
    %v3807 = vld [vmem:[#allocation13 + $0xf8] sm:$0xff]
    %v3840 = vunpack.c.l.b16 %v3776
    %v3841 = vunpack.c.h.b16 %v3776
    %v3842 = vunpack.c.l.b16 %v3777
    %v3843 = vunpack.c.h.b16 %v3777
    %v3844 = vunpack.c.l.b16 %v3778
    %v3845 = vunpack.c.h.b16 %v3778
    %v3846 = vunpack.c.l.b16 %v3779
    %v3847 = vunpack.c.h.b16 %v3779
    %v3848 = vunpack.c.l.b16 %v3780
    %v3849 = vunpack.c.h.b16 %v3780
    %v3850 = vunpack.c.l.b16 %v3781
    %v3851 = vunpack.c.h.b16 %v3781
    %v3852 = vunpack.c.l.b16 %v3782
    %v3853 = vunpack.c.h.b16 %v3782
    %v3854 = vunpack.c.l.b16 %v3783
    %v3855 = vunpack.c.h.b16 %v3783
    %v3856 = vunpack.c.l.b16 %v3784
    %v3857 = vunpack.c.h.b16 %v3784
    %v3858 = vunpack.c.l.b16 %v3785
    %v3859 = vunpack.c.h.b16 %v3785
    %v3860 = vunpack.c.l.b16 %v3786
    %v3861 = vunpack.c.h.b16 %v3786
    %v3862 = vunpack.c.l.b16 %v3787
    %v3863 = vunpack.c.h.b16 %v3787
    %v3864 = vunpack.c.l.b16 %v3788
    %v3865 = vunpack.c.h.b16 %v3788
    %v3866 = vunpack.c.l.b16 %v3789
    %v3867 = vunpack.c.h.b16 %v3789
    %v3868 = vunpack.c.l.b16 %v3790
    %v3869 = vunpack.c.h.b16 %v3790
    %v3870 = vunpack.c.l.b16 %v3791
    %v3871 = vunpack.c.h.b16 %v3791
    %v3872 = vunpack.c.l.b16 %v3792
    %v3873 = vunpack.c.h.b16 %v3792
    %v3874 = vunpack.c.l.b16 %v3793
    %v3875 = vunpack.c.h.b16 %v3793
    %v3876 = vunpack.c.l.b16 %v3794
    %v3877 = vunpack.c.h.b16 %v3794
    %v3878 = vunpack.c.l.b16 %v3795
    %v3879 = vunpack.c.h.b16 %v3795
    %v3880 = vunpack.c.l.b16 %v3796
    %v3881 = vunpack.c.h.b16 %v3796
    %v3882 = vunpack.c.l.b16 %v3797
    %v3883 = vunpack.c.h.b16 %v3797
    %v3884 = vunpack.c.l.b16 %v3798
    %v3885 = vunpack.c.h.b16 %v3798
    %v3886 = vunpack.c.l.b16 %v3799
    %v3887 = vunpack.c.h.b16 %v3799
    %v3888 = vunpack.c.l.b16 %v3800
    %v3889 = vunpack.c.h.b16 %v3800
    %v3890 = vunpack.c.l.b16 %v3801
    %v3891 = vunpack.c.h.b16 %v3801
    %v3892 = vunpack.c.l.b16 %v3802
    %v3893 = vunpack.c.h.b16 %v3802
    %v3894 = vunpack.c.l.b16 %v3803
    %v3895 = vunpack.c.h.b16 %v3803
    %v3896 = vunpack.c.l.b16 %v3804
    %v3897 = vunpack.c.h.b16 %v3804
    %v3898 = vunpack.c.l.b16 %v3805
    %v3899 = vunpack.c.h.b16 %v3805
    %v3900 = vunpack.c.l.b16 %v3806
    %v3901 = vunpack.c.h.b16 %v3806
    %v3902 = vunpack.c.l.b16 %v3807
    %v3903 = vunpack.c.h.b16 %v3807
    %v3904 = vpack.c.b16 %v3844, %v3840
    %v3905 = vpack.c.b16 %v3845, %v3841
    %v3906 = vpack.c.b16 %v3846, %v3842
    %v3907 = vpack.c.b16 %v3847, %v3843
    %v3908 = vpack.c.b16 %v3852, %v3848
    %v3909 = vpack.c.b16 %v3853, %v3849
    %v3910 = vpack.c.b16 %v3854, %v3850
    %v3911 = vpack.c.b16 %v3855, %v3851
    %v3912 = vpack.c.b16 %v3860, %v3856
    %v3913 = vpack.c.b16 %v3861, %v3857
    %v3914 = vpack.c.b16 %v3862, %v3858
    %v3915 = vpack.c.b16 %v3863, %v3859
    %v3916 = vpack.c.b16 %v3868, %v3864
    %v3917 = vpack.c.b16 %v3869, %v3865
    %v3918 = vpack.c.b16 %v3870, %v3866
    %v3919 = vpack.c.b16 %v3871, %v3867
    %v3920 = vpack.c.b16 %v3876, %v3872
    %v3921 = vpack.c.b16 %v3877, %v3873
    %v3922 = vpack.c.b16 %v3878, %v3874
    %v3923 = vpack.c.b16 %v3879, %v3875
    %v3924 = vpack.c.b16 %v3884, %v3880
    %v3925 = vpack.c.b16 %v3885, %v3881
    %v3926 = vpack.c.b16 %v3886, %v3882
    %v3927 = vpack.c.b16 %v3887, %v3883
    %v3928 = vpack.c.b16 %v3892, %v3888
    %v3929 = vpack.c.b16 %v3893, %v3889
    %v3930 = vpack.c.b16 %v3894, %v3890
    %v3931 = vpack.c.b16 %v3895, %v3891
    %v3932 = vpack.c.b16 %v3900, %v3896
    %v3933 = vpack.c.b16 %v3901, %v3897
    %v3934 = vpack.c.b16 %v3902, %v3898
    %v3935 = vpack.c.b16 %v3903, %v3899
    %3968 = vmatprep.subr.bf16.mxu0 %v3905
    %3969 = vmatpush1.bf16.msra.mxu0 %v3904
    %3970 = vmatprep.subr.bf16.mxu0 %v3909
    %3971 = vmatpush1.bf16.msra.mxu0 %v3908
    %3972 = vmatprep.subr.bf16.mxu0 %v3913
    %3973 = vmatpush1.bf16.msra.mxu0 %v3912
    %3974 = vmatprep.subr.bf16.mxu0 %v3917
    %3975 = vmatpush1.bf16.msra.mxu0 %v3916
    %3976 = vmatprep.subr.bf16.mxu0 %v3921
    %3977 = vmatpush1.bf16.msra.mxu0 %v3920
    %3978 = vmatprep.subr.bf16.mxu0 %v3925
    %3979 = vmatpush1.bf16.msra.mxu0 %v3924
    %3980 = vmatprep.subr.bf16.mxu0 %v3929
    %3981 = vmatpush1.bf16.msra.mxu0 %v3928
    %3982 = vmatprep.subr.bf16.mxu0 %v3933
    %3983 = vmatpush1.bf16.msra.mxu0 %v3932
    %3984 = vmatprep.subr.bf16.mxu0 0
    %3985 = vmatpush1.bf16.msra.mxu0 0
    %3986 = vmatprep.subr.bf16.mxu0 0
    %3987 = vmatpush1.bf16.msra.mxu0 0
    %3988 = vmatprep.subr.bf16.mxu0 0
    %3989 = vmatpush1.bf16.msra.mxu0 0
    %3990 = vmatprep.subr.bf16.mxu0 0
    %3991 = vmatpush1.bf16.msra.mxu0 0
    %3992 = vmatprep.subr.bf16.mxu0 0
    %3993 = vmatpush1.bf16.msra.mxu0 0
    %3994 = vmatprep.subr.bf16.mxu0 0
    %3995 = vmatpush1.bf16.msra.mxu0 0
    %3996 = vmatprep.subr.bf16.mxu0 0
    %3997 = vmatpush1.bf16.msra.mxu0 0
    %3998 = vmatprep.subr.bf16.mxu0 0
    %3999 = vmatpush1.bf16.msra.mxu0 0
    %4000 = vmatprep.mubr.bf16.mxu0 0
    %4001 = vmatmul.mubr.bf16.gmra.mrb[0].mxu0 %v3275
    %v4002 = vpop.f32.mrb[0].mxu0
    %v4003 = vadd.f32 0.0, %v4002
    %v4004 = vpop.f32.mrb[0].mxu0
    %v4005 = vadd.f32 0.0, %v4004
    %v4006 = vpop.f32.mrb[0].mxu0
    %v4007 = vpop.f32.mrb[0].mxu0
    %4008 = vdwg.mxu0
    %4009 = vmatprep.subr.bf16.mxu0 %v3907
    %4010 = vmatpush1.bf16.msra.mxu0 %v3906
    %4011 = vmatprep.subr.bf16.mxu0 %v3911
    %4012 = vmatpush1.bf16.msra.mxu0 %v3910
    %4013 = vmatprep.subr.bf16.mxu0 %v3915
    %4014 = vmatpush1.bf16.msra.mxu0 %v3914
    %4015 = vmatprep.subr.bf16.mxu0 %v3919
    %4016 = vmatpush1.bf16.msra.mxu0 %v3918
    %4017 = vmatprep.subr.bf16.mxu0 %v3923
    %4018 = vmatpush1.bf16.msra.mxu0 %v3922
    %4019 = vmatprep.subr.bf16.mxu0 %v3927
    %4020 = vmatpush1.bf16.msra.mxu0 %v3926
    %4021 = vmatprep.subr.bf16.mxu0 %v3931
    %4022 = vmatpush1.bf16.msra.mxu0 %v3930
    %4023 = vmatprep.subr.bf16.mxu0 %v3935
    %4024 = vmatpush1.bf16.msra.mxu0 %v3934
    %4025 = vmatprep.subr.bf16.mxu0 0
    %4026 = vmatpush1.bf16.msra.mxu0 0
    %4027 = vmatprep.subr.bf16.mxu0 0
    %4028 = vmatpush1.bf16.msra.mxu0 0
    %4029 = vmatprep.subr.bf16.mxu0 0
    %4030 = vmatpush1.bf16.msra.mxu0 0
    %4031 = vmatprep.subr.bf16.mxu0 0
    %4032 = vmatpush1.bf16.msra.mxu0 0
    %4033 = vmatprep.subr.bf16.mxu0 0
    %4034 = vmatpush1.bf16.msra.mxu0 0
    %4035 = vmatprep.subr.bf16.mxu0 0
    %4036 = vmatpush1.bf16.msra.mxu0 0
    %4037 = vmatprep.subr.bf16.mxu0 0
    %4038 = vmatpush1.bf16.msra.mxu0 0
    %4039 = vmatprep.subr.bf16.mxu0 0
    %4040 = vmatpush1.bf16.msra.mxu0 0
    %4041 = vmatprep.mubr.bf16.mxu0 0
    %4042 = vmatmul.mubr.bf16.gmra.mrb[0].mxu0 %v3275
    %v4043 = vpop.f32.mrb[0].mxu0
    %v4044 = vadd.f32 0.0, %v4043
    %v4045 = vpop.f32.mrb[0].mxu0
    %v4046 = vadd.f32 0.0, %v4045
    %v4047 = vpop.f32.mrb[0].mxu0
    %v4048 = vpop.f32.mrb[0].mxu0
    %4049 = vdwg.mxu0
    %v4050 = vadd.f32 %v3772, %v4003
    %v4051 = vadd.f32 %v3773, %v4005
    %v4052 = vadd.f32 %v3774, %v4044
    %v4053 = vadd.f32 %v3775, %v4046
    %v4054 = vxor.u32 %v4050, 2147483648
    %v4055 = vmul.f32 %v4054, 1.442695
    %v4056 = vpow.pop %v4055
    %v4057 = vadd.f32 %v4056, 1.0
    %v4058 = vrcp.pop %v4057
    %v4059 = vmul.f32 1.0, %v4058
    %v4060 = vxor.u32 %v4051, 2147483648
    %v4061 = vmul.f32 %v4060, 1.442695
    %v4062 = vpow.pop %v4061
    %v4063 = vadd.f32 %v4062, 1.0
    %v4064 = vrcp.pop %v4063
    %v4065 = vmul.f32 1.0, %v4064
    %v4066 = vtanh.pop %v4052
    %v4067 = vxor.u32 %v4053, 2147483648
    %v4068 = vmul.f32 %v4067, 1.442695
    %v4069 = vpow.pop %v4068
    %v4070 = vadd.f32 %v4069, 1.0
    %v4071 = vrcp.pop %v4070
    %v4072 = vmul.f32 1.0, %v4071
    %v4073 = vmul.f32 %v4065, %v3272
    %v4074 = vmul.f32 %v4059, %v4066
    %v4075 = vadd.f32 %v4073, %v4074
    %v4076 = vtanh.pop %v4075
    %v4077 = vmul.f32 %v4072, %v4076
    %v4078 = vpack.c.bf16 %v4077, %v4077
    %v4079 = vpack.c.bf16 %v3766, %v3766
    %v4080 = vld [vmem:[#allocation14] sm:$0xff]
    %v4081 = vld [vmem:[#allocation14 + $0x8] sm:$0xff]
    %v4082 = vld [vmem:[#allocation14 + $0x10] sm:$0xff]
    %v4083 = vld [vmem:[#allocation14 + $0x18] sm:$0xff]
    %v4084 = vld [vmem:[#allocation14 + $0x20] sm:$0xff]
    %v4085 = vld [vmem:[#allocation14 + $0x28] sm:$0xff]
    %v4086 = vld [vmem:[#allocation14 + $0x30] sm:$0xff]
    %v4087 = vld [vmem:[#allocation14 + $0x38] sm:$0xff]
    %v4088 = vld [vmem:[#allocation14 + $0x40] sm:$0xff]
    %v4089 = vld [vmem:[#allocation14 + $0x48] sm:$0xff]
    %v4090 = vld [vmem:[#allocation14 + $0x50] sm:$0xff]
    %v4091 = vld [vmem:[#allocation14 + $0x58] sm:$0xff]
    %v4092 = vld [vmem:[#allocation14 + $0x60] sm:$0xff]
    %v4093 = vld [vmem:[#allocation14 + $0x68] sm:$0xff]
    %v4094 = vld [vmem:[#allocation14 + $0x70] sm:$0xff]
    %v4095 = vld [vmem:[#allocation14 + $0x78] sm:$0xff]
    %v4096 = vld [vmem:[#allocation14 + $0x80] sm:$0xff]
    %v4097 = vld [vmem:[#allocation14 + $0x88] sm:$0xff]
    %v4098 = vld [vmem:[#allocation14 + $0x90] sm:$0xff]
    %v4099 = vld [vmem:[#allocation14 + $0x98] sm:$0xff]
    %v4100 = vld [vmem:[#allocation14 + $0xa0] sm:$0xff]
    %v4101 = vld [vmem:[#allocation14 + $0xa8] sm:$0xff]
    %v4102 = vld [vmem:[#allocation14 + $0xb0] sm:$0xff]
    %v4103 = vld [vmem:[#allocation14 + $0xb8] sm:$0xff]
    %v4104 = vld [vmem:[#allocation14 + $0xc0] sm:$0xff]
    %v4105 = vld [vmem:[#allocation14 + $0xc8] sm:$0xff]
    %v4106 = vld [vmem:[#allocation14 + $0xd0] sm:$0xff]
    %v4107 = vld [vmem:[#allocation14 + $0xd8] sm:$0xff]
    %v4108 = vld [vmem:[#allocation14 + $0xe0] sm:$0xff]
    %v4109 = vld [vmem:[#allocation14 + $0xe8] sm:$0xff]
    %v4110 = vld [vmem:[#allocation14 + $0xf0] sm:$0xff]
    %v4111 = vld [vmem:[#allocation14 + $0xf8] sm:$0xff]
    %v4112 = vld [vmem:[#allocation14 + $0x100] sm:$0xff]
    %v4113 = vld [vmem:[#allocation14 + $0x108] sm:$0xff]
    %v4114 = vld [vmem:[#allocation14 + $0x110] sm:$0xff]
    %v4115 = vld [vmem:[#allocation14 + $0x118] sm:$0xff]
    %v4116 = vld [vmem:[#allocation14 + $0x120] sm:$0xff]
    %v4117 = vld [vmem:[#allocation14 + $0x128] sm:$0xff]
    %v4118 = vld [vmem:[#allocation14 + $0x130] sm:$0xff]
    %v4119 = vld [vmem:[#allocation14 + $0x138] sm:$0xff]
    %v4120 = vld [vmem:[#allocation14 + $0x140] sm:$0xff]
    %v4121 = vld [vmem:[#allocation14 + $0x148] sm:$0xff]
    %v4122 = vld [vmem:[#allocation14 + $0x150] sm:$0xff]
    %v4123 = vld [vmem:[#allocation14 + $0x158] sm:$0xff]
    %v4124 = vld [vmem:[#allocation14 + $0x160] sm:$0xff]
    %v4125 = vld [vmem:[#allocation14 + $0x168] sm:$0xff]
    %v4126 = vld [vmem:[#allocation14 + $0x170] sm:$0xff]
    %v4127 = vld [vmem:[#allocation14 + $0x178] sm:$0xff]
    %v4128 = vld [vmem:[#allocation14 + $0x180] sm:$0xff]
    %v4129 = vld [vmem:[#allocation14 + $0x188] sm:$0xff]
    %v4130 = vld [vmem:[#allocation14 + $0x190] sm:$0xff]
    %v4131 = vld [vmem:[#allocation14 + $0x198] sm:$0xff]
    %v4132 = vld [vmem:[#allocation14 + $0x1a0] sm:$0xff]
    %v4133 = vld [vmem:[#allocation14 + $0x1a8] sm:$0xff]
    %v4134 = vld [vmem:[#allocation14 + $0x1b0] sm:$0xff]
    %v4135 = vld [vmem:[#allocation14 + $0x1b8] sm:$0xff]
    %v4136 = vld [vmem:[#allocation14 + $0x1c0] sm:$0xff]
    %v4137 = vld [vmem:[#allocation14 + $0x1c8] sm:$0xff]
    %v4138 = vld [vmem:[#allocation14 + $0x1d0] sm:$0xff]
    %v4139 = vld [vmem:[#allocation14 + $0x1d8] sm:$0xff]
    %v4140 = vld [vmem:[#allocation14 + $0x1e0] sm:$0xff]
    %v4141 = vld [vmem:[#allocation14 + $0x1e8] sm:$0xff]
    %v4142 = vld [vmem:[#allocation14 + $0x1f0] sm:$0xff]
    %v4143 = vld [vmem:[#allocation14 + $0x1f8] sm:$0xff]
    %v4208 = vunpack.c.l.b16 %v4080
    %v4209 = vunpack.c.h.b16 %v4080
    %v4210 = vunpack.c.l.b16 %v4081
    %v4211 = vunpack.c.h.b16 %v4081
    %v4212 = vunpack.c.l.b16 %v4082
    %v4213 = vunpack.c.h.b16 %v4082
    %v4214 = vunpack.c.l.b16 %v4083
    %v4215 = vunpack.c.h.b16 %v4083
    %v4216 = vunpack.c.l.b16 %v4084
    %v4217 = vunpack.c.h.b16 %v4084
    %v4218 = vunpack.c.l.b16 %v4085
    %v4219 = vunpack.c.h.b16 %v4085
    %v4220 = vunpack.c.l.b16 %v4086
    %v4221 = vunpack.c.h.b16 %v4086
    %v4222 = vunpack.c.l.b16 %v4087
    %v4223 = vunpack.c.h.b16 %v4087
    %v4224 = vunpack.c.l.b16 %v4088
    %v4225 = vunpack.c.h.b16 %v4088
    %v4226 = vunpack.c.l.b16 %v4089
    %v4227 = vunpack.c.h.b16 %v4089
    %v4228 = vunpack.c.l.b16 %v4090
    %v4229 = vunpack.c.h.b16 %v4090
    %v4230 = vunpack.c.l.b16 %v4091
    %v4231 = vunpack.c.h.b16 %v4091
    %v4232 = vunpack.c.l.b16 %v4092
    %v4233 = vunpack.c.h.b16 %v4092
    %v4234 = vunpack.c.l.b16 %v4093
    %v4235 = vunpack.c.h.b16 %v4093
    %v4236 = vunpack.c.l.b16 %v4094
    %v4237 = vunpack.c.h.b16 %v4094
    %v4238 = vunpack.c.l.b16 %v4095
    %v4239 = vunpack.c.h.b16 %v4095
    %v4240 = vunpack.c.l.b16 %v4096
    %v4241 = vunpack.c.h.b16 %v4096
    %v4242 = vunpack.c.l.b16 %v4097
    %v4243 = vunpack.c.h.b16 %v4097
    %v4244 = vunpack.c.l.b16 %v4098
    %v4245 = vunpack.c.h.b16 %v4098
    %v4246 = vunpack.c.l.b16 %v4099
    %v4247 = vunpack.c.h.b16 %v4099
    %v4248 = vunpack.c.l.b16 %v4100
    %v4249 = vunpack.c.h.b16 %v4100
    %v4250 = vunpack.c.l.b16 %v4101
    %v4251 = vunpack.c.h.b16 %v4101
    %v4252 = vunpack.c.l.b16 %v4102
    %v4253 = vunpack.c.h.b16 %v4102
    %v4254 = vunpack.c.l.b16 %v4103
    %v4255 = vunpack.c.h.b16 %v4103
    %v4256 = vunpack.c.l.b16 %v4104
    %v4257 = vunpack.c.h.b16 %v4104
    %v4258 = vunpack.c.l.b16 %v4105
    %v4259 = vunpack.c.h.b16 %v4105
    %v4260 = vunpack.c.l.b16 %v4106
    %v4261 = vunpack.c.h.b16 %v4106
    %v4262 = vunpack.c.l.b16 %v4107
    %v4263 = vunpack.c.h.b16 %v4107
    %v4264 = vunpack.c.l.b16 %v4108
    %v4265 = vunpack.c.h.b16 %v4108
    %v4266 = vunpack.c.l.b16 %v4109
    %v4267 = vunpack.c.h.b16 %v4109
    %v4268 = vunpack.c.l.b16 %v4110
    %v4269 = vunpack.c.h.b16 %v4110
    %v4270 = vunpack.c.l.b16 %v4111
    %v4271 = vunpack.c.h.b16 %v4111
    %v4272 = vunpack.c.l.b16 %v4112
    %v4273 = vunpack.c.h.b16 %v4112
    %v4274 = vunpack.c.l.b16 %v4113
    %v4275 = vunpack.c.h.b16 %v4113
    %v4276 = vunpack.c.l.b16 %v4114
    %v4277 = vunpack.c.h.b16 %v4114
    %v4278 = vunpack.c.l.b16 %v4115
    %v4279 = vunpack.c.h.b16 %v4115
    %v4280 = vunpack.c.l.b16 %v4116
    %v4281 = vunpack.c.h.b16 %v4116
    %v4282 = vunpack.c.l.b16 %v4117
    %v4283 = vunpack.c.h.b16 %v4117
    %v4284 = vunpack.c.l.b16 %v4118
    %v4285 = vunpack.c.h.b16 %v4118
    %v4286 = vunpack.c.l.b16 %v4119
    %v4287 = vunpack.c.h.b16 %v4119
    %v4288 = vunpack.c.l.b16 %v4120
    %v4289 = vunpack.c.h.b16 %v4120
    %v4290 = vunpack.c.l.b16 %v4121
    %v4291 = vunpack.c.h.b16 %v4121
    %v4292 = vunpack.c.l.b16 %v4122
    %v4293 = vunpack.c.h.b16 %v4122
    %v4294 = vunpack.c.l.b16 %v4123
    %v4295 = vunpack.c.h.b16 %v4123
    %v4296 = vunpack.c.l.b16 %v4124
    %v4297 = vunpack.c.h.b16 %v4124
    %v4298 = vunpack.c.l.b16 %v4125
    %v4299 = vunpack.c.h.b16 %v4125
    %v4300 = vunpack.c.l.b16 %v4126
    %v4301 = vunpack.c.h.b16 %v4126
    %v4302 = vunpack.c.l.b16 %v4127
    %v4303 = vunpack.c.h.b16 %v4127
    %v4304 = vunpack.c.l.b16 %v4128
    %v4305 = vunpack.c.h.b16 %v4128
    %v4306 = vunpack.c.l.b16 %v4129
    %v4307 = vunpack.c.h.b16 %v4129
    %v4308 = vunpack.c.l.b16 %v4130
    %v4309 = vunpack.c.h.b16 %v4130
    %v4310 = vunpack.c.l.b16 %v4131
    %v4311 = vunpack.c.h.b16 %v4131
    %v4312 = vunpack.c.l.b16 %v4132
    %v4313 = vunpack.c.h.b16 %v4132
    %v4314 = vunpack.c.l.b16 %v4133
    %v4315 = vunpack.c.h.b16 %v4133
    %v4316 = vunpack.c.l.b16 %v4134
    %v4317 = vunpack.c.h.b16 %v4134
    %v4318 = vunpack.c.l.b16 %v4135
    %v4319 = vunpack.c.h.b16 %v4135
    %v4320 = vunpack.c.l.b16 %v4136
    %v4321 = vunpack.c.h.b16 %v4136
    %v4322 = vunpack.c.l.b16 %v4137
    %v4323 = vunpack.c.h.b16 %v4137
    %v4324 = vunpack.c.l.b16 %v4138
    %v4325 = vunpack.c.h.b16 %v4138
    %v4326 = vunpack.c.l.b16 %v4139
    %v4327 = vunpack.c.h.b16 %v4139
    %v4328 = vunpack.c.l.b16 %v4140
    %v4329 = vunpack.c.h.b16 %v4140
    %v4330 = vunpack.c.l.b16 %v4141
    %v4331 = vunpack.c.h.b16 %v4141
    %v4332 = vunpack.c.l.b16 %v4142
    %v4333 = vunpack.c.h.b16 %v4142
    %v4334 = vunpack.c.l.b16 %v4143
    %v4335 = vunpack.c.h.b16 %v4143
    %v4336 = vpack.c.b16 %v4212, %v4208
    %v4337 = vpack.c.b16 %v4213, %v4209
    %v4338 = vpack.c.b16 %v4214, %v4210
    %v4339 = vpack.c.b16 %v4215, %v4211
    %v4340 = vpack.c.b16 %v4220, %v4216
    %v4341 = vpack.c.b16 %v4221, %v4217
    %v4342 = vpack.c.b16 %v4222, %v4218
    %v4343 = vpack.c.b16 %v4223, %v4219
    %v4344 = vpack.c.b16 %v4228, %v4224
    %v4345 = vpack.c.b16 %v4229, %v4225
    %v4346 = vpack.c.b16 %v4230, %v4226
    %v4347 = vpack.c.b16 %v4231, %v4227
    %v4348 = vpack.c.b16 %v4236, %v4232
    %v4349 = vpack.c.b16 %v4237, %v4233
    %v4350 = vpack.c.b16 %v4238, %v4234
    %v4351 = vpack.c.b16 %v4239, %v4235
    %v4352 = vpack.c.b16 %v4244, %v4240
    %v4353 = vpack.c.b16 %v4245, %v4241
    %v4354 = vpack.c.b16 %v4246, %v4242
    %v4355 = vpack.c.b16 %v4247, %v4243
    %v4356 = vpack.c.b16 %v4252, %v4248
    %v4357 = vpack.c.b16 %v4253, %v4249
    %v4358 = vpack.c.b16 %v4254, %v4250
    %v4359 = vpack.c.b16 %v4255, %v4251
    %v4360 = vpack.c.b16 %v4260, %v4256
    %v4361 = vpack.c.b16 %v4261, %v4257
    %v4362 = vpack.c.b16 %v4262, %v4258
    %v4363 = vpack.c.b16 %v4263, %v4259
    %v4364 = vpack.c.b16 %v4268, %v4264
    %v4365 = vpack.c.b16 %v4269, %v4265
    %v4366 = vpack.c.b16 %v4270, %v4266
    %v4367 = vpack.c.b16 %v4271, %v4267
    %v4368 = vpack.c.b16 %v4276, %v4272
    %v4369 = vpack.c.b16 %v4277, %v4273
    %v4370 = vpack.c.b16 %v4278, %v4274
    %v4371 = vpack.c.b16 %v4279, %v4275
    %v4372 = vpack.c.b16 %v4284, %v4280
    %v4373 = vpack.c.b16 %v4285, %v4281
    %v4374 = vpack.c.b16 %v4286, %v4282
    %v4375 = vpack.c.b16 %v4287, %v4283
    %v4376 = vpack.c.b16 %v4292, %v4288
    %v4377 = vpack.c.b16 %v4293, %v4289
    %v4378 = vpack.c.b16 %v4294, %v4290
    %v4379 = vpack.c.b16 %v4295, %v4291
    %v4380 = vpack.c.b16 %v4300, %v4296
    %v4381 = vpack.c.b16 %v4301, %v4297
    %v4382 = vpack.c.b16 %v4302, %v4298
    %v4383 = vpack.c.b16 %v4303, %v4299
    %v4384 = vpack.c.b16 %v4308, %v4304
    %v4385 = vpack.c.b16 %v4309, %v4305
    %v4386 = vpack.c.b16 %v4310, %v4306
    %v4387 = vpack.c.b16 %v4311, %v4307
    %v4388 = vpack.c.b16 %v4316, %v4312
    %v4389 = vpack.c.b16 %v4317, %v4313
    %v4390 = vpack.c.b16 %v4318, %v4314
    %v4391 = vpack.c.b16 %v4319, %v4315
    %v4392 = vpack.c.b16 %v4324, %v4320
    %v4393 = vpack.c.b16 %v4325, %v4321
    %v4394 = vpack.c.b16 %v4326, %v4322
    %v4395 = vpack.c.b16 %v4327, %v4323
    %v4396 = vpack.c.b16 %v4332, %v4328
    %v4397 = vpack.c.b16 %v4333, %v4329
    %v4398 = vpack.c.b16 %v4334, %v4330
    %v4399 = vpack.c.b16 %v4335, %v4331
    %4464 = vmatprep.subr.bf16.mxu0 %v4337
    %4465 = vmatpush1.bf16.msra.mxu0 %v4336
    %4466 = vmatprep.subr.bf16.mxu0 %v4341
    %4467 = vmatpush1.bf16.msra.mxu0 %v4340
    %4468 = vmatprep.subr.bf16.mxu0 %v4345
    %4469 = vmatpush1.bf16.msra.mxu0 %v4344
    %4470 = vmatprep.subr.bf16.mxu0 %v4349
    %4471 = vmatpush1.bf16.msra.mxu0 %v4348
    %4472 = vmatprep.subr.bf16.mxu0 %v4353
    %4473 = vmatpush1.bf16.msra.mxu0 %v4352
    %4474 = vmatprep.subr.bf16.mxu0 %v4357
    %4475 = vmatpush1.bf16.msra.mxu0 %v4356
    %4476 = vmatprep.subr.bf16.mxu0 %v4361
    %4477 = vmatpush1.bf16.msra.mxu0 %v4360
    %4478 = vmatprep.subr.bf16.mxu0 %v4365
    %4479 = vmatpush1.bf16.msra.mxu0 %v4364
    %4480 = vmatprep.subr.bf16.mxu0 %v4369
    %4481 = vmatpush1.bf16.msra.mxu0 %v4368
    %4482 = vmatprep.subr.bf16.mxu0 %v4373
    %4483 = vmatpush1.bf16.msra.mxu0 %v4372
    %4484 = vmatprep.subr.bf16.mxu0 %v4377
    %4485 = vmatpush1.bf16.msra.mxu0 %v4376
    %4486 = vmatprep.subr.bf16.mxu0 %v4381
    %4487 = vmatpush1.bf16.msra.mxu0 %v4380
    %4488 = vmatprep.subr.bf16.mxu0 %v4385
    %4489 = vmatpush1.bf16.msra.mxu0 %v4384
    %4490 = vmatprep.subr.bf16.mxu0 %v4389
    %4491 = vmatpush1.bf16.msra.mxu0 %v4388
    %4492 = vmatprep.subr.bf16.mxu0 %v4393
    %4493 = vmatpush1.bf16.msra.mxu0 %v4392
    %4494 = vmatprep.subr.bf16.mxu0 %v4397
    %4495 = vmatpush1.bf16.msra.mxu0 %v4396
    %4496 = vmatprep.mubr.bf16.mxu0 %v4079
    %4497 = vmatmul.mubr.bf16.gmra.mrb[0].mxu0 %v4078
    %v4498 = vpop.f32.mrb[0].mxu0
    %v4499 = vadd.f32 %v536, %v4498
    %v4500 = vpop.f32.mrb[0].mxu0
    %v4501 = vadd.f32 %v540, %v4500
    %v4502 = vpop.f32.mrb[0].mxu0
    %v4503 = vpop.f32.mrb[0].mxu0
    %4504 = vdwg.mxu0
    %4505 = vmatprep.subr.bf16.mxu0 %v4339
    %4506 = vmatpush1.bf16.msra.mxu0 %v4338
    %4507 = vmatprep.subr.bf16.mxu0 %v4343
    %4508 = vmatpush1.bf16.msra.mxu0 %v4342
    %4509 = vmatprep.subr.bf16.mxu0 %v4347
    %4510 = vmatpush1.bf16.msra.mxu0 %v4346
    %4511 = vmatprep.subr.bf16.mxu0 %v4351
    %4512 = vmatpush1.bf16.msra.mxu0 %v4350
    %4513 = vmatprep.subr.bf16.mxu0 %v4355
    %4514 = vmatpush1.bf16.msra.mxu0 %v4354
    %4515 = vmatprep.subr.bf16.mxu0 %v4359
    %4516 = vmatpush1.bf16.msra.mxu0 %v4358
    %4517 = vmatprep.subr.bf16.mxu0 %v4363
    %4518 = vmatpush1.bf16.msra.mxu0 %v4362
    %4519 = vmatprep.subr.bf16.mxu0 %v4367
    %4520 = vmatpush1.bf16.msra.mxu0 %v4366
    %4521 = vmatprep.subr.bf16.mxu0 %v4371
    %4522 = vmatpush1.bf16.msra.mxu0 %v4370
    %4523 = vmatprep.subr.bf16.mxu0 %v4375
    %4524 = vmatpush1.bf16.msra.mxu0 %v4374
    %4525 = vmatprep.subr.bf16.mxu0 %v4379
    %4526 = vmatpush1.bf16.msra.mxu0 %v4378
    %4527 = vmatprep.subr.bf16.mxu0 %v4383
    %4528 = vmatpush1.bf16.msra.mxu0 %v4382
    %4529 = vmatprep.subr.bf16.mxu0 %v4387
    %4530 = vmatpush1.bf16.msra.mxu0 %v4386
    %4531 = vmatprep.subr.bf16.mxu0 %v4391
    %4532 = vmatpush1.bf16.msra.mxu0 %v4390
    %4533 = vmatprep.subr.bf16.mxu0 %v4395
    %4534 = vmatpush1.bf16.msra.mxu0 %v4394
    %4535 = vmatprep.subr.bf16.mxu0 %v4399
    %4536 = vmatpush1.bf16.msra.mxu0 %v4398
    %4537 = vmatprep.mubr.bf16.mxu0 %v4079
    %4538 = vmatmul.mubr.bf16.gmra.mrb[0].mxu0 %v4078
    %v4539 = vpop.f32.mrb[0].mxu0
    %v4540 = vadd.f32 %v544, %v4539
    %v4541 = vpop.f32.mrb[0].mxu0
    %v4542 = vadd.f32 %v548, %v4541
    %v4543 = vpop.f32.mrb[0].mxu0
    %v4544 = vpop.f32.mrb[0].mxu0
    %4545 = vdwg.mxu0
    %v4546 = vxor.u32 %v4499, 2147483648
    %v4547 = vmul.f32 %v4546, 1.442695
    %v4548 = vpow.pop %v4547
    %v4549 = vadd.f32 %v4548, 1.0
    %v4550 = vrcp.pop %v4549
    %v4551 = vmul.f32 1.0, %v4550
    %v4552 = vxor.u32 %v4501, 2147483648
    %v4553 = vmul.f32 %v4552, 1.442695
    %v4554 = vpow.pop %v4553
    %v4555 = vadd.f32 %v4554, 1.0
    %v4556 = vrcp.pop %v4555
    %v4557 = vmul.f32 1.0, %v4556
    %v4558 = vtanh.pop %v4540
    %v4559 = vxor.u32 %v4542, 2147483648
    %v4560 = vmul.f32 %v4559, 1.442695
    %v4561 = vpow.pop %v4560
    %v4562 = vadd.f32 %v4561, 1.0
    %v4563 = vrcp.pop %v4562
    %v4564 = vmul.f32 1.0, %v4563
    %v4565 = vmul.f32 %v4557, %v3764
    %v4566 = vmul.f32 %v4551, %v4558
    %v4567 = vadd.f32 %v4565, %v4566
    %v4568 = vtanh.pop %v4567
    %v4569 = vmul.f32 %v4564, %v4568
    %s4570 = scalar_lea.vmem [#allocation3], 32
    %4571 = vst [vmem:[%s4570] sm:$0xff] %v4569
    %s4572 = smul.u32 5, 4
    %s4573 = smul.addr %s4572, 8
    %s4574 = scalar_lea.vmem [#allocation2], %s4573
    %v4575 = vld [vmem:[%s4574] sm:$0xff]
    %v4576 = vld [vmem:[%s4574 + $0x8] sm:$0xff]
    %v4577 = vld [vmem:[%s4574 + $0x10] sm:$0xff]
    %v4578 = vld [vmem:[%s4574 + $0x18] sm:$0xff]
    %v4579 = vld [vmem:[#allocation13] sm:$0xff]
    %v4580 = vld [vmem:[#allocation13 + $0x8] sm:$0xff]
    %v4581 = vld [vmem:[#allocation13 + $0x10] sm:$0xff]
    %v4582 = vld [vmem:[#allocation13 + $0x18] sm:$0xff]
    %v4583 = vld [vmem:[#allocation13 + $0x20] sm:$0xff]
    %v4584 = vld [vmem:[#allocation13 + $0x28] sm:$0xff]
    %v4585 = vld [vmem:[#allocation13 + $0x30] sm:$0xff]
    %v4586 = vld [vmem:[#allocation13 + $0x38] sm:$0xff]
    %v4587 = vld [vmem:[#allocation13 + $0x40] sm:$0xff]
    %v4588 = vld [vmem:[#allocation13 + $0x48] sm:$0xff]
    %v4589 = vld [vmem:[#allocation13 + $0x50] sm:$0xff]
    %v4590 = vld [vmem:[#allocation13 + $0x58] sm:$0xff]
    %v4591 = vld [vmem:[#allocation13 + $0x60] sm:$0xff]
    %v4592 = vld [vmem:[#allocation13 + $0x68] sm:$0xff]
    %v4593 = vld [vmem:[#allocation13 + $0x70] sm:$0xff]
    %v4594 = vld [vmem:[#allocation13 + $0x78] sm:$0xff]
    %v4595 = vld [vmem:[#allocation13 + $0x80] sm:$0xff]
    %v4596 = vld [vmem:[#allocation13 + $0x88] sm:$0xff]
    %v4597 = vld [vmem:[#allocation13 + $0x90] sm:$0xff]
    %v4598 = vld [vmem:[#allocation13 + $0x98] sm:$0xff]
    %v4599 = vld [vmem:[#allocation13 + $0xa0] sm:$0xff]
    %v4600 = vld [vmem:[#allocation13 + $0xa8] sm:$0xff]
    %v4601 = vld [vmem:[#allocation13 + $0xb0] sm:$0xff]
    %v4602 = vld [vmem:[#allocation13 + $0xb8] sm:$0xff]
    %v4603 = vld [vmem:[#allocation13 + $0xc0] sm:$0xff]
    %v4604 = vld [vmem:[#allocation13 + $0xc8] sm:$0xff]
    %v4605 = vld [vmem:[#allocation13 + $0xd0] sm:$0xff]
    %v4606 = vld [vmem:[#allocation13 + $0xd8] sm:$0xff]
    %v4607 = vld [vmem:[#allocation13 + $0xe0] sm:$0xff]
    %v4608 = vld [vmem:[#allocation13 + $0xe8] sm:$0xff]
    %v4609 = vld [vmem:[#allocation13 + $0xf0] sm:$0xff]
    %v4610 = vld [vmem:[#allocation13 + $0xf8] sm:$0xff]
    %v4643 = vunpack.c.l.b16 %v4579
    %v4644 = vunpack.c.h.b16 %v4579
    %v4645 = vunpack.c.l.b16 %v4580
    %v4646 = vunpack.c.h.b16 %v4580
    %v4647 = vunpack.c.l.b16 %v4581
    %v4648 = vunpack.c.h.b16 %v4581
    %v4649 = vunpack.c.l.b16 %v4582
    %v4650 = vunpack.c.h.b16 %v4582
    %v4651 = vunpack.c.l.b16 %v4583
    %v4652 = vunpack.c.h.b16 %v4583
    %v4653 = vunpack.c.l.b16 %v4584
    %v4654 = vunpack.c.h.b16 %v4584
    %v4655 = vunpack.c.l.b16 %v4585
    %v4656 = vunpack.c.h.b16 %v4585
    %v4657 = vunpack.c.l.b16 %v4586
    %v4658 = vunpack.c.h.b16 %v4586
    %v4659 = vunpack.c.l.b16 %v4587
    %v4660 = vunpack.c.h.b16 %v4587
    %v4661 = vunpack.c.l.b16 %v4588
    %v4662 = vunpack.c.h.b16 %v4588
    %v4663 = vunpack.c.l.b16 %v4589
    %v4664 = vunpack.c.h.b16 %v4589
    %v4665 = vunpack.c.l.b16 %v4590
    %v4666 = vunpack.c.h.b16 %v4590
    %v4667 = vunpack.c.l.b16 %v4591
    %v4668 = vunpack.c.h.b16 %v4591
    %v4669 = vunpack.c.l.b16 %v4592
    %v4670 = vunpack.c.h.b16 %v4592
    %v4671 = vunpack.c.l.b16 %v4593
    %v4672 = vunpack.c.h.b16 %v4593
    %v4673 = vunpack.c.l.b16 %v4594
    %v4674 = vunpack.c.h.b16 %v4594
    %v4675 = vunpack.c.l.b16 %v4595
    %v4676 = vunpack.c.h.b16 %v4595
    %v4677 = vunpack.c.l.b16 %v4596
    %v4678 = vunpack.c.h.b16 %v4596
    %v4679 = vunpack.c.l.b16 %v4597
    %v4680 = vunpack.c.h.b16 %v4597
    %v4681 = vunpack.c.l.b16 %v4598
    %v4682 = vunpack.c.h.b16 %v4598
    %v4683 = vunpack.c.l.b16 %v4599
    %v4684 = vunpack.c.h.b16 %v4599
    %v4685 = vunpack.c.l.b16 %v4600
    %v4686 = vunpack.c.h.b16 %v4600
    %v4687 = vunpack.c.l.b16 %v4601
    %v4688 = vunpack.c.h.b16 %v4601
    %v4689 = vunpack.c.l.b16 %v4602
    %v4690 = vunpack.c.h.b16 %v4602
    %v4691 = vunpack.c.l.b16 %v4603
    %v4692 = vunpack.c.h.b16 %v4603
    %v4693 = vunpack.c.l.b16 %v4604
    %v4694 = vunpack.c.h.b16 %v4604
    %v4695 = vunpack.c.l.b16 %v4605
    %v4696 = vunpack.c.h.b16 %v4605
    %v4697 = vunpack.c.l.b16 %v4606
    %v4698 = vunpack.c.h.b16 %v4606
    %v4699 = vunpack.c.l.b16 %v4607
    %v4700 = vunpack.c.h.b16 %v4607
    %v4701 = vunpack.c.l.b16 %v4608
    %v4702 = vunpack.c.h.b16 %v4608
    %v4703 = vunpack.c.l.b16 %v4609
    %v4704 = vunpack.c.h.b16 %v4609
    %v4705 = vunpack.c.l.b16 %v4610
    %v4706 = vunpack.c.h.b16 %v4610
    %v4707 = vpack.c.b16 %v4647, %v4643
    %v4708 = vpack.c.b16 %v4648, %v4644
    %v4709 = vpack.c.b16 %v4649, %v4645
    %v4710 = vpack.c.b16 %v4650, %v4646
    %v4711 = vpack.c.b16 %v4655, %v4651
    %v4712 = vpack.c.b16 %v4656, %v4652
    %v4713 = vpack.c.b16 %v4657, %v4653
    %v4714 = vpack.c.b16 %v4658, %v4654
    %v4715 = vpack.c.b16 %v4663, %v4659
    %v4716 = vpack.c.b16 %v4664, %v4660
    %v4717 = vpack.c.b16 %v4665, %v4661
    %v4718 = vpack.c.b16 %v4666, %v4662
    %v4719 = vpack.c.b16 %v4671, %v4667
    %v4720 = vpack.c.b16 %v4672, %v4668
    %v4721 = vpack.c.b16 %v4673, %v4669
    %v4722 = vpack.c.b16 %v4674, %v4670
    %v4723 = vpack.c.b16 %v4679, %v4675
    %v4724 = vpack.c.b16 %v4680, %v4676
    %v4725 = vpack.c.b16 %v4681, %v4677
    %v4726 = vpack.c.b16 %v4682, %v4678
    %v4727 = vpack.c.b16 %v4687, %v4683
    %v4728 = vpack.c.b16 %v4688, %v4684
    %v4729 = vpack.c.b16 %v4689, %v4685
    %v4730 = vpack.c.b16 %v4690, %v4686
    %v4731 = vpack.c.b16 %v4695, %v4691
    %v4732 = vpack.c.b16 %v4696, %v4692
    %v4733 = vpack.c.b16 %v4697, %v4693
    %v4734 = vpack.c.b16 %v4698, %v4694
    %v4735 = vpack.c.b16 %v4703, %v4699
    %v4736 = vpack.c.b16 %v4704, %v4700
    %v4737 = vpack.c.b16 %v4705, %v4701
    %v4738 = vpack.c.b16 %v4706, %v4702
    %4771 = vmatprep.subr.bf16.mxu0 %v4708
    %4772 = vmatpush1.bf16.msra.mxu0 %v4707
    %4773 = vmatprep.subr.bf16.mxu0 %v4712
    %4774 = vmatpush1.bf16.msra.mxu0 %v4711
    %4775 = vmatprep.subr.bf16.mxu0 %v4716
    %4776 = vmatpush1.bf16.msra.mxu0 %v4715
    %4777 = vmatprep.subr.bf16.mxu0 %v4720
    %4778 = vmatpush1.bf16.msra.mxu0 %v4719
    %4779 = vmatprep.subr.bf16.mxu0 %v4724
    %4780 = vmatpush1.bf16.msra.mxu0 %v4723
    %4781 = vmatprep.subr.bf16.mxu0 %v4728
    %4782 = vmatpush1.bf16.msra.mxu0 %v4727
    %4783 = vmatprep.subr.bf16.mxu0 %v4732
    %4784 = vmatpush1.bf16.msra.mxu0 %v4731
    %4785 = vmatprep.subr.bf16.mxu0 %v4736
    %4786 = vmatpush1.bf16.msra.mxu0 %v4735
    %4787 = vmatprep.subr.bf16.mxu0 0
    %4788 = vmatpush1.bf16.msra.mxu0 0
    %4789 = vmatprep.subr.bf16.mxu0 0
    %4790 = vmatpush1.bf16.msra.mxu0 0
    %4791 = vmatprep.subr.bf16.mxu0 0
    %4792 = vmatpush1.bf16.msra.mxu0 0
    %4793 = vmatprep.subr.bf16.mxu0 0
    %4794 = vmatpush1.bf16.msra.mxu0 0
    %4795 = vmatprep.subr.bf16.mxu0 0
    %4796 = vmatpush1.bf16.msra.mxu0 0
    %4797 = vmatprep.subr.bf16.mxu0 0
    %4798 = vmatpush1.bf16.msra.mxu0 0
    %4799 = vmatprep.subr.bf16.mxu0 0
    %4800 = vmatpush1.bf16.msra.mxu0 0
    %4801 = vmatprep.subr.bf16.mxu0 0
    %4802 = vmatpush1.bf16.msra.mxu0 0
    %4803 = vmatprep.mubr.bf16.mxu0 0
    %4804 = vmatmul.mubr.bf16.gmra.mrb[0].mxu0 %v4078
    %v4805 = vpop.f32.mrb[0].mxu0
    %v4806 = vadd.f32 0.0, %v4805
    %v4807 = vpop.f32.mrb[0].mxu0
    %v4808 = vadd.f32 0.0, %v4807
    %v4809 = vpop.f32.mrb[0].mxu0
    %v4810 = vpop.f32.mrb[0].mxu0
    %4811 = vdwg.mxu0
    %4812 = vmatprep.subr.bf16.mxu0 %v4710
    %4813 = vmatpush1.bf16.msra.mxu0 %v4709
    %4814 = vmatprep.subr.bf16.mxu0 %v4714
    %4815 = vmatpush1.bf16.msra.mxu0 %v4713
    %4816 = vmatprep.subr.bf16.mxu0 %v4718
    %4817 = vmatpush1.bf16.msra.mxu0 %v4717
    %4818 = vmatprep.subr.bf16.mxu0 %v4722
    %4819 = vmatpush1.bf16.msra.mxu0 %v4721
    %4820 = vmatprep.subr.bf16.mxu0 %v4726
    %4821 = vmatpush1.bf16.msra.mxu0 %v4725
    %4822 = vmatprep.subr.bf16.mxu0 %v4730
    %4823 = vmatpush1.bf16.msra.mxu0 %v4729
    %4824 = vmatprep.subr.bf16.mxu0 %v4734
    %4825 = vmatpush1.bf16.msra.mxu0 %v4733
    %4826 = vmatprep.subr.bf16.mxu0 %v4738
    %4827 = vmatpush1.bf16.msra.mxu0 %v4737
    %4828 = vmatprep.subr.bf16.mxu0 0
    %4829 = vmatpush1.bf16.msra.mxu0 0
    %4830 = vmatprep.subr.bf16.mxu0 0
    %4831 = vmatpush1.bf16.msra.mxu0 0
    %4832 = vmatprep.subr.bf16.mxu0 0
    %4833 = vmatpush1.bf16.msra.mxu0 0
    %4834 = vmatprep.subr.bf16.mxu0 0
    %4835 = vmatpush1.bf16.msra.mxu0 0
    %4836 = vmatprep.subr.bf16.mxu0 0
    %4837 = vmatpush1.bf16.msra.mxu0 0
    %4838 = vmatprep.subr.bf16.mxu0 0
    %4839 = vmatpush1.bf16.msra.mxu0 0
    %4840 = vmatprep.subr.bf16.mxu0 0
    %4841 = vmatpush1.bf16.msra.mxu0 0
    %4842 = vmatprep.subr.bf16.mxu0 0
    %4843 = vmatpush1.bf16.msra.mxu0 0
    %4844 = vmatprep.mubr.bf16.mxu0 0
    %4845 = vmatmul.mubr.bf16.gmra.mrb[0].mxu0 %v4078
    %v4846 = vpop.f32.mrb[0].mxu0
    %v4847 = vadd.f32 0.0, %v4846
    %v4848 = vpop.f32.mrb[0].mxu0
    %v4849 = vadd.f32 0.0, %v4848
    %v4850 = vpop.f32.mrb[0].mxu0
    %v4851 = vpop.f32.mrb[0].mxu0
    %4852 = vdwg.mxu0
    %v4853 = vadd.f32 %v4575, %v4806
    %v4854 = vadd.f32 %v4576, %v4808
    %v4855 = vadd.f32 %v4577, %v4847
    %v4856 = vadd.f32 %v4578, %v4849
    %v4857 = vxor.u32 %v4853, 2147483648
    %v4858 = vmul.f32 %v4857, 1.442695
    %v4859 = vpow.pop %v4858
    %v4860 = vadd.f32 %v4859, 1.0
    %v4861 = vrcp.pop %v4860
    %v4862 = vmul.f32 1.0, %v4861
    %v4863 = vxor.u32 %v4854, 2147483648
    %v4864 = vmul.f32 %v4863, 1.442695
    %v4865 = vpow.pop %v4864
    %v4866 = vadd.f32 %v4865, 1.0
    %v4867 = vrcp.pop %v4866
    %v4868 = vmul.f32 1.0, %v4867
    %v4869 = vtanh.pop %v4855
    %v4870 = vxor.u32 %v4856, 2147483648
    %v4871 = vmul.f32 %v4870, 1.442695
    %v4872 = vpow.pop %v4871
    %v4873 = vadd.f32 %v4872, 1.0
    %v4874 = vrcp.pop %v4873
    %v4875 = vmul.f32 1.0, %v4874
    %v4876 = vmul.f32 %v4868, %v4075
    %v4877 = vmul.f32 %v4862, %v4869
    %v4878 = vadd.f32 %v4876, %v4877
    %v4879 = vtanh.pop %v4878
    %v4880 = vmul.f32 %v4875, %v4879
    %v4881 = vpack.c.bf16 %v4880, %v4880
    %v4882 = vpack.c.bf16 %v4569, %v4569
    %v4883 = vld [vmem:[#allocation14] sm:$0xff]
    %v4884 = vld [vmem:[#allocation14 + $0x8] sm:$0xff]
    %v4885 = vld [vmem:[#allocation14 + $0x10] sm:$0xff]
    %v4886 = vld [vmem:[#allocation14 + $0x18] sm:$0xff]
    %v4887 = vld [vmem:[#allocation14 + $0x20] sm:$0xff]
    %v4888 = vld [vmem:[#allocation14 + $0x28] sm:$0xff]
    %v4889 = vld [vmem:[#allocation14 + $0x30] sm:$0xff]
    %v4890 = vld [vmem:[#allocation14 + $0x38] sm:$0xff]
    %v4891 = vld [vmem:[#allocation14 + $0x40] sm:$0xff]
    %v4892 = vld [vmem:[#allocation14 + $0x48] sm:$0xff]
    %v4893 = vld [vmem:[#allocation14 + $0x50] sm:$0xff]
    %v4894 = vld [vmem:[#allocation14 + $0x58] sm:$0xff]
    %v4895 = vld [vmem:[#allocation14 + $0x60] sm:$0xff]
    %v4896 = vld [vmem:[#allocation14 + $0x68] sm:$0xff]
    %v4897 = vld [vmem:[#allocation14 + $0x70] sm:$0xff]
    %v4898 = vld [vmem:[#allocation14 + $0x78] sm:$0xff]
    %v4899 = vld [vmem:[#allocation14 + $0x80] sm:$0xff]
    %v4900 = vld [vmem:[#allocation14 + $0x88] sm:$0xff]
    %v4901 = vld [vmem:[#allocation14 + $0x90] sm:$0xff]
    %v4902 = vld [vmem:[#allocation14 + $0x98] sm:$0xff]
    %v4903 = vld [vmem:[#allocation14 + $0xa0] sm:$0xff]
    %v4904 = vld [vmem:[#allocation14 + $0xa8] sm:$0xff]
    %v4905 = vld [vmem:[#allocation14 + $0xb0] sm:$0xff]
    %v4906 = vld [vmem:[#allocation14 + $0xb8] sm:$0xff]
    %v4907 = vld [vmem:[#allocation14 + $0xc0] sm:$0xff]
    %v4908 = vld [vmem:[#allocation14 + $0xc8] sm:$0xff]
    %v4909 = vld [vmem:[#allocation14 + $0xd0] sm:$0xff]
    %v4910 = vld [vmem:[#allocation14 + $0xd8] sm:$0xff]
    %v4911 = vld [vmem:[#allocation14 + $0xe0] sm:$0xff]
    %v4912 = vld [vmem:[#allocation14 + $0xe8] sm:$0xff]
    %v4913 = vld [vmem:[#allocation14 + $0xf0] sm:$0xff]
    %v4914 = vld [vmem:[#allocation14 + $0xf8] sm:$0xff]
    %v4915 = vld [vmem:[#allocation14 + $0x100] sm:$0xff]
    %v4916 = vld [vmem:[#allocation14 + $0x108] sm:$0xff]
    %v4917 = vld [vmem:[#allocation14 + $0x110] sm:$0xff]
    %v4918 = vld [vmem:[#allocation14 + $0x118] sm:$0xff]
    %v4919 = vld [vmem:[#allocation14 + $0x120] sm:$0xff]
    %v4920 = vld [vmem:[#allocation14 + $0x128] sm:$0xff]
    %v4921 = vld [vmem:[#allocation14 + $0x130] sm:$0xff]
    %v4922 = vld [vmem:[#allocation14 + $0x138] sm:$0xff]
    %v4923 = vld [vmem:[#allocation14 + $0x140] sm:$0xff]
    %v4924 = vld [vmem:[#allocation14 + $0x148] sm:$0xff]
    %v4925 = vld [vmem:[#allocation14 + $0x150] sm:$0xff]
    %v4926 = vld [vmem:[#allocation14 + $0x158] sm:$0xff]
    %v4927 = vld [vmem:[#allocation14 + $0x160] sm:$0xff]
    %v4928 = vld [vmem:[#allocation14 + $0x168] sm:$0xff]
    %v4929 = vld [vmem:[#allocation14 + $0x170] sm:$0xff]
    %v4930 = vld [vmem:[#allocation14 + $0x178] sm:$0xff]
    %v4931 = vld [vmem:[#allocation14 + $0x180] sm:$0xff]
    %v4932 = vld [vmem:[#allocation14 + $0x188] sm:$0xff]
    %v4933 = vld [vmem:[#allocation14 + $0x190] sm:$0xff]
    %v4934 = vld [vmem:[#allocation14 + $0x198] sm:$0xff]
    %v4935 = vld [vmem:[#allocation14 + $0x1a0] sm:$0xff]
    %v4936 = vld [vmem:[#allocation14 + $0x1a8] sm:$0xff]
    %v4937 = vld [vmem:[#allocation14 + $0x1b0] sm:$0xff]
    %v4938 = vld [vmem:[#allocation14 + $0x1b8] sm:$0xff]
    %v4939 = vld [vmem:[#allocation14 + $0x1c0] sm:$0xff]
    %v4940 = vld [vmem:[#allocation14 + $0x1c8] sm:$0xff]
    %v4941 = vld [vmem:[#allocation14 + $0x1d0] sm:$0xff]
    %v4942 = vld [vmem:[#allocation14 + $0x1d8] sm:$0xff]
    %v4943 = vld [vmem:[#allocation14 + $0x1e0] sm:$0xff]
    %v4944 = vld [vmem:[#allocation14 + $0x1e8] sm:$0xff]
    %v4945 = vld [vmem:[#allocation14 + $0x1f0] sm:$0xff]
    %v4946 = vld [vmem:[#allocation14 + $0x1f8] sm:$0xff]
    %v5011 = vunpack.c.l.b16 %v4883
    %v5012 = vunpack.c.h.b16 %v4883
    %v5013 = vunpack.c.l.b16 %v4884
    %v5014 = vunpack.c.h.b16 %v4884
    %v5015 = vunpack.c.l.b16 %v4885
    %v5016 = vunpack.c.h.b16 %v4885
    %v5017 = vunpack.c.l.b16 %v4886
    %v5018 = vunpack.c.h.b16 %v4886
    %v5019 = vunpack.c.l.b16 %v4887
    %v5020 = vunpack.c.h.b16 %v4887
    %v5021 = vunpack.c.l.b16 %v4888
    %v5022 = vunpack.c.h.b16 %v4888
    %v5023 = vunpack.c.l.b16 %v4889
    %v5024 = vunpack.c.h.b16 %v4889
    %v5025 = vunpack.c.l.b16 %v4890
    %v5026 = vunpack.c.h.b16 %v4890
    %v5027 = vunpack.c.l.b16 %v4891
    %v5028 = vunpack.c.h.b16 %v4891
    %v5029 = vunpack.c.l.b16 %v4892
    %v5030 = vunpack.c.h.b16 %v4892
    %v5031 = vunpack.c.l.b16 %v4893
    %v5032 = vunpack.c.h.b16 %v4893
    %v5033 = vunpack.c.l.b16 %v4894
    %v5034 = vunpack.c.h.b16 %v4894
    %v5035 = vunpack.c.l.b16 %v4895
    %v5036 = vunpack.c.h.b16 %v4895
    %v5037 = vunpack.c.l.b16 %v4896
    %v5038 = vunpack.c.h.b16 %v4896
    %v5039 = vunpack.c.l.b16 %v4897
    %v5040 = vunpack.c.h.b16 %v4897
    %v5041 = vunpack.c.l.b16 %v4898
    %v5042 = vunpack.c.h.b16 %v4898
    %v5043 = vunpack.c.l.b16 %v4899
    %v5044 = vunpack.c.h.b16 %v4899
    %v5045 = vunpack.c.l.b16 %v4900
    %v5046 = vunpack.c.h.b16 %v4900
    %v5047 = vunpack.c.l.b16 %v4901
    %v5048 = vunpack.c.h.b16 %v4901
    %v5049 = vunpack.c.l.b16 %v4902
    %v5050 = vunpack.c.h.b16 %v4902
    %v5051 = vunpack.c.l.b16 %v4903
    %v5052 = vunpack.c.h.b16 %v4903
    %v5053 = vunpack.c.l.b16 %v4904
    %v5054 = vunpack.c.h.b16 %v4904
    %v5055 = vunpack.c.l.b16 %v4905
    %v5056 = vunpack.c.h.b16 %v4905
    %v5057 = vunpack.c.l.b16 %v4906
    %v5058 = vunpack.c.h.b16 %v4906
    %v5059 = vunpack.c.l.b16 %v4907
    %v5060 = vunpack.c.h.b16 %v4907
    %v5061 = vunpack.c.l.b16 %v4908
    %v5062 = vunpack.c.h.b16 %v4908
    %v5063 = vunpack.c.l.b16 %v4909
    %v5064 = vunpack.c.h.b16 %v4909
    %v5065 = vunpack.c.l.b16 %v4910
    %v5066 = vunpack.c.h.b16 %v4910
    %v5067 = vunpack.c.l.b16 %v4911
    %v5068 = vunpack.c.h.b16 %v4911
    %v5069 = vunpack.c.l.b16 %v4912
    %v5070 = vunpack.c.h.b16 %v4912
    %v5071 = vunpack.c.l.b16 %v4913
    %v5072 = vunpack.c.h.b16 %v4913
    %v5073 = vunpack.c.l.b16 %v4914
    %v5074 = vunpack.c.h.b16 %v4914
    %v5075 = vunpack.c.l.b16 %v4915
    %v5076 = vunpack.c.h.b16 %v4915
    %v5077 = vunpack.c.l.b16 %v4916
    %v5078 = vunpack.c.h.b16 %v4916
    %v5079 = vunpack.c.l.b16 %v4917
    %v5080 = vunpack.c.h.b16 %v4917
    %v5081 = vunpack.c.l.b16 %v4918
    %v5082 = vunpack.c.h.b16 %v4918
    %v5083 = vunpack.c.l.b16 %v4919
    %v5084 = vunpack.c.h.b16 %v4919
    %v5085 = vunpack.c.l.b16 %v4920
    %v5086 = vunpack.c.h.b16 %v4920
    %v5087 = vunpack.c.l.b16 %v4921
    %v5088 = vunpack.c.h.b16 %v4921
    %v5089 = vunpack.c.l.b16 %v4922
    %v5090 = vunpack.c.h.b16 %v4922
    %v5091 = vunpack.c.l.b16 %v4923
    %v5092 = vunpack.c.h.b16 %v4923
    %v5093 = vunpack.c.l.b16 %v4924
    %v5094 = vunpack.c.h.b16 %v4924
    %v5095 = vunpack.c.l.b16 %v4925
    %v5096 = vunpack.c.h.b16 %v4925
    %v5097 = vunpack.c.l.b16 %v4926
    %v5098 = vunpack.c.h.b16 %v4926
    %v5099 = vunpack.c.l.b16 %v4927
    %v5100 = vunpack.c.h.b16 %v4927
    %v5101 = vunpack.c.l.b16 %v4928
    %v5102 = vunpack.c.h.b16 %v4928
    %v5103 = vunpack.c.l.b16 %v4929
    %v5104 = vunpack.c.h.b16 %v4929
    %v5105 = vunpack.c.l.b16 %v4930
    %v5106 = vunpack.c.h.b16 %v4930
    %v5107 = vunpack.c.l.b16 %v4931
    %v5108 = vunpack.c.h.b16 %v4931
    %v5109 = vunpack.c.l.b16 %v4932
    %v5110 = vunpack.c.h.b16 %v4932
    %v5111 = vunpack.c.l.b16 %v4933
    %v5112 = vunpack.c.h.b16 %v4933
    %v5113 = vunpack.c.l.b16 %v4934
    %v5114 = vunpack.c.h.b16 %v4934
    %v5115 = vunpack.c.l.b16 %v4935
    %v5116 = vunpack.c.h.b16 %v4935
    %v5117 = vunpack.c.l.b16 %v4936
    %v5118 = vunpack.c.h.b16 %v4936
    %v5119 = vunpack.c.l.b16 %v4937
    %v5120 = vunpack.c.h.b16 %v4937
    %v5121 = vunpack.c.l.b16 %v4938
    %v5122 = vunpack.c.h.b16 %v4938
    %v5123 = vunpack.c.l.b16 %v4939
    %v5124 = vunpack.c.h.b16 %v4939
    %v5125 = vunpack.c.l.b16 %v4940
    %v5126 = vunpack.c.h.b16 %v4940
    %v5127 = vunpack.c.l.b16 %v4941
    %v5128 = vunpack.c.h.b16 %v4941
    %v5129 = vunpack.c.l.b16 %v4942
    %v5130 = vunpack.c.h.b16 %v4942
    %v5131 = vunpack.c.l.b16 %v4943
    %v5132 = vunpack.c.h.b16 %v4943
    %v5133 = vunpack.c.l.b16 %v4944
    %v5134 = vunpack.c.h.b16 %v4944
    %v5135 = vunpack.c.l.b16 %v4945
    %v5136 = vunpack.c.h.b16 %v4945
    %v5137 = vunpack.c.l.b16 %v4946
    %v5138 = vunpack.c.h.b16 %v4946
    %v5139 = vpack.c.b16 %v5015, %v5011
    %v5140 = vpack.c.b16 %v5016, %v5012
    %v5141 = vpack.c.b16 %v5017, %v5013
    %v5142 = vpack.c.b16 %v5018, %v5014
    %v5143 = vpack.c.b16 %v5023, %v5019
    %v5144 = vpack.c.b16 %v5024, %v5020
    %v5145 = vpack.c.b16 %v5025, %v5021
    %v5146 = vpack.c.b16 %v5026, %v5022
    %v5147 = vpack.c.b16 %v5031, %v5027
    %v5148 = vpack.c.b16 %v5032, %v5028
    %v5149 = vpack.c.b16 %v5033, %v5029
    %v5150 = vpack.c.b16 %v5034, %v5030
    %v5151 = vpack.c.b16 %v5039, %v5035
    %v5152 = vpack.c.b16 %v5040, %v5036
    %v5153 = vpack.c.b16 %v5041, %v5037
    %v5154 = vpack.c.b16 %v5042, %v5038
    %v5155 = vpack.c.b16 %v5047, %v5043
    %v5156 = vpack.c.b16 %v5048, %v5044
    %v5157 = vpack.c.b16 %v5049, %v5045
    %v5158 = vpack.c.b16 %v5050, %v5046
    %v5159 = vpack.c.b16 %v5055, %v5051
    %v5160 = vpack.c.b16 %v5056, %v5052
    %v5161 = vpack.c.b16 %v5057, %v5053
    %v5162 = vpack.c.b16 %v5058, %v5054
    %v5163 = vpack.c.b16 %v5063, %v5059
    %v5164 = vpack.c.b16 %v5064, %v5060
    %v5165 = vpack.c.b16 %v5065, %v5061
    %v5166 = vpack.c.b16 %v5066, %v5062
    %v5167 = vpack.c.b16 %v5071, %v5067
    %v5168 = vpack.c.b16 %v5072, %v5068
    %v5169 = vpack.c.b16 %v5073, %v5069
    %v5170 = vpack.c.b16 %v5074, %v5070
    %v5171 = vpack.c.b16 %v5079, %v5075
    %v5172 = vpack.c.b16 %v5080, %v5076
    %v5173 = vpack.c.b16 %v5081, %v5077
    %v5174 = vpack.c.b16 %v5082, %v5078
    %v5175 = vpack.c.b16 %v5087, %v5083
    %v5176 = vpack.c.b16 %v5088, %v5084
    %v5177 = vpack.c.b16 %v5089, %v5085
    %v5178 = vpack.c.b16 %v5090, %v5086
    %v5179 = vpack.c.b16 %v5095, %v5091
    %v5180 = vpack.c.b16 %v5096, %v5092
    %v5181 = vpack.c.b16 %v5097, %v5093
    %v5182 = vpack.c.b16 %v5098, %v5094
    %v5183 = vpack.c.b16 %v5103, %v5099
    %v5184 = vpack.c.b16 %v5104, %v5100
    %v5185 = vpack.c.b16 %v5105, %v5101
    %v5186 = vpack.c.b16 %v5106, %v5102
    %v5187 = vpack.c.b16 %v5111, %v5107
    %v5188 = vpack.c.b16 %v5112, %v5108
    %v5189 = vpack.c.b16 %v5113, %v5109
    %v5190 = vpack.c.b16 %v5114, %v5110
    %v5191 = vpack.c.b16 %v5119, %v5115
    %v5192 = vpack.c.b16 %v5120, %v5116
    %v5193 = vpack.c.b16 %v5121, %v5117
    %v5194 = vpack.c.b16 %v5122, %v5118
    %v5195 = vpack.c.b16 %v5127, %v5123
    %v5196 = vpack.c.b16 %v5128, %v5124
    %v5197 = vpack.c.b16 %v5129, %v5125
    %v5198 = vpack.c.b16 %v5130, %v5126
    %v5199 = vpack.c.b16 %v5135, %v5131
    %v5200 = vpack.c.b16 %v5136, %v5132
    %v5201 = vpack.c.b16 %v5137, %v5133
    %v5202 = vpack.c.b16 %v5138, %v5134
    %5267 = vmatprep.subr.bf16.mxu0 %v5140
    %5268 = vmatpush1.bf16.msra.mxu0 %v5139
    %5269 = vmatprep.subr.bf16.mxu0 %v5144
    %5270 = vmatpush1.bf16.msra.mxu0 %v5143
    %5271 = vmatprep.subr.bf16.mxu0 %v5148
    %5272 = vmatpush1.bf16.msra.mxu0 %v5147
    %5273 = vmatprep.subr.bf16.mxu0 %v5152
    %5274 = vmatpush1.bf16.msra.mxu0 %v5151
    %5275 = vmatprep.subr.bf16.mxu0 %v5156
    %5276 = vmatpush1.bf16.msra.mxu0 %v5155
    %5277 = vmatprep.subr.bf16.mxu0 %v5160
    %5278 = vmatpush1.bf16.msra.mxu0 %v5159
    %5279 = vmatprep.subr.bf16.mxu0 %v5164
    %5280 = vmatpush1.bf16.msra.mxu0 %v5163
    %5281 = vmatprep.subr.bf16.mxu0 %v5168
    %5282 = vmatpush1.bf16.msra.mxu0 %v5167
    %5283 = vmatprep.subr.bf16.mxu0 %v5172
    %5284 = vmatpush1.bf16.msra.mxu0 %v5171
    %5285 = vmatprep.subr.bf16.mxu0 %v5176
    %5286 = vmatpush1.bf16.msra.mxu0 %v5175
    %5287 = vmatprep.subr.bf16.mxu0 %v5180
    %5288 = vmatpush1.bf16.msra.mxu0 %v5179
    %5289 = vmatprep.subr.bf16.mxu0 %v5184
    %5290 = vmatpush1.bf16.msra.mxu0 %v5183
    %5291 = vmatprep.subr.bf16.mxu0 %v5188
    %5292 = vmatpush1.bf16.msra.mxu0 %v5187
    %5293 = vmatprep.subr.bf16.mxu0 %v5192
    %5294 = vmatpush1.bf16.msra.mxu0 %v5191
    %5295 = vmatprep.subr.bf16.mxu0 %v5196
    %5296 = vmatpush1.bf16.msra.mxu0 %v5195
    %5297 = vmatprep.subr.bf16.mxu0 %v5200
    %5298 = vmatpush1.bf16.msra.mxu0 %v5199
    %5299 = vmatprep.mubr.bf16.mxu0 %v4882
    %5300 = vmatmul.mubr.bf16.gmra.mrb[0].mxu0 %v4881
    %v5301 = vpop.f32.mrb[0].mxu0
    %v5302 = vadd.f32 %v536, %v5301
    %v5303 = vpop.f32.mrb[0].mxu0
    %v5304 = vadd.f32 %v540, %v5303
    %v5305 = vpop.f32.mrb[0].mxu0
    %v5306 = vpop.f32.mrb[0].mxu0
    %5307 = vdwg.mxu0
    %5308 = vmatprep.subr.bf16.mxu0 %v5142
    %5309 = vmatpush1.bf16.msra.mxu0 %v5141
    %5310 = vmatprep.subr.bf16.mxu0 %v5146
    %5311 = vmatpush1.bf16.msra.mxu0 %v5145
    %5312 = vmatprep.subr.bf16.mxu0 %v5150
    %5313 = vmatpush1.bf16.msra.mxu0 %v5149
    %5314 = vmatprep.subr.bf16.mxu0 %v5154
    %5315 = vmatpush1.bf16.msra.mxu0 %v5153
    %5316 = vmatprep.subr.bf16.mxu0 %v5158
    %5317 = vmatpush1.bf16.msra.mxu0 %v5157
    %5318 = vmatprep.subr.bf16.mxu0 %v5162
    %5319 = vmatpush1.bf16.msra.mxu0 %v5161
    %5320 = vmatprep.subr.bf16.mxu0 %v5166
    %5321 = vmatpush1.bf16.msra.mxu0 %v5165
    %5322 = vmatprep.subr.bf16.mxu0 %v5170
    %5323 = vmatpush1.bf16.msra.mxu0 %v5169
    %5324 = vmatprep.subr.bf16.mxu0 %v5174
    %5325 = vmatpush1.bf16.msra.mxu0 %v5173
    %5326 = vmatprep.subr.bf16.mxu0 %v5178
    %5327 = vmatpush1.bf16.msra.mxu0 %v5177
    %5328 = vmatprep.subr.bf16.mxu0 %v5182
    %5329 = vmatpush1.bf16.msra.mxu0 %v5181
    %5330 = vmatprep.subr.bf16.mxu0 %v5186
    %5331 = vmatpush1.bf16.msra.mxu0 %v5185
    %5332 = vmatprep.subr.bf16.mxu0 %v5190
    %5333 = vmatpush1.bf16.msra.mxu0 %v5189
    %5334 = vmatprep.subr.bf16.mxu0 %v5194
    %5335 = vmatpush1.bf16.msra.mxu0 %v5193
    %5336 = vmatprep.subr.bf16.mxu0 %v5198
    %5337 = vmatpush1.bf16.msra.mxu0 %v5197
    %5338 = vmatprep.subr.bf16.mxu0 %v5202
    %5339 = vmatpush1.bf16.msra.mxu0 %v5201
    %5340 = vmatprep.mubr.bf16.mxu0 %v4882
    %5341 = vmatmul.mubr.bf16.gmra.mrb[0].mxu0 %v4881
    %v5342 = vpop.f32.mrb[0].mxu0
    %v5343 = vadd.f32 %v544, %v5342
    %v5344 = vpop.f32.mrb[0].mxu0
    %v5345 = vadd.f32 %v548, %v5344
    %v5346 = vpop.f32.mrb[0].mxu0
    %v5347 = vpop.f32.mrb[0].mxu0
    %5348 = vdwg.mxu0
    %v5349 = vxor.u32 %v5302, 2147483648
    %v5350 = vmul.f32 %v5349, 1.442695
    %v5351 = vpow.pop %v5350
    %v5352 = vadd.f32 %v5351, 1.0
    %v5353 = vrcp.pop %v5352
    %v5354 = vmul.f32 1.0, %v5353
    %v5355 = vxor.u32 %v5304, 2147483648
    %v5356 = vmul.f32 %v5355, 1.442695
    %v5357 = vpow.pop %v5356
    %v5358 = vadd.f32 %v5357, 1.0
    %v5359 = vrcp.pop %v5358
    %v5360 = vmul.f32 1.0, %v5359
    %v5361 = vtanh.pop %v5343
    %v5362 = vxor.u32 %v5345, 2147483648
    %v5363 = vmul.f32 %v5362, 1.442695
    %v5364 = vpow.pop %v5363
    %v5365 = vadd.f32 %v5364, 1.0
    %v5366 = vrcp.pop %v5365
    %v5367 = vmul.f32 1.0, %v5366
    %v5368 = vmul.f32 %v5360, %v4567
    %v5369 = vmul.f32 %v5354, %v5361
    %v5370 = vadd.f32 %v5368, %v5369
    %v5371 = vtanh.pop %v5370
    %v5372 = vmul.f32 %v5367, %v5371
    %s5373 = scalar_lea.vmem [#allocation3], 40
    %5374 = vst [vmem:[%s5373] sm:$0xff] %v5372
    %s5375 = smul.u32 6, 4
    %s5376 = smul.addr %s5375, 8
    %s5377 = scalar_lea.vmem [#allocation2], %s5376
    %v5378 = vld [vmem:[%s5377] sm:$0xff]
    %v5379 = vld [vmem:[%s5377 + $0x8] sm:$0xff]
    %v5380 = vld [vmem:[%s5377 + $0x10] sm:$0xff]
    %v5381 = vld [vmem:[%s5377 + $0x18] sm:$0xff]
    %v5382 = vld [vmem:[#allocation13] sm:$0xff]
    %v5383 = vld [vmem:[#allocation13 + $0x8] sm:$0xff]
    %v5384 = vld [vmem:[#allocation13 + $0x10] sm:$0xff]
    %v5385 = vld [vmem:[#allocation13 + $0x18] sm:$0xff]
    %v5386 = vld [vmem:[#allocation13 + $0x20] sm:$0xff]
    %v5387 = vld [vmem:[#allocation13 + $0x28] sm:$0xff]
    %v5388 = vld [vmem:[#allocation13 + $0x30] sm:$0xff]
    %v5389 = vld [vmem:[#allocation13 + $0x38] sm:$0xff]
    %v5390 = vld [vmem:[#allocation13 + $0x40] sm:$0xff]
    %v5391 = vld [vmem:[#allocation13 + $0x48] sm:$0xff]
    %v5392 = vld [vmem:[#allocation13 + $0x50] sm:$0xff]
    %v5393 = vld [vmem:[#allocation13 + $0x58] sm:$0xff]
    %v5394 = vld [vmem:[#allocation13 + $0x60] sm:$0xff]
    %v5395 = vld [vmem:[#allocation13 + $0x68] sm:$0xff]
    %v5396 = vld [vmem:[#allocation13 + $0x70] sm:$0xff]
    %v5397 = vld [vmem:[#allocation13 + $0x78] sm:$0xff]
    %v5398 = vld [vmem:[#allocation13 + $0x80] sm:$0xff]
    %v5399 = vld [vmem:[#allocation13 + $0x88] sm:$0xff]
    %v5400 = vld [vmem:[#allocation13 + $0x90] sm:$0xff]
    %v5401 = vld [vmem:[#allocation13 + $0x98] sm:$0xff]
    %v5402 = vld [vmem:[#allocation13 + $0xa0] sm:$0xff]
    %v5403 = vld [vmem:[#allocation13 + $0xa8] sm:$0xff]
    %v5404 = vld [vmem:[#allocation13 + $0xb0] sm:$0xff]
    %v5405 = vld [vmem:[#allocation13 + $0xb8] sm:$0xff]
    %v5406 = vld [vmem:[#allocation13 + $0xc0] sm:$0xff]
    %v5407 = vld [vmem:[#allocation13 + $0xc8] sm:$0xff]
    %v5408 = vld [vmem:[#allocation13 + $0xd0] sm:$0xff]
    %v5409 = vld [vmem:[#allocation13 + $0xd8] sm:$0xff]
    %v5410 = vld [vmem:[#allocation13 + $0xe0] sm:$0xff]
    %v5411 = vld [vmem:[#allocation13 + $0xe8] sm:$0xff]
    %v5412 = vld [vmem:[#allocation13 + $0xf0] sm:$0xff]
    %v5413 = vld [vmem:[#allocation13 + $0xf8] sm:$0xff]
    %v5446 = vunpack.c.l.b16 %v5382
    %v5447 = vunpack.c.h.b16 %v5382
    %v5448 = vunpack.c.l.b16 %v5383
    %v5449 = vunpack.c.h.b16 %v5383
    %v5450 = vunpack.c.l.b16 %v5384
    %v5451 = vunpack.c.h.b16 %v5384
    %v5452 = vunpack.c.l.b16 %v5385
    %v5453 = vunpack.c.h.b16 %v5385
    %v5454 = vunpack.c.l.b16 %v5386
    %v5455 = vunpack.c.h.b16 %v5386
    %v5456 = vunpack.c.l.b16 %v5387
    %v5457 = vunpack.c.h.b16 %v5387
    %v5458 = vunpack.c.l.b16 %v5388
    %v5459 = vunpack.c.h.b16 %v5388
    %v5460 = vunpack.c.l.b16 %v5389
    %v5461 = vunpack.c.h.b16 %v5389
    %v5462 = vunpack.c.l.b16 %v5390
    %v5463 = vunpack.c.h.b16 %v5390
    %v5464 = vunpack.c.l.b16 %v5391
    %v5465 = vunpack.c.h.b16 %v5391
    %v5466 = vunpack.c.l.b16 %v5392
    %v5467 = vunpack.c.h.b16 %v5392
    %v5468 = vunpack.c.l.b16 %v5393
    %v5469 = vunpack.c.h.b16 %v5393
    %v5470 = vunpack.c.l.b16 %v5394
    %v5471 = vunpack.c.h.b16 %v5394
    %v5472 = vunpack.c.l.b16 %v5395
    %v5473 = vunpack.c.h.b16 %v5395
    %v5474 = vunpack.c.l.b16 %v5396
    %v5475 = vunpack.c.h.b16 %v5396
    %v5476 = vunpack.c.l.b16 %v5397
    %v5477 = vunpack.c.h.b16 %v5397
    %v5478 = vunpack.c.l.b16 %v5398
    %v5479 = vunpack.c.h.b16 %v5398
    %v5480 = vunpack.c.l.b16 %v5399
    %v5481 = vunpack.c.h.b16 %v5399
    %v5482 = vunpack.c.l.b16 %v5400
    %v5483 = vunpack.c.h.b16 %v5400
    %v5484 = vunpack.c.l.b16 %v5401
    %v5485 = vunpack.c.h.b16 %v5401
    %v5486 = vunpack.c.l.b16 %v5402
    %v5487 = vunpack.c.h.b16 %v5402
    %v5488 = vunpack.c.l.b16 %v5403
    %v5489 = vunpack.c.h.b16 %v5403
    %v5490 = vunpack.c.l.b16 %v5404
    %v5491 = vunpack.c.h.b16 %v5404
    %v5492 = vunpack.c.l.b16 %v5405
    %v5493 = vunpack.c.h.b16 %v5405
    %v5494 = vunpack.c.l.b16 %v5406
    %v5495 = vunpack.c.h.b16 %v5406
    %v5496 = vunpack.c.l.b16 %v5407
    %v5497 = vunpack.c.h.b16 %v5407
    %v5498 = vunpack.c.l.b16 %v5408
    %v5499 = vunpack.c.h.b16 %v5408
    %v5500 = vunpack.c.l.b16 %v5409
    %v5501 = vunpack.c.h.b16 %v5409
    %v5502 = vunpack.c.l.b16 %v5410
    %v5503 = vunpack.c.h.b16 %v5410
    %v5504 = vunpack.c.l.b16 %v5411
    %v5505 = vunpack.c.h.b16 %v5411
    %v5506 = vunpack.c.l.b16 %v5412
    %v5507 = vunpack.c.h.b16 %v5412
    %v5508 = vunpack.c.l.b16 %v5413
    %v5509 = vunpack.c.h.b16 %v5413
    %v5510 = vpack.c.b16 %v5450, %v5446
    %v5511 = vpack.c.b16 %v5451, %v5447
    %v5512 = vpack.c.b16 %v5452, %v5448
    %v5513 = vpack.c.b16 %v5453, %v5449
    %v5514 = vpack.c.b16 %v5458, %v5454
    %v5515 = vpack.c.b16 %v5459, %v5455
    %v5516 = vpack.c.b16 %v5460, %v5456
    %v5517 = vpack.c.b16 %v5461, %v5457
    %v5518 = vpack.c.b16 %v5466, %v5462
    %v5519 = vpack.c.b16 %v5467, %v5463
    %v5520 = vpack.c.b16 %v5468, %v5464
    %v5521 = vpack.c.b16 %v5469, %v5465
    %v5522 = vpack.c.b16 %v5474, %v5470
    %v5523 = vpack.c.b16 %v5475, %v5471
    %v5524 = vpack.c.b16 %v5476, %v5472
    %v5525 = vpack.c.b16 %v5477, %v5473
    %v5526 = vpack.c.b16 %v5482, %v5478
    %v5527 = vpack.c.b16 %v5483, %v5479
    %v5528 = vpack.c.b16 %v5484, %v5480
    %v5529 = vpack.c.b16 %v5485, %v5481
    %v5530 = vpack.c.b16 %v5490, %v5486
    %v5531 = vpack.c.b16 %v5491, %v5487
    %v5532 = vpack.c.b16 %v5492, %v5488
    %v5533 = vpack.c.b16 %v5493, %v5489
    %v5534 = vpack.c.b16 %v5498, %v5494
    %v5535 = vpack.c.b16 %v5499, %v5495
    %v5536 = vpack.c.b16 %v5500, %v5496
    %v5537 = vpack.c.b16 %v5501, %v5497
    %v5538 = vpack.c.b16 %v5506, %v5502
    %v5539 = vpack.c.b16 %v5507, %v5503
    %v5540 = vpack.c.b16 %v5508, %v5504
    %v5541 = vpack.c.b16 %v5509, %v5505
    %5574 = vmatprep.subr.bf16.mxu0 %v5511
    %5575 = vmatpush1.bf16.msra.mxu0 %v5510
    %5576 = vmatprep.subr.bf16.mxu0 %v5515
    %5577 = vmatpush1.bf16.msra.mxu0 %v5514
    %5578 = vmatprep.subr.bf16.mxu0 %v5519
    %5579 = vmatpush1.bf16.msra.mxu0 %v5518
    %5580 = vmatprep.subr.bf16.mxu0 %v5523
    %5581 = vmatpush1.bf16.msra.mxu0 %v5522
    %5582 = vmatprep.subr.bf16.mxu0 %v5527
    %5583 = vmatpush1.bf16.msra.mxu0 %v5526
    %5584 = vmatprep.subr.bf16.mxu0 %v5531
    %5585 = vmatpush1.bf16.msra.mxu0 %v5530
    %5586 = vmatprep.subr.bf16.mxu0 %v5535
    %5587 = vmatpush1.bf16.msra.mxu0 %v5534
    %5588 = vmatprep.subr.bf16.mxu0 %v5539
    %5589 = vmatpush1.bf16.msra.mxu0 %v5538
    %5590 = vmatprep.subr.bf16.mxu0 0
    %5591 = vmatpush1.bf16.msra.mxu0 0
    %5592 = vmatprep.subr.bf16.mxu0 0
    %5593 = vmatpush1.bf16.msra.mxu0 0
    %5594 = vmatprep.subr.bf16.mxu0 0
    %5595 = vmatpush1.bf16.msra.mxu0 0
    %5596 = vmatprep.subr.bf16.mxu0 0
    %5597 = vmatpush1.bf16.msra.mxu0 0
    %5598 = vmatprep.subr.bf16.mxu0 0
    %5599 = vmatpush1.bf16.msra.mxu0 0
    %5600 = vmatprep.subr.bf16.mxu0 0
    %5601 = vmatpush1.bf16.msra.mxu0 0
    %5602 = vmatprep.subr.bf16.mxu0 0
    %5603 = vmatpush1.bf16.msra.mxu0 0
    %5604 = vmatprep.subr.bf16.mxu0 0
    %5605 = vmatpush1.bf16.msra.mxu0 0
    %5606 = vmatprep.mubr.bf16.mxu0 0
    %5607 = vmatmul.mubr.bf16.gmra.mrb[0].mxu0 %v4881
    %v5608 = vpop.f32.mrb[0].mxu0
    %v5609 = vadd.f32 0.0, %v5608
    %v5610 = vpop.f32.mrb[0].mxu0
    %v5611 = vadd.f32 0.0, %v5610
    %v5612 = vpop.f32.mrb[0].mxu0
    %v5613 = vpop.f32.mrb[0].mxu0
    %5614 = vdwg.mxu0
    %5615 = vmatprep.subr.bf16.mxu0 %v5513
    %5616 = vmatpush1.bf16.msra.mxu0 %v5512
    %5617 = vmatprep.subr.bf16.mxu0 %v5517
    %5618 = vmatpush1.bf16.msra.mxu0 %v5516
    %5619 = vmatprep.subr.bf16.mxu0 %v5521
    %5620 = vmatpush1.bf16.msra.mxu0 %v5520
    %5621 = vmatprep.subr.bf16.mxu0 %v5525
    %5622 = vmatpush1.bf16.msra.mxu0 %v5524
    %5623 = vmatprep.subr.bf16.mxu0 %v5529
    %5624 = vmatpush1.bf16.msra.mxu0 %v5528
    %5625 = vmatprep.subr.bf16.mxu0 %v5533
    %5626 = vmatpush1.bf16.msra.mxu0 %v5532
    %5627 = vmatprep.subr.bf16.mxu0 %v5537
    %5628 = vmatpush1.bf16.msra.mxu0 %v5536
    %5629 = vmatprep.subr.bf16.mxu0 %v5541
    %5630 = vmatpush1.bf16.msra.mxu0 %v5540
    %5631 = vmatprep.subr.bf16.mxu0 0
    %5632 = vmatpush1.bf16.msra.mxu0 0
    %5633 = vmatprep.subr.bf16.mxu0 0
    %5634 = vmatpush1.bf16.msra.mxu0 0
    %5635 = vmatprep.subr.bf16.mxu0 0
    %5636 = vmatpush1.bf16.msra.mxu0 0
    %5637 = vmatprep.subr.bf16.mxu0 0
    %5638 = vmatpush1.bf16.msra.mxu0 0
    %5639 = vmatprep.subr.bf16.mxu0 0
    %5640 = vmatpush1.bf16.msra.mxu0 0
    %5641 = vmatprep.subr.bf16.mxu0 0
    %5642 = vmatpush1.bf16.msra.mxu0 0
    %5643 = vmatprep.subr.bf16.mxu0 0
    %5644 = vmatpush1.bf16.msra.mxu0 0
    %5645 = vmatprep.subr.bf16.mxu0 0
    %5646 = vmatpush1.bf16.msra.mxu0 0
    %5647 = vmatprep.mubr.bf16.mxu0 0
    %5648 = vmatmul.mubr.bf16.gmra.mrb[0].mxu0 %v4881
    %v5649 = vpop.f32.mrb[0].mxu0
    %v5650 = vadd.f32 0.0, %v5649
    %v5651 = vpop.f32.mrb[0].mxu0
    %v5652 = vadd.f32 0.0, %v5651
    %v5653 = vpop.f32.mrb[0].mxu0
    %v5654 = vpop.f32.mrb[0].mxu0
    %5655 = vdwg.mxu0
    %v5656 = vadd.f32 %v5378, %v5609
    %v5657 = vadd.f32 %v5379, %v5611
    %v5658 = vadd.f32 %v5380, %v5650
    %v5659 = vadd.f32 %v5381, %v5652
    %v5660 = vxor.u32 %v5656, 2147483648
    %v5661 = vmul.f32 %v5660, 1.442695
    %v5662 = vpow.pop %v5661
    %v5663 = vadd.f32 %v5662, 1.0
    %v5664 = vrcp.pop %v5663
    %v5665 = vmul.f32 1.0, %v5664
    %v5666 = vxor.u32 %v5657, 2147483648
    %v5667 = vmul.f32 %v5666, 1.442695
    %v5668 = vpow.pop %v5667
    %v5669 = vadd.f32 %v5668, 1.0
    %v5670 = vrcp.pop %v5669
    %v5671 = vmul.f32 1.0, %v5670
    %v5672 = vtanh.pop %v5658
    %v5673 = vxor.u32 %v5659, 2147483648
    %v5674 = vmul.f32 %v5673, 1.442695
    %v5675 = vpow.pop %v5674
    %v5676 = vadd.f32 %v5675, 1.0
    %v5677 = vrcp.pop %v5676
    %v5678 = vmul.f32 1.0, %v5677
    %v5679 = vmul.f32 %v5671, %v4878
    %v5680 = vmul.f32 %v5665, %v5672
    %v5681 = vadd.f32 %v5679, %v5680
    %v5682 = vtanh.pop %v5681
    %v5683 = vmul.f32 %v5678, %v5682
    %v5684 = vpack.c.bf16 %v5683, %v5683
    %v5685 = vpack.c.bf16 %v5372, %v5372
    %v5686 = vld [vmem:[#allocation14] sm:$0xff]
    %v5687 = vld [vmem:[#allocation14 + $0x8] sm:$0xff]
    %v5688 = vld [vmem:[#allocation14 + $0x10] sm:$0xff]
    %v5689 = vld [vmem:[#allocation14 + $0x18] sm:$0xff]
    %v5690 = vld [vmem:[#allocation14 + $0x20] sm:$0xff]
    %v5691 = vld [vmem:[#allocation14 + $0x28] sm:$0xff]
    %v5692 = vld [vmem:[#allocation14 + $0x30] sm:$0xff]
    %v5693 = vld [vmem:[#allocation14 + $0x38] sm:$0xff]
    %v5694 = vld [vmem:[#allocation14 + $0x40] sm:$0xff]
    %v5695 = vld [vmem:[#allocation14 + $0x48] sm:$0xff]
    %v5696 = vld [vmem:[#allocation14 + $0x50] sm:$0xff]
    %v5697 = vld [vmem:[#allocation14 + $0x58] sm:$0xff]
    %v5698 = vld [vmem:[#allocation14 + $0x60] sm:$0xff]
    %v5699 = vld [vmem:[#allocation14 + $0x68] sm:$0xff]
    %v5700 = vld [vmem:[#allocation14 + $0x70] sm:$0xff]
    %v5701 = vld [vmem:[#allocation14 + $0x78] sm:$0xff]
    %v5702 = vld [vmem:[#allocation14 + $0x80] sm:$0xff]
    %v5703 = vld [vmem:[#allocation14 + $0x88] sm:$0xff]
    %v5704 = vld [vmem:[#allocation14 + $0x90] sm:$0xff]
    %v5705 = vld [vmem:[#allocation14 + $0x98] sm:$0xff]
    %v5706 = vld [vmem:[#allocation14 + $0xa0] sm:$0xff]
    %v5707 = vld [vmem:[#allocation14 + $0xa8] sm:$0xff]
    %v5708 = vld [vmem:[#allocation14 + $0xb0] sm:$0xff]
    %v5709 = vld [vmem:[#allocation14 + $0xb8] sm:$0xff]
    %v5710 = vld [vmem:[#allocation14 + $0xc0] sm:$0xff]
    %v5711 = vld [vmem:[#allocation14 + $0xc8] sm:$0xff]
    %v5712 = vld [vmem:[#allocation14 + $0xd0] sm:$0xff]
    %v5713 = vld [vmem:[#allocation14 + $0xd8] sm:$0xff]
    %v5714 = vld [vmem:[#allocation14 + $0xe0] sm:$0xff]
    %v5715 = vld [vmem:[#allocation14 + $0xe8] sm:$0xff]
    %v5716 = vld [vmem:[#allocation14 + $0xf0] sm:$0xff]
    %v5717 = vld [vmem:[#allocation14 + $0xf8] sm:$0xff]
    %v5718 = vld [vmem:[#allocation14 + $0x100] sm:$0xff]
    %v5719 = vld [vmem:[#allocation14 + $0x108] sm:$0xff]
    %v5720 = vld [vmem:[#allocation14 + $0x110] sm:$0xff]
    %v5721 = vld [vmem:[#allocation14 + $0x118] sm:$0xff]
    %v5722 = vld [vmem:[#allocation14 + $0x120] sm:$0xff]
    %v5723 = vld [vmem:[#allocation14 + $0x128] sm:$0xff]
    %v5724 = vld [vmem:[#allocation14 + $0x130] sm:$0xff]
    %v5725 = vld [vmem:[#allocation14 + $0x138] sm:$0xff]
    %v5726 = vld [vmem:[#allocation14 + $0x140] sm:$0xff]
    %v5727 = vld [vmem:[#allocation14 + $0x148] sm:$0xff]
    %v5728 = vld [vmem:[#allocation14 + $0x150] sm:$0xff]
    %v5729 = vld [vmem:[#allocation14 + $0x158] sm:$0xff]
    %v5730 = vld [vmem:[#allocation14 + $0x160] sm:$0xff]
    %v5731 = vld [vmem:[#allocation14 + $0x168] sm:$0xff]
    %v5732 = vld [vmem:[#allocation14 + $0x170] sm:$0xff]
    %v5733 = vld [vmem:[#allocation14 + $0x178] sm:$0xff]
    %v5734 = vld [vmem:[#allocation14 + $0x180] sm:$0xff]
    %v5735 = vld [vmem:[#allocation14 + $0x188] sm:$0xff]
    %v5736 = vld [vmem:[#allocation14 + $0x190] sm:$0xff]
    %v5737 = vld [vmem:[#allocation14 + $0x198] sm:$0xff]
    %v5738 = vld [vmem:[#allocation14 + $0x1a0] sm:$0xff]
    %v5739 = vld [vmem:[#allocation14 + $0x1a8] sm:$0xff]
    %v5740 = vld [vmem:[#allocation14 + $0x1b0] sm:$0xff]
    %v5741 = vld [vmem:[#allocation14 + $0x1b8] sm:$0xff]
    %v5742 = vld [vmem:[#allocation14 + $0x1c0] sm:$0xff]
    %v5743 = vld [vmem:[#allocation14 + $0x1c8] sm:$0xff]
    %v5744 = vld [vmem:[#allocation14 + $0x1d0] sm:$0xff]
    %v5745 = vld [vmem:[#allocation14 + $0x1d8] sm:$0xff]
    %v5746 = vld [vmem:[#allocation14 + $0x1e0] sm:$0xff]
    %v5747 = vld [vmem:[#allocation14 + $0x1e8] sm:$0xff]
    %v5748 = vld [vmem:[#allocation14 + $0x1f0] sm:$0xff]
    %v5749 = vld [vmem:[#allocation14 + $0x1f8] sm:$0xff]
    %v5814 = vunpack.c.l.b16 %v5686
    %v5815 = vunpack.c.h.b16 %v5686
    %v5816 = vunpack.c.l.b16 %v5687
    %v5817 = vunpack.c.h.b16 %v5687
    %v5818 = vunpack.c.l.b16 %v5688
    %v5819 = vunpack.c.h.b16 %v5688
    %v5820 = vunpack.c.l.b16 %v5689
    %v5821 = vunpack.c.h.b16 %v5689
    %v5822 = vunpack.c.l.b16 %v5690
    %v5823 = vunpack.c.h.b16 %v5690
    %v5824 = vunpack.c.l.b16 %v5691
    %v5825 = vunpack.c.h.b16 %v5691
    %v5826 = vunpack.c.l.b16 %v5692
    %v5827 = vunpack.c.h.b16 %v5692
    %v5828 = vunpack.c.l.b16 %v5693
    %v5829 = vunpack.c.h.b16 %v5693
    %v5830 = vunpack.c.l.b16 %v5694
    %v5831 = vunpack.c.h.b16 %v5694
    %v5832 = vunpack.c.l.b16 %v5695
    %v5833 = vunpack.c.h.b16 %v5695
    %v5834 = vunpack.c.l.b16 %v5696
    %v5835 = vunpack.c.h.b16 %v5696
    %v5836 = vunpack.c.l.b16 %v5697
    %v5837 = vunpack.c.h.b16 %v5697
    %v5838 = vunpack.c.l.b16 %v5698
    %v5839 = vunpack.c.h.b16 %v5698
    %v5840 = vunpack.c.l.b16 %v5699
    %v5841 = vunpack.c.h.b16 %v5699
    %v5842 = vunpack.c.l.b16 %v5700
    %v5843 = vunpack.c.h.b16 %v5700
    %v5844 = vunpack.c.l.b16 %v5701
    %v5845 = vunpack.c.h.b16 %v5701
    %v5846 = vunpack.c.l.b16 %v5702
    %v5847 = vunpack.c.h.b16 %v5702
    %v5848 = vunpack.c.l.b16 %v5703
    %v5849 = vunpack.c.h.b16 %v5703
    %v5850 = vunpack.c.l.b16 %v5704
    %v5851 = vunpack.c.h.b16 %v5704
    %v5852 = vunpack.c.l.b16 %v5705
    %v5853 = vunpack.c.h.b16 %v5705
    %v5854 = vunpack.c.l.b16 %v5706
    %v5855 = vunpack.c.h.b16 %v5706
    %v5856 = vunpack.c.l.b16 %v5707
    %v5857 = vunpack.c.h.b16 %v5707
    %v5858 = vunpack.c.l.b16 %v5708
    %v5859 = vunpack.c.h.b16 %v5708
    %v5860 = vunpack.c.l.b16 %v5709
    %v5861 = vunpack.c.h.b16 %v5709
    %v5862 = vunpack.c.l.b16 %v5710
    %v5863 = vunpack.c.h.b16 %v5710
    %v5864 = vunpack.c.l.b16 %v5711
    %v5865 = vunpack.c.h.b16 %v5711
    %v5866 = vunpack.c.l.b16 %v5712
    %v5867 = vunpack.c.h.b16 %v5712
    %v5868 = vunpack.c.l.b16 %v5713
    %v5869 = vunpack.c.h.b16 %v5713
    %v5870 = vunpack.c.l.b16 %v5714
    %v5871 = vunpack.c.h.b16 %v5714
    %v5872 = vunpack.c.l.b16 %v5715
    %v5873 = vunpack.c.h.b16 %v5715
    %v5874 = vunpack.c.l.b16 %v5716
    %v5875 = vunpack.c.h.b16 %v5716
    %v5876 = vunpack.c.l.b16 %v5717
    %v5877 = vunpack.c.h.b16 %v5717
    %v5878 = vunpack.c.l.b16 %v5718
    %v5879 = vunpack.c.h.b16 %v5718
    %v5880 = vunpack.c.l.b16 %v5719
    %v5881 = vunpack.c.h.b16 %v5719
    %v5882 = vunpack.c.l.b16 %v5720
    %v5883 = vunpack.c.h.b16 %v5720
    %v5884 = vunpack.c.l.b16 %v5721
    %v5885 = vunpack.c.h.b16 %v5721
    %v5886 = vunpack.c.l.b16 %v5722
    %v5887 = vunpack.c.h.b16 %v5722
    %v5888 = vunpack.c.l.b16 %v5723
    %v5889 = vunpack.c.h.b16 %v5723
    %v5890 = vunpack.c.l.b16 %v5724
    %v5891 = vunpack.c.h.b16 %v5724
    %v5892 = vunpack.c.l.b16 %v5725
    %v5893 = vunpack.c.h.b16 %v5725
    %v5894 = vunpack.c.l.b16 %v5726
    %v5895 = vunpack.c.h.b16 %v5726
    %v5896 = vunpack.c.l.b16 %v5727
    %v5897 = vunpack.c.h.b16 %v5727
    %v5898 = vunpack.c.l.b16 %v5728
    %v5899 = vunpack.c.h.b16 %v5728
    %v5900 = vunpack.c.l.b16 %v5729
    %v5901 = vunpack.c.h.b16 %v5729
    %v5902 = vunpack.c.l.b16 %v5730
    %v5903 = vunpack.c.h.b16 %v5730
    %v5904 = vunpack.c.l.b16 %v5731
    %v5905 = vunpack.c.h.b16 %v5731
    %v5906 = vunpack.c.l.b16 %v5732
    %v5907 = vunpack.c.h.b16 %v5732
    %v5908 = vunpack.c.l.b16 %v5733
    %v5909 = vunpack.c.h.b16 %v5733
    %v5910 = vunpack.c.l.b16 %v5734
    %v5911 = vunpack.c.h.b16 %v5734
    %v5912 = vunpack.c.l.b16 %v5735
    %v5913 = vunpack.c.h.b16 %v5735
    %v5914 = vunpack.c.l.b16 %v5736
    %v5915 = vunpack.c.h.b16 %v5736
    %v5916 = vunpack.c.l.b16 %v5737
    %v5917 = vunpack.c.h.b16 %v5737
    %v5918 = vunpack.c.l.b16 %v5738
    %v5919 = vunpack.c.h.b16 %v5738
    %v5920 = vunpack.c.l.b16 %v5739
    %v5921 = vunpack.c.h.b16 %v5739
    %v5922 = vunpack.c.l.b16 %v5740
    %v5923 = vunpack.c.h.b16 %v5740
    %v5924 = vunpack.c.l.b16 %v5741
    %v5925 = vunpack.c.h.b16 %v5741
    %v5926 = vunpack.c.l.b16 %v5742
    %v5927 = vunpack.c.h.b16 %v5742
    %v5928 = vunpack.c.l.b16 %v5743
    %v5929 = vunpack.c.h.b16 %v5743
    %v5930 = vunpack.c.l.b16 %v5744
    %v5931 = vunpack.c.h.b16 %v5744
    %v5932 = vunpack.c.l.b16 %v5745
    %v5933 = vunpack.c.h.b16 %v5745
    %v5934 = vunpack.c.l.b16 %v5746
    %v5935 = vunpack.c.h.b16 %v5746
    %v5936 = vunpack.c.l.b16 %v5747
    %v5937 = vunpack.c.h.b16 %v5747
    %v5938 = vunpack.c.l.b16 %v5748
    %v5939 = vunpack.c.h.b16 %v5748
    %v5940 = vunpack.c.l.b16 %v5749
    %v5941 = vunpack.c.h.b16 %v5749
    %v5942 = vpack.c.b16 %v5818, %v5814
    %v5943 = vpack.c.b16 %v5819, %v5815
    %v5944 = vpack.c.b16 %v5820, %v5816
    %v5945 = vpack.c.b16 %v5821, %v5817
    %v5946 = vpack.c.b16 %v5826, %v5822
    %v5947 = vpack.c.b16 %v5827, %v5823
    %v5948 = vpack.c.b16 %v5828, %v5824
    %v5949 = vpack.c.b16 %v5829, %v5825
    %v5950 = vpack.c.b16 %v5834, %v5830
    %v5951 = vpack.c.b16 %v5835, %v5831
    %v5952 = vpack.c.b16 %v5836, %v5832
    %v5953 = vpack.c.b16 %v5837, %v5833
    %v5954 = vpack.c.b16 %v5842, %v5838
    %v5955 = vpack.c.b16 %v5843, %v5839
    %v5956 = vpack.c.b16 %v5844, %v5840
    %v5957 = vpack.c.b16 %v5845, %v5841
    %v5958 = vpack.c.b16 %v5850, %v5846
    %v5959 = vpack.c.b16 %v5851, %v5847
    %v5960 = vpack.c.b16 %v5852, %v5848
    %v5961 = vpack.c.b16 %v5853, %v5849
    %v5962 = vpack.c.b16 %v5858, %v5854
    %v5963 = vpack.c.b16 %v5859, %v5855
    %v5964 = vpack.c.b16 %v5860, %v5856
    %v5965 = vpack.c.b16 %v5861, %v5857
    %v5966 = vpack.c.b16 %v5866, %v5862
    %v5967 = vpack.c.b16 %v5867, %v5863
    %v5968 = vpack.c.b16 %v5868, %v5864
    %v5969 = vpack.c.b16 %v5869, %v5865
    %v5970 = vpack.c.b16 %v5874, %v5870
    %v5971 = vpack.c.b16 %v5875, %v5871
    %v5972 = vpack.c.b16 %v5876, %v5872
    %v5973 = vpack.c.b16 %v5877, %v5873
    %v5974 = vpack.c.b16 %v5882, %v5878
    %v5975 = vpack.c.b16 %v5883, %v5879
    %v5976 = vpack.c.b16 %v5884, %v5880
    %v5977 = vpack.c.b16 %v5885, %v5881
    %v5978 = vpack.c.b16 %v5890, %v5886
    %v5979 = vpack.c.b16 %v5891, %v5887
    %v5980 = vpack.c.b16 %v5892, %v5888
    %v5981 = vpack.c.b16 %v5893, %v5889
    %v5982 = vpack.c.b16 %v5898, %v5894
    %v5983 = vpack.c.b16 %v5899, %v5895
    %v5984 = vpack.c.b16 %v5900, %v5896
    %v5985 = vpack.c.b16 %v5901, %v5897
    %v5986 = vpack.c.b16 %v5906, %v5902
    %v5987 = vpack.c.b16 %v5907, %v5903
    %v5988 = vpack.c.b16 %v5908, %v5904
    %v5989 = vpack.c.b16 %v5909, %v5905
    %v5990 = vpack.c.b16 %v5914, %v5910
    %v5991 = vpack.c.b16 %v5915, %v5911
    %v5992 = vpack.c.b16 %v5916, %v5912
    %v5993 = vpack.c.b16 %v5917, %v5913
    %v5994 = vpack.c.b16 %v5922, %v5918
    %v5995 = vpack.c.b16 %v5923, %v5919
    %v5996 = vpack.c.b16 %v5924, %v5920
    %v5997 = vpack.c.b16 %v5925, %v5921
    %v5998 = vpack.c.b16 %v5930, %v5926
    %v5999 = vpack.c.b16 %v5931, %v5927
    %v6000 = vpack.c.b16 %v5932, %v5928
    %v6001 = vpack.c.b16 %v5933, %v5929
    %v6002 = vpack.c.b16 %v5938, %v5934
    %v6003 = vpack.c.b16 %v5939, %v5935
    %v6004 = vpack.c.b16 %v5940, %v5936
    %v6005 = vpack.c.b16 %v5941, %v5937
    %6070 = vmatprep.subr.bf16.mxu0 %v5943
    %6071 = vmatpush1.bf16.msra.mxu0 %v5942
    %6072 = vmatprep.subr.bf16.mxu0 %v5947
    %6073 = vmatpush1.bf16.msra.mxu0 %v5946
    %6074 = vmatprep.subr.bf16.mxu0 %v5951
    %6075 = vmatpush1.bf16.msra.mxu0 %v5950
    %6076 = vmatprep.subr.bf16.mxu0 %v5955
    %6077 = vmatpush1.bf16.msra.mxu0 %v5954
    %6078 = vmatprep.subr.bf16.mxu0 %v5959
    %6079 = vmatpush1.bf16.msra.mxu0 %v5958
    %6080 = vmatprep.subr.bf16.mxu0 %v5963
    %6081 = vmatpush1.bf16.msra.mxu0 %v5962
    %6082 = vmatprep.subr.bf16.mxu0 %v5967
    %6083 = vmatpush1.bf16.msra.mxu0 %v5966
    %6084 = vmatprep.subr.bf16.mxu0 %v5971
    %6085 = vmatpush1.bf16.msra.mxu0 %v5970
    %6086 = vmatprep.subr.bf16.mxu0 %v5975
    %6087 = vmatpush1.bf16.msra.mxu0 %v5974
    %6088 = vmatprep.subr.bf16.mxu0 %v5979
    %6089 = vmatpush1.bf16.msra.mxu0 %v5978
    %6090 = vmatprep.subr.bf16.mxu0 %v5983
    %6091 = vmatpush1.bf16.msra.mxu0 %v5982
    %6092 = vmatprep.subr.bf16.mxu0 %v5987
    %6093 = vmatpush1.bf16.msra.mxu0 %v5986
    %6094 = vmatprep.subr.bf16.mxu0 %v5991
    %6095 = vmatpush1.bf16.msra.mxu0 %v5990
    %6096 = vmatprep.subr.bf16.mxu0 %v5995
    %6097 = vmatpush1.bf16.msra.mxu0 %v5994
    %6098 = vmatprep.subr.bf16.mxu0 %v5999
    %6099 = vmatpush1.bf16.msra.mxu0 %v5998
    %6100 = vmatprep.subr.bf16.mxu0 %v6003
    %6101 = vmatpush1.bf16.msra.mxu0 %v6002
    %6102 = vmatprep.mubr.bf16.mxu0 %v5685
    %6103 = vmatmul.mubr.bf16.gmra.mrb[0].mxu0 %v5684
    %v6104 = vpop.f32.mrb[0].mxu0
    %v6105 = vadd.f32 %v536, %v6104
    %v6106 = vpop.f32.mrb[0].mxu0
    %v6107 = vadd.f32 %v540, %v6106
    %v6108 = vpop.f32.mrb[0].mxu0
    %v6109 = vpop.f32.mrb[0].mxu0
    %6110 = vdwg.mxu0
    %6111 = vmatprep.subr.bf16.mxu0 %v5945
    %6112 = vmatpush1.bf16.msra.mxu0 %v5944
    %6113 = vmatprep.subr.bf16.mxu0 %v5949
    %6114 = vmatpush1.bf16.msra.mxu0 %v5948
    %6115 = vmatprep.subr.bf16.mxu0 %v5953
    %6116 = vmatpush1.bf16.msra.mxu0 %v5952
    %6117 = vmatprep.subr.bf16.mxu0 %v5957
    %6118 = vmatpush1.bf16.msra.mxu0 %v5956
    %6119 = vmatprep.subr.bf16.mxu0 %v5961
    %6120 = vmatpush1.bf16.msra.mxu0 %v5960
    %6121 = vmatprep.subr.bf16.mxu0 %v5965
    %6122 = vmatpush1.bf16.msra.mxu0 %v5964
    %6123 = vmatprep.subr.bf16.mxu0 %v5969
    %6124 = vmatpush1.bf16.msra.mxu0 %v5968
    %6125 = vmatprep.subr.bf16.mxu0 %v5973
    %6126 = vmatpush1.bf16.msra.mxu0 %v5972
    %6127 = vmatprep.subr.bf16.mxu0 %v5977
    %6128 = vmatpush1.bf16.msra.mxu0 %v5976
    %6129 = vmatprep.subr.bf16.mxu0 %v5981
    %6130 = vmatpush1.bf16.msra.mxu0 %v5980
    %6131 = vmatprep.subr.bf16.mxu0 %v5985
    %6132 = vmatpush1.bf16.msra.mxu0 %v5984
    %6133 = vmatprep.subr.bf16.mxu0 %v5989
    %6134 = vmatpush1.bf16.msra.mxu0 %v5988
    %6135 = vmatprep.subr.bf16.mxu0 %v5993
    %6136 = vmatpush1.bf16.msra.mxu0 %v5992
    %6137 = vmatprep.subr.bf16.mxu0 %v5997
    %6138 = vmatpush1.bf16.msra.mxu0 %v5996
    %6139 = vmatprep.subr.bf16.mxu0 %v6001
    %6140 = vmatpush1.bf16.msra.mxu0 %v6000
    %6141 = vmatprep.subr.bf16.mxu0 %v6005
    %6142 = vmatpush1.bf16.msra.mxu0 %v6004
    %6143 = vmatprep.mubr.bf16.mxu0 %v5685
    %6144 = vmatmul.mubr.bf16.gmra.mrb[0].mxu0 %v5684
    %v6145 = vpop.f32.mrb[0].mxu0
    %v6146 = vadd.f32 %v544, %v6145
    %v6147 = vpop.f32.mrb[0].mxu0
    %v6148 = vadd.f32 %v548, %v6147
    %v6149 = vpop.f32.mrb[0].mxu0
    %v6150 = vpop.f32.mrb[0].mxu0
    %6151 = vdwg.mxu0
    %v6152 = vxor.u32 %v6105, 2147483648
    %v6153 = vmul.f32 %v6152, 1.442695
    %v6154 = vpow.pop %v6153
    %v6155 = vadd.f32 %v6154, 1.0
    %v6156 = vrcp.pop %v6155
    %v6157 = vmul.f32 1.0, %v6156
    %v6158 = vxor.u32 %v6107, 2147483648
    %v6159 = vmul.f32 %v6158, 1.442695
    %v6160 = vpow.pop %v6159
    %v6161 = vadd.f32 %v6160, 1.0
    %v6162 = vrcp.pop %v6161
    %v6163 = vmul.f32 1.0, %v6162
    %v6164 = vtanh.pop %v6146
    %v6165 = vxor.u32 %v6148, 2147483648
    %v6166 = vmul.f32 %v6165, 1.442695
    %v6167 = vpow.pop %v6166
    %v6168 = vadd.f32 %v6167, 1.0
    %v6169 = vrcp.pop %v6168
    %v6170 = vmul.f32 1.0, %v6169
    %v6171 = vmul.f32 %v6163, %v5370
    %v6172 = vmul.f32 %v6157, %v6164
    %v6173 = vadd.f32 %v6171, %v6172
    %v6174 = vtanh.pop %v6173
    %v6175 = vmul.f32 %v6170, %v6174
    %s6176 = scalar_lea.vmem [#allocation3], 48
    %6177 = vst [vmem:[%s6176] sm:$0xff] %v6175
    %s6178 = smul.u32 7, 4
    %s6179 = smul.addr %s6178, 8
    %s6180 = scalar_lea.vmem [#allocation2], %s6179
    %v6181 = vld [vmem:[%s6180] sm:$0xff]
    %v6182 = vld [vmem:[%s6180 + $0x8] sm:$0xff]
    %v6183 = vld [vmem:[%s6180 + $0x10] sm:$0xff]
    %v6184 = vld [vmem:[%s6180 + $0x18] sm:$0xff]
    %v6185 = vld [vmem:[#allocation13] sm:$0xff]
    %v6186 = vld [vmem:[#allocation13 + $0x8] sm:$0xff]
    %v6187 = vld [vmem:[#allocation13 + $0x10] sm:$0xff]
    %v6188 = vld [vmem:[#allocation13 + $0x18] sm:$0xff]
    %v6189 = vld [vmem:[#allocation13 + $0x20] sm:$0xff]
    %v6190 = vld [vmem:[#allocation13 + $0x28] sm:$0xff]
    %v6191 = vld [vmem:[#allocation13 + $0x30] sm:$0xff]
    %v6192 = vld [vmem:[#allocation13 + $0x38] sm:$0xff]
    %v6193 = vld [vmem:[#allocation13 + $0x40] sm:$0xff]
    %v6194 = vld [vmem:[#allocation13 + $0x48] sm:$0xff]
    %v6195 = vld [vmem:[#allocation13 + $0x50] sm:$0xff]
    %v6196 = vld [vmem:[#allocation13 + $0x58] sm:$0xff]
    %v6197 = vld [vmem:[#allocation13 + $0x60] sm:$0xff]
    %v6198 = vld [vmem:[#allocation13 + $0x68] sm:$0xff]
    %v6199 = vld [vmem:[#allocation13 + $0x70] sm:$0xff]
    %v6200 = vld [vmem:[#allocation13 + $0x78] sm:$0xff]
    %v6201 = vld [vmem:[#allocation13 + $0x80] sm:$0xff]
    %v6202 = vld [vmem:[#allocation13 + $0x88] sm:$0xff]
    %v6203 = vld [vmem:[#allocation13 + $0x90] sm:$0xff]
    %v6204 = vld [vmem:[#allocation13 + $0x98] sm:$0xff]
    %v6205 = vld [vmem:[#allocation13 + $0xa0] sm:$0xff]
    %v6206 = vld [vmem:[#allocation13 + $0xa8] sm:$0xff]
    %v6207 = vld [vmem:[#allocation13 + $0xb0] sm:$0xff]
    %v6208 = vld [vmem:[#allocation13 + $0xb8] sm:$0xff]
    %v6209 = vld [vmem:[#allocation13 + $0xc0] sm:$0xff]
    %v6210 = vld [vmem:[#allocation13 + $0xc8] sm:$0xff]
    %v6211 = vld [vmem:[#allocation13 + $0xd0] sm:$0xff]
    %v6212 = vld [vmem:[#allocation13 + $0xd8] sm:$0xff]
    %v6213 = vld [vmem:[#allocation13 + $0xe0] sm:$0xff]
    %v6214 = vld [vmem:[#allocation13 + $0xe8] sm:$0xff]
    %v6215 = vld [vmem:[#allocation13 + $0xf0] sm:$0xff]
    %v6216 = vld [vmem:[#allocation13 + $0xf8] sm:$0xff]
    %v6249 = vunpack.c.l.b16 %v6185
    %v6250 = vunpack.c.h.b16 %v6185
    %v6251 = vunpack.c.l.b16 %v6186
    %v6252 = vunpack.c.h.b16 %v6186
    %v6253 = vunpack.c.l.b16 %v6187
    %v6254 = vunpack.c.h.b16 %v6187
    %v6255 = vunpack.c.l.b16 %v6188
    %v6256 = vunpack.c.h.b16 %v6188
    %v6257 = vunpack.c.l.b16 %v6189
    %v6258 = vunpack.c.h.b16 %v6189
    %v6259 = vunpack.c.l.b16 %v6190
    %v6260 = vunpack.c.h.b16 %v6190
    %v6261 = vunpack.c.l.b16 %v6191
    %v6262 = vunpack.c.h.b16 %v6191
    %v6263 = vunpack.c.l.b16 %v6192
    %v6264 = vunpack.c.h.b16 %v6192
    %v6265 = vunpack.c.l.b16 %v6193
    %v6266 = vunpack.c.h.b16 %v6193
    %v6267 = vunpack.c.l.b16 %v6194
    %v6268 = vunpack.c.h.b16 %v6194
    %v6269 = vunpack.c.l.b16 %v6195
    %v6270 = vunpack.c.h.b16 %v6195
    %v6271 = vunpack.c.l.b16 %v6196
    %v6272 = vunpack.c.h.b16 %v6196
    %v6273 = vunpack.c.l.b16 %v6197
    %v6274 = vunpack.c.h.b16 %v6197
    %v6275 = vunpack.c.l.b16 %v6198
    %v6276 = vunpack.c.h.b16 %v6198
    %v6277 = vunpack.c.l.b16 %v6199
    %v6278 = vunpack.c.h.b16 %v6199
    %v6279 = vunpack.c.l.b16 %v6200
    %v6280 = vunpack.c.h.b16 %v6200
    %v6281 = vunpack.c.l.b16 %v6201
    %v6282 = vunpack.c.h.b16 %v6201
    %v6283 = vunpack.c.l.b16 %v6202
    %v6284 = vunpack.c.h.b16 %v6202
    %v6285 = vunpack.c.l.b16 %v6203
    %v6286 = vunpack.c.h.b16 %v6203
    %v6287 = vunpack.c.l.b16 %v6204
    %v6288 = vunpack.c.h.b16 %v6204
    %v6289 = vunpack.c.l.b16 %v6205
    %v6290 = vunpack.c.h.b16 %v6205
    %v6291 = vunpack.c.l.b16 %v6206
    %v6292 = vunpack.c.h.b16 %v6206
    %v6293 = vunpack.c.l.b16 %v6207
    %v6294 = vunpack.c.h.b16 %v6207
    %v6295 = vunpack.c.l.b16 %v6208
    %v6296 = vunpack.c.h.b16 %v6208
    %v6297 = vunpack.c.l.b16 %v6209
    %v6298 = vunpack.c.h.b16 %v6209
    %v6299 = vunpack.c.l.b16 %v6210
    %v6300 = vunpack.c.h.b16 %v6210
    %v6301 = vunpack.c.l.b16 %v6211
    %v6302 = vunpack.c.h.b16 %v6211
    %v6303 = vunpack.c.l.b16 %v6212
    %v6304 = vunpack.c.h.b16 %v6212
    %v6305 = vunpack.c.l.b16 %v6213
    %v6306 = vunpack.c.h.b16 %v6213
    %v6307 = vunpack.c.l.b16 %v6214
    %v6308 = vunpack.c.h.b16 %v6214
    %v6309 = vunpack.c.l.b16 %v6215
    %v6310 = vunpack.c.h.b16 %v6215
    %v6311 = vunpack.c.l.b16 %v6216
    %v6312 = vunpack.c.h.b16 %v6216
    %v6313 = vpack.c.b16 %v6253, %v6249
    %v6314 = vpack.c.b16 %v6254, %v6250
    %v6315 = vpack.c.b16 %v6255, %v6251
    %v6316 = vpack.c.b16 %v6256, %v6252
    %v6317 = vpack.c.b16 %v6261, %v6257
    %v6318 = vpack.c.b16 %v6262, %v6258
    %v6319 = vpack.c.b16 %v6263, %v6259
    %v6320 = vpack.c.b16 %v6264, %v6260
    %v6321 = vpack.c.b16 %v6269, %v6265
    %v6322 = vpack.c.b16 %v6270, %v6266
    %v6323 = vpack.c.b16 %v6271, %v6267
    %v6324 = vpack.c.b16 %v6272, %v6268
    %v6325 = vpack.c.b16 %v6277, %v6273
    %v6326 = vpack.c.b16 %v6278, %v6274
    %v6327 = vpack.c.b16 %v6279, %v6275
    %v6328 = vpack.c.b16 %v6280, %v6276
    %v6329 = vpack.c.b16 %v6285, %v6281
    %v6330 = vpack.c.b16 %v6286, %v6282
    %v6331 = vpack.c.b16 %v6287, %v6283
    %v6332 = vpack.c.b16 %v6288, %v6284
    %v6333 = vpack.c.b16 %v6293, %v6289
    %v6334 = vpack.c.b16 %v6294, %v6290
    %v6335 = vpack.c.b16 %v6295, %v6291
    %v6336 = vpack.c.b16 %v6296, %v6292
    %v6337 = vpack.c.b16 %v6301, %v6297
    %v6338 = vpack.c.b16 %v6302, %v6298
    %v6339 = vpack.c.b16 %v6303, %v6299
    %v6340 = vpack.c.b16 %v6304, %v6300
    %v6341 = vpack.c.b16 %v6309, %v6305
    %v6342 = vpack.c.b16 %v6310, %v6306
    %v6343 = vpack.c.b16 %v6311, %v6307
    %v6344 = vpack.c.b16 %v6312, %v6308
    %6377 = vmatprep.subr.bf16.mxu0 %v6314
    %6378 = vmatpush1.bf16.msra.mxu0 %v6313
    %6379 = vmatprep.subr.bf16.mxu0 %v6318
    %6380 = vmatpush1.bf16.msra.mxu0 %v6317
    %6381 = vmatprep.subr.bf16.mxu0 %v6322
    %6382 = vmatpush1.bf16.msra.mxu0 %v6321
    %6383 = vmatprep.subr.bf16.mxu0 %v6326
    %6384 = vmatpush1.bf16.msra.mxu0 %v6325
    %6385 = vmatprep.subr.bf16.mxu0 %v6330
    %6386 = vmatpush1.bf16.msra.mxu0 %v6329
    %6387 = vmatprep.subr.bf16.mxu0 %v6334
    %6388 = vmatpush1.bf16.msra.mxu0 %v6333
    %6389 = vmatprep.subr.bf16.mxu0 %v6338
    %6390 = vmatpush1.bf16.msra.mxu0 %v6337
    %6391 = vmatprep.subr.bf16.mxu0 %v6342
    %6392 = vmatpush1.bf16.msra.mxu0 %v6341
    %6393 = vmatprep.subr.bf16.mxu0 0
    %6394 = vmatpush1.bf16.msra.mxu0 0
    %6395 = vmatprep.subr.bf16.mxu0 0
    %6396 = vmatpush1.bf16.msra.mxu0 0
    %6397 = vmatprep.subr.bf16.mxu0 0
    %6398 = vmatpush1.bf16.msra.mxu0 0
    %6399 = vmatprep.subr.bf16.mxu0 0
    %6400 = vmatpush1.bf16.msra.mxu0 0
    %6401 = vmatprep.subr.bf16.mxu0 0
    %6402 = vmatpush1.bf16.msra.mxu0 0
    %6403 = vmatprep.subr.bf16.mxu0 0
    %6404 = vmatpush1.bf16.msra.mxu0 0
    %6405 = vmatprep.subr.bf16.mxu0 0
    %6406 = vmatpush1.bf16.msra.mxu0 0
    %6407 = vmatprep.subr.bf16.mxu0 0
    %6408 = vmatpush1.bf16.msra.mxu0 0
    %6409 = vmatprep.mubr.bf16.mxu0 0
    %6410 = vmatmul.mubr.bf16.gmra.mrb[0].mxu0 %v5684
    %v6411 = vpop.f32.mrb[0].mxu0
    %v6412 = vadd.f32 0.0, %v6411
    %v6413 = vpop.f32.mrb[0].mxu0
    %v6414 = vadd.f32 0.0, %v6413
    %v6415 = vpop.f32.mrb[0].mxu0
    %v6416 = vpop.f32.mrb[0].mxu0
    %6417 = vdwg.mxu0
    %6418 = vmatprep.subr.bf16.mxu0 %v6316
    %6419 = vmatpush1.bf16.msra.mxu0 %v6315
    %6420 = vmatprep.subr.bf16.mxu0 %v6320
    %6421 = vmatpush1.bf16.msra.mxu0 %v6319
    %6422 = vmatprep.subr.bf16.mxu0 %v6324
    %6423 = vmatpush1.bf16.msra.mxu0 %v6323
    %6424 = vmatprep.subr.bf16.mxu0 %v6328
    %6425 = vmatpush1.bf16.msra.mxu0 %v6327
    %6426 = vmatprep.subr.bf16.mxu0 %v6332
    %6427 = vmatpush1.bf16.msra.mxu0 %v6331
    %6428 = vmatprep.subr.bf16.mxu0 %v6336
    %6429 = vmatpush1.bf16.msra.mxu0 %v6335
    %6430 = vmatprep.subr.bf16.mxu0 %v6340
    %6431 = vmatpush1.bf16.msra.mxu0 %v6339
    %6432 = vmatprep.subr.bf16.mxu0 %v6344
    %6433 = vmatpush1.bf16.msra.mxu0 %v6343
    %6434 = vmatprep.subr.bf16.mxu0 0
    %6435 = vmatpush1.bf16.msra.mxu0 0
    %6436 = vmatprep.subr.bf16.mxu0 0
    %6437 = vmatpush1.bf16.msra.mxu0 0
    %6438 = vmatprep.subr.bf16.mxu0 0
    %6439 = vmatpush1.bf16.msra.mxu0 0
    %6440 = vmatprep.subr.bf16.mxu0 0
    %6441 = vmatpush1.bf16.msra.mxu0 0
    %6442 = vmatprep.subr.bf16.mxu0 0
    %6443 = vmatpush1.bf16.msra.mxu0 0
    %6444 = vmatprep.subr.bf16.mxu0 0
    %6445 = vmatpush1.bf16.msra.mxu0 0
    %6446 = vmatprep.subr.bf16.mxu0 0
    %6447 = vmatpush1.bf16.msra.mxu0 0
    %6448 = vmatprep.subr.bf16.mxu0 0
    %6449 = vmatpush1.bf16.msra.mxu0 0
    %6450 = vmatprep.mubr.bf16.mxu0 0
    %6451 = vmatmul.mubr.bf16.gmra.mrb[0].mxu0 %v5684
    %v6452 = vpop.f32.mrb[0].mxu0
    %v6453 = vadd.f32 0.0, %v6452
    %v6454 = vpop.f32.mrb[0].mxu0
    %v6455 = vadd.f32 0.0, %v6454
    %v6456 = vpop.f32.mrb[0].mxu0
    %v6457 = vpop.f32.mrb[0].mxu0
    %6458 = vdwg.mxu0
    %v6459 = vadd.f32 %v6181, %v6412
    %v6460 = vadd.f32 %v6182, %v6414
    %v6461 = vadd.f32 %v6183, %v6453
    %v6462 = vadd.f32 %v6184, %v6455
    %v6463 = vxor.u32 %v6459, 2147483648
    %v6464 = vmul.f32 %v6463, 1.442695
    %v6465 = vpow.pop %v6464
    %v6466 = vadd.f32 %v6465, 1.0
    %v6467 = vrcp.pop %v6466
    %v6468 = vmul.f32 1.0, %v6467
    %v6469 = vxor.u32 %v6460, 2147483648
    %v6470 = vmul.f32 %v6469, 1.442695
    %v6471 = vpow.pop %v6470
    %v6472 = vadd.f32 %v6471, 1.0
    %v6473 = vrcp.pop %v6472
    %v6474 = vmul.f32 1.0, %v6473
    %v6475 = vtanh.pop %v6461
    %v6476 = vxor.u32 %v6462, 2147483648
    %v6477 = vmul.f32 %v6476, 1.442695
    %v6478 = vpow.pop %v6477
    %v6479 = vadd.f32 %v6478, 1.0
    %v6480 = vrcp.pop %v6479
    %v6481 = vmul.f32 1.0, %v6480
    %v6482 = vmul.f32 %v6474, %v5681
    %v6483 = vmul.f32 %v6468, %v6475
    %v6484 = vadd.f32 %v6482, %v6483
    %v6485 = vtanh.pop %v6484
    %v6486 = vmul.f32 %v6481, %v6485
    %v6487 = vpack.c.bf16 %v6486, %v6486
    %v6488 = vpack.c.bf16 %v6175, %v6175
    %v6489 = vld [vmem:[#allocation14] sm:$0xff]
    %v6490 = vld [vmem:[#allocation14 + $0x8] sm:$0xff]
    %v6491 = vld [vmem:[#allocation14 + $0x10] sm:$0xff]
    %v6492 = vld [vmem:[#allocation14 + $0x18] sm:$0xff]
    %v6493 = vld [vmem:[#allocation14 + $0x20] sm:$0xff]
    %v6494 = vld [vmem:[#allocation14 + $0x28] sm:$0xff]
    %v6495 = vld [vmem:[#allocation14 + $0x30] sm:$0xff]
    %v6496 = vld [vmem:[#allocation14 + $0x38] sm:$0xff]
    %v6497 = vld [vmem:[#allocation14 + $0x40] sm:$0xff]
    %v6498 = vld [vmem:[#allocation14 + $0x48] sm:$0xff]
    %v6499 = vld [vmem:[#allocation14 + $0x50] sm:$0xff]
    %v6500 = vld [vmem:[#allocation14 + $0x58] sm:$0xff]
    %v6501 = vld [vmem:[#allocation14 + $0x60] sm:$0xff]
    %v6502 = vld [vmem:[#allocation14 + $0x68] sm:$0xff]
    %v6503 = vld [vmem:[#allocation14 + $0x70] sm:$0xff]
    %v6504 = vld [vmem:[#allocation14 + $0x78] sm:$0xff]
    %v6505 = vld [vmem:[#allocation14 + $0x80] sm:$0xff]
    %v6506 = vld [vmem:[#allocation14 + $0x88] sm:$0xff]
    %v6507 = vld [vmem:[#allocation14 + $0x90] sm:$0xff]
    %v6508 = vld [vmem:[#allocation14 + $0x98] sm:$0xff]
    %v6509 = vld [vmem:[#allocation14 + $0xa0] sm:$0xff]
    %v6510 = vld [vmem:[#allocation14 + $0xa8] sm:$0xff]
    %v6511 = vld [vmem:[#allocation14 + $0xb0] sm:$0xff]
    %v6512 = vld [vmem:[#allocation14 + $0xb8] sm:$0xff]
    %v6513 = vld [vmem:[#allocation14 + $0xc0] sm:$0xff]
    %v6514 = vld [vmem:[#allocation14 + $0xc8] sm:$0xff]
    %v6515 = vld [vmem:[#allocation14 + $0xd0] sm:$0xff]
    %v6516 = vld [vmem:[#allocation14 + $0xd8] sm:$0xff]
    %v6517 = vld [vmem:[#allocation14 + $0xe0] sm:$0xff]
    %v6518 = vld [vmem:[#allocation14 + $0xe8] sm:$0xff]
    %v6519 = vld [vmem:[#allocation14 + $0xf0] sm:$0xff]
    %v6520 = vld [vmem:[#allocation14 + $0xf8] sm:$0xff]
    %v6521 = vld [vmem:[#allocation14 + $0x100] sm:$0xff]
    %v6522 = vld [vmem:[#allocation14 + $0x108] sm:$0xff]
    %v6523 = vld [vmem:[#allocation14 + $0x110] sm:$0xff]
    %v6524 = vld [vmem:[#allocation14 + $0x118] sm:$0xff]
    %v6525 = vld [vmem:[#allocation14 + $0x120] sm:$0xff]
    %v6526 = vld [vmem:[#allocation14 + $0x128] sm:$0xff]
    %v6527 = vld [vmem:[#allocation14 + $0x130] sm:$0xff]
    %v6528 = vld [vmem:[#allocation14 + $0x138] sm:$0xff]
    %v6529 = vld [vmem:[#allocation14 + $0x140] sm:$0xff]
    %v6530 = vld [vmem:[#allocation14 + $0x148] sm:$0xff]
    %v6531 = vld [vmem:[#allocation14 + $0x150] sm:$0xff]
    %v6532 = vld [vmem:[#allocation14 + $0x158] sm:$0xff]
    %v6533 = vld [vmem:[#allocation14 + $0x160] sm:$0xff]
    %v6534 = vld [vmem:[#allocation14 + $0x168] sm:$0xff]
    %v6535 = vld [vmem:[#allocation14 + $0x170] sm:$0xff]
    %v6536 = vld [vmem:[#allocation14 + $0x178] sm:$0xff]
    %v6537 = vld [vmem:[#allocation14 + $0x180] sm:$0xff]
    %v6538 = vld [vmem:[#allocation14 + $0x188] sm:$0xff]
    %v6539 = vld [vmem:[#allocation14 + $0x190] sm:$0xff]
    %v6540 = vld [vmem:[#allocation14 + $0x198] sm:$0xff]
    %v6541 = vld [vmem:[#allocation14 + $0x1a0] sm:$0xff]
    %v6542 = vld [vmem:[#allocation14 + $0x1a8] sm:$0xff]
    %v6543 = vld [vmem:[#allocation14 + $0x1b0] sm:$0xff]
    %v6544 = vld [vmem:[#allocation14 + $0x1b8] sm:$0xff]
    %v6545 = vld [vmem:[#allocation14 + $0x1c0] sm:$0xff]
    %v6546 = vld [vmem:[#allocation14 + $0x1c8] sm:$0xff]
    %v6547 = vld [vmem:[#allocation14 + $0x1d0] sm:$0xff]
    %v6548 = vld [vmem:[#allocation14 + $0x1d8] sm:$0xff]
    %v6549 = vld [vmem:[#allocation14 + $0x1e0] sm:$0xff]
    %v6550 = vld [vmem:[#allocation14 + $0x1e8] sm:$0xff]
    %v6551 = vld [vmem:[#allocation14 + $0x1f0] sm:$0xff]
    %v6552 = vld [vmem:[#allocation14 + $0x1f8] sm:$0xff]
    %v6617 = vunpack.c.l.b16 %v6489
    %v6618 = vunpack.c.h.b16 %v6489
    %v6619 = vunpack.c.l.b16 %v6490
    %v6620 = vunpack.c.h.b16 %v6490
    %v6621 = vunpack.c.l.b16 %v6491
    %v6622 = vunpack.c.h.b16 %v6491
    %v6623 = vunpack.c.l.b16 %v6492
    %v6624 = vunpack.c.h.b16 %v6492
    %v6625 = vunpack.c.l.b16 %v6493
    %v6626 = vunpack.c.h.b16 %v6493
    %v6627 = vunpack.c.l.b16 %v6494
    %v6628 = vunpack.c.h.b16 %v6494
    %v6629 = vunpack.c.l.b16 %v6495
    %v6630 = vunpack.c.h.b16 %v6495
    %v6631 = vunpack.c.l.b16 %v6496
    %v6632 = vunpack.c.h.b16 %v6496
    %v6633 = vunpack.c.l.b16 %v6497
    %v6634 = vunpack.c.h.b16 %v6497
    %v6635 = vunpack.c.l.b16 %v6498
    %v6636 = vunpack.c.h.b16 %v6498
    %v6637 = vunpack.c.l.b16 %v6499
    %v6638 = vunpack.c.h.b16 %v6499
    %v6639 = vunpack.c.l.b16 %v6500
    %v6640 = vunpack.c.h.b16 %v6500
    %v6641 = vunpack.c.l.b16 %v6501
    %v6642 = vunpack.c.h.b16 %v6501
    %v6643 = vunpack.c.l.b16 %v6502
    %v6644 = vunpack.c.h.b16 %v6502
    %v6645 = vunpack.c.l.b16 %v6503
    %v6646 = vunpack.c.h.b16 %v6503
    %v6647 = vunpack.c.l.b16 %v6504
    %v6648 = vunpack.c.h.b16 %v6504
    %v6649 = vunpack.c.l.b16 %v6505
    %v6650 = vunpack.c.h.b16 %v6505
    %v6651 = vunpack.c.l.b16 %v6506
    %v6652 = vunpack.c.h.b16 %v6506
    %v6653 = vunpack.c.l.b16 %v6507
    %v6654 = vunpack.c.h.b16 %v6507
    %v6655 = vunpack.c.l.b16 %v6508
    %v6656 = vunpack.c.h.b16 %v6508
    %v6657 = vunpack.c.l.b16 %v6509
    %v6658 = vunpack.c.h.b16 %v6509
    %v6659 = vunpack.c.l.b16 %v6510
    %v6660 = vunpack.c.h.b16 %v6510
    %v6661 = vunpack.c.l.b16 %v6511
    %v6662 = vunpack.c.h.b16 %v6511
    %v6663 = vunpack.c.l.b16 %v6512
    %v6664 = vunpack.c.h.b16 %v6512
    %v6665 = vunpack.c.l.b16 %v6513
    %v6666 = vunpack.c.h.b16 %v6513
    %v6667 = vunpack.c.l.b16 %v6514
    %v6668 = vunpack.c.h.b16 %v6514
    %v6669 = vunpack.c.l.b16 %v6515
    %v6670 = vunpack.c.h.b16 %v6515
    %v6671 = vunpack.c.l.b16 %v6516
    %v6672 = vunpack.c.h.b16 %v6516
    %v6673 = vunpack.c.l.b16 %v6517
    %v6674 = vunpack.c.h.b16 %v6517
    %v6675 = vunpack.c.l.b16 %v6518
    %v6676 = vunpack.c.h.b16 %v6518
    %v6677 = vunpack.c.l.b16 %v6519
    %v6678 = vunpack.c.h.b16 %v6519
    %v6679 = vunpack.c.l.b16 %v6520
    %v6680 = vunpack.c.h.b16 %v6520
    %v6681 = vunpack.c.l.b16 %v6521
    %v6682 = vunpack.c.h.b16 %v6521
    %v6683 = vunpack.c.l.b16 %v6522
    %v6684 = vunpack.c.h.b16 %v6522
    %v6685 = vunpack.c.l.b16 %v6523
    %v6686 = vunpack.c.h.b16 %v6523
    %v6687 = vunpack.c.l.b16 %v6524
    %v6688 = vunpack.c.h.b16 %v6524
    %v6689 = vunpack.c.l.b16 %v6525
    %v6690 = vunpack.c.h.b16 %v6525
    %v6691 = vunpack.c.l.b16 %v6526
    %v6692 = vunpack.c.h.b16 %v6526
    %v6693 = vunpack.c.l.b16 %v6527
    %v6694 = vunpack.c.h.b16 %v6527
    %v6695 = vunpack.c.l.b16 %v6528
    %v6696 = vunpack.c.h.b16 %v6528
    %v6697 = vunpack.c.l.b16 %v6529
    %v6698 = vunpack.c.h.b16 %v6529
    %v6699 = vunpack.c.l.b16 %v6530
    %v6700 = vunpack.c.h.b16 %v6530
    %v6701 = vunpack.c.l.b16 %v6531
    %v6702 = vunpack.c.h.b16 %v6531
    %v6703 = vunpack.c.l.b16 %v6532
    %v6704 = vunpack.c.h.b16 %v6532
    %v6705 = vunpack.c.l.b16 %v6533
    %v6706 = vunpack.c.h.b16 %v6533
    %v6707 = vunpack.c.l.b16 %v6534
    %v6708 = vunpack.c.h.b16 %v6534
    %v6709 = vunpack.c.l.b16 %v6535
    %v6710 = vunpack.c.h.b16 %v6535
    %v6711 = vunpack.c.l.b16 %v6536
    %v6712 = vunpack.c.h.b16 %v6536
    %v6713 = vunpack.c.l.b16 %v6537
    %v6714 = vunpack.c.h.b16 %v6537
    %v6715 = vunpack.c.l.b16 %v6538
    %v6716 = vunpack.c.h.b16 %v6538
    %v6717 = vunpack.c.l.b16 %v6539
    %v6718 = vunpack.c.h.b16 %v6539
    %v6719 = vunpack.c.l.b16 %v6540
    %v6720 = vunpack.c.h.b16 %v6540
    %v6721 = vunpack.c.l.b16 %v6541
    %v6722 = vunpack.c.h.b16 %v6541
    %v6723 = vunpack.c.l.b16 %v6542
    %v6724 = vunpack.c.h.b16 %v6542
    %v6725 = vunpack.c.l.b16 %v6543
    %v6726 = vunpack.c.h.b16 %v6543
    %v6727 = vunpack.c.l.b16 %v6544
    %v6728 = vunpack.c.h.b16 %v6544
    %v6729 = vunpack.c.l.b16 %v6545
    %v6730 = vunpack.c.h.b16 %v6545
    %v6731 = vunpack.c.l.b16 %v6546
    %v6732 = vunpack.c.h.b16 %v6546
    %v6733 = vunpack.c.l.b16 %v6547
    %v6734 = vunpack.c.h.b16 %v6547
    %v6735 = vunpack.c.l.b16 %v6548
    %v6736 = vunpack.c.h.b16 %v6548
    %v6737 = vunpack.c.l.b16 %v6549
    %v6738 = vunpack.c.h.b16 %v6549
    %v6739 = vunpack.c.l.b16 %v6550
    %v6740 = vunpack.c.h.b16 %v6550
    %v6741 = vunpack.c.l.b16 %v6551
    %v6742 = vunpack.c.h.b16 %v6551
    %v6743 = vunpack.c.l.b16 %v6552
    %v6744 = vunpack.c.h.b16 %v6552
    %v6745 = vpack.c.b16 %v6621, %v6617
    %v6746 = vpack.c.b16 %v6622, %v6618
    %v6747 = vpack.c.b16 %v6623, %v6619
    %v6748 = vpack.c.b16 %v6624, %v6620
    %v6749 = vpack.c.b16 %v6629, %v6625
    %v6750 = vpack.c.b16 %v6630, %v6626
    %v6751 = vpack.c.b16 %v6631, %v6627
    %v6752 = vpack.c.b16 %v6632, %v6628
    %v6753 = vpack.c.b16 %v6637, %v6633
    %v6754 = vpack.c.b16 %v6638, %v6634
    %v6755 = vpack.c.b16 %v6639, %v6635
    %v6756 = vpack.c.b16 %v6640, %v6636
    %v6757 = vpack.c.b16 %v6645, %v6641
    %v6758 = vpack.c.b16 %v6646, %v6642
    %v6759 = vpack.c.b16 %v6647, %v6643
    %v6760 = vpack.c.b16 %v6648, %v6644
    %v6761 = vpack.c.b16 %v6653, %v6649
    %v6762 = vpack.c.b16 %v6654, %v6650
    %v6763 = vpack.c.b16 %v6655, %v6651
    %v6764 = vpack.c.b16 %v6656, %v6652
    %v6765 = vpack.c.b16 %v6661, %v6657
    %v6766 = vpack.c.b16 %v6662, %v6658
    %v6767 = vpack.c.b16 %v6663, %v6659
    %v6768 = vpack.c.b16 %v6664, %v6660
    %v6769 = vpack.c.b16 %v6669, %v6665
    %v6770 = vpack.c.b16 %v6670, %v6666
    %v6771 = vpack.c.b16 %v6671, %v6667
    %v6772 = vpack.c.b16 %v6672, %v6668
    %v6773 = vpack.c.b16 %v6677, %v6673
    %v6774 = vpack.c.b16 %v6678, %v6674
    %v6775 = vpack.c.b16 %v6679, %v6675
    %v6776 = vpack.c.b16 %v6680, %v6676
    %v6777 = vpack.c.b16 %v6685, %v6681
    %v6778 = vpack.c.b16 %v6686, %v6682
    %v6779 = vpack.c.b16 %v6687, %v6683
    %v6780 = vpack.c.b16 %v6688, %v6684
    %v6781 = vpack.c.b16 %v6693, %v6689
    %v6782 = vpack.c.b16 %v6694, %v6690
    %v6783 = vpack.c.b16 %v6695, %v6691
    %v6784 = vpack.c.b16 %v6696, %v6692
    %v6785 = vpack.c.b16 %v6701, %v6697
    %v6786 = vpack.c.b16 %v6702, %v6698
    %v6787 = vpack.c.b16 %v6703, %v6699
    %v6788 = vpack.c.b16 %v6704, %v6700
    %v6789 = vpack.c.b16 %v6709, %v6705
    %v6790 = vpack.c.b16 %v6710, %v6706
    %v6791 = vpack.c.b16 %v6711, %v6707
    %v6792 = vpack.c.b16 %v6712, %v6708
    %v6793 = vpack.c.b16 %v6717, %v6713
    %v6794 = vpack.c.b16 %v6718, %v6714
    %v6795 = vpack.c.b16 %v6719, %v6715
    %v6796 = vpack.c.b16 %v6720, %v6716
    %v6797 = vpack.c.b16 %v6725, %v6721
    %v6798 = vpack.c.b16 %v6726, %v6722
    %v6799 = vpack.c.b16 %v6727, %v6723
    %v6800 = vpack.c.b16 %v6728, %v6724
    %v6801 = vpack.c.b16 %v6733, %v6729
    %v6802 = vpack.c.b16 %v6734, %v6730
    %v6803 = vpack.c.b16 %v6735, %v6731
    %v6804 = vpack.c.b16 %v6736, %v6732
    %v6805 = vpack.c.b16 %v6741, %v6737
    %v6806 = vpack.c.b16 %v6742, %v6738
    %v6807 = vpack.c.b16 %v6743, %v6739
    %v6808 = vpack.c.b16 %v6744, %v6740
    %6873 = vmatprep.subr.bf16.mxu0 %v6746
    %6874 = vmatpush1.bf16.msra.mxu0 %v6745
    %6875 = vmatprep.subr.bf16.mxu0 %v6750
    %6876 = vmatpush1.bf16.msra.mxu0 %v6749
    %6877 = vmatprep.subr.bf16.mxu0 %v6754
    %6878 = vmatpush1.bf16.msra.mxu0 %v6753
    %6879 = vmatprep.subr.bf16.mxu0 %v6758
    %6880 = vmatpush1.bf16.msra.mxu0 %v6757
    %6881 = vmatprep.subr.bf16.mxu0 %v6762
    %6882 = vmatpush1.bf16.msra.mxu0 %v6761
    %6883 = vmatprep.subr.bf16.mxu0 %v6766
    %6884 = vmatpush1.bf16.msra.mxu0 %v6765
    %6885 = vmatprep.subr.bf16.mxu0 %v6770
    %6886 = vmatpush1.bf16.msra.mxu0 %v6769
    %6887 = vmatprep.subr.bf16.mxu0 %v6774
    %6888 = vmatpush1.bf16.msra.mxu0 %v6773
    %6889 = vmatprep.subr.bf16.mxu0 %v6778
    %6890 = vmatpush1.bf16.msra.mxu0 %v6777
    %6891 = vmatprep.subr.bf16.mxu0 %v6782
    %6892 = vmatpush1.bf16.msra.mxu0 %v6781
    %6893 = vmatprep.subr.bf16.mxu0 %v6786
    %6894 = vmatpush1.bf16.msra.mxu0 %v6785
    %6895 = vmatprep.subr.bf16.mxu0 %v6790
    %6896 = vmatpush1.bf16.msra.mxu0 %v6789
    %6897 = vmatprep.subr.bf16.mxu0 %v6794
    %6898 = vmatpush1.bf16.msra.mxu0 %v6793
    %6899 = vmatprep.subr.bf16.mxu0 %v6798
    %6900 = vmatpush1.bf16.msra.mxu0 %v6797
    %6901 = vmatprep.subr.bf16.mxu0 %v6802
    %6902 = vmatpush1.bf16.msra.mxu0 %v6801
    %6903 = vmatprep.subr.bf16.mxu0 %v6806
    %6904 = vmatpush1.bf16.msra.mxu0 %v6805
    %6905 = vmatprep.mubr.bf16.mxu0 %v6488
    %6906 = vmatmul.mubr.bf16.gmra.mrb[0].mxu0 %v6487
    %v6907 = vpop.f32.mrb[0].mxu0
    %v6908 = vadd.f32 %v536, %v6907
    %v6909 = vpop.f32.mrb[0].mxu0
    %v6910 = vadd.f32 %v540, %v6909
    %v6911 = vpop.f32.mrb[0].mxu0
    %v6912 = vpop.f32.mrb[0].mxu0
    %6913 = vdwg.mxu0
    %6914 = vmatprep.subr.bf16.mxu0 %v6748
    %6915 = vmatpush1.bf16.msra.mxu0 %v6747
    %6916 = vmatprep.subr.bf16.mxu0 %v6752
    %6917 = vmatpush1.bf16.msra.mxu0 %v6751
    %6918 = vmatprep.subr.bf16.mxu0 %v6756
    %6919 = vmatpush1.bf16.msra.mxu0 %v6755
    %6920 = vmatprep.subr.bf16.mxu0 %v6760
    %6921 = vmatpush1.bf16.msra.mxu0 %v6759
    %6922 = vmatprep.subr.bf16.mxu0 %v6764
    %6923 = vmatpush1.bf16.msra.mxu0 %v6763
    %6924 = vmatprep.subr.bf16.mxu0 %v6768
    %6925 = vmatpush1.bf16.msra.mxu0 %v6767
    %6926 = vmatprep.subr.bf16.mxu0 %v6772
    %6927 = vmatpush1.bf16.msra.mxu0 %v6771
    %6928 = vmatprep.subr.bf16.mxu0 %v6776
    %6929 = vmatpush1.bf16.msra.mxu0 %v6775
    %6930 = vmatprep.subr.bf16.mxu0 %v6780
    %6931 = vmatpush1.bf16.msra.mxu0 %v6779
    %6932 = vmatprep.subr.bf16.mxu0 %v6784
    %6933 = vmatpush1.bf16.msra.mxu0 %v6783
    %6934 = vmatprep.subr.bf16.mxu0 %v6788
    %6935 = vmatpush1.bf16.msra.mxu0 %v6787
    %6936 = vmatprep.subr.bf16.mxu0 %v6792
    %6937 = vmatpush1.bf16.msra.mxu0 %v6791
    %6938 = vmatprep.subr.bf16.mxu0 %v6796
    %6939 = vmatpush1.bf16.msra.mxu0 %v6795
    %6940 = vmatprep.subr.bf16.mxu0 %v6800
    %6941 = vmatpush1.bf16.msra.mxu0 %v6799
    %6942 = vmatprep.subr.bf16.mxu0 %v6804
    %6943 = vmatpush1.bf16.msra.mxu0 %v6803
    %6944 = vmatprep.subr.bf16.mxu0 %v6808
    %6945 = vmatpush1.bf16.msra.mxu0 %v6807
    %6946 = vmatprep.mubr.bf16.mxu0 %v6488
    %6947 = vmatmul.mubr.bf16.gmra.mrb[0].mxu0 %v6487
    %v6948 = vpop.f32.mrb[0].mxu0
    %v6949 = vadd.f32 %v544, %v6948
    %v6950 = vpop.f32.mrb[0].mxu0
    %v6951 = vadd.f32 %v548, %v6950
    %v6952 = vpop.f32.mrb[0].mxu0
    %v6953 = vpop.f32.mrb[0].mxu0
    %6954 = vdwg.mxu0
    %v6955 = vxor.u32 %v6908, 2147483648
    %v6956 = vmul.f32 %v6955, 1.442695
    %v6957 = vpow.pop %v6956
    %v6958 = vadd.f32 %v6957, 1.0
    %v6959 = vrcp.pop %v6958
    %v6960 = vmul.f32 1.0, %v6959
    %v6961 = vxor.u32 %v6910, 2147483648
    %v6962 = vmul.f32 %v6961, 1.442695
    %v6963 = vpow.pop %v6962
    %v6964 = vadd.f32 %v6963, 1.0
    %v6965 = vrcp.pop %v6964
    %v6966 = vmul.f32 1.0, %v6965
    %v6967 = vtanh.pop %v6949
    %v6968 = vxor.u32 %v6951, 2147483648
    %v6969 = vmul.f32 %v6968, 1.442695
    %v6970 = vpow.pop %v6969
    %v6971 = vadd.f32 %v6970, 1.0
    %v6972 = vrcp.pop %v6971
    %v6973 = vmul.f32 1.0, %v6972
    %v6974 = vmul.f32 %v6966, %v6173
    %v6975 = vmul.f32 %v6960, %v6967
    %v6976 = vadd.f32 %v6974, %v6975
    %v6977 = vtanh.pop %v6976
    %v6978 = vmul.f32 %v6973, %v6977
    %s6979 = scalar_lea.vmem [#allocation3], 56
    %6980 = vst [vmem:[%s6979] sm:$0xff] %v6978
    %6981 = vst [vmem:[#allocation4] sm:$0xff] %v6486
    %6982 = vst [vmem:[#allocation5] sm:$0xff] %v6484
    %6983 = vst [vmem:[#allocation6] sm:$0xff] %v6978
    %6984 = vst [vmem:[#allocation7] sm:$0xff] %v6976
    %v6985 = vld [vmem:[#allocation3] sm:$0xff]
    %v6986 = vld [vmem:[#allocation3 + $0x8] sm:$0xff]
    %v6987 = vld [vmem:[#allocation3 + $0x10] sm:$0xff]
    %v6988 = vld [vmem:[#allocation3 + $0x18] sm:$0xff]
    %v6989 = vld [vmem:[#allocation3 + $0x20] sm:$0xff]
    %v6990 = vld [vmem:[#allocation3 + $0x28] sm:$0xff]
    %v6991 = vld [vmem:[#allocation3 + $0x30] sm:$0xff]
    %v6992 = vld [vmem:[#allocation3 + $0x38] sm:$0xff]
    %v6993 = vpack.c.bf16 %v6986, %v6985
    %v6994 = vpack.c.bf16 %v6988, %v6987
    %v6995 = vpack.c.bf16 %v6990, %v6989
    %v6996 = vpack.c.bf16 %v6992, %v6991
    %v6997 = vld [vmem:[#allocation16] sm:$0xf]
    %v6998 = vld [vmem:[#allocation16 + $0x4] sm:$0xf]
    %v6999 = vld [vmem:[#allocation16 + $0x8] sm:$0xf]
    %v7000 = vld [vmem:[#allocation16 + $0xc] sm:$0xf]
    %v7001 = vld [vmem:[#allocation16 + $0x10] sm:$0xf]
    %v7002 = vld [vmem:[#allocation16 + $0x14] sm:$0xf]
    %v7003 = vld [vmem:[#allocation16 + $0x18] sm:$0xf]
    %v7004 = vld [vmem:[#allocation16 + $0x1c] sm:$0xf]
    %v7005 = vld [vmem:[#allocation16 + $0x20] sm:$0xf]
    %v7006 = vld [vmem:[#allocation16 + $0x24] sm:$0xf]
    %v7007 = vld [vmem:[#allocation16 + $0x28] sm:$0xf]
    %v7008 = vld [vmem:[#allocation16 + $0x2c] sm:$0xf]
    %v7009 = vld [vmem:[#allocation16 + $0x30] sm:$0xf]
    %v7010 = vld [vmem:[#allocation16 + $0x34] sm:$0xf]
    %v7011 = vld [vmem:[#allocation16 + $0x38] sm:$0xf]
    %v7012 = vld [vmem:[#allocation16 + $0x3c] sm:$0xf]
    %v7013 = vld [vmem:[%s7] sm:$0x1]
    %v7015 = vlaneseq
    %v7016 = vshrl.u32 %v7015, 7
    %v7017 = vsub.s32 0, %v7016
    %v7018 = vrot.slane %v7013, %v7017
    %v7036 = vunpack.c.l.b16 %v6997
    %v7037 = vunpack.c.l.b16 %v6998
    %v7038 = vunpack.c.l.b16 %v6999
    %v7039 = vunpack.c.l.b16 %v7000
    %v7040 = vunpack.c.l.b16 %v7001
    %v7041 = vunpack.c.l.b16 %v7002
    %v7042 = vunpack.c.l.b16 %v7003
    %v7043 = vunpack.c.l.b16 %v7004
    %v7044 = vunpack.c.l.b16 %v7005
    %v7045 = vunpack.c.l.b16 %v7006
    %v7046 = vunpack.c.l.b16 %v7007
    %v7047 = vunpack.c.l.b16 %v7008
    %v7048 = vunpack.c.l.b16 %v7009
    %v7049 = vunpack.c.l.b16 %v7010
    %v7050 = vunpack.c.l.b16 %v7011
    %v7051 = vunpack.c.l.b16 %v7012
    %v7052 = vpack.c.b16 %v7037, %v7036
    %v7053 = vpack.c.b16 %v7039, %v7038
    %v7054 = vpack.c.b16 %v7041, %v7040
    %v7055 = vpack.c.b16 %v7043, %v7042
    %v7056 = vpack.c.b16 %v7045, %v7044
    %v7057 = vpack.c.b16 %v7047, %v7046
    %v7058 = vpack.c.b16 %v7049, %v7048
    %v7059 = vpack.c.b16 %v7051, %v7050
    %7068 = vmatprep.subr.bf16.mxu0 0
    %7069 = vmatpush1.bf16.msra.mxu0 %v7052
    %7070 = vmatprep.subr.bf16.mxu0 0
    %7071 = vmatpush1.bf16.msra.mxu0 %v7053
    %7072 = vmatprep.subr.bf16.mxu0 0
    %7073 = vmatpush1.bf16.msra.mxu0 %v7054
    %7074 = vmatprep.subr.bf16.mxu0 0
    %7075 = vmatpush1.bf16.msra.mxu0 %v7055
    %7076 = vmatprep.subr.bf16.mxu0 0
    %7077 = vmatpush1.bf16.msra.mxu0 %v7056
    %7078 = vmatprep.subr.bf16.mxu0 0
    %7079 = vmatpush1.bf16.msra.mxu0 %v7057
    %7080 = vmatprep.subr.bf16.mxu0 0
    %7081 = vmatpush1.bf16.msra.mxu0 %v7058
    %7082 = vmatprep.subr.bf16.mxu0 0
    %7083 = vmatpush1.bf16.msra.mxu0 %v7059
    %7084 = vmatprep.subr.bf16.mxu0 0
    %7085 = vmatpush1.bf16.msra.mxu0 0
    %7086 = vmatprep.subr.bf16.mxu0 0
    %7087 = vmatpush1.bf16.msra.mxu0 0
    %7088 = vmatprep.subr.bf16.mxu0 0
    %7089 = vmatpush1.bf16.msra.mxu0 0
    %7090 = vmatprep.subr.bf16.mxu0 0
    %7091 = vmatpush1.bf16.msra.mxu0 0
    %7092 = vmatprep.subr.bf16.mxu0 0
    %7093 = vmatpush1.bf16.msra.mxu0 0
    %7094 = vmatprep.subr.bf16.mxu0 0
    %7095 = vmatpush1.bf16.msra.mxu0 0
    %7096 = vmatprep.subr.bf16.mxu0 0
    %7097 = vmatpush1.bf16.msra.mxu0 0
    %7098 = vmatprep.subr.bf16.mxu0 0
    %7099 = vmatpush1.bf16.msra.mxu0 0
    %7100 = vmatprep.mubr.bf16.mxu0 0
    %7101 = vmatmul.mubr.bf16.gmra.mrb[0].mxu0 %v6993
    %v7102 = vpop.f32.mrb[0].mxu0
    %v7103 = vadd.f32 %v7018, %v7102
    %v7104 = vpop.f32.mrb[0].mxu0
    %v7105 = vpop.f32.mrb[0].mxu0
    %v7106 = vadd.f32 %v7018, %v7105
    %v7107 = vpop.f32.mrb[0].mxu0
    %7108 = vmatprep.mubr.bf16.mxu0 0
    %7109 = vmatmul.mubr.bf16.gmra.mrb[0].mxu0 %v6994
    %v7110 = vpop.f32.mrb[0].mxu0
    %v7111 = vadd.f32 %v7018, %v7110
    %v7112 = vpop.f32.mrb[0].mxu0
    %v7113 = vpop.f32.mrb[0].mxu0
    %v7114 = vadd.f32 %v7018, %v7113
    %v7115 = vpop.f32.mrb[0].mxu0
    %7116 = vmatprep.mubr.bf16.mxu0 0
    %7117 = vmatmul.mubr.bf16.gmra.mrb[0].mxu0 %v6995
    %v7118 = vpop.f32.mrb[0].mxu0
    %v7119 = vadd.f32 %v7018, %v7118
    %v7120 = vpop.f32.mrb[0].mxu0
    %v7121 = vpop.f32.mrb[0].mxu0
    %v7122 = vadd.f32 %v7018, %v7121
    %v7123 = vpop.f32.mrb[0].mxu0
    %7124 = vmatprep.mubr.bf16.mxu0 0
    %7125 = vmatmul.mubr.bf16.gmra.mrb[0].mxu0 %v6996
    %v7126 = vpop.f32.mrb[0].mxu0
    %v7127 = vadd.f32 %v7018, %v7126
    %v7128 = vpop.f32.mrb[0].mxu0
    %v7129 = vpop.f32.mrb[0].mxu0
    %v7130 = vadd.f32 %v7018, %v7129
    %v7131 = vpop.f32.mrb[0].mxu0
    %7132 = vdwg.mxu0
    %7133 = vst [vmem:[#allocation17] sm:$0xff] %v7103
    %7134 = vst [vmem:[#allocation17 + $0x8] sm:$0xff] %v7106
    %7135 = vst [vmem:[#allocation17 + $0x10] sm:$0xff] %v7111
    %7136 = vst [vmem:[#allocation17 + $0x18] sm:$0xff] %v7114
    %7137 = vst [vmem:[#allocation17 + $0x20] sm:$0xff] %v7119
    %7138 = vst [vmem:[#allocation17 + $0x28] sm:$0xff] %v7122
    %7139 = vst [vmem:[#allocation17 + $0x30] sm:$0xff] %v7127
    %7140 = vst [vmem:[#allocation17 + $0x38] sm:$0xff] %v7130
    // Predicated region
    $region58: #{tpu_custom_call.1} parent=1 // pred_check
      _
    $region59: #{tpu_custom_call.1} parent=1 // pred_check_branch
      %7142 = sbr.rel (0) target = $region61
    $region60: #{tpu_custom_call.1} parent=1 // pred_region
      %s7144 = ssub.s32 1024, 1024
      %7145 = vsyncadd [#allocation10], %s7144
      %s7146 = sshll.u32 [#allocation17], 4
      %s7147 = int_to_ptr.vmem [resolvable:$true] %s7146
      %7152 = dma.vmem_to_hbm [thread:$0]  %s7147, 1024, %s8, [#allocation10], 128, 128, 8
    $region61: #{tpu_custom_call.1} parent=1 // pred_fallthru
      _
    // Predicated region
    $region62: #{tpu_custom_call.1} parent=1 // pred_check
      _
    $region63: #{tpu_custom_call.1} parent=1 // pred_check_branch
      %7154 = sbr.rel (0) target = $region65
    $region64: #{tpu_custom_call.1} parent=1 // pred_region
      %7155 = dma.done [#allocation10], 1024
    $region65: #{tpu_custom_call.1} parent=1 // pred_fallthru
      _
    %7156 = vsyncpa [#allocation9], 1
    %7157 = vsyncpa [#allocation12], 1
    %7158 = vsyncpa [#allocation15], 1
    %7159 = vsyncpa [#allocation10], 1

</llo_original>
